<compile_context>
chip_gen: v7x
topology: tpu7x:2x2x1
jax: 0.10.0
libtpu: 0.0.40
codegen_flags: <defaults>
</compile_context>

<pallas_src>
import numpy as np
import jax
import jax.numpy as jnp
from jax.experimental import pallas as pl
from jax.experimental.pallas import tpu as pltpu

# ---- model hyper-parameters (PyTorch module defaults) ----------------------
IN_CHANNELS = 1
OUT_CHANNELS = 12
HIDDEN = 16
KERNEL_SIZE = 2
NUM_BLOCKS = 4
NUM_LAYERS = 2
RECEPTIVE_FIELD = 1 + NUM_BLOCKS * ((KERNEL_SIZE - 1) * (2 ** NUM_LAYERS - 1)) // (2 - 1)
FINAL_T = RECEPTIVE_FIELD - NUM_BLOCKS * (KERNEL_SIZE - 1) * (2 ** NUM_LAYERS - 1)
NUM_TOTAL_LAYERS = NUM_BLOCKS * NUM_LAYERS


# ---- the fused WaveNet kernel ----------------------------------------------
def wavenet_kernel(x_ref, wl_ref, wsk_ref, win_ref, wp1_ref, wp2_ref, out_ref):
    H, K = HIDDEN, KERNEL_SIZE
    rf = RECEPTIVE_FIELD
    tm = x_ref.shape[-1] // rf                     # lane tile (batch*node columns)

    x = x_ref[0].astype(jnp.float32)               # (Cin, rf*tm)
    win = win_ref[...]                             # (H, Cin+1): [w_in | b_in]

    # input 1x1 conv (Cin tiny) as a lane-dense broadcast multiply-accumulate
    h = win[:, 0:1] * x[0:1, :] + win[:, IN_CHANNELS:IN_CHANNELS + 1]
    for c in range(1, IN_CHANNELS):
        h = h + win[:, c:c + 1] * x[c:c + 1, :]

    t = rf
    skip_parts = []
    layer = 0
    for _ in range(NUM_BLOCKS):
        d = 1
        for _ in range(NUM_LAYERS):
            t_out = t - d * (K - 1)
            wl = wl_ref[layer]                          # (3H, K*H+1) packed layer weights
            w_fg = wl[0:2 * H, 0:K * H]                 # (2H, K*H) fused filter+gate, both taps
            b_fg = wl[0:2 * H, K * H:K * H + 1]         # (2H, 1)

            # both dilation taps stacked on the channel (sublane) axis -> one matmul
            xcat = jnp.concatenate(
                [h[:, j * d * tm:(j * d + t_out) * tm] for j in range(K)], axis=0)
            y = jnp.dot(w_fg, xcat, preferred_element_type=jnp.float32) + b_fg
            g = jnp.tanh(y[0:H]) * jax.nn.sigmoid(y[H:2 * H])    # (H, t_out*tm)

            # skip conv only needs the last FINAL_T steps; defer to one fused matmul
            skip_parts.append(g[:, (t_out - FINAL_T) * tm:])

            # residual 1x1 conv + add the last t_out steps of the previous h.
            # The very last layer's residual output is never consumed -> skip it.
            if layer < NUM_TOTAL_LAYERS - 1:
                w_r = wl[2 * H:3 * H, 0:H]              # (H, H)   residual 1x1
                b_r = wl[2 * H:3 * H, K * H:K * H + 1]  # (H, 1)
                h = (jnp.dot(w_r, g, preferred_element_type=jnp.float32) + b_r
                     + h[:, (t - t_out) * tm:])
            t = t_out
            d *= 2
            layer += 1

    # all skip convs fused: (H, L*H) @ (L*H, FINAL_T*tm), biases pre-summed
    skip_stack = jnp.concatenate(skip_parts, axis=0)             # (L*H, FINAL_T*tm)
    w_s = wsk_ref[:, 0:NUM_TOTAL_LAYERS * H]
    b_s = wsk_ref[:, NUM_TOTAL_LAYERS * H:NUM_TOTAL_LAYERS * H + 1]
    skip_sum = jnp.dot(w_s, skip_stack, preferred_element_type=jnp.float32) + b_s

    # output projection: ReLU -> 1x1 -> ReLU -> 1x1  (all lane-dense)
    y = jnp.maximum(skip_sum, 0.0)
    wp1 = wp1_ref[...]
    y = jnp.dot(wp1[:, 0:H], y, preferred_element_type=jnp.float32) + wp1[:, H:H + 1]
    y = jnp.maximum(y, 0.0)
    wp2 = wp2_ref[...]
    y = jnp.dot(wp2[:, 0:H], y, preferred_element_type=jnp.float32) + wp2[:, H:H + 1]
    out_ref[0] = y.astype(out_ref.dtype)


# ---- parameters (deterministic synthetic init, PyTorch-ish uniform) ---------
def init_params(key):
    L = NUM_TOTAL_LAYERS

    def u(k, shape, fan_in):
        bound = 1.0 / np.sqrt(fan_in)
        return jax.random.uniform(k, shape, jnp.float32, -bound, bound)

    ks = jax.random.split(key, 14)
    return dict(
        w_in=u(ks[0], (IN_CHANNELS, HIDDEN), IN_CHANNELS),
        b_in=u(ks[1], (1, HIDDEN), IN_CHANNELS),
        wf=u(ks[2], (L, KERNEL_SIZE, HIDDEN, HIDDEN), HIDDEN * KERNEL_SIZE),
        bf=u(ks[3], (L, HIDDEN), HIDDEN * KERNEL_SIZE),
        wg=u(ks[4], (L, KERNEL_SIZE, HIDDEN, HIDDEN), HIDDEN * KERNEL_SIZE),
        bg=u(ks[5], (L, HIDDEN), HIDDEN * KERNEL_SIZE),
        ws=u(ks[6], (L, HIDDEN, HIDDEN), HIDDEN),
        bs=u(ks[7], (L, HIDDEN), HIDDEN),
        wr=u(ks[8], (L, HIDDEN, HIDDEN), HIDDEN),
        br=u(ks[9], (L, HIDDEN), HIDDEN),
        wp1=u(ks[10], (HIDDEN, HIDDEN), HIDDEN),
        bp1=u(ks[11], (1, HIDDEN), HIDDEN),
        wp2=u(ks[12], (HIDDEN, OUT_CHANNELS), HIDDEN),
        bp2=u(ks[13], (1, OUT_CHANNELS), HIDDEN),
    )


# ---- pack the 14 tensors into 5 kernel buffers (wrapper side, tiny) ---------
def pack_params(params):
    L, K, H = NUM_TOTAL_LAYERS, KERNEL_SIZE, HIDDEN
    f32 = jnp.float32

    def taps_T(w):  # (L, K, Hin, Hout) -> (L, Hout, K*Hin)
        return jnp.concatenate([jnp.swapaxes(w[:, j], 1, 2) for j in range(K)], axis=2)

    # per-layer block: rows 0:2H = [W_filter|W_gate taps | bias], rows 2H:3H = [W_res | pad | bias]
    w_fg = jnp.concatenate([taps_T(params['wf']), taps_T(params['wg'])], axis=1)  # (L,2H,K*H)
    b_fg = jnp.concatenate([params['bf'], params['bg']], axis=1)[..., None]       # (L,2H,1)
    top = jnp.concatenate([w_fg, b_fg], axis=2)                                   # (L,2H,K*H+1)
    w_rT = jnp.swapaxes(params['wr'], 1, 2)                                       # (L,H,H)
    pad = jnp.zeros((L, H, K * H - H), f32)
    bot = jnp.concatenate([w_rT, pad, params['br'][..., None]], axis=2)           # (L,H,K*H+1)
    w_layers = jnp.concatenate([top, bot], axis=1).astype(f32)                    # (L,3H,K*H+1)

    # all skip convs stacked horizontally; biases summed (all FINAL_T slices get them)
    w_sT = jnp.swapaxes(params['ws'], 1, 2)                                       # (L,Hout,Hin)
    w_s_all = jnp.transpose(w_sT, (1, 0, 2)).reshape(H, L * H)
    b_s_all = jnp.sum(params['bs'], axis=0)[:, None]
    w_skip = jnp.concatenate([w_s_all, b_s_all], axis=1).astype(f32)              # (H, L*H+1)

    w_in_pk = jnp.concatenate([params['w_in'].T, params['b_in'].T], axis=1).astype(f32)
    w_p1_pk = jnp.concatenate([params['wp1'].T, params['bp1'].T], axis=1).astype(f32)
    w_p2_pk = jnp.concatenate([params['wp2'].T, params['bp2'].T], axis=1).astype(f32)
    return w_layers, w_skip, w_in_pk, w_p1_pk, w_p2_pk


# ---- wrapper: layout glue + pallas_call -------------------------------------
def wavenet_pallas(x, params, tile_m=256):
    """x: (B, in_steps, N_nodes, in_channels) -> (B, out_channels, N_nodes, FINAL_T)."""
    assert tile_m % 128 == 0, "tile_m must be a multiple of 128 (lane width)"
    B, in_steps, N, cin = x.shape
    assert cin == IN_CHANNELS
    M = B * N
    rf = RECEPTIVE_FIELD

    # (B,T,N,C) -> (C,T,M) with M = b*N + n ; time handling matches the torch forward
    xt = jnp.transpose(x, (3, 1, 0, 2)).reshape(cin, in_steps, M).astype(jnp.float32)
    if in_steps < rf:
        xt = jnp.pad(xt, ((0, 0), (rf - in_steps, 0), (0, 0)))   # left-pad time
    elif in_steps > rf:
        xt = xt[:, -rf:, :]                                      # keep last rf steps

    pad_m = (-M) % tile_m
    if pad_m:
        xt = jnp.pad(xt, ((0, 0), (0, 0), (0, pad_m)))
    Mp = M + pad_m
    G = Mp // tile_m

    # (C, rf, Mp) -> (G, C, rf*tile_m): per grid step a lane-dense (C, T*tile_m) slab
    xg = jnp.transpose(xt.reshape(cin, rf, G, tile_m), (2, 0, 1, 3)).reshape(
        G, cin, rf * tile_m)

    w_layers, w_skip, w_in_pk, w_p1_pk, w_p2_pk = pack_params(params)

    out = pl.pallas_call(
        wavenet_kernel,
        out_shape=jax.ShapeDtypeStruct((G, OUT_CHANNELS, FINAL_T * tile_m), jnp.float32),
        grid=(G,),
        in_specs=[
            pl.BlockSpec((1, cin, rf * tile_m), lambda i: (i, 0, 0)),
            pl.BlockSpec(w_layers.shape, lambda i: (0, 0, 0)),
            pl.BlockSpec(w_skip.shape, lambda i: (0, 0)),
            pl.BlockSpec(w_in_pk.shape, lambda i: (0, 0)),
            pl.BlockSpec(w_p1_pk.shape, lambda i: (0, 0)),
            pl.BlockSpec(w_p2_pk.shape, lambda i: (0, 0)),
        ],
        out_specs=pl.BlockSpec((1, OUT_CHANNELS, FINAL_T * tile_m), lambda i: (i, 0, 0)),
        compiler_params=pltpu.CompilerParams(
            dimension_semantics=("parallel",),
            vmem_limit_bytes=32 * 1024 * 1024),   # headroom for larger tile_m on v5e
    )(xg, w_layers, w_skip, w_in_pk, w_p1_pk, w_p2_pk)

    # (G, OUT, FINAL_T*tile_m) -> torch layout (B, out_channels, N, FINAL_T)
    out = out.reshape(G, OUT_CHANNELS, FINAL_T, tile_m)
    out = jnp.transpose(out, (1, 2, 0, 3)).reshape(OUT_CHANNELS, FINAL_T, Mp)[:, :, :M]
    out = out.reshape(OUT_CHANNELS, FINAL_T, B, N)
    return jnp.transpose(out, (2, 0, 3, 1))


# ---- pure-JAX reference (same math, independent code path) ------------------
def wavenet_ref(x, params):
    B, in_steps, N, cin = x.shape
    rf = RECEPTIVE_FIELD
    xt = jnp.transpose(x, (1, 0, 2, 3)).reshape(in_steps, B * N, cin).astype(jnp.float32)
    if in_steps < rf:
        xt = jnp.pad(xt, ((rf - in_steps, 0), (0, 0), (0, 0)))
    elif in_steps > rf:
        xt = xt[-rf:]

    h = jnp.einsum('tmi,ic->tmc', xt, params['w_in']) + params['b_in'][0]
    skips = []
    layer = 0
    for _ in range(NUM_BLOCKS):
        d = 1
        for _ in range(NUM_LAYERS):
            residual = h
            t_out = h.shape[0] - d * (KERNEL_SIZE - 1)

            def dil(w, b, h_in=h, d_=d, t_out_=t_out, l_=layer):
                y = b[l_]
                for j in range(KERNEL_SIZE):
                    y = y + jnp.einsum('tmh,hc->tmc',
                                       h_in[j * d_: j * d_ + t_out_], w[l_, j])
                return y

            filt = jnp.tanh(dil(params['wf'], params['bf']))
            gate = jax.nn.sigmoid(dil(params['wg'], params['bg']))
            h = filt * gate
            skips.append(jnp.einsum('tmh,hc->tmc', h, params['ws'][layer]) + params['bs'][layer])
            h = (jnp.einsum('tmh,hc->tmc', h, params['wr'][layer]) + params['br'][layer]
                 + residual[residual.shape[0] - h.shape[0]:])
            d *= 2
            layer += 1

    ss = skips[0][skips[0].shape[0] - FINAL_T:]
    for s in skips[1:]:
        ss = ss + s[s.shape[0] - FINAL_T:]
    y = jnp.maximum(ss, 0.0)
    y = jnp.einsum('tmh,hc->tmc', y, params['wp1']) + params['bp1'][0]
    y = jnp.maximum(y, 0.0)
    y = jnp.einsum('tmh,hc->tmc', y, params['wp2']) + params['bp2'][0]
    out = y.reshape(FINAL_T, B, N, OUT_CHANNELS)
    return jnp.transpose(out, (1, 3, 2, 0))


if __name__ == "__main__":
    key = jax.random.PRNGKey(0)
    kp, kx = jax.random.split(key)
    params = init_params(kp)

    # x: (batch=2, in_steps=8, num_nodes=256, in_channels=1); in_steps < receptive
    # field (13) exercises the left zero-padding path of the torch forward.
    # M = B*N = 512 -> grid of 2 parallel steps with tile_m=256 (both v7x cores busy).
    B, T_IN, N = 2, 8, 256
    x = jax.random.normal(kx, (B, T_IN, N, IN_CHANNELS), jnp.float32)

    out = jax.block_until_ready(wavenet_pallas(x, params, tile_m=256))
    assert out.shape == (B, OUT_CHANNELS, N, FINAL_T), out.shape

    ref = wavenet_ref(x, params)
    np.testing.assert_allclose(np.asarray(out), np.asarray(ref), rtol=1e-4, atol=1e-4)

    print("KERNEL_OK")
</pallas_src>

<mosaic_0001>
module attributes {stable_mosaic.version = 11 : i64} {
  func.func @wavenet_kernel(%arg0: i32, %arg1: memref<1x1x3328xf32, #tpu.memory_space<vmem>>, %arg2: memref<8x48x33xf32, #tpu.memory_space<vmem>>, %arg3: memref<16x129xf32, #tpu.memory_space<vmem>>, %arg4: memref<16x2xf32, #tpu.memory_space<vmem>>, %arg5: memref<16x17xf32, #tpu.memory_space<vmem>>, %arg6: memref<12x17xf32, #tpu.memory_space<vmem>>, %arg7: memref<1x12x256xf32, #tpu.memory_space<vmem>>) attributes {dimension_semantics = [#tpu.dimension_semantics<parallel>], iteration_bounds = array<i64: 2>, scalar_prefetch = 0 : i64, scratch_operands = 0 : i64, tpu.core_type = #tpu.core_type<tc>, window_params = [{transform_indices = @transform_0, window_bounds = array<i64: 1, 1, 3328>}, {pipeline_mode = #tpu.pipeline_mode<synchronous>, transform_indices = @transform_1, window_bounds = array<i64: 8, 48, 33>}, {pipeline_mode = #tpu.pipeline_mode<synchronous>, transform_indices = @transform_2, window_bounds = array<i64: 16, 129>}, {pipeline_mode = #tpu.pipeline_mode<synchronous>, transform_indices = @transform_3, window_bounds = array<i64: 16, 2>}, {pipeline_mode = #tpu.pipeline_mode<synchronous>, transform_indices = @transform_4, window_bounds = array<i64: 16, 17>}, {pipeline_mode = #tpu.pipeline_mode<synchronous>, transform_indices = @transform_5, window_bounds = array<i64: 12, 17>}, {transform_indices = @transform_6, window_bounds = array<i64: 1, 12, 256>}]} {
    %c0 = arith.constant 0 : index
    %c0_0 = arith.constant 0 : index
    %c0_1 = arith.constant 0 : index
    %0 = vector.load %arg1[%c0, %c0_0, %c0_1] : memref<1x1x3328xf32, #tpu.memory_space<vmem>>, vector<1x1x3328xf32>
    %1 = vector.shape_cast %0 : vector<1x1x3328xf32> to vector<1x3328xf32>
    %c0_2 = arith.constant 0 : index
    %c0_3 = arith.constant 0 : index
    %2 = vector.load %arg4[%c0_2, %c0_3] : memref<16x2xf32, #tpu.memory_space<vmem>>, vector<16x2xf32>
    %3 = vector.extract_strided_slice %2 {offsets = [0, 0], sizes = [16, 1], strides = [1, 1]} : vector<16x2xf32> to vector<16x1xf32>
    %4 = vector.broadcast %3 : vector<16x1xf32> to vector<16x3328xf32>
    %5 = vector.broadcast %1 : vector<1x3328xf32> to vector<16x3328xf32>
    %6 = arith.mulf %4, %5 : vector<16x3328xf32>
    %7 = vector.extract_strided_slice %2 {offsets = [0, 1], sizes = [16, 1], strides = [1, 1]} : vector<16x2xf32> to vector<16x1xf32>
    %8 = vector.broadcast %7 : vector<16x1xf32> to vector<16x3328xf32>
    %9 = arith.addf %6, %8 : vector<16x3328xf32>
    %c0_4 = arith.constant 0 : index
    %c0_5 = arith.constant 0 : index
    %c0_6 = arith.constant 0 : index
    %10 = vector.load %arg2[%c0_4, %c0_5, %c0_6] : memref<8x48x33xf32, #tpu.memory_space<vmem>>, vector<1x48x33xf32>
    %11 = vector.shape_cast %10 : vector<1x48x33xf32> to vector<48x33xf32>
    %12 = vector.extract_strided_slice %11 {offsets = [0, 0], sizes = [32, 32], strides = [1, 1]} : vector<48x33xf32> to vector<32x32xf32>
    %13 = vector.extract_strided_slice %11 {offsets = [0, 32], sizes = [32, 1], strides = [1, 1]} : vector<48x33xf32> to vector<32x1xf32>
    %14 = vector.extract_strided_slice %9 {offsets = [0, 0], sizes = [16, 3072], strides = [1, 1]} : vector<16x3328xf32> to vector<16x3072xf32>
    %15 = vector.extract_strided_slice %9 {offsets = [0, 256], sizes = [16, 3072], strides = [1, 1]} : vector<16x3328xf32> to vector<16x3072xf32>
    %16 = tpu.concatenate %14, %15 in 0 : vector<16x3072xf32>, vector<16x3072xf32> -> vector<32x3072xf32>
    %cst = arith.constant dense<0.000000e+00> : vector<32x3072xf32>
    %17 = tpu.matmul %12, %16, %cst {dimension_numbers = #tpu.dot_dimension_numbers<[1], [0], [0], [1], [0, 0, 1, 1], [], []>} : vector<32x32xf32>, vector<32x3072xf32>, vector<32x3072xf32> -> vector<32x3072xf32>
    %18 = vector.broadcast %13 : vector<32x1xf32> to vector<32x3072xf32>
    %19 = arith.addf %17, %18 : vector<32x3072xf32>
    %20 = vector.extract_strided_slice %19 {offsets = [0, 0], sizes = [16, 3072], strides = [1, 1]} : vector<32x3072xf32> to vector<16x3072xf32>
    %21 = math.tanh %20 : vector<16x3072xf32>
    %22 = vector.extract_strided_slice %19 {offsets = [16, 0], sizes = [16, 3072], strides = [1, 1]} : vector<32x3072xf32> to vector<16x3072xf32>
    %23 = arith.negf %22 : vector<16x3072xf32>
    %24 = math.exp %23 : vector<16x3072xf32>
    %cst_7 = arith.constant 1.000000e+00 : f32
    %25 = vector.broadcast %cst_7 : f32 to vector<16x3072xf32>
    %26 = arith.addf %25, %24 : vector<16x3072xf32>
    %27 = arith.divf %25, %26 : vector<16x3072xf32>
    %28 = arith.mulf %21, %27 : vector<16x3072xf32>
    %29 = vector.extract_strided_slice %28 {offsets = [0, 2816], sizes = [16, 256], strides = [1, 1]} : vector<16x3072xf32> to vector<16x256xf32>
    %30 = vector.extract_strided_slice %11 {offsets = [32, 0], sizes = [16, 16], strides = [1, 1]} : vector<48x33xf32> to vector<16x16xf32>
    %31 = vector.extract_strided_slice %11 {offsets = [32, 32], sizes = [16, 1], strides = [1, 1]} : vector<48x33xf32> to vector<16x1xf32>
    %cst_8 = arith.constant dense<0.000000e+00> : vector<16x3072xf32>
    %32 = tpu.matmul %30, %28, %cst_8 {dimension_numbers = #tpu.dot_dimension_numbers<[1], [0], [0], [1], [0, 0, 1, 1], [], []>} : vector<16x16xf32>, vector<16x3072xf32>, vector<16x3072xf32> -> vector<16x3072xf32>
    %33 = vector.broadcast %31 : vector<16x1xf32> to vector<16x3072xf32>
    %34 = arith.addf %32, %33 : vector<16x3072xf32>
    %35 = vector.extract_strided_slice %9 {offsets = [0, 256], sizes = [16, 3072], strides = [1, 1]} : vector<16x3328xf32> to vector<16x3072xf32>
    %36 = arith.addf %34, %35 : vector<16x3072xf32>
    %c1 = arith.constant 1 : index
    %c0_9 = arith.constant 0 : index
    %c0_10 = arith.constant 0 : index
    %37 = vector.load %arg2[%c1, %c0_9, %c0_10] : memref<8x48x33xf32, #tpu.memory_space<vmem>>, vector<1x48x33xf32>
    %38 = vector.shape_cast %37 : vector<1x48x33xf32> to vector<48x33xf32>
    %39 = vector.extract_strided_slice %38 {offsets = [0, 0], sizes = [32, 32], strides = [1, 1]} : vector<48x33xf32> to vector<32x32xf32>
    %40 = vector.extract_strided_slice %38 {offsets = [0, 32], sizes = [32, 1], strides = [1, 1]} : vector<48x33xf32> to vector<32x1xf32>
    %41 = vector.extract_strided_slice %36 {offsets = [0, 0], sizes = [16, 2560], strides = [1, 1]} : vector<16x3072xf32> to vector<16x2560xf32>
    %42 = vector.extract_strided_slice %36 {offsets = [0, 512], sizes = [16, 2560], strides = [1, 1]} : vector<16x3072xf32> to vector<16x2560xf32>
    %43 = tpu.concatenate %41, %42 in 0 : vector<16x2560xf32>, vector<16x2560xf32> -> vector<32x2560xf32>
    %cst_11 = arith.constant dense<0.000000e+00> : vector<32x2560xf32>
    %44 = tpu.matmul %39, %43, %cst_11 {dimension_numbers = #tpu.dot_dimension_numbers<[1], [0], [0], [1], [0, 0, 1, 1], [], []>} : vector<32x32xf32>, vector<32x2560xf32>, vector<32x2560xf32> -> vector<32x2560xf32>
    %45 = vector.broadcast %40 : vector<32x1xf32> to vector<32x2560xf32>
    %46 = arith.addf %44, %45 : vector<32x2560xf32>
    %47 = vector.extract_strided_slice %46 {offsets = [0, 0], sizes = [16, 2560], strides = [1, 1]} : vector<32x2560xf32> to vector<16x2560xf32>
    %48 = math.tanh %47 : vector<16x2560xf32>
    %49 = vector.extract_strided_slice %46 {offsets = [16, 0], sizes = [16, 2560], strides = [1, 1]} : vector<32x2560xf32> to vector<16x2560xf32>
    %50 = arith.negf %49 : vector<16x2560xf32>
    %51 = math.exp %50 : vector<16x2560xf32>
    %cst_12 = arith.constant 1.000000e+00 : f32
    %52 = vector.broadcast %cst_12 : f32 to vector<16x2560xf32>
    %53 = arith.addf %52, %51 : vector<16x2560xf32>
    %54 = arith.divf %52, %53 : vector<16x2560xf32>
    %55 = arith.mulf %48, %54 : vector<16x2560xf32>
    %56 = vector.extract_strided_slice %55 {offsets = [0, 2304], sizes = [16, 256], strides = [1, 1]} : vector<16x2560xf32> to vector<16x256xf32>
    %57 = vector.extract_strided_slice %38 {offsets = [32, 0], sizes = [16, 16], strides = [1, 1]} : vector<48x33xf32> to vector<16x16xf32>
    %58 = vector.extract_strided_slice %38 {offsets = [32, 32], sizes = [16, 1], strides = [1, 1]} : vector<48x33xf32> to vector<16x1xf32>
    %cst_13 = arith.constant dense<0.000000e+00> : vector<16x2560xf32>
    %59 = tpu.matmul %57, %55, %cst_13 {dimension_numbers = #tpu.dot_dimension_numbers<[1], [0], [0], [1], [0, 0, 1, 1], [], []>} : vector<16x16xf32>, vector<16x2560xf32>, vector<16x2560xf32> -> vector<16x2560xf32>
    %60 = vector.broadcast %58 : vector<16x1xf32> to vector<16x2560xf32>
    %61 = arith.addf %59, %60 : vector<16x2560xf32>
    %62 = vector.extract_strided_slice %36 {offsets = [0, 512], sizes = [16, 2560], strides = [1, 1]} : vector<16x3072xf32> to vector<16x2560xf32>
    %63 = arith.addf %61, %62 : vector<16x2560xf32>
    %c2 = arith.constant 2 : index
    %c0_14 = arith.constant 0 : index
    %c0_15 = arith.constant 0 : index
    %64 = vector.load %arg2[%c2, %c0_14, %c0_15] : memref<8x48x33xf32, #tpu.memory_space<vmem>>, vector<1x48x33xf32>
    %65 = vector.shape_cast %64 : vector<1x48x33xf32> to vector<48x33xf32>
    %66 = vector.extract_strided_slice %65 {offsets = [0, 0], sizes = [32, 32], strides = [1, 1]} : vector<48x33xf32> to vector<32x32xf32>
    %67 = vector.extract_strided_slice %65 {offsets = [0, 32], sizes = [32, 1], strides = [1, 1]} : vector<48x33xf32> to vector<32x1xf32>
    %68 = vector.extract_strided_slice %63 {offsets = [0, 0], sizes = [16, 2304], strides = [1, 1]} : vector<16x2560xf32> to vector<16x2304xf32>
    %69 = vector.extract_strided_slice %63 {offsets = [0, 256], sizes = [16, 2304], strides = [1, 1]} : vector<16x2560xf32> to vector<16x2304xf32>
    %70 = tpu.concatenate %68, %69 in 0 : vector<16x2304xf32>, vector<16x2304xf32> -> vector<32x2304xf32>
    %cst_16 = arith.constant dense<0.000000e+00> : vector<32x2304xf32>
    %71 = tpu.matmul %66, %70, %cst_16 {dimension_numbers = #tpu.dot_dimension_numbers<[1], [0], [0], [1], [0, 0, 1, 1], [], []>} : vector<32x32xf32>, vector<32x2304xf32>, vector<32x2304xf32> -> vector<32x2304xf32>
    %72 = vector.broadcast %67 : vector<32x1xf32> to vector<32x2304xf32>
    %73 = arith.addf %71, %72 : vector<32x2304xf32>
    %74 = vector.extract_strided_slice %73 {offsets = [0, 0], sizes = [16, 2304], strides = [1, 1]} : vector<32x2304xf32> to vector<16x2304xf32>
    %75 = math.tanh %74 : vector<16x2304xf32>
    %76 = vector.extract_strided_slice %73 {offsets = [16, 0], sizes = [16, 2304], strides = [1, 1]} : vector<32x2304xf32> to vector<16x2304xf32>
    %77 = arith.negf %76 : vector<16x2304xf32>
    %78 = math.exp %77 : vector<16x2304xf32>
    %cst_17 = arith.constant 1.000000e+00 : f32
    %79 = vector.broadcast %cst_17 : f32 to vector<16x2304xf32>
    %80 = arith.addf %79, %78 : vector<16x2304xf32>
    %81 = arith.divf %79, %80 : vector<16x2304xf32>
    %82 = arith.mulf %75, %81 : vector<16x2304xf32>
    %83 = vector.extract_strided_slice %82 {offsets = [0, 2048], sizes = [16, 256], strides = [1, 1]} : vector<16x2304xf32> to vector<16x256xf32>
    %84 = vector.extract_strided_slice %65 {offsets = [32, 0], sizes = [16, 16], strides = [1, 1]} : vector<48x33xf32> to vector<16x16xf32>
    %85 = vector.extract_strided_slice %65 {offsets = [32, 32], sizes = [16, 1], strides = [1, 1]} : vector<48x33xf32> to vector<16x1xf32>
    %cst_18 = arith.constant dense<0.000000e+00> : vector<16x2304xf32>
    %86 = tpu.matmul %84, %82, %cst_18 {dimension_numbers = #tpu.dot_dimension_numbers<[1], [0], [0], [1], [0, 0, 1, 1], [], []>} : vector<16x16xf32>, vector<16x2304xf32>, vector<16x2304xf32> -> vector<16x2304xf32>
    %87 = vector.broadcast %85 : vector<16x1xf32> to vector<16x2304xf32>
    %88 = arith.addf %86, %87 : vector<16x2304xf32>
    %89 = vector.extract_strided_slice %63 {offsets = [0, 256], sizes = [16, 2304], strides = [1, 1]} : vector<16x2560xf32> to vector<16x2304xf32>
    %90 = arith.addf %88, %89 : vector<16x2304xf32>
    %c3 = arith.constant 3 : index
    %c0_19 = arith.constant 0 : index
    %c0_20 = arith.constant 0 : index
    %91 = vector.load %arg2[%c3, %c0_19, %c0_20] : memref<8x48x33xf32, #tpu.memory_space<vmem>>, vector<1x48x33xf32>
    %92 = vector.shape_cast %91 : vector<1x48x33xf32> to vector<48x33xf32>
    %93 = vector.extract_strided_slice %92 {offsets = [0, 0], sizes = [32, 32], strides = [1, 1]} : vector<48x33xf32> to vector<32x32xf32>
    %94 = vector.extract_strided_slice %92 {offsets = [0, 32], sizes = [32, 1], strides = [1, 1]} : vector<48x33xf32> to vector<32x1xf32>
    %95 = vector.extract_strided_slice %90 {offsets = [0, 0], sizes = [16, 1792], strides = [1, 1]} : vector<16x2304xf32> to vector<16x1792xf32>
    %96 = vector.extract_strided_slice %90 {offsets = [0, 512], sizes = [16, 1792], strides = [1, 1]} : vector<16x2304xf32> to vector<16x1792xf32>
    %97 = tpu.concatenate %95, %96 in 0 : vector<16x1792xf32>, vector<16x1792xf32> -> vector<32x1792xf32>
    %cst_21 = arith.constant dense<0.000000e+00> : vector<32x1792xf32>
    %98 = tpu.matmul %93, %97, %cst_21 {dimension_numbers = #tpu.dot_dimension_numbers<[1], [0], [0], [1], [0, 0, 1, 1], [], []>} : vector<32x32xf32>, vector<32x1792xf32>, vector<32x1792xf32> -> vector<32x1792xf32>
    %99 = vector.broadcast %94 : vector<32x1xf32> to vector<32x1792xf32>
    %100 = arith.addf %98, %99 : vector<32x1792xf32>
    %101 = vector.extract_strided_slice %100 {offsets = [0, 0], sizes = [16, 1792], strides = [1, 1]} : vector<32x1792xf32> to vector<16x1792xf32>
    %102 = math.tanh %101 : vector<16x1792xf32>
    %103 = vector.extract_strided_slice %100 {offsets = [16, 0], sizes = [16, 1792], strides = [1, 1]} : vector<32x1792xf32> to vector<16x1792xf32>
    %104 = arith.negf %103 : vector<16x1792xf32>
    %105 = math.exp %104 : vector<16x1792xf32>
    %cst_22 = arith.constant 1.000000e+00 : f32
    %106 = vector.broadcast %cst_22 : f32 to vector<16x1792xf32>
    %107 = arith.addf %106, %105 : vector<16x1792xf32>
    %108 = arith.divf %106, %107 : vector<16x1792xf32>
    %109 = arith.mulf %102, %108 : vector<16x1792xf32>
    %110 = vector.extract_strided_slice %109 {offsets = [0, 1536], sizes = [16, 256], strides = [1, 1]} : vector<16x1792xf32> to vector<16x256xf32>
    %111 = vector.extract_strided_slice %92 {offsets = [32, 0], sizes = [16, 16], strides = [1, 1]} : vector<48x33xf32> to vector<16x16xf32>
    %112 = vector.extract_strided_slice %92 {offsets = [32, 32], sizes = [16, 1], strides = [1, 1]} : vector<48x33xf32> to vector<16x1xf32>
    %cst_23 = arith.constant dense<0.000000e+00> : vector<16x1792xf32>
    %113 = tpu.matmul %111, %109, %cst_23 {dimension_numbers = #tpu.dot_dimension_numbers<[1], [0], [0], [1], [0, 0, 1, 1], [], []>} : vector<16x16xf32>, vector<16x1792xf32>, vector<16x1792xf32> -> vector<16x1792xf32>
    %114 = vector.broadcast %112 : vector<16x1xf32> to vector<16x1792xf32>
    %115 = arith.addf %113, %114 : vector<16x1792xf32>
    %116 = vector.extract_strided_slice %90 {offsets = [0, 512], sizes = [16, 1792], strides = [1, 1]} : vector<16x2304xf32> to vector<16x1792xf32>
    %117 = arith.addf %115, %116 : vector<16x1792xf32>
    %c4 = arith.constant 4 : index
    %c0_24 = arith.constant 0 : index
    %c0_25 = arith.constant 0 : index
    %118 = vector.load %arg2[%c4, %c0_24, %c0_25] : memref<8x48x33xf32, #tpu.memory_space<vmem>>, vector<1x48x33xf32>
    %119 = vector.shape_cast %118 : vector<1x48x33xf32> to vector<48x33xf32>
    %120 = vector.extract_strided_slice %119 {offsets = [0, 0], sizes = [32, 32], strides = [1, 1]} : vector<48x33xf32> to vector<32x32xf32>
    %121 = vector.extract_strided_slice %119 {offsets = [0, 32], sizes = [32, 1], strides = [1, 1]} : vector<48x33xf32> to vector<32x1xf32>
    %122 = vector.extract_strided_slice %117 {offsets = [0, 0], sizes = [16, 1536], strides = [1, 1]} : vector<16x1792xf32> to vector<16x1536xf32>
    %123 = vector.extract_strided_slice %117 {offsets = [0, 256], sizes = [16, 1536], strides = [1, 1]} : vector<16x1792xf32> to vector<16x1536xf32>
    %124 = tpu.concatenate %122, %123 in 0 : vector<16x1536xf32>, vector<16x1536xf32> -> vector<32x1536xf32>
    %cst_26 = arith.constant dense<0.000000e+00> : vector<32x1536xf32>
    %125 = tpu.matmul %120, %124, %cst_26 {dimension_numbers = #tpu.dot_dimension_numbers<[1], [0], [0], [1], [0, 0, 1, 1], [], []>} : vector<32x32xf32>, vector<32x1536xf32>, vector<32x1536xf32> -> vector<32x1536xf32>
    %126 = vector.broadcast %121 : vector<32x1xf32> to vector<32x1536xf32>
    %127 = arith.addf %125, %126 : vector<32x1536xf32>
    %128 = vector.extract_strided_slice %127 {offsets = [0, 0], sizes = [16, 1536], strides = [1, 1]} : vector<32x1536xf32> to vector<16x1536xf32>
    %129 = math.tanh %128 : vector<16x1536xf32>
    %130 = vector.extract_strided_slice %127 {offsets = [16, 0], sizes = [16, 1536], strides = [1, 1]} : vector<32x1536xf32> to vector<16x1536xf32>
    %131 = arith.negf %130 : vector<16x1536xf32>
    %132 = math.exp %131 : vector<16x1536xf32>
    %cst_27 = arith.constant 1.000000e+00 : f32
    %133 = vector.broadcast %cst_27 : f32 to vector<16x1536xf32>
    %134 = arith.addf %133, %132 : vector<16x1536xf32>
    %135 = arith.divf %133, %134 : vector<16x1536xf32>
    %136 = arith.mulf %129, %135 : vector<16x1536xf32>
    %137 = vector.extract_strided_slice %136 {offsets = [0, 1280], sizes = [16, 256], strides = [1, 1]} : vector<16x1536xf32> to vector<16x256xf32>
    %138 = vector.extract_strided_slice %119 {offsets = [32, 0], sizes = [16, 16], strides = [1, 1]} : vector<48x33xf32> to vector<16x16xf32>
    %139 = vector.extract_strided_slice %119 {offsets = [32, 32], sizes = [16, 1], strides = [1, 1]} : vector<48x33xf32> to vector<16x1xf32>
    %cst_28 = arith.constant dense<0.000000e+00> : vector<16x1536xf32>
    %140 = tpu.matmul %138, %136, %cst_28 {dimension_numbers = #tpu.dot_dimension_numbers<[1], [0], [0], [1], [0, 0, 1, 1], [], []>} : vector<16x16xf32>, vector<16x1536xf32>, vector<16x1536xf32> -> vector<16x1536xf32>
    %141 = vector.broadcast %139 : vector<16x1xf32> to vector<16x1536xf32>
    %142 = arith.addf %140, %141 : vector<16x1536xf32>
    %143 = vector.extract_strided_slice %117 {offsets = [0, 256], sizes = [16, 1536], strides = [1, 1]} : vector<16x1792xf32> to vector<16x1536xf32>
    %144 = arith.addf %142, %143 : vector<16x1536xf32>
    %c5 = arith.constant 5 : index
    %c0_29 = arith.constant 0 : index
    %c0_30 = arith.constant 0 : index
    %145 = vector.load %arg2[%c5, %c0_29, %c0_30] : memref<8x48x33xf32, #tpu.memory_space<vmem>>, vector<1x48x33xf32>
    %146 = vector.shape_cast %145 : vector<1x48x33xf32> to vector<48x33xf32>
    %147 = vector.extract_strided_slice %146 {offsets = [0, 0], sizes = [32, 32], strides = [1, 1]} : vector<48x33xf32> to vector<32x32xf32>
    %148 = vector.extract_strided_slice %146 {offsets = [0, 32], sizes = [32, 1], strides = [1, 1]} : vector<48x33xf32> to vector<32x1xf32>
    %149 = vector.extract_strided_slice %144 {offsets = [0, 0], sizes = [16, 1024], strides = [1, 1]} : vector<16x1536xf32> to vector<16x1024xf32>
    %150 = vector.extract_strided_slice %144 {offsets = [0, 512], sizes = [16, 1024], strides = [1, 1]} : vector<16x1536xf32> to vector<16x1024xf32>
    %151 = tpu.concatenate %149, %150 in 0 : vector<16x1024xf32>, vector<16x1024xf32> -> vector<32x1024xf32>
    %cst_31 = arith.constant dense<0.000000e+00> : vector<32x1024xf32>
    %152 = tpu.matmul %147, %151, %cst_31 {dimension_numbers = #tpu.dot_dimension_numbers<[1], [0], [0], [1], [0, 0, 1, 1], [], []>} : vector<32x32xf32>, vector<32x1024xf32>, vector<32x1024xf32> -> vector<32x1024xf32>
    %153 = vector.broadcast %148 : vector<32x1xf32> to vector<32x1024xf32>
    %154 = arith.addf %152, %153 : vector<32x1024xf32>
    %155 = vector.extract_strided_slice %154 {offsets = [0, 0], sizes = [16, 1024], strides = [1, 1]} : vector<32x1024xf32> to vector<16x1024xf32>
    %156 = math.tanh %155 : vector<16x1024xf32>
    %157 = vector.extract_strided_slice %154 {offsets = [16, 0], sizes = [16, 1024], strides = [1, 1]} : vector<32x1024xf32> to vector<16x1024xf32>
    %158 = arith.negf %157 : vector<16x1024xf32>
    %159 = math.exp %158 : vector<16x1024xf32>
    %cst_32 = arith.constant 1.000000e+00 : f32
    %160 = vector.broadcast %cst_32 : f32 to vector<16x1024xf32>
    %161 = arith.addf %160, %159 : vector<16x1024xf32>
    %162 = arith.divf %160, %161 : vector<16x1024xf32>
    %163 = arith.mulf %156, %162 : vector<16x1024xf32>
    %164 = vector.extract_strided_slice %163 {offsets = [0, 768], sizes = [16, 256], strides = [1, 1]} : vector<16x1024xf32> to vector<16x256xf32>
    %165 = vector.extract_strided_slice %146 {offsets = [32, 0], sizes = [16, 16], strides = [1, 1]} : vector<48x33xf32> to vector<16x16xf32>
    %166 = vector.extract_strided_slice %146 {offsets = [32, 32], sizes = [16, 1], strides = [1, 1]} : vector<48x33xf32> to vector<16x1xf32>
    %cst_33 = arith.constant dense<0.000000e+00> : vector<16x1024xf32>
    %167 = tpu.matmul %165, %163, %cst_33 {dimension_numbers = #tpu.dot_dimension_numbers<[1], [0], [0], [1], [0, 0, 1, 1], [], []>} : vector<16x16xf32>, vector<16x1024xf32>, vector<16x1024xf32> -> vector<16x1024xf32>
    %168 = vector.broadcast %166 : vector<16x1xf32> to vector<16x1024xf32>
    %169 = arith.addf %167, %168 : vector<16x1024xf32>
    %170 = vector.extract_strided_slice %144 {offsets = [0, 512], sizes = [16, 1024], strides = [1, 1]} : vector<16x1536xf32> to vector<16x1024xf32>
    %171 = arith.addf %169, %170 : vector<16x1024xf32>
    %c6 = arith.constant 6 : index
    %c0_34 = arith.constant 0 : index
    %c0_35 = arith.constant 0 : index
    %172 = vector.load %arg2[%c6, %c0_34, %c0_35] : memref<8x48x33xf32, #tpu.memory_space<vmem>>, vector<1x48x33xf32>
    %173 = vector.shape_cast %172 : vector<1x48x33xf32> to vector<48x33xf32>
    %174 = vector.extract_strided_slice %173 {offsets = [0, 0], sizes = [32, 32], strides = [1, 1]} : vector<48x33xf32> to vector<32x32xf32>
    %175 = vector.extract_strided_slice %173 {offsets = [0, 32], sizes = [32, 1], strides = [1, 1]} : vector<48x33xf32> to vector<32x1xf32>
    %176 = vector.extract_strided_slice %171 {offsets = [0, 0], sizes = [16, 768], strides = [1, 1]} : vector<16x1024xf32> to vector<16x768xf32>
    %177 = vector.extract_strided_slice %171 {offsets = [0, 256], sizes = [16, 768], strides = [1, 1]} : vector<16x1024xf32> to vector<16x768xf32>
    %178 = tpu.concatenate %176, %177 in 0 : vector<16x768xf32>, vector<16x768xf32> -> vector<32x768xf32>
    %cst_36 = arith.constant dense<0.000000e+00> : vector<32x768xf32>
    %179 = tpu.matmul %174, %178, %cst_36 {dimension_numbers = #tpu.dot_dimension_numbers<[1], [0], [0], [1], [0, 0, 1, 1], [], []>} : vector<32x32xf32>, vector<32x768xf32>, vector<32x768xf32> -> vector<32x768xf32>
    %180 = vector.broadcast %175 : vector<32x1xf32> to vector<32x768xf32>
    %181 = arith.addf %179, %180 : vector<32x768xf32>
    %182 = vector.extract_strided_slice %181 {offsets = [0, 0], sizes = [16, 768], strides = [1, 1]} : vector<32x768xf32> to vector<16x768xf32>
    %183 = math.tanh %182 : vector<16x768xf32>
    %184 = vector.extract_strided_slice %181 {offsets = [16, 0], sizes = [16, 768], strides = [1, 1]} : vector<32x768xf32> to vector<16x768xf32>
    %185 = arith.negf %184 : vector<16x768xf32>
    %186 = math.exp %185 : vector<16x768xf32>
    %cst_37 = arith.constant 1.000000e+00 : f32
    %187 = vector.broadcast %cst_37 : f32 to vector<16x768xf32>
    %188 = arith.addf %187, %186 : vector<16x768xf32>
    %189 = arith.divf %187, %188 : vector<16x768xf32>
    %190 = arith.mulf %183, %189 : vector<16x768xf32>
    %191 = vector.extract_strided_slice %190 {offsets = [0, 512], sizes = [16, 256], strides = [1, 1]} : vector<16x768xf32> to vector<16x256xf32>
    %192 = vector.extract_strided_slice %173 {offsets = [32, 0], sizes = [16, 16], strides = [1, 1]} : vector<48x33xf32> to vector<16x16xf32>
    %193 = vector.extract_strided_slice %173 {offsets = [32, 32], sizes = [16, 1], strides = [1, 1]} : vector<48x33xf32> to vector<16x1xf32>
    %cst_38 = arith.constant dense<0.000000e+00> : vector<16x768xf32>
    %194 = tpu.matmul %192, %190, %cst_38 {dimension_numbers = #tpu.dot_dimension_numbers<[1], [0], [0], [1], [0, 0, 1, 1], [], []>} : vector<16x16xf32>, vector<16x768xf32>, vector<16x768xf32> -> vector<16x768xf32>
    %195 = vector.broadcast %193 : vector<16x1xf32> to vector<16x768xf32>
    %196 = arith.addf %194, %195 : vector<16x768xf32>
    %197 = vector.extract_strided_slice %171 {offsets = [0, 256], sizes = [16, 768], strides = [1, 1]} : vector<16x1024xf32> to vector<16x768xf32>
    %198 = arith.addf %196, %197 : vector<16x768xf32>
    %c7 = arith.constant 7 : index
    %c0_39 = arith.constant 0 : index
    %c0_40 = arith.constant 0 : index
    %199 = vector.load %arg2[%c7, %c0_39, %c0_40] : memref<8x48x33xf32, #tpu.memory_space<vmem>>, vector<1x48x33xf32>
    %200 = vector.shape_cast %199 : vector<1x48x33xf32> to vector<48x33xf32>
    %201 = vector.extract_strided_slice %200 {offsets = [0, 0], sizes = [32, 32], strides = [1, 1]} : vector<48x33xf32> to vector<32x32xf32>
    %202 = vector.extract_strided_slice %200 {offsets = [0, 32], sizes = [32, 1], strides = [1, 1]} : vector<48x33xf32> to vector<32x1xf32>
    %203 = vector.extract_strided_slice %198 {offsets = [0, 0], sizes = [16, 256], strides = [1, 1]} : vector<16x768xf32> to vector<16x256xf32>
    %204 = vector.extract_strided_slice %198 {offsets = [0, 512], sizes = [16, 256], strides = [1, 1]} : vector<16x768xf32> to vector<16x256xf32>
    %205 = tpu.concatenate %203, %204 in 0 : vector<16x256xf32>, vector<16x256xf32> -> vector<32x256xf32>
    %cst_41 = arith.constant dense<0.000000e+00> : vector<32x256xf32>
    %206 = tpu.matmul %201, %205, %cst_41 {dimension_numbers = #tpu.dot_dimension_numbers<[1], [0], [0], [1], [0, 0, 1, 1], [], []>} : vector<32x32xf32>, vector<32x256xf32>, vector<32x256xf32> -> vector<32x256xf32>
    %207 = vector.broadcast %202 : vector<32x1xf32> to vector<32x256xf32>
    %208 = arith.addf %206, %207 : vector<32x256xf32>
    %209 = vector.extract_strided_slice %208 {offsets = [0, 0], sizes = [16, 256], strides = [1, 1]} : vector<32x256xf32> to vector<16x256xf32>
    %210 = math.tanh %209 : vector<16x256xf32>
    %211 = vector.extract_strided_slice %208 {offsets = [16, 0], sizes = [16, 256], strides = [1, 1]} : vector<32x256xf32> to vector<16x256xf32>
    %212 = arith.negf %211 : vector<16x256xf32>
    %213 = math.exp %212 : vector<16x256xf32>
    %cst_42 = arith.constant 1.000000e+00 : f32
    %214 = vector.broadcast %cst_42 : f32 to vector<16x256xf32>
    %215 = arith.addf %214, %213 : vector<16x256xf32>
    %216 = arith.divf %214, %215 : vector<16x256xf32>
    %217 = arith.mulf %210, %216 : vector<16x256xf32>
    %218 = tpu.concatenate %29, %56, %83, %110, %137, %164, %191, %217 in 0 : vector<16x256xf32>, vector<16x256xf32>, vector<16x256xf32>, vector<16x256xf32>, vector<16x256xf32>, vector<16x256xf32>, vector<16x256xf32>, vector<16x256xf32> -> vector<128x256xf32>
    %c0_43 = arith.constant 0 : index
    %c0_44 = arith.constant 0 : index
    %219 = vector.load %arg3[%c0_43, %c0_44] : memref<16x129xf32, #tpu.memory_space<vmem>>, vector<16x128xf32>
    %c0_45 = arith.constant 0 : index
    %c128 = arith.constant 128 : index
    %220 = vector.load %arg3[%c0_45, %c128] : memref<16x129xf32, #tpu.memory_space<vmem>>, vector<16x1xf32>
    %cst_46 = arith.constant dense<0.000000e+00> : vector<16x256xf32>
    %221 = tpu.matmul %219, %218, %cst_46 {dimension_numbers = #tpu.dot_dimension_numbers<[1], [0], [0], [1], [0, 0, 1, 1], [], []>} : vector<16x128xf32>, vector<128x256xf32>, vector<16x256xf32> -> vector<16x256xf32>
    %222 = vector.broadcast %220 : vector<16x1xf32> to vector<16x256xf32>
    %223 = arith.addf %221, %222 : vector<16x256xf32>
    %cst_47 = arith.constant 0.000000e+00 : f32
    %224 = vector.broadcast %cst_47 : f32 to vector<16x256xf32>
    %225 = arith.maximumf %223, %224 : vector<16x256xf32>
    %c0_48 = arith.constant 0 : index
    %c0_49 = arith.constant 0 : index
    %226 = vector.load %arg5[%c0_48, %c0_49] : memref<16x17xf32, #tpu.memory_space<vmem>>, vector<16x17xf32>
    %227 = vector.extract_strided_slice %226 {offsets = [0, 0], sizes = [16, 16], strides = [1, 1]} : vector<16x17xf32> to vector<16x16xf32>
    %cst_50 = arith.constant dense<0.000000e+00> : vector<16x256xf32>
    %228 = tpu.matmul %227, %225, %cst_50 {dimension_numbers = #tpu.dot_dimension_numbers<[1], [0], [0], [1], [0, 0, 1, 1], [], []>} : vector<16x16xf32>, vector<16x256xf32>, vector<16x256xf32> -> vector<16x256xf32>
    %229 = vector.extract_strided_slice %226 {offsets = [0, 16], sizes = [16, 1], strides = [1, 1]} : vector<16x17xf32> to vector<16x1xf32>
    %230 = vector.broadcast %229 : vector<16x1xf32> to vector<16x256xf32>
    %231 = arith.addf %228, %230 : vector<16x256xf32>
    %cst_51 = arith.constant 0.000000e+00 : f32
    %232 = vector.broadcast %cst_51 : f32 to vector<16x256xf32>
    %233 = arith.maximumf %231, %232 : vector<16x256xf32>
    %c0_52 = arith.constant 0 : index
    %c0_53 = arith.constant 0 : index
    %234 = vector.load %arg6[%c0_52, %c0_53] : memref<12x17xf32, #tpu.memory_space<vmem>>, vector<12x17xf32>
    %235 = vector.extract_strided_slice %234 {offsets = [0, 0], sizes = [12, 16], strides = [1, 1]} : vector<12x17xf32> to vector<12x16xf32>
    %cst_54 = arith.constant dense<0.000000e+00> : vector<12x256xf32>
    %236 = tpu.matmul %235, %233, %cst_54 {dimension_numbers = #tpu.dot_dimension_numbers<[1], [0], [0], [1], [0, 0, 1, 1], [], []>} : vector<12x16xf32>, vector<16x256xf32>, vector<12x256xf32> -> vector<12x256xf32>
    %237 = vector.extract_strided_slice %234 {offsets = [0, 16], sizes = [12, 1], strides = [1, 1]} : vector<12x17xf32> to vector<12x1xf32>
    %238 = vector.broadcast %237 : vector<12x1xf32> to vector<12x256xf32>
    %239 = arith.addf %236, %238 : vector<12x256xf32>
    %c0_55 = arith.constant 0 : index
    %c0_56 = arith.constant 0 : index
    %c0_57 = arith.constant 0 : index
    %240 = vector.load %arg7[%c0_55, %c0_56, %c0_57] : memref<1x12x256xf32, #tpu.memory_space<vmem>>, vector<1x12x256xf32>
    %241 = vector.shape_cast %240 : vector<1x12x256xf32> to vector<12x256xf32>
    %242 = vector.shape_cast %239 : vector<12x256xf32> to vector<1x12x256xf32>
    tpu.vector_store %arg7[%c0_55, %c0_56, %c0_57], %242 {strides = array<i32>} : memref<1x12x256xf32, #tpu.memory_space<vmem>>, vector<1x12x256xf32>,
    return
  }
  func.func @transform_0(%arg0: i32) -> (i32, i32, i32) {
    %c0_i32 = arith.constant 0 : i32
    %c0_i32_0 = arith.constant 0 : i32
    %c0_i32_1 = arith.constant 0 : i32
    return %arg0, %c0_i32, %c0_i32_0 : i32, i32, i32
  }
  func.func @transform_1(%arg0: i32) -> (i32, i32, i32) {
    %c0_i32 = arith.constant 0 : i32
    %c0_i32_0 = arith.constant 0 : i32
    %c0_i32_1 = arith.constant 0 : i32
    %c0_i32_2 = arith.constant 0 : i32
    return %c0_i32, %c0_i32_0, %c0_i32_1 : i32, i32, i32
  }
  func.func @transform_2(%arg0: i32) -> (i32, i32) {
    %c0_i32 = arith.constant 0 : i32
    %c0_i32_0 = arith.constant 0 : i32
    %c0_i32_1 = arith.constant 0 : i32
    return %c0_i32, %c0_i32_0 : i32, i32
  }
  func.func @transform_3(%arg0: i32) -> (i32, i32) {
    %c0_i32 = arith.constant 0 : i32
    %c0_i32_0 = arith.constant 0 : i32
    %c0_i32_1 = arith.constant 0 : i32
    return %c0_i32, %c0_i32_0 : i32, i32
  }
  func.func @transform_4(%arg0: i32) -> (i32, i32) {
    %c0_i32 = arith.constant 0 : i32
    %c0_i32_0 = arith.constant 0 : i32
    %c0_i32_1 = arith.constant 0 : i32
    return %c0_i32, %c0_i32_0 : i32, i32
  }
  func.func @transform_5(%arg0: i32) -> (i32, i32) {
    %c0_i32 = arith.constant 0 : i32
    %c0_i32_0 = arith.constant 0 : i32
    %c0_i32_1 = arith.constant 0 : i32
    return %c0_i32, %c0_i32_0 : i32, i32
  }
  func.func @transform_6(%arg0: i32) -> (i32, i32, i32) {
    %c0_i32 = arith.constant 0 : i32
    %c0_i32_0 = arith.constant 0 : i32
    %c0_i32_1 = arith.constant 0 : i32
    return %arg0, %c0_i32, %c0_i32_0 : i32, i32, i32
  }
}

</mosaic_0001>

<llo_original>
// kernel: tpu_custom_call.1
$region0: #{tpu_custom_call.1}
  #allocation0 [shape = 'u32[]', space=smem, size = 0x4, offset = 0x4, fixed_abs, tag = 'smem constant byte address 0x4 - core index']
  #allocation1 [shape = 'u32[144,128]{1,0:T(1,128)}', space=vmem, size = 0x12000, scoped, tag = 'internal scratch']
  %s0 = inlined_call_operand.vmem [shape: f32[2,1,3328], index: 0, kind: input, shape index: {}]
  %s1 = inlined_call_operand.vmem [shape: f32[8,48,33], index: 1, kind: input, shape index: {}]
  %s2 = inlined_call_operand.vmem [shape: f32[16,129], index: 2, kind: input, shape index: {}]
  %s3 = inlined_call_operand.vmem [shape: f32[16,2], index: 3, kind: input, shape index: {}]
  %s4 = inlined_call_operand.vmem [shape: f32[16,17], index: 4, kind: input, shape index: {}]
  %s5 = inlined_call_operand.vmem [shape: f32[12,17], index: 5, kind: input, shape index: {}]
  %s6 = inlined_call_operand.vmem [shape: f32[2,12,256], index: 6, kind: output, shape index: {}]
  %s7 = sld [smem:[#allocation0]]
  $region57: #{tpu_custom_call.1} parent=0
    _
  %s9 = ssub.s32 1, %s7
  %s10 = scalar_select 0, %s9, %s7
  loop: start=0, step=1, limit=4
  $region2: #{tpu_custom_call.1} parent=0 // loop_pre_header
    _
  $region3: #{tpu_custom_call.1} parent=0 // loop_header
    %s12 = sphi 0, %s16
    %p13 = scmp.ge.s32.totalorder %s12, 4
    %s22 = sphi 0, %s24
    %s25 = sphi 0, %s22
    %s26 = sphi 0, %s25
    %s42 = sphi 0, %s26
    %s46 = sphi 0, %s46
    %s48 = sphi 0, %s46
    %s49 = sphi 0, %s48
    %s63 = sphi 0, %s49
    %s67 = sphi 0, %s67
    %s69 = sphi 0, %s67
    %s70 = sphi 0, %s69
    %s84 = sphi 0, %s70
    %s88 = sphi 0, %s88
    %s90 = sphi 0, %s88
    %s91 = sphi 0, %s90
    %s105 = sphi 0, %s91
    %s109 = sphi 0, %s109
    %s111 = sphi 0, %s109
    %s112 = sphi 0, %s111
    %s126 = sphi 0, %s112
    %s130 = sphi 0, %s130
    %s132 = sphi 0, %s130
    %s133 = sphi 0, %s132
    %s147 = sphi 0, %s133
    %s153 = sphi 0, %s155
    %s156 = sphi 0, %s153
    %s157 = sphi 0, %s156
    %s173 = sphi 0, %s157
  $region4: #{tpu_custom_call.1} parent=0 // loop_header_branch
    %15 = sbr.rel (%p13) target = $region8
  $region5: #{tpu_custom_call.1} parent=0 // loop_body
    %s17 = ssub.s32 %s12, 1
    %s18 = ssub.s32 %s12, 2
    %s19 = sadd.s32 %s12, 1
    %s20 = ssub.s32 %s12, %s19
    %p21 = scmp.eq.s32.totalorder %s20, 0
    %s23 = sadd.s32 %s22, 1
    %s24 = scalar_select %p21, %s22, %s23
    %p27 = pneg %p21
    %p28 = scmp.eq.s32.totalorder %s12, 1
    %p29 = por %p27, %p28
    %p30 = scmp.ne.s32.totalorder %s22, %s25
    %p31 = scmp.eq.s32.totalorder %s12, 0
    %p32 = por %p30, %p31
    %p33 = scmp.ne.s32.totalorder %s22, %s25
    %p34 = scmp.eq.s32.totalorder %s17, 1
    %p35 = por %p33, %p34
    %p36 = scmp.ne.s32.totalorder %s25, %s26
    %p37 = scmp.eq.s32.totalorder %s17, 0
    %p38 = por %p36, %p37
    %p39 = scmp.ne.s32.totalorder %s25, %s26
    %p40 = scmp.eq.s32.totalorder %s18, 1
    %p41 = por %p39, %p40
    %p43 = scmp.ne.s32.totalorder %s26, %s42
    %p44 = scmp.eq.s32.totalorder %s18, 0
    %p45 = por %p43, %p44
    %s47 = sadd.s32 %s46, 1
    %p50 = scmp.eq.s32.totalorder %s12, 1
    %p51 = scmp.ne.s32.totalorder %s46, %s48
    %p52 = scmp.eq.s32.totalorder %s12, 0
    %p53 = por %p51, %p52
    %p54 = scmp.ne.s32.totalorder %s46, %s48
    %p55 = scmp.eq.s32.totalorder %s17, 1
    %p56 = por %p54, %p55
    %p57 = scmp.ne.s32.totalorder %s48, %s49
    %p58 = scmp.eq.s32.totalorder %s17, 0
    %p59 = por %p57, %p58
    %p60 = scmp.ne.s32.totalorder %s48, %s49
    %p61 = scmp.eq.s32.totalorder %s18, 1
    %p62 = por %p60, %p61
    %p64 = scmp.ne.s32.totalorder %s49, %s63
    %p65 = scmp.eq.s32.totalorder %s18, 0
    %p66 = por %p64, %p65
    %s68 = sadd.s32 %s67, 1
    %p71 = scmp.eq.s32.totalorder %s12, 1
    %p72 = scmp.ne.s32.totalorder %s67, %s69
    %p73 = scmp.eq.s32.totalorder %s12, 0
    %p74 = por %p72, %p73
    %p75 = scmp.ne.s32.totalorder %s67, %s69
    %p76 = scmp.eq.s32.totalorder %s17, 1
    %p77 = por %p75, %p76
    %p78 = scmp.ne.s32.totalorder %s69, %s70
    %p79 = scmp.eq.s32.totalorder %s17, 0
    %p80 = por %p78, %p79
    %p81 = scmp.ne.s32.totalorder %s69, %s70
    %p82 = scmp.eq.s32.totalorder %s18, 1
    %p83 = por %p81, %p82
    %p85 = scmp.ne.s32.totalorder %s70, %s84
    %p86 = scmp.eq.s32.totalorder %s18, 0
    %p87 = por %p85, %p86
    %s89 = sadd.s32 %s88, 1
    %p92 = scmp.eq.s32.totalorder %s12, 1
    %p93 = scmp.ne.s32.totalorder %s88, %s90
    %p94 = scmp.eq.s32.totalorder %s12, 0
    %p95 = por %p93, %p94
    %p96 = scmp.ne.s32.totalorder %s88, %s90
    %p97 = scmp.eq.s32.totalorder %s17, 1
    %p98 = por %p96, %p97
    %p99 = scmp.ne.s32.totalorder %s90, %s91
    %p100 = scmp.eq.s32.totalorder %s17, 0
    %p101 = por %p99, %p100
    %p102 = scmp.ne.s32.totalorder %s90, %s91
    %p103 = scmp.eq.s32.totalorder %s18, 1
    %p104 = por %p102, %p103
    %p106 = scmp.ne.s32.totalorder %s91, %s105
    %p107 = scmp.eq.s32.totalorder %s18, 0
    %p108 = por %p106, %p107
    %s110 = sadd.s32 %s109, 1
    %p113 = scmp.eq.s32.totalorder %s12, 1
    %p114 = scmp.ne.s32.totalorder %s109, %s111
    %p115 = scmp.eq.s32.totalorder %s12, 0
    %p116 = por %p114, %p115
    %p117 = scmp.ne.s32.totalorder %s109, %s111
    %p118 = scmp.eq.s32.totalorder %s17, 1
    %p119 = por %p117, %p118
    %p120 = scmp.ne.s32.totalorder %s111, %s112
    %p121 = scmp.eq.s32.totalorder %s17, 0
    %p122 = por %p120, %p121
    %p123 = scmp.ne.s32.totalorder %s111, %s112
    %p124 = scmp.eq.s32.totalorder %s18, 1
    %p125 = por %p123, %p124
    %p127 = scmp.ne.s32.totalorder %s112, %s126
    %p128 = scmp.eq.s32.totalorder %s18, 0
    %p129 = por %p127, %p128
    %s131 = sadd.s32 %s130, 1
    %p134 = scmp.eq.s32.totalorder %s12, 1
    %p135 = scmp.ne.s32.totalorder %s130, %s132
    %p136 = scmp.eq.s32.totalorder %s12, 0
    %p137 = por %p135, %p136
    %p138 = scmp.ne.s32.totalorder %s130, %s132
    %p139 = scmp.eq.s32.totalorder %s17, 1
    %p140 = por %p138, %p139
    %p141 = scmp.ne.s32.totalorder %s132, %s133
    %p142 = scmp.eq.s32.totalorder %s17, 0
    %p143 = por %p141, %p142
    %p144 = scmp.ne.s32.totalorder %s132, %s133
    %p145 = scmp.eq.s32.totalorder %s18, 1
    %p146 = por %p144, %p145
    %p148 = scmp.ne.s32.totalorder %s133, %s147
    %p149 = scmp.eq.s32.totalorder %s18, 0
    %p150 = por %p148, %p149
    %s151 = ssub.s32 %s12, %s19
    %p152 = scmp.eq.s32.totalorder %s151, 0
    %s154 = sadd.s32 %s153, 1
    %s155 = scalar_select %p152, %s153, %s154
    %p158 = pneg %p152
    %p159 = scmp.eq.s32.totalorder %s12, 1
    %p160 = por %p158, %p159
    %p161 = scmp.ne.s32.totalorder %s153, %s156
    %p162 = scmp.eq.s32.totalorder %s12, 0
    %p163 = por %p161, %p162
    %p164 = scmp.ne.s32.totalorder %s153, %s156
    %p165 = scmp.eq.s32.totalorder %s17, 1
    %p166 = por %p164, %p165
    %p167 = scmp.ne.s32.totalorder %s156, %s157
    %p168 = scmp.eq.s32.totalorder %s17, 0
    %p169 = por %p167, %p168
    %p170 = scmp.ne.s32.totalorder %s156, %s157
    %p171 = scmp.eq.s32.totalorder %s18, 1
    %p172 = por %p170, %p171
    %p174 = scmp.ne.s32.totalorder %s157, %s173
    %p175 = scmp.eq.s32.totalorder %s18, 0
    %p176 = por %p174, %p175
    %p177 = scmp.le.s32.totalorder 1, %s12
    %p178 = scmp.lt.s32.totalorder %s12, 3
    %p179 = pnand %p177, %p178
    %p180 = pneg %p179
    // Predicated region
    $region9: #{tpu_custom_call.1} parent=5 // pred_check
      _
    $region10: #{tpu_custom_call.1} parent=5 // pred_check_branch
      %182 = sbr.rel (%p179) target = $region12
    $region11: #{tpu_custom_call.1} parent=5 // pred_region
      %s183 = ssub.s32 %s12, 1
      // Predicated region
      $region13: #{tpu_custom_call.1} parent=11 // pred_check
        %p184 = pneg %p59
      $region14: #{tpu_custom_call.1} parent=11 // pred_check_branch
        %186 = sbr.rel (%p184) target = $region16
      $region15: #{tpu_custom_call.1} parent=11 // pred_region
        _
      $region16: #{tpu_custom_call.1} parent=11 // pred_fallthru
        _
      // Predicated region
      $region17: #{tpu_custom_call.1} parent=11 // pred_check
        %p187 = pneg %p80
      $region18: #{tpu_custom_call.1} parent=11 // pred_check_branch
        %189 = sbr.rel (%p187) target = $region20
      $region19: #{tpu_custom_call.1} parent=11 // pred_region
        _
      $region20: #{tpu_custom_call.1} parent=11 // pred_fallthru
        _
      // Predicated region
      $region21: #{tpu_custom_call.1} parent=11 // pred_check
        %p190 = pneg %p101
      $region22: #{tpu_custom_call.1} parent=11 // pred_check_branch
        %192 = sbr.rel (%p190) target = $region24
      $region23: #{tpu_custom_call.1} parent=11 // pred_region
        _
      $region24: #{tpu_custom_call.1} parent=11 // pred_fallthru
        _
      // Predicated region
      $region25: #{tpu_custom_call.1} parent=11 // pred_check
        %p193 = pneg %p122
      $region26: #{tpu_custom_call.1} parent=11 // pred_check_branch
        %195 = sbr.rel (%p193) target = $region28
      $region27: #{tpu_custom_call.1} parent=11 // pred_region
        _
      $region28: #{tpu_custom_call.1} parent=11 // pred_fallthru
        _
      // Predicated region
      $region29: #{tpu_custom_call.1} parent=11 // pred_check
        %p196 = pneg %p143
      $region30: #{tpu_custom_call.1} parent=11 // pred_check_branch
        %198 = sbr.rel (%p196) target = $region32
      $region31: #{tpu_custom_call.1} parent=11 // pred_region
        _
      $region32: #{tpu_custom_call.1} parent=11 // pred_fallthru
        _
    $region12: #{tpu_custom_call.1} parent=5 // pred_fallthru
      _
    %p199 = scmp.lt.s32.totalorder %s12, 2
    // Predicated region
    $region33: #{tpu_custom_call.1} parent=5 // pred_check
      %p200 = pneg %p199
    $region34: #{tpu_custom_call.1} parent=5 // pred_check_branch
      %202 = sbr.rel (%p200) target = $region36
    $region35: #{tpu_custom_call.1} parent=5 // pred_region
      // Predicated region
      $region37: #{tpu_custom_call.1} parent=35 // pred_check
        %p203 = pneg %p32
      $region38: #{tpu_custom_call.1} parent=35 // pred_check_branch
        %205 = sbr.rel (%p203) target = $region40
      $region39: #{tpu_custom_call.1} parent=35 // pred_region
        %p206 = scmp.lt.s32.totalorder %s12, 1
        %s207 = scalar_select %p206, %s12, 1
        %s208 = smul.addr %s207, 26
        %s209 = scalar_lea.vmem %s0, %s208
      $region40: #{tpu_custom_call.1} parent=35 // pred_fallthru
        _
    $region36: #{tpu_custom_call.1} parent=5 // pred_fallthru
      _
    %p210 = scmp.le.s32.totalorder 1, %s12
    %p211 = scmp.lt.s32.totalorder %s12, 3
    %p212 = pnand %p210, %p211
    %p213 = pneg %p212
    // Predicated region
    $region41: #{tpu_custom_call.1} parent=5 // pred_check
      _
    $region42: #{tpu_custom_call.1} parent=5 // pred_check_branch
      %215 = sbr.rel (%p212) target = $region44
    $region43: #{tpu_custom_call.1} parent=5 // pred_region
      %s216 = ssub.s32 %s12, 1
      %p217 = scmp.lt.s32.totalorder %s17, 1
      %s218 = scalar_select %p217, %s17, 1
      %s219 = smul.addr %s218, 26
      %s220 = scalar_lea.vmem %s0, %s219
      %p221 = pneg %p38
      %p222 = pneg %p35
      %p223 = pneg %p59
      %p224 = pneg %p56
      %p225 = pneg %p80
      %p226 = pneg %p77
      %p227 = pneg %p101
      %p228 = pneg %p98
      %p229 = pneg %p122
      %p230 = pneg %p119
      %p231 = pneg %p143
      %p232 = pneg %p140
      %p233 = pneg %p169
      %p234 = pneg %p166
      %p235 = scmp.lt.s32.totalorder %s17, 1
      %s236 = scalar_select %p235, %s17, 1
      %s237 = smul.addr %s236, 4
      %s238 = smul.addr %s237, 8
      %s239 = scalar_lea.vmem %s6, %s238
      %p240 = scmp.lt.s32.totalorder %s17, 1
      %s241 = scalar_select %p240, %s17, 1
      %s242 = smul.addr %s241, 26
      %s243 = scalar_lea.vmem %s0, %s242
      %p244 = scmp.lt.s32.totalorder %s17, 1
      %s245 = scalar_select %p244, %s17, 1
      %s246 = smul.addr %s245, 4
      %s247 = smul.addr %s246, 8
      %s248 = scalar_lea.vmem %s6, %s247
      %v249 = vld [vmem:[%s243] sm:$0xff]
      %v250 = vld [vmem:[%s243 + $0x8] sm:$0xff]
      %v251 = vld [vmem:[%s243 + $0x10] sm:$0xff]
      %v252 = vld [vmem:[%s243 + $0x18] sm:$0x3]
      %v253 = vld [vmem:[%s3] sm:$0xff]
      %v254 = vld [vmem:[%s3 + $0x8] sm:$0xff]
      %256 = vset.pattern.permute.xlu0 0
      %257 = vperm.xlu0 %256, %v253
      %v258 = vpop.permute.xlu0 %257
      %261 = vset.pattern.permute.xlu0 0
      %262 = vperm.xlu0 %261, %v254
      %v263 = vpop.permute.xlu0 %262
      %v269 = vlaneseq
      %v270 = vshrl.u32 %v269, 7
      %v271 = vsub.s32 0, %v270
      %v272 = vrot.slane %v249, %v271
      %v273 = vlaneseq
      %v274 = vshrl.u32 %v273, 7
      %v275 = vsub.s32 1, %v274
      %v276 = vrot.slane %v249, %v275
      %v277 = vlaneseq
      %v278 = vshrl.u32 %v277, 7
      %v279 = vsub.s32 2, %v278
      %v280 = vrot.slane %v249, %v279
      %v281 = vlaneseq
      %v282 = vshrl.u32 %v281, 7
      %v283 = vsub.s32 3, %v282
      %v284 = vrot.slane %v249, %v283
      %v285 = vlaneseq
      %v286 = vshrl.u32 %v285, 7
      %v287 = vsub.s32 4, %v286
      %v288 = vrot.slane %v249, %v287
      %v289 = vlaneseq
      %v290 = vshrl.u32 %v289, 7
      %v291 = vsub.s32 5, %v290
      %v292 = vrot.slane %v249, %v291
      %v293 = vlaneseq
      %v294 = vshrl.u32 %v293, 7
      %v295 = vsub.s32 6, %v294
      %v296 = vrot.slane %v249, %v295
      %v297 = vlaneseq
      %v298 = vshrl.u32 %v297, 7
      %v299 = vsub.s32 7, %v298
      %v300 = vrot.slane %v249, %v299
      %v301 = vlaneseq
      %v302 = vshrl.u32 %v301, 7
      %v303 = vsub.s32 0, %v302
      %v304 = vrot.slane %v250, %v303
      %v305 = vlaneseq
      %v306 = vshrl.u32 %v305, 7
      %v307 = vsub.s32 1, %v306
      %v308 = vrot.slane %v250, %v307
      %v309 = vlaneseq
      %v310 = vshrl.u32 %v309, 7
      %v311 = vsub.s32 2, %v310
      %v312 = vrot.slane %v250, %v311
      %v313 = vlaneseq
      %v314 = vshrl.u32 %v313, 7
      %v315 = vsub.s32 3, %v314
      %v316 = vrot.slane %v250, %v315
      %v317 = vlaneseq
      %v318 = vshrl.u32 %v317, 7
      %v319 = vsub.s32 4, %v318
      %v320 = vrot.slane %v250, %v319
      %v321 = vlaneseq
      %v322 = vshrl.u32 %v321, 7
      %v323 = vsub.s32 5, %v322
      %v324 = vrot.slane %v250, %v323
      %v325 = vlaneseq
      %v326 = vshrl.u32 %v325, 7
      %v327 = vsub.s32 6, %v326
      %v328 = vrot.slane %v250, %v327
      %v329 = vlaneseq
      %v330 = vshrl.u32 %v329, 7
      %v331 = vsub.s32 7, %v330
      %v332 = vrot.slane %v250, %v331
      %v333 = vlaneseq
      %v334 = vshrl.u32 %v333, 7
      %v335 = vsub.s32 0, %v334
      %v336 = vrot.slane %v251, %v335
      %v337 = vlaneseq
      %v338 = vshrl.u32 %v337, 7
      %v339 = vsub.s32 1, %v338
      %v340 = vrot.slane %v251, %v339
      %v341 = vlaneseq
      %v342 = vshrl.u32 %v341, 7
      %v343 = vsub.s32 2, %v342
      %v344 = vrot.slane %v251, %v343
      %v345 = vlaneseq
      %v346 = vshrl.u32 %v345, 7
      %v347 = vsub.s32 3, %v346
      %v348 = vrot.slane %v251, %v347
      %v349 = vlaneseq
      %v350 = vshrl.u32 %v349, 7
      %v351 = vsub.s32 4, %v350
      %v352 = vrot.slane %v251, %v351
      %v353 = vlaneseq
      %v354 = vshrl.u32 %v353, 7
      %v355 = vsub.s32 5, %v354
      %v356 = vrot.slane %v251, %v355
      %v357 = vlaneseq
      %v358 = vshrl.u32 %v357, 7
      %v359 = vsub.s32 6, %v358
      %v360 = vrot.slane %v251, %v359
      %v361 = vlaneseq
      %v362 = vshrl.u32 %v361, 7
      %v363 = vsub.s32 7, %v362
      %v364 = vrot.slane %v251, %v363
      %v365 = vlaneseq
      %v366 = vshrl.u32 %v365, 7
      %v367 = vsub.s32 0, %v366
      %v368 = vrot.slane %v252, %v367
      %v369 = vlaneseq
      %v370 = vshrl.u32 %v369, 7
      %v371 = vsub.s32 1, %v370
      %v372 = vrot.slane %v252, %v371
      %v399 = vmul.f32 %v258, %v272
      %v400 = vmul.f32 %v258, %v276
      %v401 = vmul.f32 %v258, %v280
      %v402 = vmul.f32 %v258, %v284
      %v403 = vmul.f32 %v258, %v288
      %v404 = vmul.f32 %v258, %v292
      %v405 = vmul.f32 %v258, %v296
      %v406 = vmul.f32 %v258, %v300
      %v407 = vmul.f32 %v258, %v304
      %v408 = vmul.f32 %v258, %v308
      %v409 = vmul.f32 %v258, %v312
      %v410 = vmul.f32 %v258, %v316
      %v411 = vmul.f32 %v258, %v320
      %v412 = vmul.f32 %v258, %v324
      %v413 = vmul.f32 %v258, %v328
      %v414 = vmul.f32 %v258, %v332
      %v415 = vmul.f32 %v258, %v336
      %v416 = vmul.f32 %v258, %v340
      %v417 = vmul.f32 %v258, %v344
      %v418 = vmul.f32 %v258, %v348
      %v419 = vmul.f32 %v258, %v352
      %v420 = vmul.f32 %v258, %v356
      %v421 = vmul.f32 %v258, %v360
      %v422 = vmul.f32 %v258, %v364
      %v423 = vmul.f32 %v258, %v368
      %v424 = vmul.f32 %v258, %v372
      %v425 = vmul.f32 %v263, %v272
      %v426 = vmul.f32 %v263, %v276
      %v427 = vmul.f32 %v263, %v280
      %v428 = vmul.f32 %v263, %v284
      %v429 = vmul.f32 %v263, %v288
      %v430 = vmul.f32 %v263, %v292
      %v431 = vmul.f32 %v263, %v296
      %v432 = vmul.f32 %v263, %v300
      %v433 = vmul.f32 %v263, %v304
      %v434 = vmul.f32 %v263, %v308
      %v435 = vmul.f32 %v263, %v312
      %v436 = vmul.f32 %v263, %v316
      %v437 = vmul.f32 %v263, %v320
      %v438 = vmul.f32 %v263, %v324
      %v439 = vmul.f32 %v263, %v328
      %v440 = vmul.f32 %v263, %v332
      %v441 = vmul.f32 %v263, %v336
      %v442 = vmul.f32 %v263, %v340
      %v443 = vmul.f32 %v263, %v344
      %v444 = vmul.f32 %v263, %v348
      %v445 = vmul.f32 %v263, %v352
      %v446 = vmul.f32 %v263, %v356
      %v447 = vmul.f32 %v263, %v360
      %v448 = vmul.f32 %v263, %v364
      %v449 = vmul.f32 %v263, %v368
      %v450 = vmul.f32 %v263, %v372
      %451 = vset.pattern.permute.xlu0 1
      %452 = vperm.xlu0 %451, %v253
      %v453 = vpop.permute.xlu0 %452
      %455 = vset.pattern.permute.xlu0 1
      %456 = vperm.xlu0 %455, %v254
      %v457 = vpop.permute.xlu0 %456
      %v459 = vadd.f32 %v399, %v453
      %v460 = vadd.f32 %v400, %v453
      %v461 = vadd.f32 %v401, %v453
      %v462 = vadd.f32 %v402, %v453
      %v463 = vadd.f32 %v403, %v453
      %v464 = vadd.f32 %v404, %v453
      %v465 = vadd.f32 %v405, %v453
      %v466 = vadd.f32 %v406, %v453
      %v467 = vadd.f32 %v407, %v453
      %v468 = vadd.f32 %v408, %v453
      %v469 = vadd.f32 %v409, %v453
      %v470 = vadd.f32 %v410, %v453
      %v471 = vadd.f32 %v411, %v453
      %v472 = vadd.f32 %v412, %v453
      %v473 = vadd.f32 %v413, %v453
      %v474 = vadd.f32 %v414, %v453
      %v475 = vadd.f32 %v415, %v453
      %v476 = vadd.f32 %v416, %v453
      %v477 = vadd.f32 %v417, %v453
      %v478 = vadd.f32 %v418, %v453
      %v479 = vadd.f32 %v419, %v453
      %v480 = vadd.f32 %v420, %v453
      %v481 = vadd.f32 %v421, %v453
      %v482 = vadd.f32 %v422, %v453
      %v483 = vadd.f32 %v423, %v453
      %v484 = vadd.f32 %v424, %v453
      %v485 = vadd.f32 %v425, %v457
      %v486 = vadd.f32 %v426, %v457
      %v487 = vadd.f32 %v427, %v457
      %v488 = vadd.f32 %v428, %v457
      %v489 = vadd.f32 %v429, %v457
      %v490 = vadd.f32 %v430, %v457
      %v491 = vadd.f32 %v431, %v457
      %v492 = vadd.f32 %v432, %v457
      %v493 = vadd.f32 %v433, %v457
      %v494 = vadd.f32 %v434, %v457
      %v495 = vadd.f32 %v435, %v457
      %v496 = vadd.f32 %v436, %v457
      %v497 = vadd.f32 %v437, %v457
      %v498 = vadd.f32 %v438, %v457
      %v499 = vadd.f32 %v439, %v457
      %v500 = vadd.f32 %v440, %v457
      %v501 = vadd.f32 %v441, %v457
      %v502 = vadd.f32 %v442, %v457
      %v503 = vadd.f32 %v443, %v457
      %v504 = vadd.f32 %v444, %v457
      %v505 = vadd.f32 %v445, %v457
      %v506 = vadd.f32 %v446, %v457
      %v507 = vadd.f32 %v447, %v457
      %v508 = vadd.f32 %v448, %v457
      %v509 = vadd.f32 %v449, %v457
      %v510 = vadd.f32 %v450, %v457
      %v511 = vld [vmem:[%s1] sm:$0xff]
      %v512 = vld [vmem:[%s1 + $0x8] sm:$0xff]
      %v513 = vld [vmem:[%s1 + $0x10] sm:$0xff]
      %v514 = vld [vmem:[%s1 + $0x18] sm:$0xff]
      %v515 = vld [vmem:[%s1 + $0x20] sm:$0xff]
      %v516 = vld [vmem:[%s1 + $0x28] sm:$0xff]
      %518 = vset.pattern.permute.xlu0 32
      %519 = vperm.xlu0 %518, %v511
      %v520 = vpop.permute.xlu0 %519
      %523 = vset.pattern.permute.xlu0 32
      %524 = vperm.xlu0 %523, %v512
      %v525 = vpop.permute.xlu0 %524
      %528 = vset.pattern.permute.xlu0 32
      %529 = vperm.xlu0 %528, %v513
      %v530 = vpop.permute.xlu0 %529
      %533 = vset.pattern.permute.xlu0 32
      %534 = vperm.xlu0 %533, %v514
      %v535 = vpop.permute.xlu0 %534
      %vm537 = vcmask 261120
      %v538 = vsel %vm537, %v511, 0
      %v540 = vsel %vm537, %v512, 0
      %v542 = vsel %vm537, %v513, 0
      %v544 = vsel %vm537, %v514, 0
      %546 = vmatprep.subr.mxu0 %v460
      %547 = vmatpush1.msra.mxu0 %v459
      %548 = vmatprep.subr.mxu0 %v486
      %549 = vmatpush1.msra.mxu0 %v485
      %550 = vmatprep.subr.mxu0 %v462
      %551 = vmatpush1.msra.mxu0 %v461
      %552 = vmatprep.subr.mxu0 %v488
      %553 = vmatpush1.msra.mxu0 %v487
      %554 = vmatprep.subr.mxu0 0.0
      %555 = vmatpush1.msra.mxu0 0.0
      %556 = vmatprep.subr.mxu0 0.0
      %557 = vmatpush1.msra.mxu0 0.0
      %558 = vmatprep.subr.mxu0 0.0
      %559 = vmatpush1.msra.mxu0 0.0
      %560 = vmatprep.subr.mxu0 0.0
      %561 = vmatpush1.msra.mxu0 0.0
      %562 = vmatprep.subr.mxu0 0.0
      %563 = vmatpush1.msra.mxu0 0.0
      %564 = vmatprep.subr.mxu0 0.0
      %565 = vmatpush1.msra.mxu0 0.0
      %566 = vmatprep.subr.mxu0 0.0
      %567 = vmatpush1.msra.mxu0 0.0
      %568 = vmatprep.subr.mxu0 0.0
      %569 = vmatpush1.msra.mxu0 0.0
      %570 = vmatprep.subr.mxu0 0.0
      %571 = vmatpush1.msra.mxu0 0.0
      %572 = vmatprep.subr.mxu0 0.0
      %573 = vmatpush1.msra.mxu0 0.0
      %574 = vmatprep.subr.mxu0 0.0
      %575 = vmatpush1.msra.mxu0 0.0
      %576 = vmatprep.subr.mxu0 0.0
      %577 = vmatpush1.msra.mxu0 0.0
      %578 = vmatprep.subr.mxu0 0.0
      %579 = vmatpush1.msra.mxu0 0.0
      %580 = vmatprep.subr.mxu0 0.0
      %581 = vmatpush1.msra.mxu0 0.0
      %582 = vmatprep.subr.mxu0 0.0
      %583 = vmatpush1.msra.mxu0 0.0
      %584 = vmatprep.subr.mxu0 0.0
      %585 = vmatpush1.msra.mxu0 0.0
      %586 = vmatprep.subr.mxu0 0.0
      %587 = vmatpush1.msra.mxu0 0.0
      %588 = vmatprep.subr.mxu0 0.0
      %589 = vmatpush1.msra.mxu0 0.0
      %590 = vmatprep.subr.mxu0 0.0
      %591 = vmatpush1.msra.mxu0 0.0
      %592 = vmatprep.subr.mxu0 0.0
      %593 = vmatpush1.msra.mxu0 0.0
      %594 = vmatprep.subr.mxu0 0.0
      %595 = vmatpush1.msra.mxu0 0.0
      %596 = vmatprep.subr.mxu0 0.0
      %597 = vmatpush1.msra.mxu0 0.0
      %598 = vmatprep.subr.mxu0 0.0
      %599 = vmatpush1.msra.mxu0 0.0
      %600 = vmatprep.subr.mxu0 0.0
      %601 = vmatpush1.msra.mxu0 0.0
      %602 = vmatprep.subr.mxu0 0.0
      %603 = vmatpush1.msra.mxu0 0.0
      %604 = vmatprep.subr.mxu0 0.0
      %605 = vmatpush1.msra.mxu0 0.0
      %606 = vmatprep.subr.mxu0 0.0
      %607 = vmatpush1.msra.mxu0 0.0
      %608 = vmatprep.subr.mxu0 0.0
      %609 = vmatpush1.msra.mxu0 0.0
      %610 = vmatprep.mubr.f32.mxu0 0.0
      %611 = vmatmul.mubr.f32.gmra.mrb[0].mxu0 %v538
      %v612 = vpop.f32.mrb[0].mxu0
      %v613 = vadd.f32 %v520, %v612
      %v614 = vpop.f32.mrb[0].mxu0
      %v615 = vadd.f32 %v520, %v614
      %616 = vmatprep.mubr.f32.mxu0 0.0
      %617 = vmatmul.mubr.f32.gmra.mrb[0].mxu0 %v540
      %v618 = vpop.f32.mrb[0].mxu0
      %v619 = vadd.f32 %v525, %v618
      %v620 = vpop.f32.mrb[0].mxu0
      %v621 = vadd.f32 %v525, %v620
      %622 = vmatprep.mubr.f32.mxu0 0.0
      %623 = vmatmul.mubr.f32.gmra.mrb[0].mxu0 %v542
      %v624 = vpop.f32.mrb[0].mxu0
      %v625 = vadd.f32 %v530, %v624
      %v626 = vpop.f32.mrb[0].mxu0
      %v627 = vadd.f32 %v530, %v626
      %628 = vmatprep.mubr.f32.mxu0 0.0
      %629 = vmatmul.mubr.f32.gmra.mrb[0].mxu0 %v544
      %v630 = vpop.f32.mrb[0].mxu0
      %v631 = vadd.f32 %v535, %v630
      %v632 = vpop.f32.mrb[0].mxu0
      %v633 = vadd.f32 %v535, %v632
      %634 = vdwg.mxu0
      %635 = vmatprep.subr.mxu0 %v462
      %636 = vmatpush1.msra.mxu0 %v461
      %637 = vmatprep.subr.mxu0 %v488
      %638 = vmatpush1.msra.mxu0 %v487
      %639 = vmatprep.subr.mxu0 %v464
      %640 = vmatpush1.msra.mxu0 %v463
      %641 = vmatprep.subr.mxu0 %v490
      %642 = vmatpush1.msra.mxu0 %v489
      %643 = vmatprep.subr.mxu0 0.0
      %644 = vmatpush1.msra.mxu0 0.0
      %645 = vmatprep.subr.mxu0 0.0
      %646 = vmatpush1.msra.mxu0 0.0
      %647 = vmatprep.subr.mxu0 0.0
      %648 = vmatpush1.msra.mxu0 0.0
      %649 = vmatprep.subr.mxu0 0.0
      %650 = vmatpush1.msra.mxu0 0.0
      %651 = vmatprep.subr.mxu0 0.0
      %652 = vmatpush1.msra.mxu0 0.0
      %653 = vmatprep.subr.mxu0 0.0
      %654 = vmatpush1.msra.mxu0 0.0
      %655 = vmatprep.subr.mxu0 0.0
      %656 = vmatpush1.msra.mxu0 0.0
      %657 = vmatprep.subr.mxu0 0.0
      %658 = vmatpush1.msra.mxu0 0.0
      %659 = vmatprep.subr.mxu0 0.0
      %660 = vmatpush1.msra.mxu0 0.0
      %661 = vmatprep.subr.mxu0 0.0
      %662 = vmatpush1.msra.mxu0 0.0
      %663 = vmatprep.subr.mxu0 0.0
      %664 = vmatpush1.msra.mxu0 0.0
      %665 = vmatprep.subr.mxu0 0.0
      %666 = vmatpush1.msra.mxu0 0.0
      %667 = vmatprep.subr.mxu0 0.0
      %668 = vmatpush1.msra.mxu0 0.0
      %669 = vmatprep.subr.mxu0 0.0
      %670 = vmatpush1.msra.mxu0 0.0
      %671 = vmatprep.subr.mxu0 0.0
      %672 = vmatpush1.msra.mxu0 0.0
      %673 = vmatprep.subr.mxu0 0.0
      %674 = vmatpush1.msra.mxu0 0.0
      %675 = vmatprep.subr.mxu0 0.0
      %676 = vmatpush1.msra.mxu0 0.0
      %677 = vmatprep.subr.mxu0 0.0
      %678 = vmatpush1.msra.mxu0 0.0
      %679 = vmatprep.subr.mxu0 0.0
      %680 = vmatpush1.msra.mxu0 0.0
      %681 = vmatprep.subr.mxu0 0.0
      %682 = vmatpush1.msra.mxu0 0.0
      %683 = vmatprep.subr.mxu0 0.0
      %684 = vmatpush1.msra.mxu0 0.0
      %685 = vmatprep.subr.mxu0 0.0
      %686 = vmatpush1.msra.mxu0 0.0
      %687 = vmatprep.subr.mxu0 0.0
      %688 = vmatpush1.msra.mxu0 0.0
      %689 = vmatprep.subr.mxu0 0.0
      %690 = vmatpush1.msra.mxu0 0.0
      %691 = vmatprep.subr.mxu0 0.0
      %692 = vmatpush1.msra.mxu0 0.0
      %693 = vmatprep.subr.mxu0 0.0
      %694 = vmatpush1.msra.mxu0 0.0
      %695 = vmatprep.subr.mxu0 0.0
      %696 = vmatpush1.msra.mxu0 0.0
      %697 = vmatprep.subr.mxu0 0.0
      %698 = vmatpush1.msra.mxu0 0.0
      %699 = vmatprep.mubr.f32.mxu0 0.0
      %700 = vmatmul.mubr.f32.gmra.mrb[0].mxu0 %v538
      %v701 = vpop.f32.mrb[0].mxu0
      %v702 = vadd.f32 %v520, %v701
      %v703 = vpop.f32.mrb[0].mxu0
      %v704 = vadd.f32 %v520, %v703
      %705 = vmatprep.mubr.f32.mxu0 0.0
      %706 = vmatmul.mubr.f32.gmra.mrb[0].mxu0 %v540
      %v707 = vpop.f32.mrb[0].mxu0
      %v708 = vadd.f32 %v525, %v707
      %v709 = vpop.f32.mrb[0].mxu0
      %v710 = vadd.f32 %v525, %v709
      %711 = vmatprep.mubr.f32.mxu0 0.0
      %712 = vmatmul.mubr.f32.gmra.mrb[0].mxu0 %v542
      %v713 = vpop.f32.mrb[0].mxu0
      %v714 = vadd.f32 %v530, %v713
      %v715 = vpop.f32.mrb[0].mxu0
      %v716 = vadd.f32 %v530, %v715
      %717 = vmatprep.mubr.f32.mxu0 0.0
      %718 = vmatmul.mubr.f32.gmra.mrb[0].mxu0 %v544
      %v719 = vpop.f32.mrb[0].mxu0
      %v720 = vadd.f32 %v535, %v719
      %v721 = vpop.f32.mrb[0].mxu0
      %v722 = vadd.f32 %v535, %v721
      %723 = vdwg.mxu0
      %724 = vmatprep.subr.mxu0 %v464
      %725 = vmatpush1.msra.mxu0 %v463
      %726 = vmatprep.subr.mxu0 %v490
      %727 = vmatpush1.msra.mxu0 %v489
      %728 = vmatprep.subr.mxu0 %v466
      %729 = vmatpush1.msra.mxu0 %v465
      %730 = vmatprep.subr.mxu0 %v492
      %731 = vmatpush1.msra.mxu0 %v491
      %732 = vmatprep.subr.mxu0 0.0
      %733 = vmatpush1.msra.mxu0 0.0
      %734 = vmatprep.subr.mxu0 0.0
      %735 = vmatpush1.msra.mxu0 0.0
      %736 = vmatprep.subr.mxu0 0.0
      %737 = vmatpush1.msra.mxu0 0.0
      %738 = vmatprep.subr.mxu0 0.0
      %739 = vmatpush1.msra.mxu0 0.0
      %740 = vmatprep.subr.mxu0 0.0
      %741 = vmatpush1.msra.mxu0 0.0
      %742 = vmatprep.subr.mxu0 0.0
      %743 = vmatpush1.msra.mxu0 0.0
      %744 = vmatprep.subr.mxu0 0.0
      %745 = vmatpush1.msra.mxu0 0.0
      %746 = vmatprep.subr.mxu0 0.0
      %747 = vmatpush1.msra.mxu0 0.0
      %748 = vmatprep.subr.mxu0 0.0
      %749 = vmatpush1.msra.mxu0 0.0
      %750 = vmatprep.subr.mxu0 0.0
      %751 = vmatpush1.msra.mxu0 0.0
      %752 = vmatprep.subr.mxu0 0.0
      %753 = vmatpush1.msra.mxu0 0.0
      %754 = vmatprep.subr.mxu0 0.0
      %755 = vmatpush1.msra.mxu0 0.0
      %756 = vmatprep.subr.mxu0 0.0
      %757 = vmatpush1.msra.mxu0 0.0
      %758 = vmatprep.subr.mxu0 0.0
      %759 = vmatpush1.msra.mxu0 0.0
      %760 = vmatprep.subr.mxu0 0.0
      %761 = vmatpush1.msra.mxu0 0.0
      %762 = vmatprep.subr.mxu0 0.0
      %763 = vmatpush1.msra.mxu0 0.0
      %764 = vmatprep.subr.mxu0 0.0
      %765 = vmatpush1.msra.mxu0 0.0
      %766 = vmatprep.subr.mxu0 0.0
      %767 = vmatpush1.msra.mxu0 0.0
      %768 = vmatprep.subr.mxu0 0.0
      %769 = vmatpush1.msra.mxu0 0.0
      %770 = vmatprep.subr.mxu0 0.0
      %771 = vmatpush1.msra.mxu0 0.0
      %772 = vmatprep.subr.mxu0 0.0
      %773 = vmatpush1.msra.mxu0 0.0
      %774 = vmatprep.subr.mxu0 0.0
      %775 = vmatpush1.msra.mxu0 0.0
      %776 = vmatprep.subr.mxu0 0.0
      %777 = vmatpush1.msra.mxu0 0.0
      %778 = vmatprep.subr.mxu0 0.0
      %779 = vmatpush1.msra.mxu0 0.0
      %780 = vmatprep.subr.mxu0 0.0
      %781 = vmatpush1.msra.mxu0 0.0
      %782 = vmatprep.subr.mxu0 0.0
      %783 = vmatpush1.msra.mxu0 0.0
      %784 = vmatprep.subr.mxu0 0.0
      %785 = vmatpush1.msra.mxu0 0.0
      %786 = vmatprep.subr.mxu0 0.0
      %787 = vmatpush1.msra.mxu0 0.0
      %788 = vmatprep.mubr.f32.mxu0 0.0
      %789 = vmatmul.mubr.f32.gmra.mrb[0].mxu0 %v538
      %v790 = vpop.f32.mrb[0].mxu0
      %v791 = vadd.f32 %v520, %v790
      %v792 = vpop.f32.mrb[0].mxu0
      %v793 = vadd.f32 %v520, %v792
      %794 = vmatprep.mubr.f32.mxu0 0.0
      %795 = vmatmul.mubr.f32.gmra.mrb[0].mxu0 %v540
      %v796 = vpop.f32.mrb[0].mxu0
      %v797 = vadd.f32 %v525, %v796
      %v798 = vpop.f32.mrb[0].mxu0
      %v799 = vadd.f32 %v525, %v798
      %800 = vmatprep.mubr.f32.mxu0 0.0
      %801 = vmatmul.mubr.f32.gmra.mrb[0].mxu0 %v542
      %v802 = vpop.f32.mrb[0].mxu0
      %v803 = vadd.f32 %v530, %v802
      %v804 = vpop.f32.mrb[0].mxu0
      %v805 = vadd.f32 %v530, %v804
      %806 = vmatprep.mubr.f32.mxu0 0.0
      %807 = vmatmul.mubr.f32.gmra.mrb[0].mxu0 %v544
      %v808 = vpop.f32.mrb[0].mxu0
      %v809 = vadd.f32 %v535, %v808
      %v810 = vpop.f32.mrb[0].mxu0
      %v811 = vadd.f32 %v535, %v810
      %812 = vdwg.mxu0
      %813 = vmatprep.subr.mxu0 %v466
      %814 = vmatpush1.msra.mxu0 %v465
      %815 = vmatprep.subr.mxu0 %v492
      %816 = vmatpush1.msra.mxu0 %v491
      %817 = vmatprep.subr.mxu0 %v468
      %818 = vmatpush1.msra.mxu0 %v467
      %819 = vmatprep.subr.mxu0 %v494
      %820 = vmatpush1.msra.mxu0 %v493
      %821 = vmatprep.subr.mxu0 0.0
      %822 = vmatpush1.msra.mxu0 0.0
      %823 = vmatprep.subr.mxu0 0.0
      %824 = vmatpush1.msra.mxu0 0.0
      %825 = vmatprep.subr.mxu0 0.0
      %826 = vmatpush1.msra.mxu0 0.0
      %827 = vmatprep.subr.mxu0 0.0
      %828 = vmatpush1.msra.mxu0 0.0
      %829 = vmatprep.subr.mxu0 0.0
      %830 = vmatpush1.msra.mxu0 0.0
      %831 = vmatprep.subr.mxu0 0.0
      %832 = vmatpush1.msra.mxu0 0.0
      %833 = vmatprep.subr.mxu0 0.0
      %834 = vmatpush1.msra.mxu0 0.0
      %835 = vmatprep.subr.mxu0 0.0
      %836 = vmatpush1.msra.mxu0 0.0
      %837 = vmatprep.subr.mxu0 0.0
      %838 = vmatpush1.msra.mxu0 0.0
      %839 = vmatprep.subr.mxu0 0.0
      %840 = vmatpush1.msra.mxu0 0.0
      %841 = vmatprep.subr.mxu0 0.0
      %842 = vmatpush1.msra.mxu0 0.0
      %843 = vmatprep.subr.mxu0 0.0
      %844 = vmatpush1.msra.mxu0 0.0
      %845 = vmatprep.subr.mxu0 0.0
      %846 = vmatpush1.msra.mxu0 0.0
      %847 = vmatprep.subr.mxu0 0.0
      %848 = vmatpush1.msra.mxu0 0.0
      %849 = vmatprep.subr.mxu0 0.0
      %850 = vmatpush1.msra.mxu0 0.0
      %851 = vmatprep.subr.mxu0 0.0
      %852 = vmatpush1.msra.mxu0 0.0
      %853 = vmatprep.subr.mxu0 0.0
      %854 = vmatpush1.msra.mxu0 0.0
      %855 = vmatprep.subr.mxu0 0.0
      %856 = vmatpush1.msra.mxu0 0.0
      %857 = vmatprep.subr.mxu0 0.0
      %858 = vmatpush1.msra.mxu0 0.0
      %859 = vmatprep.subr.mxu0 0.0
      %860 = vmatpush1.msra.mxu0 0.0
      %861 = vmatprep.subr.mxu0 0.0
      %862 = vmatpush1.msra.mxu0 0.0
      %863 = vmatprep.subr.mxu0 0.0
      %864 = vmatpush1.msra.mxu0 0.0
      %865 = vmatprep.subr.mxu0 0.0
      %866 = vmatpush1.msra.mxu0 0.0
      %867 = vmatprep.subr.mxu0 0.0
      %868 = vmatpush1.msra.mxu0 0.0
      %869 = vmatprep.subr.mxu0 0.0
      %870 = vmatpush1.msra.mxu0 0.0
      %871 = vmatprep.subr.mxu0 0.0
      %872 = vmatpush1.msra.mxu0 0.0
      %873 = vmatprep.subr.mxu0 0.0
      %874 = vmatpush1.msra.mxu0 0.0
      %875 = vmatprep.subr.mxu0 0.0
      %876 = vmatpush1.msra.mxu0 0.0
      %877 = vmatprep.mubr.f32.mxu0 0.0
      %878 = vmatmul.mubr.f32.gmra.mrb[0].mxu0 %v538
      %v879 = vpop.f32.mrb[0].mxu0
      %v880 = vadd.f32 %v520, %v879
      %v881 = vpop.f32.mrb[0].mxu0
      %v882 = vadd.f32 %v520, %v881
      %883 = vmatprep.mubr.f32.mxu0 0.0
      %884 = vmatmul.mubr.f32.gmra.mrb[0].mxu0 %v540
      %v885 = vpop.f32.mrb[0].mxu0
      %v886 = vadd.f32 %v525, %v885
      %v887 = vpop.f32.mrb[0].mxu0
      %v888 = vadd.f32 %v525, %v887
      %889 = vmatprep.mubr.f32.mxu0 0.0
      %890 = vmatmul.mubr.f32.gmra.mrb[0].mxu0 %v542
      %v891 = vpop.f32.mrb[0].mxu0
      %v892 = vadd.f32 %v530, %v891
      %v893 = vpop.f32.mrb[0].mxu0
      %v894 = vadd.f32 %v530, %v893
      %895 = vmatprep.mubr.f32.mxu0 0.0
      %896 = vmatmul.mubr.f32.gmra.mrb[0].mxu0 %v544
      %v897 = vpop.f32.mrb[0].mxu0
      %v898 = vadd.f32 %v535, %v897
      %v899 = vpop.f32.mrb[0].mxu0
      %v900 = vadd.f32 %v535, %v899
      %901 = vdwg.mxu0
      %902 = vmatprep.subr.mxu0 %v468
      %903 = vmatpush1.msra.mxu0 %v467
      %904 = vmatprep.subr.mxu0 %v494
      %905 = vmatpush1.msra.mxu0 %v493
      %906 = vmatprep.subr.mxu0 %v470
      %907 = vmatpush1.msra.mxu0 %v469
      %908 = vmatprep.subr.mxu0 %v496
      %909 = vmatpush1.msra.mxu0 %v495
      %910 = vmatprep.subr.mxu0 0.0
      %911 = vmatpush1.msra.mxu0 0.0
      %912 = vmatprep.subr.mxu0 0.0
      %913 = vmatpush1.msra.mxu0 0.0
      %914 = vmatprep.subr.mxu0 0.0
      %915 = vmatpush1.msra.mxu0 0.0
      %916 = vmatprep.subr.mxu0 0.0
      %917 = vmatpush1.msra.mxu0 0.0
      %918 = vmatprep.subr.mxu0 0.0
      %919 = vmatpush1.msra.mxu0 0.0
      %920 = vmatprep.subr.mxu0 0.0
      %921 = vmatpush1.msra.mxu0 0.0
      %922 = vmatprep.subr.mxu0 0.0
      %923 = vmatpush1.msra.mxu0 0.0
      %924 = vmatprep.subr.mxu0 0.0
      %925 = vmatpush1.msra.mxu0 0.0
      %926 = vmatprep.subr.mxu0 0.0
      %927 = vmatpush1.msra.mxu0 0.0
      %928 = vmatprep.subr.mxu0 0.0
      %929 = vmatpush1.msra.mxu0 0.0
      %930 = vmatprep.subr.mxu0 0.0
      %931 = vmatpush1.msra.mxu0 0.0
      %932 = vmatprep.subr.mxu0 0.0
      %933 = vmatpush1.msra.mxu0 0.0
      %934 = vmatprep.subr.mxu0 0.0
      %935 = vmatpush1.msra.mxu0 0.0
      %936 = vmatprep.subr.mxu0 0.0
      %937 = vmatpush1.msra.mxu0 0.0
      %938 = vmatprep.subr.mxu0 0.0
      %939 = vmatpush1.msra.mxu0 0.0
      %940 = vmatprep.subr.mxu0 0.0
      %941 = vmatpush1.msra.mxu0 0.0
      %942 = vmatprep.subr.mxu0 0.0
      %943 = vmatpush1.msra.mxu0 0.0
      %944 = vmatprep.subr.mxu0 0.0
      %945 = vmatpush1.msra.mxu0 0.0
      %946 = vmatprep.subr.mxu0 0.0
      %947 = vmatpush1.msra.mxu0 0.0
      %948 = vmatprep.subr.mxu0 0.0
      %949 = vmatpush1.msra.mxu0 0.0
      %950 = vmatprep.subr.mxu0 0.0
      %951 = vmatpush1.msra.mxu0 0.0
      %952 = vmatprep.subr.mxu0 0.0
      %953 = vmatpush1.msra.mxu0 0.0
      %954 = vmatprep.subr.mxu0 0.0
      %955 = vmatpush1.msra.mxu0 0.0
      %956 = vmatprep.subr.mxu0 0.0
      %957 = vmatpush1.msra.mxu0 0.0
      %958 = vmatprep.subr.mxu0 0.0
      %959 = vmatpush1.msra.mxu0 0.0
      %960 = vmatprep.subr.mxu0 0.0
      %961 = vmatpush1.msra.mxu0 0.0
      %962 = vmatprep.subr.mxu0 0.0
      %963 = vmatpush1.msra.mxu0 0.0
      %964 = vmatprep.subr.mxu0 0.0
      %965 = vmatpush1.msra.mxu0 0.0
      %966 = vmatprep.mubr.f32.mxu0 0.0
      %967 = vmatmul.mubr.f32.gmra.mrb[0].mxu0 %v538
      %v968 = vpop.f32.mrb[0].mxu0
      %v969 = vadd.f32 %v520, %v968
      %v970 = vpop.f32.mrb[0].mxu0
      %v971 = vadd.f32 %v520, %v970
      %972 = vmatprep.mubr.f32.mxu0 0.0
      %973 = vmatmul.mubr.f32.gmra.mrb[0].mxu0 %v540
      %v974 = vpop.f32.mrb[0].mxu0
      %v975 = vadd.f32 %v525, %v974
      %v976 = vpop.f32.mrb[0].mxu0
      %v977 = vadd.f32 %v525, %v976
      %978 = vmatprep.mubr.f32.mxu0 0.0
      %979 = vmatmul.mubr.f32.gmra.mrb[0].mxu0 %v542
      %v980 = vpop.f32.mrb[0].mxu0
      %v981 = vadd.f32 %v530, %v980
      %v982 = vpop.f32.mrb[0].mxu0
      %v983 = vadd.f32 %v530, %v982
      %984 = vmatprep.mubr.f32.mxu0 0.0
      %985 = vmatmul.mubr.f32.gmra.mrb[0].mxu0 %v544
      %v986 = vpop.f32.mrb[0].mxu0
      %v987 = vadd.f32 %v535, %v986
      %v988 = vpop.f32.mrb[0].mxu0
      %v989 = vadd.f32 %v535, %v988
      %990 = vdwg.mxu0
      %991 = vmatprep.subr.mxu0 %v470
      %992 = vmatpush1.msra.mxu0 %v469
      %993 = vmatprep.subr.mxu0 %v496
      %994 = vmatpush1.msra.mxu0 %v495
      %995 = vmatprep.subr.mxu0 %v472
      %996 = vmatpush1.msra.mxu0 %v471
      %997 = vmatprep.subr.mxu0 %v498
      %998 = vmatpush1.msra.mxu0 %v497
      %999 = vmatprep.subr.mxu0 0.0
      %1000 = vmatpush1.msra.mxu0 0.0
      %1001 = vmatprep.subr.mxu0 0.0
      %1002 = vmatpush1.msra.mxu0 0.0
      %1003 = vmatprep.subr.mxu0 0.0
      %1004 = vmatpush1.msra.mxu0 0.0
      %1005 = vmatprep.subr.mxu0 0.0
      %1006 = vmatpush1.msra.mxu0 0.0
      %1007 = vmatprep.subr.mxu0 0.0
      %1008 = vmatpush1.msra.mxu0 0.0
      %1009 = vmatprep.subr.mxu0 0.0
      %1010 = vmatpush1.msra.mxu0 0.0
      %1011 = vmatprep.subr.mxu0 0.0
      %1012 = vmatpush1.msra.mxu0 0.0
      %1013 = vmatprep.subr.mxu0 0.0
      %1014 = vmatpush1.msra.mxu0 0.0
      %1015 = vmatprep.subr.mxu0 0.0
      %1016 = vmatpush1.msra.mxu0 0.0
      %1017 = vmatprep.subr.mxu0 0.0
      %1018 = vmatpush1.msra.mxu0 0.0
      %1019 = vmatprep.subr.mxu0 0.0
      %1020 = vmatpush1.msra.mxu0 0.0
      %1021 = vmatprep.subr.mxu0 0.0
      %1022 = vmatpush1.msra.mxu0 0.0
      %1023 = vmatprep.subr.mxu0 0.0
      %1024 = vmatpush1.msra.mxu0 0.0
      %1025 = vmatprep.subr.mxu0 0.0
      %1026 = vmatpush1.msra.mxu0 0.0
      %1027 = vmatprep.subr.mxu0 0.0
      %1028 = vmatpush1.msra.mxu0 0.0
      %1029 = vmatprep.subr.mxu0 0.0
      %1030 = vmatpush1.msra.mxu0 0.0
      %1031 = vmatprep.subr.mxu0 0.0
      %1032 = vmatpush1.msra.mxu0 0.0
      %1033 = vmatprep.subr.mxu0 0.0
      %1034 = vmatpush1.msra.mxu0 0.0
      %1035 = vmatprep.subr.mxu0 0.0
      %1036 = vmatpush1.msra.mxu0 0.0
      %1037 = vmatprep.subr.mxu0 0.0
      %1038 = vmatpush1.msra.mxu0 0.0
      %1039 = vmatprep.subr.mxu0 0.0
      %1040 = vmatpush1.msra.mxu0 0.0
      %1041 = vmatprep.subr.mxu0 0.0
      %1042 = vmatpush1.msra.mxu0 0.0
      %1043 = vmatprep.subr.mxu0 0.0
      %1044 = vmatpush1.msra.mxu0 0.0
      %1045 = vmatprep.subr.mxu0 0.0
      %1046 = vmatpush1.msra.mxu0 0.0
      %1047 = vmatprep.subr.mxu0 0.0
      %1048 = vmatpush1.msra.mxu0 0.0
      %1049 = vmatprep.subr.mxu0 0.0
      %1050 = vmatpush1.msra.mxu0 0.0
      %1051 = vmatprep.subr.mxu0 0.0
      %1052 = vmatpush1.msra.mxu0 0.0
      %1053 = vmatprep.subr.mxu0 0.0
      %1054 = vmatpush1.msra.mxu0 0.0
      %1055 = vmatprep.mubr.f32.mxu0 0.0
      %1056 = vmatmul.mubr.f32.gmra.mrb[0].mxu0 %v538
      %v1057 = vpop.f32.mrb[0].mxu0
      %v1058 = vadd.f32 %v520, %v1057
      %v1059 = vpop.f32.mrb[0].mxu0
      %v1060 = vadd.f32 %v520, %v1059
      %1061 = vmatprep.mubr.f32.mxu0 0.0
      %1062 = vmatmul.mubr.f32.gmra.mrb[0].mxu0 %v540
      %v1063 = vpop.f32.mrb[0].mxu0
      %v1064 = vadd.f32 %v525, %v1063
      %v1065 = vpop.f32.mrb[0].mxu0
      %v1066 = vadd.f32 %v525, %v1065
      %1067 = vmatprep.mubr.f32.mxu0 0.0
      %1068 = vmatmul.mubr.f32.gmra.mrb[0].mxu0 %v542
      %v1069 = vpop.f32.mrb[0].mxu0
      %v1070 = vadd.f32 %v530, %v1069
      %v1071 = vpop.f32.mrb[0].mxu0
      %v1072 = vadd.f32 %v530, %v1071
      %1073 = vmatprep.mubr.f32.mxu0 0.0
      %1074 = vmatmul.mubr.f32.gmra.mrb[0].mxu0 %v544
      %v1075 = vpop.f32.mrb[0].mxu0
      %v1076 = vadd.f32 %v535, %v1075
      %v1077 = vpop.f32.mrb[0].mxu0
      %v1078 = vadd.f32 %v535, %v1077
      %1079 = vdwg.mxu0
      %1080 = vmatprep.subr.mxu0 %v472
      %1081 = vmatpush1.msra.mxu0 %v471
      %1082 = vmatprep.subr.mxu0 %v498
      %1083 = vmatpush1.msra.mxu0 %v497
      %1084 = vmatprep.subr.mxu0 %v474
      %1085 = vmatpush1.msra.mxu0 %v473
      %1086 = vmatprep.subr.mxu0 %v500
      %1087 = vmatpush1.msra.mxu0 %v499
      %1088 = vmatprep.subr.mxu0 0.0
      %1089 = vmatpush1.msra.mxu0 0.0
      %1090 = vmatprep.subr.mxu0 0.0
      %1091 = vmatpush1.msra.mxu0 0.0
      %1092 = vmatprep.subr.mxu0 0.0
      %1093 = vmatpush1.msra.mxu0 0.0
      %1094 = vmatprep.subr.mxu0 0.0
      %1095 = vmatpush1.msra.mxu0 0.0
      %1096 = vmatprep.subr.mxu0 0.0
      %1097 = vmatpush1.msra.mxu0 0.0
      %1098 = vmatprep.subr.mxu0 0.0
      %1099 = vmatpush1.msra.mxu0 0.0
      %1100 = vmatprep.subr.mxu0 0.0
      %1101 = vmatpush1.msra.mxu0 0.0
      %1102 = vmatprep.subr.mxu0 0.0
      %1103 = vmatpush1.msra.mxu0 0.0
      %1104 = vmatprep.subr.mxu0 0.0
      %1105 = vmatpush1.msra.mxu0 0.0
      %1106 = vmatprep.subr.mxu0 0.0
      %1107 = vmatpush1.msra.mxu0 0.0
      %1108 = vmatprep.subr.mxu0 0.0
      %1109 = vmatpush1.msra.mxu0 0.0
      %1110 = vmatprep.subr.mxu0 0.0
      %1111 = vmatpush1.msra.mxu0 0.0
      %1112 = vmatprep.subr.mxu0 0.0
      %1113 = vmatpush1.msra.mxu0 0.0
      %1114 = vmatprep.subr.mxu0 0.0
      %1115 = vmatpush1.msra.mxu0 0.0
      %1116 = vmatprep.subr.mxu0 0.0
      %1117 = vmatpush1.msra.mxu0 0.0
      %1118 = vmatprep.subr.mxu0 0.0
      %1119 = vmatpush1.msra.mxu0 0.0
      %1120 = vmatprep.subr.mxu0 0.0
      %1121 = vmatpush1.msra.mxu0 0.0
      %1122 = vmatprep.subr.mxu0 0.0
      %1123 = vmatpush1.msra.mxu0 0.0
      %1124 = vmatprep.subr.mxu0 0.0
      %1125 = vmatpush1.msra.mxu0 0.0
      %1126 = vmatprep.subr.mxu0 0.0
      %1127 = vmatpush1.msra.mxu0 0.0
      %1128 = vmatprep.subr.mxu0 0.0
      %1129 = vmatpush1.msra.mxu0 0.0
      %1130 = vmatprep.subr.mxu0 0.0
      %1131 = vmatpush1.msra.mxu0 0.0
      %1132 = vmatprep.subr.mxu0 0.0
      %1133 = vmatpush1.msra.mxu0 0.0
      %1134 = vmatprep.subr.mxu0 0.0
      %1135 = vmatpush1.msra.mxu0 0.0
      %1136 = vmatprep.subr.mxu0 0.0
      %1137 = vmatpush1.msra.mxu0 0.0
      %1138 = vmatprep.subr.mxu0 0.0
      %1139 = vmatpush1.msra.mxu0 0.0
      %1140 = vmatprep.subr.mxu0 0.0
      %1141 = vmatpush1.msra.mxu0 0.0
      %1142 = vmatprep.subr.mxu0 0.0
      %1143 = vmatpush1.msra.mxu0 0.0
      %1144 = vmatprep.mubr.f32.mxu0 0.0
      %1145 = vmatmul.mubr.f32.gmra.mrb[0].mxu0 %v538
      %v1146 = vpop.f32.mrb[0].mxu0
      %v1147 = vadd.f32 %v520, %v1146
      %v1148 = vpop.f32.mrb[0].mxu0
      %v1149 = vadd.f32 %v520, %v1148
      %1150 = vmatprep.mubr.f32.mxu0 0.0
      %1151 = vmatmul.mubr.f32.gmra.mrb[0].mxu0 %v540
      %v1152 = vpop.f32.mrb[0].mxu0
      %v1153 = vadd.f32 %v525, %v1152
      %v1154 = vpop.f32.mrb[0].mxu0
      %v1155 = vadd.f32 %v525, %v1154
      %1156 = vmatprep.mubr.f32.mxu0 0.0
      %1157 = vmatmul.mubr.f32.gmra.mrb[0].mxu0 %v542
      %v1158 = vpop.f32.mrb[0].mxu0
      %v1159 = vadd.f32 %v530, %v1158
      %v1160 = vpop.f32.mrb[0].mxu0
      %v1161 = vadd.f32 %v530, %v1160
      %1162 = vmatprep.mubr.f32.mxu0 0.0
      %1163 = vmatmul.mubr.f32.gmra.mrb[0].mxu0 %v544
      %v1164 = vpop.f32.mrb[0].mxu0
      %v1165 = vadd.f32 %v535, %v1164
      %v1166 = vpop.f32.mrb[0].mxu0
      %v1167 = vadd.f32 %v535, %v1166
      %1168 = vdwg.mxu0
      %1169 = vmatprep.subr.mxu0 %v474
      %1170 = vmatpush1.msra.mxu0 %v473
      %1171 = vmatprep.subr.mxu0 %v500
      %1172 = vmatpush1.msra.mxu0 %v499
      %1173 = vmatprep.subr.mxu0 %v476
      %1174 = vmatpush1.msra.mxu0 %v475
      %1175 = vmatprep.subr.mxu0 %v502
      %1176 = vmatpush1.msra.mxu0 %v501
      %1177 = vmatprep.subr.mxu0 0.0
      %1178 = vmatpush1.msra.mxu0 0.0
      %1179 = vmatprep.subr.mxu0 0.0
      %1180 = vmatpush1.msra.mxu0 0.0
      %1181 = vmatprep.subr.mxu0 0.0
      %1182 = vmatpush1.msra.mxu0 0.0
      %1183 = vmatprep.subr.mxu0 0.0
      %1184 = vmatpush1.msra.mxu0 0.0
      %1185 = vmatprep.subr.mxu0 0.0
      %1186 = vmatpush1.msra.mxu0 0.0
      %1187 = vmatprep.subr.mxu0 0.0
      %1188 = vmatpush1.msra.mxu0 0.0
      %1189 = vmatprep.subr.mxu0 0.0
      %1190 = vmatpush1.msra.mxu0 0.0
      %1191 = vmatprep.subr.mxu0 0.0
      %1192 = vmatpush1.msra.mxu0 0.0
      %1193 = vmatprep.subr.mxu0 0.0
      %1194 = vmatpush1.msra.mxu0 0.0
      %1195 = vmatprep.subr.mxu0 0.0
      %1196 = vmatpush1.msra.mxu0 0.0
      %1197 = vmatprep.subr.mxu0 0.0
      %1198 = vmatpush1.msra.mxu0 0.0
      %1199 = vmatprep.subr.mxu0 0.0
      %1200 = vmatpush1.msra.mxu0 0.0
      %1201 = vmatprep.subr.mxu0 0.0
      %1202 = vmatpush1.msra.mxu0 0.0
      %1203 = vmatprep.subr.mxu0 0.0
      %1204 = vmatpush1.msra.mxu0 0.0
      %1205 = vmatprep.subr.mxu0 0.0
      %1206 = vmatpush1.msra.mxu0 0.0
      %1207 = vmatprep.subr.mxu0 0.0
      %1208 = vmatpush1.msra.mxu0 0.0
      %1209 = vmatprep.subr.mxu0 0.0
      %1210 = vmatpush1.msra.mxu0 0.0
      %1211 = vmatprep.subr.mxu0 0.0
      %1212 = vmatpush1.msra.mxu0 0.0
      %1213 = vmatprep.subr.mxu0 0.0
      %1214 = vmatpush1.msra.mxu0 0.0
      %1215 = vmatprep.subr.mxu0 0.0
      %1216 = vmatpush1.msra.mxu0 0.0
      %1217 = vmatprep.subr.mxu0 0.0
      %1218 = vmatpush1.msra.mxu0 0.0
      %1219 = vmatprep.subr.mxu0 0.0
      %1220 = vmatpush1.msra.mxu0 0.0
      %1221 = vmatprep.subr.mxu0 0.0
      %1222 = vmatpush1.msra.mxu0 0.0
      %1223 = vmatprep.subr.mxu0 0.0
      %1224 = vmatpush1.msra.mxu0 0.0
      %1225 = vmatprep.subr.mxu0 0.0
      %1226 = vmatpush1.msra.mxu0 0.0
      %1227 = vmatprep.subr.mxu0 0.0
      %1228 = vmatpush1.msra.mxu0 0.0
      %1229 = vmatprep.subr.mxu0 0.0
      %1230 = vmatpush1.msra.mxu0 0.0
      %1231 = vmatprep.subr.mxu0 0.0
      %1232 = vmatpush1.msra.mxu0 0.0
      %1233 = vmatprep.mubr.f32.mxu0 0.0
      %1234 = vmatmul.mubr.f32.gmra.mrb[0].mxu0 %v538
      %v1235 = vpop.f32.mrb[0].mxu0
      %v1236 = vadd.f32 %v520, %v1235
      %v1237 = vpop.f32.mrb[0].mxu0
      %v1238 = vadd.f32 %v520, %v1237
      %1239 = vmatprep.mubr.f32.mxu0 0.0
      %1240 = vmatmul.mubr.f32.gmra.mrb[0].mxu0 %v540
      %v1241 = vpop.f32.mrb[0].mxu0
      %v1242 = vadd.f32 %v525, %v1241
      %v1243 = vpop.f32.mrb[0].mxu0
      %v1244 = vadd.f32 %v525, %v1243
      %1245 = vmatprep.mubr.f32.mxu0 0.0
      %1246 = vmatmul.mubr.f32.gmra.mrb[0].mxu0 %v542
      %v1247 = vpop.f32.mrb[0].mxu0
      %v1248 = vadd.f32 %v530, %v1247
      %v1249 = vpop.f32.mrb[0].mxu0
      %v1250 = vadd.f32 %v530, %v1249
      %1251 = vmatprep.mubr.f32.mxu0 0.0
      %1252 = vmatmul.mubr.f32.gmra.mrb[0].mxu0 %v544
      %v1253 = vpop.f32.mrb[0].mxu0
      %v1254 = vadd.f32 %v535, %v1253
      %v1255 = vpop.f32.mrb[0].mxu0
      %v1256 = vadd.f32 %v535, %v1255
      %1257 = vdwg.mxu0
      %1258 = vmatprep.subr.mxu0 %v476
      %1259 = vmatpush1.msra.mxu0 %v475
      %1260 = vmatprep.subr.mxu0 %v502
      %1261 = vmatpush1.msra.mxu0 %v501
      %1262 = vmatprep.subr.mxu0 %v478
      %1263 = vmatpush1.msra.mxu0 %v477
      %1264 = vmatprep.subr.mxu0 %v504
      %1265 = vmatpush1.msra.mxu0 %v503
      %1266 = vmatprep.subr.mxu0 0.0
      %1267 = vmatpush1.msra.mxu0 0.0
      %1268 = vmatprep.subr.mxu0 0.0
      %1269 = vmatpush1.msra.mxu0 0.0
      %1270 = vmatprep.subr.mxu0 0.0
      %1271 = vmatpush1.msra.mxu0 0.0
      %1272 = vmatprep.subr.mxu0 0.0
      %1273 = vmatpush1.msra.mxu0 0.0
      %1274 = vmatprep.subr.mxu0 0.0
      %1275 = vmatpush1.msra.mxu0 0.0
      %1276 = vmatprep.subr.mxu0 0.0
      %1277 = vmatpush1.msra.mxu0 0.0
      %1278 = vmatprep.subr.mxu0 0.0
      %1279 = vmatpush1.msra.mxu0 0.0
      %1280 = vmatprep.subr.mxu0 0.0
      %1281 = vmatpush1.msra.mxu0 0.0
      %1282 = vmatprep.subr.mxu0 0.0
      %1283 = vmatpush1.msra.mxu0 0.0
      %1284 = vmatprep.subr.mxu0 0.0
      %1285 = vmatpush1.msra.mxu0 0.0
      %1286 = vmatprep.subr.mxu0 0.0
      %1287 = vmatpush1.msra.mxu0 0.0
      %1288 = vmatprep.subr.mxu0 0.0
      %1289 = vmatpush1.msra.mxu0 0.0
      %1290 = vmatprep.subr.mxu0 0.0
      %1291 = vmatpush1.msra.mxu0 0.0
      %1292 = vmatprep.subr.mxu0 0.0
      %1293 = vmatpush1.msra.mxu0 0.0
      %1294 = vmatprep.subr.mxu0 0.0
      %1295 = vmatpush1.msra.mxu0 0.0
      %1296 = vmatprep.subr.mxu0 0.0
      %1297 = vmatpush1.msra.mxu0 0.0
      %1298 = vmatprep.subr.mxu0 0.0
      %1299 = vmatpush1.msra.mxu0 0.0
      %1300 = vmatprep.subr.mxu0 0.0
      %1301 = vmatpush1.msra.mxu0 0.0
      %1302 = vmatprep.subr.mxu0 0.0
      %1303 = vmatpush1.msra.mxu0 0.0
      %1304 = vmatprep.subr.mxu0 0.0
      %1305 = vmatpush1.msra.mxu0 0.0
      %1306 = vmatprep.subr.mxu0 0.0
      %1307 = vmatpush1.msra.mxu0 0.0
      %1308 = vmatprep.subr.mxu0 0.0
      %1309 = vmatpush1.msra.mxu0 0.0
      %1310 = vmatprep.subr.mxu0 0.0
      %1311 = vmatpush1.msra.mxu0 0.0
      %1312 = vmatprep.subr.mxu0 0.0
      %1313 = vmatpush1.msra.mxu0 0.0
      %1314 = vmatprep.subr.mxu0 0.0
      %1315 = vmatpush1.msra.mxu0 0.0
      %1316 = vmatprep.subr.mxu0 0.0
      %1317 = vmatpush1.msra.mxu0 0.0
      %1318 = vmatprep.subr.mxu0 0.0
      %1319 = vmatpush1.msra.mxu0 0.0
      %1320 = vmatprep.subr.mxu0 0.0
      %1321 = vmatpush1.msra.mxu0 0.0
      %1322 = vmatprep.mubr.f32.mxu0 0.0
      %1323 = vmatmul.mubr.f32.gmra.mrb[0].mxu0 %v538
      %v1324 = vpop.f32.mrb[0].mxu0
      %v1325 = vadd.f32 %v520, %v1324
      %v1326 = vpop.f32.mrb[0].mxu0
      %v1327 = vadd.f32 %v520, %v1326
      %1328 = vmatprep.mubr.f32.mxu0 0.0
      %1329 = vmatmul.mubr.f32.gmra.mrb[0].mxu0 %v540
      %v1330 = vpop.f32.mrb[0].mxu0
      %v1331 = vadd.f32 %v525, %v1330
      %v1332 = vpop.f32.mrb[0].mxu0
      %v1333 = vadd.f32 %v525, %v1332
      %1334 = vmatprep.mubr.f32.mxu0 0.0
      %1335 = vmatmul.mubr.f32.gmra.mrb[0].mxu0 %v542
      %v1336 = vpop.f32.mrb[0].mxu0
      %v1337 = vadd.f32 %v530, %v1336
      %v1338 = vpop.f32.mrb[0].mxu0
      %v1339 = vadd.f32 %v530, %v1338
      %1340 = vmatprep.mubr.f32.mxu0 0.0
      %1341 = vmatmul.mubr.f32.gmra.mrb[0].mxu0 %v544
      %v1342 = vpop.f32.mrb[0].mxu0
      %v1343 = vadd.f32 %v535, %v1342
      %v1344 = vpop.f32.mrb[0].mxu0
      %v1345 = vadd.f32 %v535, %v1344
      %1346 = vdwg.mxu0
      %1347 = vmatprep.subr.mxu0 %v478
      %1348 = vmatpush1.msra.mxu0 %v477
      %1349 = vmatprep.subr.mxu0 %v504
      %1350 = vmatpush1.msra.mxu0 %v503
      %1351 = vmatprep.subr.mxu0 %v480
      %1352 = vmatpush1.msra.mxu0 %v479
      %1353 = vmatprep.subr.mxu0 %v506
      %1354 = vmatpush1.msra.mxu0 %v505
      %1355 = vmatprep.subr.mxu0 0.0
      %1356 = vmatpush1.msra.mxu0 0.0
      %1357 = vmatprep.subr.mxu0 0.0
      %1358 = vmatpush1.msra.mxu0 0.0
      %1359 = vmatprep.subr.mxu0 0.0
      %1360 = vmatpush1.msra.mxu0 0.0
      %1361 = vmatprep.subr.mxu0 0.0
      %1362 = vmatpush1.msra.mxu0 0.0
      %1363 = vmatprep.subr.mxu0 0.0
      %1364 = vmatpush1.msra.mxu0 0.0
      %1365 = vmatprep.subr.mxu0 0.0
      %1366 = vmatpush1.msra.mxu0 0.0
      %1367 = vmatprep.subr.mxu0 0.0
      %1368 = vmatpush1.msra.mxu0 0.0
      %1369 = vmatprep.subr.mxu0 0.0
      %1370 = vmatpush1.msra.mxu0 0.0
      %1371 = vmatprep.subr.mxu0 0.0
      %1372 = vmatpush1.msra.mxu0 0.0
      %1373 = vmatprep.subr.mxu0 0.0
      %1374 = vmatpush1.msra.mxu0 0.0
      %1375 = vmatprep.subr.mxu0 0.0
      %1376 = vmatpush1.msra.mxu0 0.0
      %1377 = vmatprep.subr.mxu0 0.0
      %1378 = vmatpush1.msra.mxu0 0.0
      %1379 = vmatprep.subr.mxu0 0.0
      %1380 = vmatpush1.msra.mxu0 0.0
      %1381 = vmatprep.subr.mxu0 0.0
      %1382 = vmatpush1.msra.mxu0 0.0
      %1383 = vmatprep.subr.mxu0 0.0
      %1384 = vmatpush1.msra.mxu0 0.0
      %1385 = vmatprep.subr.mxu0 0.0
      %1386 = vmatpush1.msra.mxu0 0.0
      %1387 = vmatprep.subr.mxu0 0.0
      %1388 = vmatpush1.msra.mxu0 0.0
      %1389 = vmatprep.subr.mxu0 0.0
      %1390 = vmatpush1.msra.mxu0 0.0
      %1391 = vmatprep.subr.mxu0 0.0
      %1392 = vmatpush1.msra.mxu0 0.0
      %1393 = vmatprep.subr.mxu0 0.0
      %1394 = vmatpush1.msra.mxu0 0.0
      %1395 = vmatprep.subr.mxu0 0.0
      %1396 = vmatpush1.msra.mxu0 0.0
      %1397 = vmatprep.subr.mxu0 0.0
      %1398 = vmatpush1.msra.mxu0 0.0
      %1399 = vmatprep.subr.mxu0 0.0
      %1400 = vmatpush1.msra.mxu0 0.0
      %1401 = vmatprep.subr.mxu0 0.0
      %1402 = vmatpush1.msra.mxu0 0.0
      %1403 = vmatprep.subr.mxu0 0.0
      %1404 = vmatpush1.msra.mxu0 0.0
      %1405 = vmatprep.subr.mxu0 0.0
      %1406 = vmatpush1.msra.mxu0 0.0
      %1407 = vmatprep.subr.mxu0 0.0
      %1408 = vmatpush1.msra.mxu0 0.0
      %1409 = vmatprep.subr.mxu0 0.0
      %1410 = vmatpush1.msra.mxu0 0.0
      %1411 = vmatprep.mubr.f32.mxu0 0.0
      %1412 = vmatmul.mubr.f32.gmra.mrb[0].mxu0 %v538
      %v1413 = vpop.f32.mrb[0].mxu0
      %v1414 = vadd.f32 %v520, %v1413
      %v1415 = vpop.f32.mrb[0].mxu0
      %v1416 = vadd.f32 %v520, %v1415
      %1417 = vmatprep.mubr.f32.mxu0 0.0
      %1418 = vmatmul.mubr.f32.gmra.mrb[0].mxu0 %v540
      %v1419 = vpop.f32.mrb[0].mxu0
      %v1420 = vadd.f32 %v525, %v1419
      %v1421 = vpop.f32.mrb[0].mxu0
      %v1422 = vadd.f32 %v525, %v1421
      %1423 = vmatprep.mubr.f32.mxu0 0.0
      %1424 = vmatmul.mubr.f32.gmra.mrb[0].mxu0 %v542
      %v1425 = vpop.f32.mrb[0].mxu0
      %v1426 = vadd.f32 %v530, %v1425
      %v1427 = vpop.f32.mrb[0].mxu0
      %v1428 = vadd.f32 %v530, %v1427
      %1429 = vmatprep.mubr.f32.mxu0 0.0
      %1430 = vmatmul.mubr.f32.gmra.mrb[0].mxu0 %v544
      %v1431 = vpop.f32.mrb[0].mxu0
      %v1432 = vadd.f32 %v535, %v1431
      %v1433 = vpop.f32.mrb[0].mxu0
      %v1434 = vadd.f32 %v535, %v1433
      %1435 = vdwg.mxu0
      %1436 = vmatprep.subr.mxu0 %v480
      %1437 = vmatpush1.msra.mxu0 %v479
      %1438 = vmatprep.subr.mxu0 %v506
      %1439 = vmatpush1.msra.mxu0 %v505
      %1440 = vmatprep.subr.mxu0 %v482
      %1441 = vmatpush1.msra.mxu0 %v481
      %1442 = vmatprep.subr.mxu0 %v508
      %1443 = vmatpush1.msra.mxu0 %v507
      %1444 = vmatprep.subr.mxu0 0.0
      %1445 = vmatpush1.msra.mxu0 0.0
      %1446 = vmatprep.subr.mxu0 0.0
      %1447 = vmatpush1.msra.mxu0 0.0
      %1448 = vmatprep.subr.mxu0 0.0
      %1449 = vmatpush1.msra.mxu0 0.0
      %1450 = vmatprep.subr.mxu0 0.0
      %1451 = vmatpush1.msra.mxu0 0.0
      %1452 = vmatprep.subr.mxu0 0.0
      %1453 = vmatpush1.msra.mxu0 0.0
      %1454 = vmatprep.subr.mxu0 0.0
      %1455 = vmatpush1.msra.mxu0 0.0
      %1456 = vmatprep.subr.mxu0 0.0
      %1457 = vmatpush1.msra.mxu0 0.0
      %1458 = vmatprep.subr.mxu0 0.0
      %1459 = vmatpush1.msra.mxu0 0.0
      %1460 = vmatprep.subr.mxu0 0.0
      %1461 = vmatpush1.msra.mxu0 0.0
      %1462 = vmatprep.subr.mxu0 0.0
      %1463 = vmatpush1.msra.mxu0 0.0
      %1464 = vmatprep.subr.mxu0 0.0
      %1465 = vmatpush1.msra.mxu0 0.0
      %1466 = vmatprep.subr.mxu0 0.0
      %1467 = vmatpush1.msra.mxu0 0.0
      %1468 = vmatprep.subr.mxu0 0.0
      %1469 = vmatpush1.msra.mxu0 0.0
      %1470 = vmatprep.subr.mxu0 0.0
      %1471 = vmatpush1.msra.mxu0 0.0
      %1472 = vmatprep.subr.mxu0 0.0
      %1473 = vmatpush1.msra.mxu0 0.0
      %1474 = vmatprep.subr.mxu0 0.0
      %1475 = vmatpush1.msra.mxu0 0.0
      %1476 = vmatprep.subr.mxu0 0.0
      %1477 = vmatpush1.msra.mxu0 0.0
      %1478 = vmatprep.subr.mxu0 0.0
      %1479 = vmatpush1.msra.mxu0 0.0
      %1480 = vmatprep.subr.mxu0 0.0
      %1481 = vmatpush1.msra.mxu0 0.0
      %1482 = vmatprep.subr.mxu0 0.0
      %1483 = vmatpush1.msra.mxu0 0.0
      %1484 = vmatprep.subr.mxu0 0.0
      %1485 = vmatpush1.msra.mxu0 0.0
      %1486 = vmatprep.subr.mxu0 0.0
      %1487 = vmatpush1.msra.mxu0 0.0
      %1488 = vmatprep.subr.mxu0 0.0
      %1489 = vmatpush1.msra.mxu0 0.0
      %1490 = vmatprep.subr.mxu0 0.0
      %1491 = vmatpush1.msra.mxu0 0.0
      %1492 = vmatprep.subr.mxu0 0.0
      %1493 = vmatpush1.msra.mxu0 0.0
      %1494 = vmatprep.subr.mxu0 0.0
      %1495 = vmatpush1.msra.mxu0 0.0
      %1496 = vmatprep.subr.mxu0 0.0
      %1497 = vmatpush1.msra.mxu0 0.0
      %1498 = vmatprep.subr.mxu0 0.0
      %1499 = vmatpush1.msra.mxu0 0.0
      %1500 = vmatprep.mubr.f32.mxu0 0.0
      %1501 = vmatmul.mubr.f32.gmra.mrb[0].mxu0 %v538
      %v1502 = vpop.f32.mrb[0].mxu0
      %v1503 = vadd.f32 %v520, %v1502
      %v1504 = vpop.f32.mrb[0].mxu0
      %v1505 = vadd.f32 %v520, %v1504
      %1506 = vmatprep.mubr.f32.mxu0 0.0
      %1507 = vmatmul.mubr.f32.gmra.mrb[0].mxu0 %v540
      %v1508 = vpop.f32.mrb[0].mxu0
      %v1509 = vadd.f32 %v525, %v1508
      %v1510 = vpop.f32.mrb[0].mxu0
      %v1511 = vadd.f32 %v525, %v1510
      %1512 = vmatprep.mubr.f32.mxu0 0.0
      %1513 = vmatmul.mubr.f32.gmra.mrb[0].mxu0 %v542
      %v1514 = vpop.f32.mrb[0].mxu0
      %v1515 = vadd.f32 %v530, %v1514
      %v1516 = vpop.f32.mrb[0].mxu0
      %v1517 = vadd.f32 %v530, %v1516
      %1518 = vmatprep.mubr.f32.mxu0 0.0
      %1519 = vmatmul.mubr.f32.gmra.mrb[0].mxu0 %v544
      %v1520 = vpop.f32.mrb[0].mxu0
      %v1521 = vadd.f32 %v535, %v1520
      %v1522 = vpop.f32.mrb[0].mxu0
      %v1523 = vadd.f32 %v535, %v1522
      %1524 = vdwg.mxu0
      %1525 = vmatprep.subr.mxu0 %v482
      %1526 = vmatpush1.msra.mxu0 %v481
      %1527 = vmatprep.subr.mxu0 %v508
      %1528 = vmatpush1.msra.mxu0 %v507
      %1529 = vmatprep.subr.mxu0 %v484
      %1530 = vmatpush1.msra.mxu0 %v483
      %1531 = vmatprep.subr.mxu0 %v510
      %1532 = vmatpush1.msra.mxu0 %v509
      %1533 = vmatprep.subr.mxu0 0.0
      %1534 = vmatpush1.msra.mxu0 0.0
      %1535 = vmatprep.subr.mxu0 0.0
      %1536 = vmatpush1.msra.mxu0 0.0
      %1537 = vmatprep.subr.mxu0 0.0
      %1538 = vmatpush1.msra.mxu0 0.0
      %1539 = vmatprep.subr.mxu0 0.0
      %1540 = vmatpush1.msra.mxu0 0.0
      %1541 = vmatprep.subr.mxu0 0.0
      %1542 = vmatpush1.msra.mxu0 0.0
      %1543 = vmatprep.subr.mxu0 0.0
      %1544 = vmatpush1.msra.mxu0 0.0
      %1545 = vmatprep.subr.mxu0 0.0
      %1546 = vmatpush1.msra.mxu0 0.0
      %1547 = vmatprep.subr.mxu0 0.0
      %1548 = vmatpush1.msra.mxu0 0.0
      %1549 = vmatprep.subr.mxu0 0.0
      %1550 = vmatpush1.msra.mxu0 0.0
      %1551 = vmatprep.subr.mxu0 0.0
      %1552 = vmatpush1.msra.mxu0 0.0
      %1553 = vmatprep.subr.mxu0 0.0
      %1554 = vmatpush1.msra.mxu0 0.0
      %1555 = vmatprep.subr.mxu0 0.0
      %1556 = vmatpush1.msra.mxu0 0.0
      %1557 = vmatprep.subr.mxu0 0.0
      %1558 = vmatpush1.msra.mxu0 0.0
      %1559 = vmatprep.subr.mxu0 0.0
      %1560 = vmatpush1.msra.mxu0 0.0
      %1561 = vmatprep.subr.mxu0 0.0
      %1562 = vmatpush1.msra.mxu0 0.0
      %1563 = vmatprep.subr.mxu0 0.0
      %1564 = vmatpush1.msra.mxu0 0.0
      %1565 = vmatprep.subr.mxu0 0.0
      %1566 = vmatpush1.msra.mxu0 0.0
      %1567 = vmatprep.subr.mxu0 0.0
      %1568 = vmatpush1.msra.mxu0 0.0
      %1569 = vmatprep.subr.mxu0 0.0
      %1570 = vmatpush1.msra.mxu0 0.0
      %1571 = vmatprep.subr.mxu0 0.0
      %1572 = vmatpush1.msra.mxu0 0.0
      %1573 = vmatprep.subr.mxu0 0.0
      %1574 = vmatpush1.msra.mxu0 0.0
      %1575 = vmatprep.subr.mxu0 0.0
      %1576 = vmatpush1.msra.mxu0 0.0
      %1577 = vmatprep.subr.mxu0 0.0
      %1578 = vmatpush1.msra.mxu0 0.0
      %1579 = vmatprep.subr.mxu0 0.0
      %1580 = vmatpush1.msra.mxu0 0.0
      %1581 = vmatprep.subr.mxu0 0.0
      %1582 = vmatpush1.msra.mxu0 0.0
      %1583 = vmatprep.subr.mxu0 0.0
      %1584 = vmatpush1.msra.mxu0 0.0
      %1585 = vmatprep.subr.mxu0 0.0
      %1586 = vmatpush1.msra.mxu0 0.0
      %1587 = vmatprep.subr.mxu0 0.0
      %1588 = vmatpush1.msra.mxu0 0.0
      %1589 = vmatprep.mubr.f32.mxu0 0.0
      %1590 = vmatmul.mubr.f32.gmra.mrb[0].mxu0 %v538
      %v1591 = vpop.f32.mrb[0].mxu0
      %v1592 = vadd.f32 %v520, %v1591
      %v1593 = vpop.f32.mrb[0].mxu0
      %v1594 = vadd.f32 %v520, %v1593
      %1595 = vmatprep.mubr.f32.mxu0 0.0
      %1596 = vmatmul.mubr.f32.gmra.mrb[0].mxu0 %v540
      %v1597 = vpop.f32.mrb[0].mxu0
      %v1598 = vadd.f32 %v525, %v1597
      %v1599 = vpop.f32.mrb[0].mxu0
      %v1600 = vadd.f32 %v525, %v1599
      %1601 = vmatprep.mubr.f32.mxu0 0.0
      %1602 = vmatmul.mubr.f32.gmra.mrb[0].mxu0 %v542
      %v1603 = vpop.f32.mrb[0].mxu0
      %v1604 = vadd.f32 %v530, %v1603
      %v1605 = vpop.f32.mrb[0].mxu0
      %v1606 = vadd.f32 %v530, %v1605
      %1607 = vmatprep.mubr.f32.mxu0 0.0
      %1608 = vmatmul.mubr.f32.gmra.mrb[0].mxu0 %v544
      %v1609 = vpop.f32.mrb[0].mxu0
      %v1610 = vadd.f32 %v535, %v1609
      %v1611 = vpop.f32.mrb[0].mxu0
      %v1612 = vadd.f32 %v535, %v1611
      %1613 = vdwg.mxu0
      %v1614 = vtanh.pop %v613
      %v1615 = vtanh.pop %v615
      %v1616 = vtanh.pop %v702
      %v1617 = vtanh.pop %v704
      %v1618 = vtanh.pop %v791
      %v1619 = vtanh.pop %v793
      %v1620 = vtanh.pop %v880
      %v1621 = vtanh.pop %v882
      %v1622 = vtanh.pop %v969
      %v1623 = vtanh.pop %v971
      %v1624 = vtanh.pop %v1058
      %v1625 = vtanh.pop %v1060
      %v1626 = vtanh.pop %v1147
      %v1627 = vtanh.pop %v1149
      %v1628 = vtanh.pop %v1236
      %v1629 = vtanh.pop %v1238
      %v1630 = vtanh.pop %v1325
      %v1631 = vtanh.pop %v1327
      %v1632 = vtanh.pop %v1414
      %v1633 = vtanh.pop %v1416
      %v1634 = vtanh.pop %v1503
      %v1635 = vtanh.pop %v1505
      %v1636 = vtanh.pop %v1592
      %v1637 = vtanh.pop %v1594
      %v1638 = vtanh.pop %v619
      %v1639 = vtanh.pop %v621
      %v1640 = vtanh.pop %v708
      %v1641 = vtanh.pop %v710
      %v1642 = vtanh.pop %v797
      %v1643 = vtanh.pop %v799
      %v1644 = vtanh.pop %v886
      %v1645 = vtanh.pop %v888
      %v1646 = vtanh.pop %v975
      %v1647 = vtanh.pop %v977
      %v1648 = vtanh.pop %v1064
      %v1649 = vtanh.pop %v1066
      %v1650 = vtanh.pop %v1153
      %v1651 = vtanh.pop %v1155
      %v1652 = vtanh.pop %v1242
      %v1653 = vtanh.pop %v1244
      %v1654 = vtanh.pop %v1331
      %v1655 = vtanh.pop %v1333
      %v1656 = vtanh.pop %v1420
      %v1657 = vtanh.pop %v1422
      %v1658 = vtanh.pop %v1509
      %v1659 = vtanh.pop %v1511
      %v1660 = vtanh.pop %v1598
      %v1661 = vtanh.pop %v1600
      %v1662 = vxor.u32 %v625, 2147483648
      %v1663 = vxor.u32 %v627, 2147483648
      %v1664 = vxor.u32 %v714, 2147483648
      %v1665 = vxor.u32 %v716, 2147483648
      %v1666 = vxor.u32 %v803, 2147483648
      %v1667 = vxor.u32 %v805, 2147483648
      %v1668 = vxor.u32 %v892, 2147483648
      %v1669 = vxor.u32 %v894, 2147483648
      %v1670 = vxor.u32 %v981, 2147483648
      %v1671 = vxor.u32 %v983, 2147483648
      %v1672 = vxor.u32 %v1070, 2147483648
      %v1673 = vxor.u32 %v1072, 2147483648
      %v1674 = vxor.u32 %v1159, 2147483648
      %v1675 = vxor.u32 %v1161, 2147483648
      %v1676 = vxor.u32 %v1248, 2147483648
      %v1677 = vxor.u32 %v1250, 2147483648
      %v1678 = vxor.u32 %v1337, 2147483648
      %v1679 = vxor.u32 %v1339, 2147483648
      %v1680 = vxor.u32 %v1426, 2147483648
      %v1681 = vxor.u32 %v1428, 2147483648
      %v1682 = vxor.u32 %v1515, 2147483648
      %v1683 = vxor.u32 %v1517, 2147483648
      %v1684 = vxor.u32 %v1604, 2147483648
      %v1685 = vxor.u32 %v1606, 2147483648
      %v1686 = vxor.u32 %v631, 2147483648
      %v1687 = vxor.u32 %v633, 2147483648
      %v1688 = vxor.u32 %v720, 2147483648
      %v1689 = vxor.u32 %v722, 2147483648
      %v1690 = vxor.u32 %v809, 2147483648
      %v1691 = vxor.u32 %v811, 2147483648
      %v1692 = vxor.u32 %v898, 2147483648
      %v1693 = vxor.u32 %v900, 2147483648
      %v1694 = vxor.u32 %v987, 2147483648
      %v1695 = vxor.u32 %v989, 2147483648
      %v1696 = vxor.u32 %v1076, 2147483648
      %v1697 = vxor.u32 %v1078, 2147483648
      %v1698 = vxor.u32 %v1165, 2147483648
      %v1699 = vxor.u32 %v1167, 2147483648
      %v1700 = vxor.u32 %v1254, 2147483648
      %v1701 = vxor.u32 %v1256, 2147483648
      %v1702 = vxor.u32 %v1343, 2147483648
      %v1703 = vxor.u32 %v1345, 2147483648
      %v1704 = vxor.u32 %v1432, 2147483648
      %v1705 = vxor.u32 %v1434, 2147483648
      %v1706 = vxor.u32 %v1521, 2147483648
      %v1707 = vxor.u32 %v1523, 2147483648
      %v1708 = vxor.u32 %v1610, 2147483648
      %v1709 = vxor.u32 %v1612, 2147483648
      %v1710 = vmul.f32 %v1662, 1.442695
      %v1711 = vpow.pop %v1710
      %v1712 = vmul.f32 %v1663, 1.442695
      %v1713 = vpow.pop %v1712
      %v1714 = vmul.f32 %v1664, 1.442695
      %v1715 = vpow.pop %v1714
      %v1716 = vmul.f32 %v1665, 1.442695
      %v1717 = vpow.pop %v1716
      %v1718 = vmul.f32 %v1666, 1.442695
      %v1719 = vpow.pop %v1718
      %v1720 = vmul.f32 %v1667, 1.442695
      %v1721 = vpow.pop %v1720
      %v1722 = vmul.f32 %v1668, 1.442695
      %v1723 = vpow.pop %v1722
      %v1724 = vmul.f32 %v1669, 1.442695
      %v1725 = vpow.pop %v1724
      %v1726 = vmul.f32 %v1670, 1.442695
      %v1727 = vpow.pop %v1726
      %v1728 = vmul.f32 %v1671, 1.442695
      %v1729 = vpow.pop %v1728
      %v1730 = vmul.f32 %v1672, 1.442695
      %v1731 = vpow.pop %v1730
      %v1732 = vmul.f32 %v1673, 1.442695
      %v1733 = vpow.pop %v1732
      %v1734 = vmul.f32 %v1674, 1.442695
      %v1735 = vpow.pop %v1734
      %v1736 = vmul.f32 %v1675, 1.442695
      %v1737 = vpow.pop %v1736
      %v1738 = vmul.f32 %v1676, 1.442695
      %v1739 = vpow.pop %v1738
      %v1740 = vmul.f32 %v1677, 1.442695
      %v1741 = vpow.pop %v1740
      %v1742 = vmul.f32 %v1678, 1.442695
      %v1743 = vpow.pop %v1742
      %v1744 = vmul.f32 %v1679, 1.442695
      %v1745 = vpow.pop %v1744
      %v1746 = vmul.f32 %v1680, 1.442695
      %v1747 = vpow.pop %v1746
      %v1748 = vmul.f32 %v1681, 1.442695
      %v1749 = vpow.pop %v1748
      %v1750 = vmul.f32 %v1682, 1.442695
      %v1751 = vpow.pop %v1750
      %v1752 = vmul.f32 %v1683, 1.442695
      %v1753 = vpow.pop %v1752
      %v1754 = vmul.f32 %v1684, 1.442695
      %v1755 = vpow.pop %v1754
      %v1756 = vmul.f32 %v1685, 1.442695
      %v1757 = vpow.pop %v1756
      %v1758 = vmul.f32 %v1686, 1.442695
      %v1759 = vpow.pop %v1758
      %v1760 = vmul.f32 %v1687, 1.442695
      %v1761 = vpow.pop %v1760
      %v1762 = vmul.f32 %v1688, 1.442695
      %v1763 = vpow.pop %v1762
      %v1764 = vmul.f32 %v1689, 1.442695
      %v1765 = vpow.pop %v1764
      %v1766 = vmul.f32 %v1690, 1.442695
      %v1767 = vpow.pop %v1766
      %v1768 = vmul.f32 %v1691, 1.442695
      %v1769 = vpow.pop %v1768
      %v1770 = vmul.f32 %v1692, 1.442695
      %v1771 = vpow.pop %v1770
      %v1772 = vmul.f32 %v1693, 1.442695
      %v1773 = vpow.pop %v1772
      %v1774 = vmul.f32 %v1694, 1.442695
      %v1775 = vpow.pop %v1774
      %v1776 = vmul.f32 %v1695, 1.442695
      %v1777 = vpow.pop %v1776
      %v1778 = vmul.f32 %v1696, 1.442695
      %v1779 = vpow.pop %v1778
      %v1780 = vmul.f32 %v1697, 1.442695
      %v1781 = vpow.pop %v1780
      %v1782 = vmul.f32 %v1698, 1.442695
      %v1783 = vpow.pop %v1782
      %v1784 = vmul.f32 %v1699, 1.442695
      %v1785 = vpow.pop %v1784
      %v1786 = vmul.f32 %v1700, 1.442695
      %v1787 = vpow.pop %v1786
      %v1788 = vmul.f32 %v1701, 1.442695
      %v1789 = vpow.pop %v1788
      %v1790 = vmul.f32 %v1702, 1.442695
      %v1791 = vpow.pop %v1790
      %v1792 = vmul.f32 %v1703, 1.442695
      %v1793 = vpow.pop %v1792
      %v1794 = vmul.f32 %v1704, 1.442695
      %v1795 = vpow.pop %v1794
      %v1796 = vmul.f32 %v1705, 1.442695
      %v1797 = vpow.pop %v1796
      %v1798 = vmul.f32 %v1706, 1.442695
      %v1799 = vpow.pop %v1798
      %v1800 = vmul.f32 %v1707, 1.442695
      %v1801 = vpow.pop %v1800
      %v1802 = vmul.f32 %v1708, 1.442695
      %v1803 = vpow.pop %v1802
      %v1804 = vmul.f32 %v1709, 1.442695
      %v1805 = vpow.pop %v1804
      %v1806 = vadd.f32 %v1711, 1.0
      %v1807 = vadd.f32 %v1713, 1.0
      %v1808 = vadd.f32 %v1715, 1.0
      %v1809 = vadd.f32 %v1717, 1.0
      %v1810 = vadd.f32 %v1719, 1.0
      %v1811 = vadd.f32 %v1721, 1.0
      %v1812 = vadd.f32 %v1723, 1.0
      %v1813 = vadd.f32 %v1725, 1.0
      %v1814 = vadd.f32 %v1727, 1.0
      %v1815 = vadd.f32 %v1729, 1.0
      %v1816 = vadd.f32 %v1731, 1.0
      %v1817 = vadd.f32 %v1733, 1.0
      %v1818 = vadd.f32 %v1735, 1.0
      %v1819 = vadd.f32 %v1737, 1.0
      %v1820 = vadd.f32 %v1739, 1.0
      %v1821 = vadd.f32 %v1741, 1.0
      %v1822 = vadd.f32 %v1743, 1.0
      %v1823 = vadd.f32 %v1745, 1.0
      %v1824 = vadd.f32 %v1747, 1.0
      %v1825 = vadd.f32 %v1749, 1.0
      %v1826 = vadd.f32 %v1751, 1.0
      %v1827 = vadd.f32 %v1753, 1.0
      %v1828 = vadd.f32 %v1755, 1.0
      %v1829 = vadd.f32 %v1757, 1.0
      %v1830 = vadd.f32 %v1759, 1.0
      %v1831 = vadd.f32 %v1761, 1.0
      %v1832 = vadd.f32 %v1763, 1.0
      %v1833 = vadd.f32 %v1765, 1.0
      %v1834 = vadd.f32 %v1767, 1.0
      %v1835 = vadd.f32 %v1769, 1.0
      %v1836 = vadd.f32 %v1771, 1.0
      %v1837 = vadd.f32 %v1773, 1.0
      %v1838 = vadd.f32 %v1775, 1.0
      %v1839 = vadd.f32 %v1777, 1.0
      %v1840 = vadd.f32 %v1779, 1.0
      %v1841 = vadd.f32 %v1781, 1.0
      %v1842 = vadd.f32 %v1783, 1.0
      %v1843 = vadd.f32 %v1785, 1.0
      %v1844 = vadd.f32 %v1787, 1.0
      %v1845 = vadd.f32 %v1789, 1.0
      %v1846 = vadd.f32 %v1791, 1.0
      %v1847 = vadd.f32 %v1793, 1.0
      %v1848 = vadd.f32 %v1795, 1.0
      %v1849 = vadd.f32 %v1797, 1.0
      %v1850 = vadd.f32 %v1799, 1.0
      %v1851 = vadd.f32 %v1801, 1.0
      %v1852 = vadd.f32 %v1803, 1.0
      %v1853 = vadd.f32 %v1805, 1.0
      %v1854 = vrcp.pop %v1806
      %v1855 = vmul.f32 1.0, %v1854
      %v1856 = vrcp.pop %v1807
      %v1857 = vmul.f32 1.0, %v1856
      %v1858 = vrcp.pop %v1808
      %v1859 = vmul.f32 1.0, %v1858
      %v1860 = vrcp.pop %v1809
      %v1861 = vmul.f32 1.0, %v1860
      %v1862 = vrcp.pop %v1810
      %v1863 = vmul.f32 1.0, %v1862
      %v1864 = vrcp.pop %v1811
      %v1865 = vmul.f32 1.0, %v1864
      %v1866 = vrcp.pop %v1812
      %v1867 = vmul.f32 1.0, %v1866
      %v1868 = vrcp.pop %v1813
      %v1869 = vmul.f32 1.0, %v1868
      %v1870 = vrcp.pop %v1814
      %v1871 = vmul.f32 1.0, %v1870
      %v1872 = vrcp.pop %v1815
      %v1873 = vmul.f32 1.0, %v1872
      %v1874 = vrcp.pop %v1816
      %v1875 = vmul.f32 1.0, %v1874
      %v1876 = vrcp.pop %v1817
      %v1877 = vmul.f32 1.0, %v1876
      %v1878 = vrcp.pop %v1818
      %v1879 = vmul.f32 1.0, %v1878
      %v1880 = vrcp.pop %v1819
      %v1881 = vmul.f32 1.0, %v1880
      %v1882 = vrcp.pop %v1820
      %v1883 = vmul.f32 1.0, %v1882
      %v1884 = vrcp.pop %v1821
      %v1885 = vmul.f32 1.0, %v1884
      %v1886 = vrcp.pop %v1822
      %v1887 = vmul.f32 1.0, %v1886
      %v1888 = vrcp.pop %v1823
      %v1889 = vmul.f32 1.0, %v1888
      %v1890 = vrcp.pop %v1824
      %v1891 = vmul.f32 1.0, %v1890
      %v1892 = vrcp.pop %v1825
      %v1893 = vmul.f32 1.0, %v1892
      %v1894 = vrcp.pop %v1826
      %v1895 = vmul.f32 1.0, %v1894
      %v1896 = vrcp.pop %v1827
      %v1897 = vmul.f32 1.0, %v1896
      %v1898 = vrcp.pop %v1828
      %v1899 = vmul.f32 1.0, %v1898
      %v1900 = vrcp.pop %v1829
      %v1901 = vmul.f32 1.0, %v1900
      %v1902 = vrcp.pop %v1830
      %v1903 = vmul.f32 1.0, %v1902
      %v1904 = vrcp.pop %v1831
      %v1905 = vmul.f32 1.0, %v1904
      %v1906 = vrcp.pop %v1832
      %v1907 = vmul.f32 1.0, %v1906
      %v1908 = vrcp.pop %v1833
      %v1909 = vmul.f32 1.0, %v1908
      %v1910 = vrcp.pop %v1834
      %v1911 = vmul.f32 1.0, %v1910
      %v1912 = vrcp.pop %v1835
      %v1913 = vmul.f32 1.0, %v1912
      %v1914 = vrcp.pop %v1836
      %v1915 = vmul.f32 1.0, %v1914
      %v1916 = vrcp.pop %v1837
      %v1917 = vmul.f32 1.0, %v1916
      %v1918 = vrcp.pop %v1838
      %v1919 = vmul.f32 1.0, %v1918
      %v1920 = vrcp.pop %v1839
      %v1921 = vmul.f32 1.0, %v1920
      %v1922 = vrcp.pop %v1840
      %v1923 = vmul.f32 1.0, %v1922
      %v1924 = vrcp.pop %v1841
      %v1925 = vmul.f32 1.0, %v1924
      %v1926 = vrcp.pop %v1842
      %v1927 = vmul.f32 1.0, %v1926
      %v1928 = vrcp.pop %v1843
      %v1929 = vmul.f32 1.0, %v1928
      %v1930 = vrcp.pop %v1844
      %v1931 = vmul.f32 1.0, %v1930
      %v1932 = vrcp.pop %v1845
      %v1933 = vmul.f32 1.0, %v1932
      %v1934 = vrcp.pop %v1846
      %v1935 = vmul.f32 1.0, %v1934
      %v1936 = vrcp.pop %v1847
      %v1937 = vmul.f32 1.0, %v1936
      %v1938 = vrcp.pop %v1848
      %v1939 = vmul.f32 1.0, %v1938
      %v1940 = vrcp.pop %v1849
      %v1941 = vmul.f32 1.0, %v1940
      %v1942 = vrcp.pop %v1850
      %v1943 = vmul.f32 1.0, %v1942
      %v1944 = vrcp.pop %v1851
      %v1945 = vmul.f32 1.0, %v1944
      %v1946 = vrcp.pop %v1852
      %v1947 = vmul.f32 1.0, %v1946
      %v1948 = vrcp.pop %v1853
      %v1949 = vmul.f32 1.0, %v1948
      %v1950 = vmul.f32 %v1614, %v1855
      %v1951 = vmul.f32 %v1615, %v1857
      %v1952 = vmul.f32 %v1616, %v1859
      %v1953 = vmul.f32 %v1617, %v1861
      %v1954 = vmul.f32 %v1618, %v1863
      %v1955 = vmul.f32 %v1619, %v1865
      %v1956 = vmul.f32 %v1620, %v1867
      %v1957 = vmul.f32 %v1621, %v1869
      %v1958 = vmul.f32 %v1622, %v1871
      %v1959 = vmul.f32 %v1623, %v1873
      %v1960 = vmul.f32 %v1624, %v1875
      %v1961 = vmul.f32 %v1625, %v1877
      %v1962 = vmul.f32 %v1626, %v1879
      %v1963 = vmul.f32 %v1627, %v1881
      %v1964 = vmul.f32 %v1628, %v1883
      %v1965 = vmul.f32 %v1629, %v1885
      %v1966 = vmul.f32 %v1630, %v1887
      %v1967 = vmul.f32 %v1631, %v1889
      %v1968 = vmul.f32 %v1632, %v1891
      %v1969 = vmul.f32 %v1633, %v1893
      %v1970 = vmul.f32 %v1634, %v1895
      %v1971 = vmul.f32 %v1635, %v1897
      %v1972 = vmul.f32 %v1636, %v1899
      %v1973 = vmul.f32 %v1637, %v1901
      %v1974 = vmul.f32 %v1638, %v1903
      %v1975 = vmul.f32 %v1639, %v1905
      %v1976 = vmul.f32 %v1640, %v1907
      %v1977 = vmul.f32 %v1641, %v1909
      %v1978 = vmul.f32 %v1642, %v1911
      %v1979 = vmul.f32 %v1643, %v1913
      %v1980 = vmul.f32 %v1644, %v1915
      %v1981 = vmul.f32 %v1645, %v1917
      %v1982 = vmul.f32 %v1646, %v1919
      %v1983 = vmul.f32 %v1647, %v1921
      %v1984 = vmul.f32 %v1648, %v1923
      %v1985 = vmul.f32 %v1649, %v1925
      %v1986 = vmul.f32 %v1650, %v1927
      %v1987 = vmul.f32 %v1651, %v1929
      %v1988 = vmul.f32 %v1652, %v1931
      %v1989 = vmul.f32 %v1653, %v1933
      %v1990 = vmul.f32 %v1654, %v1935
      %v1991 = vmul.f32 %v1655, %v1937
      %v1992 = vmul.f32 %v1656, %v1939
      %v1993 = vmul.f32 %v1657, %v1941
      %v1994 = vmul.f32 %v1658, %v1943
      %v1995 = vmul.f32 %v1659, %v1945
      %v1996 = vmul.f32 %v1660, %v1947
      %v1997 = vmul.f32 %v1661, %v1949
      %1999 = vset.pattern.permute.xlu0 32
      %2000 = vperm.xlu0 %1999, %v515
      %v2001 = vpop.permute.xlu0 %2000
      %2004 = vset.pattern.permute.xlu0 32
      %2005 = vperm.xlu0 %2004, %v516
      %v2006 = vpop.permute.xlu0 %2005
      %vm2008 = vcmask 130048
      %v2009 = vsel %vm2008, %v515, 0
      %v2011 = vsel %vm2008, %v516, 0
      %2013 = vmatprep.subr.mxu0 %v1951
      %2014 = vmatpush1.msra.mxu0 %v1950
      %2015 = vmatprep.subr.mxu0 %v1975
      %2016 = vmatpush1.msra.mxu0 %v1974
      %2017 = vmatprep.subr.mxu0 0.0
      %2018 = vmatpush1.msra.mxu0 0.0
      %2019 = vmatprep.subr.mxu0 0.0
      %2020 = vmatpush1.msra.mxu0 0.0
      %2021 = vmatprep.subr.mxu0 0.0
      %2022 = vmatpush1.msra.mxu0 0.0
      %2023 = vmatprep.subr.mxu0 0.0
      %2024 = vmatpush1.msra.mxu0 0.0
      %2025 = vmatprep.subr.mxu0 0.0
      %2026 = vmatpush1.msra.mxu0 0.0
      %2027 = vmatprep.subr.mxu0 0.0
      %2028 = vmatpush1.msra.mxu0 0.0
      %2029 = vmatprep.subr.mxu0 0.0
      %2030 = vmatpush1.msra.mxu0 0.0
      %2031 = vmatprep.subr.mxu0 0.0
      %2032 = vmatpush1.msra.mxu0 0.0
      %2033 = vmatprep.subr.mxu0 0.0
      %2034 = vmatpush1.msra.mxu0 0.0
      %2035 = vmatprep.subr.mxu0 0.0
      %2036 = vmatpush1.msra.mxu0 0.0
      %2037 = vmatprep.subr.mxu0 0.0
      %2038 = vmatpush1.msra.mxu0 0.0
      %2039 = vmatprep.subr.mxu0 0.0
      %2040 = vmatpush1.msra.mxu0 0.0
      %2041 = vmatprep.subr.mxu0 0.0
      %2042 = vmatpush1.msra.mxu0 0.0
      %2043 = vmatprep.subr.mxu0 0.0
      %2044 = vmatpush1.msra.mxu0 0.0
      %2045 = vmatprep.subr.mxu0 0.0
      %2046 = vmatpush1.msra.mxu0 0.0
      %2047 = vmatprep.subr.mxu0 0.0
      %2048 = vmatpush1.msra.mxu0 0.0
      %2049 = vmatprep.subr.mxu0 0.0
      %2050 = vmatpush1.msra.mxu0 0.0
      %2051 = vmatprep.subr.mxu0 0.0
      %2052 = vmatpush1.msra.mxu0 0.0
      %2053 = vmatprep.subr.mxu0 0.0
      %2054 = vmatpush1.msra.mxu0 0.0
      %2055 = vmatprep.subr.mxu0 0.0
      %2056 = vmatpush1.msra.mxu0 0.0
      %2057 = vmatprep.subr.mxu0 0.0
      %2058 = vmatpush1.msra.mxu0 0.0
      %2059 = vmatprep.subr.mxu0 0.0
      %2060 = vmatpush1.msra.mxu0 0.0
      %2061 = vmatprep.subr.mxu0 0.0
      %2062 = vmatpush1.msra.mxu0 0.0
      %2063 = vmatprep.subr.mxu0 0.0
      %2064 = vmatpush1.msra.mxu0 0.0
      %2065 = vmatprep.subr.mxu0 0.0
      %2066 = vmatpush1.msra.mxu0 0.0
      %2067 = vmatprep.subr.mxu0 0.0
      %2068 = vmatpush1.msra.mxu0 0.0
      %2069 = vmatprep.subr.mxu0 0.0
      %2070 = vmatpush1.msra.mxu0 0.0
      %2071 = vmatprep.subr.mxu0 0.0
      %2072 = vmatpush1.msra.mxu0 0.0
      %2073 = vmatprep.subr.mxu0 0.0
      %2074 = vmatpush1.msra.mxu0 0.0
      %2075 = vmatprep.subr.mxu0 0.0
      %2076 = vmatpush1.msra.mxu0 0.0
      %2077 = vmatprep.mubr.f32.mxu0 0.0
      %2078 = vmatmul.mubr.f32.gmra.mrb[0].mxu0 %v2009
      %v2079 = vpop.f32.mrb[0].mxu0
      %v2080 = vadd.f32 %v2001, %v2079
      %v2081 = vpop.f32.mrb[0].mxu0
      %v2082 = vadd.f32 %v2001, %v2081
      %2083 = vmatprep.mubr.f32.mxu0 0.0
      %2084 = vmatmul.mubr.f32.gmra.mrb[0].mxu0 %v2011
      %v2085 = vpop.f32.mrb[0].mxu0
      %v2086 = vadd.f32 %v2006, %v2085
      %v2087 = vpop.f32.mrb[0].mxu0
      %v2088 = vadd.f32 %v2006, %v2087
      %2089 = vdwg.mxu0
      %2090 = vmatprep.subr.mxu0 %v1953
      %2091 = vmatpush1.msra.mxu0 %v1952
      %2092 = vmatprep.subr.mxu0 %v1977
      %2093 = vmatpush1.msra.mxu0 %v1976
      %2094 = vmatprep.subr.mxu0 0.0
      %2095 = vmatpush1.msra.mxu0 0.0
      %2096 = vmatprep.subr.mxu0 0.0
      %2097 = vmatpush1.msra.mxu0 0.0
      %2098 = vmatprep.subr.mxu0 0.0
      %2099 = vmatpush1.msra.mxu0 0.0
      %2100 = vmatprep.subr.mxu0 0.0
      %2101 = vmatpush1.msra.mxu0 0.0
      %2102 = vmatprep.subr.mxu0 0.0
      %2103 = vmatpush1.msra.mxu0 0.0
      %2104 = vmatprep.subr.mxu0 0.0
      %2105 = vmatpush1.msra.mxu0 0.0
      %2106 = vmatprep.subr.mxu0 0.0
      %2107 = vmatpush1.msra.mxu0 0.0
      %2108 = vmatprep.subr.mxu0 0.0
      %2109 = vmatpush1.msra.mxu0 0.0
      %2110 = vmatprep.subr.mxu0 0.0
      %2111 = vmatpush1.msra.mxu0 0.0
      %2112 = vmatprep.subr.mxu0 0.0
      %2113 = vmatpush1.msra.mxu0 0.0
      %2114 = vmatprep.subr.mxu0 0.0
      %2115 = vmatpush1.msra.mxu0 0.0
      %2116 = vmatprep.subr.mxu0 0.0
      %2117 = vmatpush1.msra.mxu0 0.0
      %2118 = vmatprep.subr.mxu0 0.0
      %2119 = vmatpush1.msra.mxu0 0.0
      %2120 = vmatprep.subr.mxu0 0.0
      %2121 = vmatpush1.msra.mxu0 0.0
      %2122 = vmatprep.subr.mxu0 0.0
      %2123 = vmatpush1.msra.mxu0 0.0
      %2124 = vmatprep.subr.mxu0 0.0
      %2125 = vmatpush1.msra.mxu0 0.0
      %2126 = vmatprep.subr.mxu0 0.0
      %2127 = vmatpush1.msra.mxu0 0.0
      %2128 = vmatprep.subr.mxu0 0.0
      %2129 = vmatpush1.msra.mxu0 0.0
      %2130 = vmatprep.subr.mxu0 0.0
      %2131 = vmatpush1.msra.mxu0 0.0
      %2132 = vmatprep.subr.mxu0 0.0
      %2133 = vmatpush1.msra.mxu0 0.0
      %2134 = vmatprep.subr.mxu0 0.0
      %2135 = vmatpush1.msra.mxu0 0.0
      %2136 = vmatprep.subr.mxu0 0.0
      %2137 = vmatpush1.msra.mxu0 0.0
      %2138 = vmatprep.subr.mxu0 0.0
      %2139 = vmatpush1.msra.mxu0 0.0
      %2140 = vmatprep.subr.mxu0 0.0
      %2141 = vmatpush1.msra.mxu0 0.0
      %2142 = vmatprep.subr.mxu0 0.0
      %2143 = vmatpush1.msra.mxu0 0.0
      %2144 = vmatprep.subr.mxu0 0.0
      %2145 = vmatpush1.msra.mxu0 0.0
      %2146 = vmatprep.subr.mxu0 0.0
      %2147 = vmatpush1.msra.mxu0 0.0
      %2148 = vmatprep.subr.mxu0 0.0
      %2149 = vmatpush1.msra.mxu0 0.0
      %2150 = vmatprep.subr.mxu0 0.0
      %2151 = vmatpush1.msra.mxu0 0.0
      %2152 = vmatprep.subr.mxu0 0.0
      %2153 = vmatpush1.msra.mxu0 0.0
      %2154 = vmatprep.mubr.f32.mxu0 0.0
      %2155 = vmatmul.mubr.f32.gmra.mrb[0].mxu0 %v2009
      %v2156 = vpop.f32.mrb[0].mxu0
      %v2157 = vadd.f32 %v2001, %v2156
      %v2158 = vpop.f32.mrb[0].mxu0
      %v2159 = vadd.f32 %v2001, %v2158
      %2160 = vmatprep.mubr.f32.mxu0 0.0
      %2161 = vmatmul.mubr.f32.gmra.mrb[0].mxu0 %v2011
      %v2162 = vpop.f32.mrb[0].mxu0
      %v2163 = vadd.f32 %v2006, %v2162
      %v2164 = vpop.f32.mrb[0].mxu0
      %v2165 = vadd.f32 %v2006, %v2164
      %2166 = vdwg.mxu0
      %2167 = vmatprep.subr.mxu0 %v1955
      %2168 = vmatpush1.msra.mxu0 %v1954
      %2169 = vmatprep.subr.mxu0 %v1979
      %2170 = vmatpush1.msra.mxu0 %v1978
      %2171 = vmatprep.subr.mxu0 0.0
      %2172 = vmatpush1.msra.mxu0 0.0
      %2173 = vmatprep.subr.mxu0 0.0
      %2174 = vmatpush1.msra.mxu0 0.0
      %2175 = vmatprep.subr.mxu0 0.0
      %2176 = vmatpush1.msra.mxu0 0.0
      %2177 = vmatprep.subr.mxu0 0.0
      %2178 = vmatpush1.msra.mxu0 0.0
      %2179 = vmatprep.subr.mxu0 0.0
      %2180 = vmatpush1.msra.mxu0 0.0
      %2181 = vmatprep.subr.mxu0 0.0
      %2182 = vmatpush1.msra.mxu0 0.0
      %2183 = vmatprep.subr.mxu0 0.0
      %2184 = vmatpush1.msra.mxu0 0.0
      %2185 = vmatprep.subr.mxu0 0.0
      %2186 = vmatpush1.msra.mxu0 0.0
      %2187 = vmatprep.subr.mxu0 0.0
      %2188 = vmatpush1.msra.mxu0 0.0
      %2189 = vmatprep.subr.mxu0 0.0
      %2190 = vmatpush1.msra.mxu0 0.0
      %2191 = vmatprep.subr.mxu0 0.0
      %2192 = vmatpush1.msra.mxu0 0.0
      %2193 = vmatprep.subr.mxu0 0.0
      %2194 = vmatpush1.msra.mxu0 0.0
      %2195 = vmatprep.subr.mxu0 0.0
      %2196 = vmatpush1.msra.mxu0 0.0
      %2197 = vmatprep.subr.mxu0 0.0
      %2198 = vmatpush1.msra.mxu0 0.0
      %2199 = vmatprep.subr.mxu0 0.0
      %2200 = vmatpush1.msra.mxu0 0.0
      %2201 = vmatprep.subr.mxu0 0.0
      %2202 = vmatpush1.msra.mxu0 0.0
      %2203 = vmatprep.subr.mxu0 0.0
      %2204 = vmatpush1.msra.mxu0 0.0
      %2205 = vmatprep.subr.mxu0 0.0
      %2206 = vmatpush1.msra.mxu0 0.0
      %2207 = vmatprep.subr.mxu0 0.0
      %2208 = vmatpush1.msra.mxu0 0.0
      %2209 = vmatprep.subr.mxu0 0.0
      %2210 = vmatpush1.msra.mxu0 0.0
      %2211 = vmatprep.subr.mxu0 0.0
      %2212 = vmatpush1.msra.mxu0 0.0
      %2213 = vmatprep.subr.mxu0 0.0
      %2214 = vmatpush1.msra.mxu0 0.0
      %2215 = vmatprep.subr.mxu0 0.0
      %2216 = vmatpush1.msra.mxu0 0.0
      %2217 = vmatprep.subr.mxu0 0.0
      %2218 = vmatpush1.msra.mxu0 0.0
      %2219 = vmatprep.subr.mxu0 0.0
      %2220 = vmatpush1.msra.mxu0 0.0
      %2221 = vmatprep.subr.mxu0 0.0
      %2222 = vmatpush1.msra.mxu0 0.0
      %2223 = vmatprep.subr.mxu0 0.0
      %2224 = vmatpush1.msra.mxu0 0.0
      %2225 = vmatprep.subr.mxu0 0.0
      %2226 = vmatpush1.msra.mxu0 0.0
      %2227 = vmatprep.subr.mxu0 0.0
      %2228 = vmatpush1.msra.mxu0 0.0
      %2229 = vmatprep.subr.mxu0 0.0
      %2230 = vmatpush1.msra.mxu0 0.0
      %2231 = vmatprep.mubr.f32.mxu0 0.0
      %2232 = vmatmul.mubr.f32.gmra.mrb[0].mxu0 %v2009
      %v2233 = vpop.f32.mrb[0].mxu0
      %v2234 = vadd.f32 %v2001, %v2233
      %v2235 = vpop.f32.mrb[0].mxu0
      %v2236 = vadd.f32 %v2001, %v2235
      %2237 = vmatprep.mubr.f32.mxu0 0.0
      %2238 = vmatmul.mubr.f32.gmra.mrb[0].mxu0 %v2011
      %v2239 = vpop.f32.mrb[0].mxu0
      %v2240 = vadd.f32 %v2006, %v2239
      %v2241 = vpop.f32.mrb[0].mxu0
      %v2242 = vadd.f32 %v2006, %v2241
      %2243 = vdwg.mxu0
      %2244 = vmatprep.subr.mxu0 %v1957
      %2245 = vmatpush1.msra.mxu0 %v1956
      %2246 = vmatprep.subr.mxu0 %v1981
      %2247 = vmatpush1.msra.mxu0 %v1980
      %2248 = vmatprep.subr.mxu0 0.0
      %2249 = vmatpush1.msra.mxu0 0.0
      %2250 = vmatprep.subr.mxu0 0.0
      %2251 = vmatpush1.msra.mxu0 0.0
      %2252 = vmatprep.subr.mxu0 0.0
      %2253 = vmatpush1.msra.mxu0 0.0
      %2254 = vmatprep.subr.mxu0 0.0
      %2255 = vmatpush1.msra.mxu0 0.0
      %2256 = vmatprep.subr.mxu0 0.0
      %2257 = vmatpush1.msra.mxu0 0.0
      %2258 = vmatprep.subr.mxu0 0.0
      %2259 = vmatpush1.msra.mxu0 0.0
      %2260 = vmatprep.subr.mxu0 0.0
      %2261 = vmatpush1.msra.mxu0 0.0
      %2262 = vmatprep.subr.mxu0 0.0
      %2263 = vmatpush1.msra.mxu0 0.0
      %2264 = vmatprep.subr.mxu0 0.0
      %2265 = vmatpush1.msra.mxu0 0.0
      %2266 = vmatprep.subr.mxu0 0.0
      %2267 = vmatpush1.msra.mxu0 0.0
      %2268 = vmatprep.subr.mxu0 0.0
      %2269 = vmatpush1.msra.mxu0 0.0
      %2270 = vmatprep.subr.mxu0 0.0
      %2271 = vmatpush1.msra.mxu0 0.0
      %2272 = vmatprep.subr.mxu0 0.0
      %2273 = vmatpush1.msra.mxu0 0.0
      %2274 = vmatprep.subr.mxu0 0.0
      %2275 = vmatpush1.msra.mxu0 0.0
      %2276 = vmatprep.subr.mxu0 0.0
      %2277 = vmatpush1.msra.mxu0 0.0
      %2278 = vmatprep.subr.mxu0 0.0
      %2279 = vmatpush1.msra.mxu0 0.0
      %2280 = vmatprep.subr.mxu0 0.0
      %2281 = vmatpush1.msra.mxu0 0.0
      %2282 = vmatprep.subr.mxu0 0.0
      %2283 = vmatpush1.msra.mxu0 0.0
      %2284 = vmatprep.subr.mxu0 0.0
      %2285 = vmatpush1.msra.mxu0 0.0
      %2286 = vmatprep.subr.mxu0 0.0
      %2287 = vmatpush1.msra.mxu0 0.0
      %2288 = vmatprep.subr.mxu0 0.0
      %2289 = vmatpush1.msra.mxu0 0.0
      %2290 = vmatprep.subr.mxu0 0.0
      %2291 = vmatpush1.msra.mxu0 0.0
      %2292 = vmatprep.subr.mxu0 0.0
      %2293 = vmatpush1.msra.mxu0 0.0
      %2294 = vmatprep.subr.mxu0 0.0
      %2295 = vmatpush1.msra.mxu0 0.0
      %2296 = vmatprep.subr.mxu0 0.0
      %2297 = vmatpush1.msra.mxu0 0.0
      %2298 = vmatprep.subr.mxu0 0.0
      %2299 = vmatpush1.msra.mxu0 0.0
      %2300 = vmatprep.subr.mxu0 0.0
      %2301 = vmatpush1.msra.mxu0 0.0
      %2302 = vmatprep.subr.mxu0 0.0
      %2303 = vmatpush1.msra.mxu0 0.0
      %2304 = vmatprep.subr.mxu0 0.0
      %2305 = vmatpush1.msra.mxu0 0.0
      %2306 = vmatprep.subr.mxu0 0.0
      %2307 = vmatpush1.msra.mxu0 0.0
      %2308 = vmatprep.mubr.f32.mxu0 0.0
      %2309 = vmatmul.mubr.f32.gmra.mrb[0].mxu0 %v2009
      %v2310 = vpop.f32.mrb[0].mxu0
      %v2311 = vadd.f32 %v2001, %v2310
      %v2312 = vpop.f32.mrb[0].mxu0
      %v2313 = vadd.f32 %v2001, %v2312
      %2314 = vmatprep.mubr.f32.mxu0 0.0
      %2315 = vmatmul.mubr.f32.gmra.mrb[0].mxu0 %v2011
      %v2316 = vpop.f32.mrb[0].mxu0
      %v2317 = vadd.f32 %v2006, %v2316
      %v2318 = vpop.f32.mrb[0].mxu0
      %v2319 = vadd.f32 %v2006, %v2318
      %2320 = vdwg.mxu0
      %2321 = vmatprep.subr.mxu0 %v1959
      %2322 = vmatpush1.msra.mxu0 %v1958
      %2323 = vmatprep.subr.mxu0 %v1983
      %2324 = vmatpush1.msra.mxu0 %v1982
      %2325 = vmatprep.subr.mxu0 0.0
      %2326 = vmatpush1.msra.mxu0 0.0
      %2327 = vmatprep.subr.mxu0 0.0
      %2328 = vmatpush1.msra.mxu0 0.0
      %2329 = vmatprep.subr.mxu0 0.0
      %2330 = vmatpush1.msra.mxu0 0.0
      %2331 = vmatprep.subr.mxu0 0.0
      %2332 = vmatpush1.msra.mxu0 0.0
      %2333 = vmatprep.subr.mxu0 0.0
      %2334 = vmatpush1.msra.mxu0 0.0
      %2335 = vmatprep.subr.mxu0 0.0
      %2336 = vmatpush1.msra.mxu0 0.0
      %2337 = vmatprep.subr.mxu0 0.0
      %2338 = vmatpush1.msra.mxu0 0.0
      %2339 = vmatprep.subr.mxu0 0.0
      %2340 = vmatpush1.msra.mxu0 0.0
      %2341 = vmatprep.subr.mxu0 0.0
      %2342 = vmatpush1.msra.mxu0 0.0
      %2343 = vmatprep.subr.mxu0 0.0
      %2344 = vmatpush1.msra.mxu0 0.0
      %2345 = vmatprep.subr.mxu0 0.0
      %2346 = vmatpush1.msra.mxu0 0.0
      %2347 = vmatprep.subr.mxu0 0.0
      %2348 = vmatpush1.msra.mxu0 0.0
      %2349 = vmatprep.subr.mxu0 0.0
      %2350 = vmatpush1.msra.mxu0 0.0
      %2351 = vmatprep.subr.mxu0 0.0
      %2352 = vmatpush1.msra.mxu0 0.0
      %2353 = vmatprep.subr.mxu0 0.0
      %2354 = vmatpush1.msra.mxu0 0.0
      %2355 = vmatprep.subr.mxu0 0.0
      %2356 = vmatpush1.msra.mxu0 0.0
      %2357 = vmatprep.subr.mxu0 0.0
      %2358 = vmatpush1.msra.mxu0 0.0
      %2359 = vmatprep.subr.mxu0 0.0
      %2360 = vmatpush1.msra.mxu0 0.0
      %2361 = vmatprep.subr.mxu0 0.0
      %2362 = vmatpush1.msra.mxu0 0.0
      %2363 = vmatprep.subr.mxu0 0.0
      %2364 = vmatpush1.msra.mxu0 0.0
      %2365 = vmatprep.subr.mxu0 0.0
      %2366 = vmatpush1.msra.mxu0 0.0
      %2367 = vmatprep.subr.mxu0 0.0
      %2368 = vmatpush1.msra.mxu0 0.0
      %2369 = vmatprep.subr.mxu0 0.0
      %2370 = vmatpush1.msra.mxu0 0.0
      %2371 = vmatprep.subr.mxu0 0.0
      %2372 = vmatpush1.msra.mxu0 0.0
      %2373 = vmatprep.subr.mxu0 0.0
      %2374 = vmatpush1.msra.mxu0 0.0
      %2375 = vmatprep.subr.mxu0 0.0
      %2376 = vmatpush1.msra.mxu0 0.0
      %2377 = vmatprep.subr.mxu0 0.0
      %2378 = vmatpush1.msra.mxu0 0.0
      %2379 = vmatprep.subr.mxu0 0.0
      %2380 = vmatpush1.msra.mxu0 0.0
      %2381 = vmatprep.subr.mxu0 0.0
      %2382 = vmatpush1.msra.mxu0 0.0
      %2383 = vmatprep.subr.mxu0 0.0
      %2384 = vmatpush1.msra.mxu0 0.0
      %2385 = vmatprep.mubr.f32.mxu0 0.0
      %2386 = vmatmul.mubr.f32.gmra.mrb[0].mxu0 %v2009
      %v2387 = vpop.f32.mrb[0].mxu0
      %v2388 = vadd.f32 %v2001, %v2387
      %v2389 = vpop.f32.mrb[0].mxu0
      %v2390 = vadd.f32 %v2001, %v2389
      %2391 = vmatprep.mubr.f32.mxu0 0.0
      %2392 = vmatmul.mubr.f32.gmra.mrb[0].mxu0 %v2011
      %v2393 = vpop.f32.mrb[0].mxu0
      %v2394 = vadd.f32 %v2006, %v2393
      %v2395 = vpop.f32.mrb[0].mxu0
      %v2396 = vadd.f32 %v2006, %v2395
      %2397 = vdwg.mxu0
      %2398 = vmatprep.subr.mxu0 %v1961
      %2399 = vmatpush1.msra.mxu0 %v1960
      %2400 = vmatprep.subr.mxu0 %v1985
      %2401 = vmatpush1.msra.mxu0 %v1984
      %2402 = vmatprep.subr.mxu0 0.0
      %2403 = vmatpush1.msra.mxu0 0.0
      %2404 = vmatprep.subr.mxu0 0.0
      %2405 = vmatpush1.msra.mxu0 0.0
      %2406 = vmatprep.subr.mxu0 0.0
      %2407 = vmatpush1.msra.mxu0 0.0
      %2408 = vmatprep.subr.mxu0 0.0
      %2409 = vmatpush1.msra.mxu0 0.0
      %2410 = vmatprep.subr.mxu0 0.0
      %2411 = vmatpush1.msra.mxu0 0.0
      %2412 = vmatprep.subr.mxu0 0.0
      %2413 = vmatpush1.msra.mxu0 0.0
      %2414 = vmatprep.subr.mxu0 0.0
      %2415 = vmatpush1.msra.mxu0 0.0
      %2416 = vmatprep.subr.mxu0 0.0
      %2417 = vmatpush1.msra.mxu0 0.0
      %2418 = vmatprep.subr.mxu0 0.0
      %2419 = vmatpush1.msra.mxu0 0.0
      %2420 = vmatprep.subr.mxu0 0.0
      %2421 = vmatpush1.msra.mxu0 0.0
      %2422 = vmatprep.subr.mxu0 0.0
      %2423 = vmatpush1.msra.mxu0 0.0
      %2424 = vmatprep.subr.mxu0 0.0
      %2425 = vmatpush1.msra.mxu0 0.0
      %2426 = vmatprep.subr.mxu0 0.0
      %2427 = vmatpush1.msra.mxu0 0.0
      %2428 = vmatprep.subr.mxu0 0.0
      %2429 = vmatpush1.msra.mxu0 0.0
      %2430 = vmatprep.subr.mxu0 0.0
      %2431 = vmatpush1.msra.mxu0 0.0
      %2432 = vmatprep.subr.mxu0 0.0
      %2433 = vmatpush1.msra.mxu0 0.0
      %2434 = vmatprep.subr.mxu0 0.0
      %2435 = vmatpush1.msra.mxu0 0.0
      %2436 = vmatprep.subr.mxu0 0.0
      %2437 = vmatpush1.msra.mxu0 0.0
      %2438 = vmatprep.subr.mxu0 0.0
      %2439 = vmatpush1.msra.mxu0 0.0
      %2440 = vmatprep.subr.mxu0 0.0
      %2441 = vmatpush1.msra.mxu0 0.0
      %2442 = vmatprep.subr.mxu0 0.0
      %2443 = vmatpush1.msra.mxu0 0.0
      %2444 = vmatprep.subr.mxu0 0.0
      %2445 = vmatpush1.msra.mxu0 0.0
      %2446 = vmatprep.subr.mxu0 0.0
      %2447 = vmatpush1.msra.mxu0 0.0
      %2448 = vmatprep.subr.mxu0 0.0
      %2449 = vmatpush1.msra.mxu0 0.0
      %2450 = vmatprep.subr.mxu0 0.0
      %2451 = vmatpush1.msra.mxu0 0.0
      %2452 = vmatprep.subr.mxu0 0.0
      %2453 = vmatpush1.msra.mxu0 0.0
      %2454 = vmatprep.subr.mxu0 0.0
      %2455 = vmatpush1.msra.mxu0 0.0
      %2456 = vmatprep.subr.mxu0 0.0
      %2457 = vmatpush1.msra.mxu0 0.0
      %2458 = vmatprep.subr.mxu0 0.0
      %2459 = vmatpush1.msra.mxu0 0.0
      %2460 = vmatprep.subr.mxu0 0.0
      %2461 = vmatpush1.msra.mxu0 0.0
      %2462 = vmatprep.mubr.f32.mxu0 0.0
      %2463 = vmatmul.mubr.f32.gmra.mrb[0].mxu0 %v2009
      %v2464 = vpop.f32.mrb[0].mxu0
      %v2465 = vadd.f32 %v2001, %v2464
      %v2466 = vpop.f32.mrb[0].mxu0
      %v2467 = vadd.f32 %v2001, %v2466
      %2468 = vmatprep.mubr.f32.mxu0 0.0
      %2469 = vmatmul.mubr.f32.gmra.mrb[0].mxu0 %v2011
      %v2470 = vpop.f32.mrb[0].mxu0
      %v2471 = vadd.f32 %v2006, %v2470
      %v2472 = vpop.f32.mrb[0].mxu0
      %v2473 = vadd.f32 %v2006, %v2472
      %2474 = vdwg.mxu0
      %2475 = vmatprep.subr.mxu0 %v1963
      %2476 = vmatpush1.msra.mxu0 %v1962
      %2477 = vmatprep.subr.mxu0 %v1987
      %2478 = vmatpush1.msra.mxu0 %v1986
      %2479 = vmatprep.subr.mxu0 0.0
      %2480 = vmatpush1.msra.mxu0 0.0
      %2481 = vmatprep.subr.mxu0 0.0
      %2482 = vmatpush1.msra.mxu0 0.0
      %2483 = vmatprep.subr.mxu0 0.0
      %2484 = vmatpush1.msra.mxu0 0.0
      %2485 = vmatprep.subr.mxu0 0.0
      %2486 = vmatpush1.msra.mxu0 0.0
      %2487 = vmatprep.subr.mxu0 0.0
      %2488 = vmatpush1.msra.mxu0 0.0
      %2489 = vmatprep.subr.mxu0 0.0
      %2490 = vmatpush1.msra.mxu0 0.0
      %2491 = vmatprep.subr.mxu0 0.0
      %2492 = vmatpush1.msra.mxu0 0.0
      %2493 = vmatprep.subr.mxu0 0.0
      %2494 = vmatpush1.msra.mxu0 0.0
      %2495 = vmatprep.subr.mxu0 0.0
      %2496 = vmatpush1.msra.mxu0 0.0
      %2497 = vmatprep.subr.mxu0 0.0
      %2498 = vmatpush1.msra.mxu0 0.0
      %2499 = vmatprep.subr.mxu0 0.0
      %2500 = vmatpush1.msra.mxu0 0.0
      %2501 = vmatprep.subr.mxu0 0.0
      %2502 = vmatpush1.msra.mxu0 0.0
      %2503 = vmatprep.subr.mxu0 0.0
      %2504 = vmatpush1.msra.mxu0 0.0
      %2505 = vmatprep.subr.mxu0 0.0
      %2506 = vmatpush1.msra.mxu0 0.0
      %2507 = vmatprep.subr.mxu0 0.0
      %2508 = vmatpush1.msra.mxu0 0.0
      %2509 = vmatprep.subr.mxu0 0.0
      %2510 = vmatpush1.msra.mxu0 0.0
      %2511 = vmatprep.subr.mxu0 0.0
      %2512 = vmatpush1.msra.mxu0 0.0
      %2513 = vmatprep.subr.mxu0 0.0
      %2514 = vmatpush1.msra.mxu0 0.0
      %2515 = vmatprep.subr.mxu0 0.0
      %2516 = vmatpush1.msra.mxu0 0.0
      %2517 = vmatprep.subr.mxu0 0.0
      %2518 = vmatpush1.msra.mxu0 0.0
      %2519 = vmatprep.subr.mxu0 0.0
      %2520 = vmatpush1.msra.mxu0 0.0
      %2521 = vmatprep.subr.mxu0 0.0
      %2522 = vmatpush1.msra.mxu0 0.0
      %2523 = vmatprep.subr.mxu0 0.0
      %2524 = vmatpush1.msra.mxu0 0.0
      %2525 = vmatprep.subr.mxu0 0.0
      %2526 = vmatpush1.msra.mxu0 0.0
      %2527 = vmatprep.subr.mxu0 0.0
      %2528 = vmatpush1.msra.mxu0 0.0
      %2529 = vmatprep.subr.mxu0 0.0
      %2530 = vmatpush1.msra.mxu0 0.0
      %2531 = vmatprep.subr.mxu0 0.0
      %2532 = vmatpush1.msra.mxu0 0.0
      %2533 = vmatprep.subr.mxu0 0.0
      %2534 = vmatpush1.msra.mxu0 0.0
      %2535 = vmatprep.subr.mxu0 0.0
      %2536 = vmatpush1.msra.mxu0 0.0
      %2537 = vmatprep.subr.mxu0 0.0
      %2538 = vmatpush1.msra.mxu0 0.0
      %2539 = vmatprep.mubr.f32.mxu0 0.0
      %2540 = vmatmul.mubr.f32.gmra.mrb[0].mxu0 %v2009
      %v2541 = vpop.f32.mrb[0].mxu0
      %v2542 = vadd.f32 %v2001, %v2541
      %v2543 = vpop.f32.mrb[0].mxu0
      %v2544 = vadd.f32 %v2001, %v2543
      %2545 = vmatprep.mubr.f32.mxu0 0.0
      %2546 = vmatmul.mubr.f32.gmra.mrb[0].mxu0 %v2011
      %v2547 = vpop.f32.mrb[0].mxu0
      %v2548 = vadd.f32 %v2006, %v2547
      %v2549 = vpop.f32.mrb[0].mxu0
      %v2550 = vadd.f32 %v2006, %v2549
      %2551 = vdwg.mxu0
      %2552 = vmatprep.subr.mxu0 %v1965
      %2553 = vmatpush1.msra.mxu0 %v1964
      %2554 = vmatprep.subr.mxu0 %v1989
      %2555 = vmatpush1.msra.mxu0 %v1988
      %2556 = vmatprep.subr.mxu0 0.0
      %2557 = vmatpush1.msra.mxu0 0.0
      %2558 = vmatprep.subr.mxu0 0.0
      %2559 = vmatpush1.msra.mxu0 0.0
      %2560 = vmatprep.subr.mxu0 0.0
      %2561 = vmatpush1.msra.mxu0 0.0
      %2562 = vmatprep.subr.mxu0 0.0
      %2563 = vmatpush1.msra.mxu0 0.0
      %2564 = vmatprep.subr.mxu0 0.0
      %2565 = vmatpush1.msra.mxu0 0.0
      %2566 = vmatprep.subr.mxu0 0.0
      %2567 = vmatpush1.msra.mxu0 0.0
      %2568 = vmatprep.subr.mxu0 0.0
      %2569 = vmatpush1.msra.mxu0 0.0
      %2570 = vmatprep.subr.mxu0 0.0
      %2571 = vmatpush1.msra.mxu0 0.0
      %2572 = vmatprep.subr.mxu0 0.0
      %2573 = vmatpush1.msra.mxu0 0.0
      %2574 = vmatprep.subr.mxu0 0.0
      %2575 = vmatpush1.msra.mxu0 0.0
      %2576 = vmatprep.subr.mxu0 0.0
      %2577 = vmatpush1.msra.mxu0 0.0
      %2578 = vmatprep.subr.mxu0 0.0
      %2579 = vmatpush1.msra.mxu0 0.0
      %2580 = vmatprep.subr.mxu0 0.0
      %2581 = vmatpush1.msra.mxu0 0.0
      %2582 = vmatprep.subr.mxu0 0.0
      %2583 = vmatpush1.msra.mxu0 0.0
      %2584 = vmatprep.subr.mxu0 0.0
      %2585 = vmatpush1.msra.mxu0 0.0
      %2586 = vmatprep.subr.mxu0 0.0
      %2587 = vmatpush1.msra.mxu0 0.0
      %2588 = vmatprep.subr.mxu0 0.0
      %2589 = vmatpush1.msra.mxu0 0.0
      %2590 = vmatprep.subr.mxu0 0.0
      %2591 = vmatpush1.msra.mxu0 0.0
      %2592 = vmatprep.subr.mxu0 0.0
      %2593 = vmatpush1.msra.mxu0 0.0
      %2594 = vmatprep.subr.mxu0 0.0
      %2595 = vmatpush1.msra.mxu0 0.0
      %2596 = vmatprep.subr.mxu0 0.0
      %2597 = vmatpush1.msra.mxu0 0.0
      %2598 = vmatprep.subr.mxu0 0.0
      %2599 = vmatpush1.msra.mxu0 0.0
      %2600 = vmatprep.subr.mxu0 0.0
      %2601 = vmatpush1.msra.mxu0 0.0
      %2602 = vmatprep.subr.mxu0 0.0
      %2603 = vmatpush1.msra.mxu0 0.0
      %2604 = vmatprep.subr.mxu0 0.0
      %2605 = vmatpush1.msra.mxu0 0.0
      %2606 = vmatprep.subr.mxu0 0.0
      %2607 = vmatpush1.msra.mxu0 0.0
      %2608 = vmatprep.subr.mxu0 0.0
      %2609 = vmatpush1.msra.mxu0 0.0
      %2610 = vmatprep.subr.mxu0 0.0
      %2611 = vmatpush1.msra.mxu0 0.0
      %2612 = vmatprep.subr.mxu0 0.0
      %2613 = vmatpush1.msra.mxu0 0.0
      %2614 = vmatprep.subr.mxu0 0.0
      %2615 = vmatpush1.msra.mxu0 0.0
      %2616 = vmatprep.mubr.f32.mxu0 0.0
      %2617 = vmatmul.mubr.f32.gmra.mrb[0].mxu0 %v2009
      %v2618 = vpop.f32.mrb[0].mxu0
      %v2619 = vadd.f32 %v2001, %v2618
      %v2620 = vpop.f32.mrb[0].mxu0
      %v2621 = vadd.f32 %v2001, %v2620
      %2622 = vmatprep.mubr.f32.mxu0 0.0
      %2623 = vmatmul.mubr.f32.gmra.mrb[0].mxu0 %v2011
      %v2624 = vpop.f32.mrb[0].mxu0
      %v2625 = vadd.f32 %v2006, %v2624
      %v2626 = vpop.f32.mrb[0].mxu0
      %v2627 = vadd.f32 %v2006, %v2626
      %2628 = vdwg.mxu0
      %2629 = vmatprep.subr.mxu0 %v1967
      %2630 = vmatpush1.msra.mxu0 %v1966
      %2631 = vmatprep.subr.mxu0 %v1991
      %2632 = vmatpush1.msra.mxu0 %v1990
      %2633 = vmatprep.subr.mxu0 0.0
      %2634 = vmatpush1.msra.mxu0 0.0
      %2635 = vmatprep.subr.mxu0 0.0
      %2636 = vmatpush1.msra.mxu0 0.0
      %2637 = vmatprep.subr.mxu0 0.0
      %2638 = vmatpush1.msra.mxu0 0.0
      %2639 = vmatprep.subr.mxu0 0.0
      %2640 = vmatpush1.msra.mxu0 0.0
      %2641 = vmatprep.subr.mxu0 0.0
      %2642 = vmatpush1.msra.mxu0 0.0
      %2643 = vmatprep.subr.mxu0 0.0
      %2644 = vmatpush1.msra.mxu0 0.0
      %2645 = vmatprep.subr.mxu0 0.0
      %2646 = vmatpush1.msra.mxu0 0.0
      %2647 = vmatprep.subr.mxu0 0.0
      %2648 = vmatpush1.msra.mxu0 0.0
      %2649 = vmatprep.subr.mxu0 0.0
      %2650 = vmatpush1.msra.mxu0 0.0
      %2651 = vmatprep.subr.mxu0 0.0
      %2652 = vmatpush1.msra.mxu0 0.0
      %2653 = vmatprep.subr.mxu0 0.0
      %2654 = vmatpush1.msra.mxu0 0.0
      %2655 = vmatprep.subr.mxu0 0.0
      %2656 = vmatpush1.msra.mxu0 0.0
      %2657 = vmatprep.subr.mxu0 0.0
      %2658 = vmatpush1.msra.mxu0 0.0
      %2659 = vmatprep.subr.mxu0 0.0
      %2660 = vmatpush1.msra.mxu0 0.0
      %2661 = vmatprep.subr.mxu0 0.0
      %2662 = vmatpush1.msra.mxu0 0.0
      %2663 = vmatprep.subr.mxu0 0.0
      %2664 = vmatpush1.msra.mxu0 0.0
      %2665 = vmatprep.subr.mxu0 0.0
      %2666 = vmatpush1.msra.mxu0 0.0
      %2667 = vmatprep.subr.mxu0 0.0
      %2668 = vmatpush1.msra.mxu0 0.0
      %2669 = vmatprep.subr.mxu0 0.0
      %2670 = vmatpush1.msra.mxu0 0.0
      %2671 = vmatprep.subr.mxu0 0.0
      %2672 = vmatpush1.msra.mxu0 0.0
      %2673 = vmatprep.subr.mxu0 0.0
      %2674 = vmatpush1.msra.mxu0 0.0
      %2675 = vmatprep.subr.mxu0 0.0
      %2676 = vmatpush1.msra.mxu0 0.0
      %2677 = vmatprep.subr.mxu0 0.0
      %2678 = vmatpush1.msra.mxu0 0.0
      %2679 = vmatprep.subr.mxu0 0.0
      %2680 = vmatpush1.msra.mxu0 0.0
      %2681 = vmatprep.subr.mxu0 0.0
      %2682 = vmatpush1.msra.mxu0 0.0
      %2683 = vmatprep.subr.mxu0 0.0
      %2684 = vmatpush1.msra.mxu0 0.0
      %2685 = vmatprep.subr.mxu0 0.0
      %2686 = vmatpush1.msra.mxu0 0.0
      %2687 = vmatprep.subr.mxu0 0.0
      %2688 = vmatpush1.msra.mxu0 0.0
      %2689 = vmatprep.subr.mxu0 0.0
      %2690 = vmatpush1.msra.mxu0 0.0
      %2691 = vmatprep.subr.mxu0 0.0
      %2692 = vmatpush1.msra.mxu0 0.0
      %2693 = vmatprep.mubr.f32.mxu0 0.0
      %2694 = vmatmul.mubr.f32.gmra.mrb[0].mxu0 %v2009
      %v2695 = vpop.f32.mrb[0].mxu0
      %v2696 = vadd.f32 %v2001, %v2695
      %v2697 = vpop.f32.mrb[0].mxu0
      %v2698 = vadd.f32 %v2001, %v2697
      %2699 = vmatprep.mubr.f32.mxu0 0.0
      %2700 = vmatmul.mubr.f32.gmra.mrb[0].mxu0 %v2011
      %v2701 = vpop.f32.mrb[0].mxu0
      %v2702 = vadd.f32 %v2006, %v2701
      %v2703 = vpop.f32.mrb[0].mxu0
      %v2704 = vadd.f32 %v2006, %v2703
      %2705 = vdwg.mxu0
      %2706 = vmatprep.subr.mxu0 %v1969
      %2707 = vmatpush1.msra.mxu0 %v1968
      %2708 = vmatprep.subr.mxu0 %v1993
      %2709 = vmatpush1.msra.mxu0 %v1992
      %2710 = vmatprep.subr.mxu0 0.0
      %2711 = vmatpush1.msra.mxu0 0.0
      %2712 = vmatprep.subr.mxu0 0.0
      %2713 = vmatpush1.msra.mxu0 0.0
      %2714 = vmatprep.subr.mxu0 0.0
      %2715 = vmatpush1.msra.mxu0 0.0
      %2716 = vmatprep.subr.mxu0 0.0
      %2717 = vmatpush1.msra.mxu0 0.0
      %2718 = vmatprep.subr.mxu0 0.0
      %2719 = vmatpush1.msra.mxu0 0.0
      %2720 = vmatprep.subr.mxu0 0.0
      %2721 = vmatpush1.msra.mxu0 0.0
      %2722 = vmatprep.subr.mxu0 0.0
      %2723 = vmatpush1.msra.mxu0 0.0
      %2724 = vmatprep.subr.mxu0 0.0
      %2725 = vmatpush1.msra.mxu0 0.0
      %2726 = vmatprep.subr.mxu0 0.0
      %2727 = vmatpush1.msra.mxu0 0.0
      %2728 = vmatprep.subr.mxu0 0.0
      %2729 = vmatpush1.msra.mxu0 0.0
      %2730 = vmatprep.subr.mxu0 0.0
      %2731 = vmatpush1.msra.mxu0 0.0
      %2732 = vmatprep.subr.mxu0 0.0
      %2733 = vmatpush1.msra.mxu0 0.0
      %2734 = vmatprep.subr.mxu0 0.0
      %2735 = vmatpush1.msra.mxu0 0.0
      %2736 = vmatprep.subr.mxu0 0.0
      %2737 = vmatpush1.msra.mxu0 0.0
      %2738 = vmatprep.subr.mxu0 0.0
      %2739 = vmatpush1.msra.mxu0 0.0
      %2740 = vmatprep.subr.mxu0 0.0
      %2741 = vmatpush1.msra.mxu0 0.0
      %2742 = vmatprep.subr.mxu0 0.0
      %2743 = vmatpush1.msra.mxu0 0.0
      %2744 = vmatprep.subr.mxu0 0.0
      %2745 = vmatpush1.msra.mxu0 0.0
      %2746 = vmatprep.subr.mxu0 0.0
      %2747 = vmatpush1.msra.mxu0 0.0
      %2748 = vmatprep.subr.mxu0 0.0
      %2749 = vmatpush1.msra.mxu0 0.0
      %2750 = vmatprep.subr.mxu0 0.0
      %2751 = vmatpush1.msra.mxu0 0.0
      %2752 = vmatprep.subr.mxu0 0.0
      %2753 = vmatpush1.msra.mxu0 0.0
      %2754 = vmatprep.subr.mxu0 0.0
      %2755 = vmatpush1.msra.mxu0 0.0
      %2756 = vmatprep.subr.mxu0 0.0
      %2757 = vmatpush1.msra.mxu0 0.0
      %2758 = vmatprep.subr.mxu0 0.0
      %2759 = vmatpush1.msra.mxu0 0.0
      %2760 = vmatprep.subr.mxu0 0.0
      %2761 = vmatpush1.msra.mxu0 0.0
      %2762 = vmatprep.subr.mxu0 0.0
      %2763 = vmatpush1.msra.mxu0 0.0
      %2764 = vmatprep.subr.mxu0 0.0
      %2765 = vmatpush1.msra.mxu0 0.0
      %2766 = vmatprep.subr.mxu0 0.0
      %2767 = vmatpush1.msra.mxu0 0.0
      %2768 = vmatprep.subr.mxu0 0.0
      %2769 = vmatpush1.msra.mxu0 0.0
      %2770 = vmatprep.mubr.f32.mxu0 0.0
      %2771 = vmatmul.mubr.f32.gmra.mrb[0].mxu0 %v2009
      %v2772 = vpop.f32.mrb[0].mxu0
      %v2773 = vadd.f32 %v2001, %v2772
      %v2774 = vpop.f32.mrb[0].mxu0
      %v2775 = vadd.f32 %v2001, %v2774
      %2776 = vmatprep.mubr.f32.mxu0 0.0
      %2777 = vmatmul.mubr.f32.gmra.mrb[0].mxu0 %v2011
      %v2778 = vpop.f32.mrb[0].mxu0
      %v2779 = vadd.f32 %v2006, %v2778
      %v2780 = vpop.f32.mrb[0].mxu0
      %v2781 = vadd.f32 %v2006, %v2780
      %2782 = vdwg.mxu0
      %2783 = vmatprep.subr.mxu0 %v1971
      %2784 = vmatpush1.msra.mxu0 %v1970
      %2785 = vmatprep.subr.mxu0 %v1995
      %2786 = vmatpush1.msra.mxu0 %v1994
      %2787 = vmatprep.subr.mxu0 0.0
      %2788 = vmatpush1.msra.mxu0 0.0
      %2789 = vmatprep.subr.mxu0 0.0
      %2790 = vmatpush1.msra.mxu0 0.0
      %2791 = vmatprep.subr.mxu0 0.0
      %2792 = vmatpush1.msra.mxu0 0.0
      %2793 = vmatprep.subr.mxu0 0.0
      %2794 = vmatpush1.msra.mxu0 0.0
      %2795 = vmatprep.subr.mxu0 0.0
      %2796 = vmatpush1.msra.mxu0 0.0
      %2797 = vmatprep.subr.mxu0 0.0
      %2798 = vmatpush1.msra.mxu0 0.0
      %2799 = vmatprep.subr.mxu0 0.0
      %2800 = vmatpush1.msra.mxu0 0.0
      %2801 = vmatprep.subr.mxu0 0.0
      %2802 = vmatpush1.msra.mxu0 0.0
      %2803 = vmatprep.subr.mxu0 0.0
      %2804 = vmatpush1.msra.mxu0 0.0
      %2805 = vmatprep.subr.mxu0 0.0
      %2806 = vmatpush1.msra.mxu0 0.0
      %2807 = vmatprep.subr.mxu0 0.0
      %2808 = vmatpush1.msra.mxu0 0.0
      %2809 = vmatprep.subr.mxu0 0.0
      %2810 = vmatpush1.msra.mxu0 0.0
      %2811 = vmatprep.subr.mxu0 0.0
      %2812 = vmatpush1.msra.mxu0 0.0
      %2813 = vmatprep.subr.mxu0 0.0
      %2814 = vmatpush1.msra.mxu0 0.0
      %2815 = vmatprep.subr.mxu0 0.0
      %2816 = vmatpush1.msra.mxu0 0.0
      %2817 = vmatprep.subr.mxu0 0.0
      %2818 = vmatpush1.msra.mxu0 0.0
      %2819 = vmatprep.subr.mxu0 0.0
      %2820 = vmatpush1.msra.mxu0 0.0
      %2821 = vmatprep.subr.mxu0 0.0
      %2822 = vmatpush1.msra.mxu0 0.0
      %2823 = vmatprep.subr.mxu0 0.0
      %2824 = vmatpush1.msra.mxu0 0.0
      %2825 = vmatprep.subr.mxu0 0.0
      %2826 = vmatpush1.msra.mxu0 0.0
      %2827 = vmatprep.subr.mxu0 0.0
      %2828 = vmatpush1.msra.mxu0 0.0
      %2829 = vmatprep.subr.mxu0 0.0
      %2830 = vmatpush1.msra.mxu0 0.0
      %2831 = vmatprep.subr.mxu0 0.0
      %2832 = vmatpush1.msra.mxu0 0.0
      %2833 = vmatprep.subr.mxu0 0.0
      %2834 = vmatpush1.msra.mxu0 0.0
      %2835 = vmatprep.subr.mxu0 0.0
      %2836 = vmatpush1.msra.mxu0 0.0
      %2837 = vmatprep.subr.mxu0 0.0
      %2838 = vmatpush1.msra.mxu0 0.0
      %2839 = vmatprep.subr.mxu0 0.0
      %2840 = vmatpush1.msra.mxu0 0.0
      %2841 = vmatprep.subr.mxu0 0.0
      %2842 = vmatpush1.msra.mxu0 0.0
      %2843 = vmatprep.subr.mxu0 0.0
      %2844 = vmatpush1.msra.mxu0 0.0
      %2845 = vmatprep.subr.mxu0 0.0
      %2846 = vmatpush1.msra.mxu0 0.0
      %2847 = vmatprep.mubr.f32.mxu0 0.0
      %2848 = vmatmul.mubr.f32.gmra.mrb[0].mxu0 %v2009
      %v2849 = vpop.f32.mrb[0].mxu0
      %v2850 = vadd.f32 %v2001, %v2849
      %v2851 = vpop.f32.mrb[0].mxu0
      %v2852 = vadd.f32 %v2001, %v2851
      %2853 = vmatprep.mubr.f32.mxu0 0.0
      %2854 = vmatmul.mubr.f32.gmra.mrb[0].mxu0 %v2011
      %v2855 = vpop.f32.mrb[0].mxu0
      %v2856 = vadd.f32 %v2006, %v2855
      %v2857 = vpop.f32.mrb[0].mxu0
      %v2858 = vadd.f32 %v2006, %v2857
      %2859 = vdwg.mxu0
      %2860 = vmatprep.subr.mxu0 %v1973
      %2861 = vmatpush1.msra.mxu0 %v1972
      %2862 = vmatprep.subr.mxu0 %v1997
      %2863 = vmatpush1.msra.mxu0 %v1996
      %2864 = vmatprep.subr.mxu0 0.0
      %2865 = vmatpush1.msra.mxu0 0.0
      %2866 = vmatprep.subr.mxu0 0.0
      %2867 = vmatpush1.msra.mxu0 0.0
      %2868 = vmatprep.subr.mxu0 0.0
      %2869 = vmatpush1.msra.mxu0 0.0
      %2870 = vmatprep.subr.mxu0 0.0
      %2871 = vmatpush1.msra.mxu0 0.0
      %2872 = vmatprep.subr.mxu0 0.0
      %2873 = vmatpush1.msra.mxu0 0.0
      %2874 = vmatprep.subr.mxu0 0.0
      %2875 = vmatpush1.msra.mxu0 0.0
      %2876 = vmatprep.subr.mxu0 0.0
      %2877 = vmatpush1.msra.mxu0 0.0
      %2878 = vmatprep.subr.mxu0 0.0
      %2879 = vmatpush1.msra.mxu0 0.0
      %2880 = vmatprep.subr.mxu0 0.0
      %2881 = vmatpush1.msra.mxu0 0.0
      %2882 = vmatprep.subr.mxu0 0.0
      %2883 = vmatpush1.msra.mxu0 0.0
      %2884 = vmatprep.subr.mxu0 0.0
      %2885 = vmatpush1.msra.mxu0 0.0
      %2886 = vmatprep.subr.mxu0 0.0
      %2887 = vmatpush1.msra.mxu0 0.0
      %2888 = vmatprep.subr.mxu0 0.0
      %2889 = vmatpush1.msra.mxu0 0.0
      %2890 = vmatprep.subr.mxu0 0.0
      %2891 = vmatpush1.msra.mxu0 0.0
      %2892 = vmatprep.subr.mxu0 0.0
      %2893 = vmatpush1.msra.mxu0 0.0
      %2894 = vmatprep.subr.mxu0 0.0
      %2895 = vmatpush1.msra.mxu0 0.0
      %2896 = vmatprep.subr.mxu0 0.0
      %2897 = vmatpush1.msra.mxu0 0.0
      %2898 = vmatprep.subr.mxu0 0.0
      %2899 = vmatpush1.msra.mxu0 0.0
      %2900 = vmatprep.subr.mxu0 0.0
      %2901 = vmatpush1.msra.mxu0 0.0
      %2902 = vmatprep.subr.mxu0 0.0
      %2903 = vmatpush1.msra.mxu0 0.0
      %2904 = vmatprep.subr.mxu0 0.0
      %2905 = vmatpush1.msra.mxu0 0.0
      %2906 = vmatprep.subr.mxu0 0.0
      %2907 = vmatpush1.msra.mxu0 0.0
      %2908 = vmatprep.subr.mxu0 0.0
      %2909 = vmatpush1.msra.mxu0 0.0
      %2910 = vmatprep.subr.mxu0 0.0
      %2911 = vmatpush1.msra.mxu0 0.0
      %2912 = vmatprep.subr.mxu0 0.0
      %2913 = vmatpush1.msra.mxu0 0.0
      %2914 = vmatprep.subr.mxu0 0.0
      %2915 = vmatpush1.msra.mxu0 0.0
      %2916 = vmatprep.subr.mxu0 0.0
      %2917 = vmatpush1.msra.mxu0 0.0
      %2918 = vmatprep.subr.mxu0 0.0
      %2919 = vmatpush1.msra.mxu0 0.0
      %2920 = vmatprep.subr.mxu0 0.0
      %2921 = vmatpush1.msra.mxu0 0.0
      %2922 = vmatprep.subr.mxu0 0.0
      %2923 = vmatpush1.msra.mxu0 0.0
      %2924 = vmatprep.mubr.f32.mxu0 0.0
      %2925 = vmatmul.mubr.f32.gmra.mrb[0].mxu0 %v2009
      %v2926 = vpop.f32.mrb[0].mxu0
      %v2927 = vadd.f32 %v2001, %v2926
      %v2928 = vpop.f32.mrb[0].mxu0
      %v2929 = vadd.f32 %v2001, %v2928
      %2930 = vmatprep.mubr.f32.mxu0 0.0
      %2931 = vmatmul.mubr.f32.gmra.mrb[0].mxu0 %v2011
      %v2932 = vpop.f32.mrb[0].mxu0
      %v2933 = vadd.f32 %v2006, %v2932
      %v2934 = vpop.f32.mrb[0].mxu0
      %v2935 = vadd.f32 %v2006, %v2934
      %2936 = vdwg.mxu0
      %v2937 = vadd.f32 %v2080, %v461
      %v2938 = vadd.f32 %v2082, %v462
      %v2939 = vadd.f32 %v2157, %v463
      %v2940 = vadd.f32 %v2159, %v464
      %v2941 = vadd.f32 %v2234, %v465
      %v2942 = vadd.f32 %v2236, %v466
      %v2943 = vadd.f32 %v2311, %v467
      %v2944 = vadd.f32 %v2313, %v468
      %v2945 = vadd.f32 %v2388, %v469
      %v2946 = vadd.f32 %v2390, %v470
      %v2947 = vadd.f32 %v2465, %v471
      %v2948 = vadd.f32 %v2467, %v472
      %v2949 = vadd.f32 %v2542, %v473
      %v2950 = vadd.f32 %v2544, %v474
      %v2951 = vadd.f32 %v2619, %v475
      %v2952 = vadd.f32 %v2621, %v476
      %v2953 = vadd.f32 %v2696, %v477
      %v2954 = vadd.f32 %v2698, %v478
      %v2955 = vadd.f32 %v2773, %v479
      %v2956 = vadd.f32 %v2775, %v480
      %v2957 = vadd.f32 %v2850, %v481
      %v2958 = vadd.f32 %v2852, %v482
      %v2959 = vadd.f32 %v2927, %v483
      %v2960 = vadd.f32 %v2929, %v484
      %v2961 = vadd.f32 %v2086, %v487
      %v2962 = vadd.f32 %v2088, %v488
      %v2963 = vadd.f32 %v2163, %v489
      %v2964 = vadd.f32 %v2165, %v490
      %v2965 = vadd.f32 %v2240, %v491
      %v2966 = vadd.f32 %v2242, %v492
      %v2967 = vadd.f32 %v2317, %v493
      %v2968 = vadd.f32 %v2319, %v494
      %v2969 = vadd.f32 %v2394, %v495
      %v2970 = vadd.f32 %v2396, %v496
      %v2971 = vadd.f32 %v2471, %v497
      %v2972 = vadd.f32 %v2473, %v498
      %v2973 = vadd.f32 %v2548, %v499
      %v2974 = vadd.f32 %v2550, %v500
      %v2975 = vadd.f32 %v2625, %v501
      %v2976 = vadd.f32 %v2627, %v502
      %v2977 = vadd.f32 %v2702, %v503
      %v2978 = vadd.f32 %v2704, %v504
      %v2979 = vadd.f32 %v2779, %v505
      %v2980 = vadd.f32 %v2781, %v506
      %v2981 = vadd.f32 %v2856, %v507
      %v2982 = vadd.f32 %v2858, %v508
      %v2983 = vadd.f32 %v2933, %v509
      %v2984 = vadd.f32 %v2935, %v510
      %s2985 = scalar_lea.vmem %s1, 48
      %v2986 = vld [vmem:[%s2985] sm:$0xff]
      %v2987 = vld [vmem:[%s2985 + $0x8] sm:$0xff]
      %v2988 = vld [vmem:[%s2985 + $0x10] sm:$0xff]
      %v2989 = vld [vmem:[%s2985 + $0x18] sm:$0xff]
      %v2990 = vld [vmem:[%s2985 + $0x20] sm:$0xff]
      %v2991 = vld [vmem:[%s2985 + $0x28] sm:$0xff]
      %2993 = vset.pattern.permute.xlu0 32
      %2994 = vperm.xlu0 %2993, %v2986
      %v2995 = vpop.permute.xlu0 %2994
      %2998 = vset.pattern.permute.xlu0 32
      %2999 = vperm.xlu0 %2998, %v2987
      %v3000 = vpop.permute.xlu0 %2999
      %3003 = vset.pattern.permute.xlu0 32
      %3004 = vperm.xlu0 %3003, %v2988
      %v3005 = vpop.permute.xlu0 %3004
      %3008 = vset.pattern.permute.xlu0 32
      %3009 = vperm.xlu0 %3008, %v2989
      %v3010 = vpop.permute.xlu0 %3009
      %v3012 = vsel %vm537, %v2986, 0
      %v3014 = vsel %vm537, %v2987, 0
      %v3016 = vsel %vm537, %v2988, 0
      %v3018 = vsel %vm537, %v2989, 0
      %3020 = vmatprep.subr.mxu0 %v2938
      %3021 = vmatpush1.msra.mxu0 %v2937
      %3022 = vmatprep.subr.mxu0 %v2962
      %3023 = vmatpush1.msra.mxu0 %v2961
      %3024 = vmatprep.subr.mxu0 %v2942
      %3025 = vmatpush1.msra.mxu0 %v2941
      %3026 = vmatprep.subr.mxu0 %v2966
      %3027 = vmatpush1.msra.mxu0 %v2965
      %3028 = vmatprep.subr.mxu0 0.0
      %3029 = vmatpush1.msra.mxu0 0.0
      %3030 = vmatprep.subr.mxu0 0.0
      %3031 = vmatpush1.msra.mxu0 0.0
      %3032 = vmatprep.subr.mxu0 0.0
      %3033 = vmatpush1.msra.mxu0 0.0
      %3034 = vmatprep.subr.mxu0 0.0
      %3035 = vmatpush1.msra.mxu0 0.0
      %3036 = vmatprep.subr.mxu0 0.0
      %3037 = vmatpush1.msra.mxu0 0.0
      %3038 = vmatprep.subr.mxu0 0.0
      %3039 = vmatpush1.msra.mxu0 0.0
      %3040 = vmatprep.subr.mxu0 0.0
      %3041 = vmatpush1.msra.mxu0 0.0
      %3042 = vmatprep.subr.mxu0 0.0
      %3043 = vmatpush1.msra.mxu0 0.0
      %3044 = vmatprep.subr.mxu0 0.0
      %3045 = vmatpush1.msra.mxu0 0.0
      %3046 = vmatprep.subr.mxu0 0.0
      %3047 = vmatpush1.msra.mxu0 0.0
      %3048 = vmatprep.subr.mxu0 0.0
      %3049 = vmatpush1.msra.mxu0 0.0
      %3050 = vmatprep.subr.mxu0 0.0
      %3051 = vmatpush1.msra.mxu0 0.0
      %3052 = vmatprep.subr.mxu0 0.0
      %3053 = vmatpush1.msra.mxu0 0.0
      %3054 = vmatprep.subr.mxu0 0.0
      %3055 = vmatpush1.msra.mxu0 0.0
      %3056 = vmatprep.subr.mxu0 0.0
      %3057 = vmatpush1.msra.mxu0 0.0
      %3058 = vmatprep.subr.mxu0 0.0
      %3059 = vmatpush1.msra.mxu0 0.0
      %3060 = vmatprep.subr.mxu0 0.0
      %3061 = vmatpush1.msra.mxu0 0.0
      %3062 = vmatprep.subr.mxu0 0.0
      %3063 = vmatpush1.msra.mxu0 0.0
      %3064 = vmatprep.subr.mxu0 0.0
      %3065 = vmatpush1.msra.mxu0 0.0
      %3066 = vmatprep.subr.mxu0 0.0
      %3067 = vmatpush1.msra.mxu0 0.0
      %3068 = vmatprep.subr.mxu0 0.0
      %3069 = vmatpush1.msra.mxu0 0.0
      %3070 = vmatprep.subr.mxu0 0.0
      %3071 = vmatpush1.msra.mxu0 0.0
      %3072 = vmatprep.subr.mxu0 0.0
      %3073 = vmatpush1.msra.mxu0 0.0
      %3074 = vmatprep.subr.mxu0 0.0
      %3075 = vmatpush1.msra.mxu0 0.0
      %3076 = vmatprep.subr.mxu0 0.0
      %3077 = vmatpush1.msra.mxu0 0.0
      %3078 = vmatprep.subr.mxu0 0.0
      %3079 = vmatpush1.msra.mxu0 0.0
      %3080 = vmatprep.subr.mxu0 0.0
      %3081 = vmatpush1.msra.mxu0 0.0
      %3082 = vmatprep.subr.mxu0 0.0
      %3083 = vmatpush1.msra.mxu0 0.0
      %3084 = vmatprep.mubr.f32.mxu0 0.0
      %3085 = vmatmul.mubr.f32.gmra.mrb[0].mxu0 %v3012
      %v3086 = vpop.f32.mrb[0].mxu0
      %v3087 = vadd.f32 %v2995, %v3086
      %v3088 = vpop.f32.mrb[0].mxu0
      %v3089 = vadd.f32 %v2995, %v3088
      %3090 = vmatprep.mubr.f32.mxu0 0.0
      %3091 = vmatmul.mubr.f32.gmra.mrb[0].mxu0 %v3014
      %v3092 = vpop.f32.mrb[0].mxu0
      %v3093 = vadd.f32 %v3000, %v3092
      %v3094 = vpop.f32.mrb[0].mxu0
      %v3095 = vadd.f32 %v3000, %v3094
      %3096 = vmatprep.mubr.f32.mxu0 0.0
      %3097 = vmatmul.mubr.f32.gmra.mrb[0].mxu0 %v3016
      %v3098 = vpop.f32.mrb[0].mxu0
      %v3099 = vadd.f32 %v3005, %v3098
      %v3100 = vpop.f32.mrb[0].mxu0
      %v3101 = vadd.f32 %v3005, %v3100
      %3102 = vmatprep.mubr.f32.mxu0 0.0
      %3103 = vmatmul.mubr.f32.gmra.mrb[0].mxu0 %v3018
      %v3104 = vpop.f32.mrb[0].mxu0
      %v3105 = vadd.f32 %v3010, %v3104
      %v3106 = vpop.f32.mrb[0].mxu0
      %v3107 = vadd.f32 %v3010, %v3106
      %3108 = vdwg.mxu0
      %3109 = vmatprep.subr.mxu0 %v2940
      %3110 = vmatpush1.msra.mxu0 %v2939
      %3111 = vmatprep.subr.mxu0 %v2964
      %3112 = vmatpush1.msra.mxu0 %v2963
      %3113 = vmatprep.subr.mxu0 %v2944
      %3114 = vmatpush1.msra.mxu0 %v2943
      %3115 = vmatprep.subr.mxu0 %v2968
      %3116 = vmatpush1.msra.mxu0 %v2967
      %3117 = vmatprep.subr.mxu0 0.0
      %3118 = vmatpush1.msra.mxu0 0.0
      %3119 = vmatprep.subr.mxu0 0.0
      %3120 = vmatpush1.msra.mxu0 0.0
      %3121 = vmatprep.subr.mxu0 0.0
      %3122 = vmatpush1.msra.mxu0 0.0
      %3123 = vmatprep.subr.mxu0 0.0
      %3124 = vmatpush1.msra.mxu0 0.0
      %3125 = vmatprep.subr.mxu0 0.0
      %3126 = vmatpush1.msra.mxu0 0.0
      %3127 = vmatprep.subr.mxu0 0.0
      %3128 = vmatpush1.msra.mxu0 0.0
      %3129 = vmatprep.subr.mxu0 0.0
      %3130 = vmatpush1.msra.mxu0 0.0
      %3131 = vmatprep.subr.mxu0 0.0
      %3132 = vmatpush1.msra.mxu0 0.0
      %3133 = vmatprep.subr.mxu0 0.0
      %3134 = vmatpush1.msra.mxu0 0.0
      %3135 = vmatprep.subr.mxu0 0.0
      %3136 = vmatpush1.msra.mxu0 0.0
      %3137 = vmatprep.subr.mxu0 0.0
      %3138 = vmatpush1.msra.mxu0 0.0
      %3139 = vmatprep.subr.mxu0 0.0
      %3140 = vmatpush1.msra.mxu0 0.0
      %3141 = vmatprep.subr.mxu0 0.0
      %3142 = vmatpush1.msra.mxu0 0.0
      %3143 = vmatprep.subr.mxu0 0.0
      %3144 = vmatpush1.msra.mxu0 0.0
      %3145 = vmatprep.subr.mxu0 0.0
      %3146 = vmatpush1.msra.mxu0 0.0
      %3147 = vmatprep.subr.mxu0 0.0
      %3148 = vmatpush1.msra.mxu0 0.0
      %3149 = vmatprep.subr.mxu0 0.0
      %3150 = vmatpush1.msra.mxu0 0.0
      %3151 = vmatprep.subr.mxu0 0.0
      %3152 = vmatpush1.msra.mxu0 0.0
      %3153 = vmatprep.subr.mxu0 0.0
      %3154 = vmatpush1.msra.mxu0 0.0
      %3155 = vmatprep.subr.mxu0 0.0
      %3156 = vmatpush1.msra.mxu0 0.0
      %3157 = vmatprep.subr.mxu0 0.0
      %3158 = vmatpush1.msra.mxu0 0.0
      %3159 = vmatprep.subr.mxu0 0.0
      %3160 = vmatpush1.msra.mxu0 0.0
      %3161 = vmatprep.subr.mxu0 0.0
      %3162 = vmatpush1.msra.mxu0 0.0
      %3163 = vmatprep.subr.mxu0 0.0
      %3164 = vmatpush1.msra.mxu0 0.0
      %3165 = vmatprep.subr.mxu0 0.0
      %3166 = vmatpush1.msra.mxu0 0.0
      %3167 = vmatprep.subr.mxu0 0.0
      %3168 = vmatpush1.msra.mxu0 0.0
      %3169 = vmatprep.subr.mxu0 0.0
      %3170 = vmatpush1.msra.mxu0 0.0
      %3171 = vmatprep.subr.mxu0 0.0
      %3172 = vmatpush1.msra.mxu0 0.0
      %3173 = vmatprep.mubr.f32.mxu0 0.0
      %3174 = vmatmul.mubr.f32.gmra.mrb[0].mxu0 %v3012
      %v3175 = vpop.f32.mrb[0].mxu0
      %v3176 = vadd.f32 %v2995, %v3175
      %v3177 = vpop.f32.mrb[0].mxu0
      %v3178 = vadd.f32 %v2995, %v3177
      %3179 = vmatprep.mubr.f32.mxu0 0.0
      %3180 = vmatmul.mubr.f32.gmra.mrb[0].mxu0 %v3014
      %v3181 = vpop.f32.mrb[0].mxu0
      %v3182 = vadd.f32 %v3000, %v3181
      %v3183 = vpop.f32.mrb[0].mxu0
      %v3184 = vadd.f32 %v3000, %v3183
      %3185 = vmatprep.mubr.f32.mxu0 0.0
      %3186 = vmatmul.mubr.f32.gmra.mrb[0].mxu0 %v3016
      %v3187 = vpop.f32.mrb[0].mxu0
      %v3188 = vadd.f32 %v3005, %v3187
      %v3189 = vpop.f32.mrb[0].mxu0
      %v3190 = vadd.f32 %v3005, %v3189
      %3191 = vmatprep.mubr.f32.mxu0 0.0
      %3192 = vmatmul.mubr.f32.gmra.mrb[0].mxu0 %v3018
      %v3193 = vpop.f32.mrb[0].mxu0
      %v3194 = vadd.f32 %v3010, %v3193
      %v3195 = vpop.f32.mrb[0].mxu0
      %v3196 = vadd.f32 %v3010, %v3195
      %3197 = vdwg.mxu0
      %3198 = vmatprep.subr.mxu0 %v2942
      %3199 = vmatpush1.msra.mxu0 %v2941
      %3200 = vmatprep.subr.mxu0 %v2966
      %3201 = vmatpush1.msra.mxu0 %v2965
      %3202 = vmatprep.subr.mxu0 %v2946
      %3203 = vmatpush1.msra.mxu0 %v2945
      %3204 = vmatprep.subr.mxu0 %v2970
      %3205 = vmatpush1.msra.mxu0 %v2969
      %3206 = vmatprep.subr.mxu0 0.0
      %3207 = vmatpush1.msra.mxu0 0.0
      %3208 = vmatprep.subr.mxu0 0.0
      %3209 = vmatpush1.msra.mxu0 0.0
      %3210 = vmatprep.subr.mxu0 0.0
      %3211 = vmatpush1.msra.mxu0 0.0
      %3212 = vmatprep.subr.mxu0 0.0
      %3213 = vmatpush1.msra.mxu0 0.0
      %3214 = vmatprep.subr.mxu0 0.0
      %3215 = vmatpush1.msra.mxu0 0.0
      %3216 = vmatprep.subr.mxu0 0.0
      %3217 = vmatpush1.msra.mxu0 0.0
      %3218 = vmatprep.subr.mxu0 0.0
      %3219 = vmatpush1.msra.mxu0 0.0
      %3220 = vmatprep.subr.mxu0 0.0
      %3221 = vmatpush1.msra.mxu0 0.0
      %3222 = vmatprep.subr.mxu0 0.0
      %3223 = vmatpush1.msra.mxu0 0.0
      %3224 = vmatprep.subr.mxu0 0.0
      %3225 = vmatpush1.msra.mxu0 0.0
      %3226 = vmatprep.subr.mxu0 0.0
      %3227 = vmatpush1.msra.mxu0 0.0
      %3228 = vmatprep.subr.mxu0 0.0
      %3229 = vmatpush1.msra.mxu0 0.0
      %3230 = vmatprep.subr.mxu0 0.0
      %3231 = vmatpush1.msra.mxu0 0.0
      %3232 = vmatprep.subr.mxu0 0.0
      %3233 = vmatpush1.msra.mxu0 0.0
      %3234 = vmatprep.subr.mxu0 0.0
      %3235 = vmatpush1.msra.mxu0 0.0
      %3236 = vmatprep.subr.mxu0 0.0
      %3237 = vmatpush1.msra.mxu0 0.0
      %3238 = vmatprep.subr.mxu0 0.0
      %3239 = vmatpush1.msra.mxu0 0.0
      %3240 = vmatprep.subr.mxu0 0.0
      %3241 = vmatpush1.msra.mxu0 0.0
      %3242 = vmatprep.subr.mxu0 0.0
      %3243 = vmatpush1.msra.mxu0 0.0
      %3244 = vmatprep.subr.mxu0 0.0
      %3245 = vmatpush1.msra.mxu0 0.0
      %3246 = vmatprep.subr.mxu0 0.0
      %3247 = vmatpush1.msra.mxu0 0.0
      %3248 = vmatprep.subr.mxu0 0.0
      %3249 = vmatpush1.msra.mxu0 0.0
      %3250 = vmatprep.subr.mxu0 0.0
      %3251 = vmatpush1.msra.mxu0 0.0
      %3252 = vmatprep.subr.mxu0 0.0
      %3253 = vmatpush1.msra.mxu0 0.0
      %3254 = vmatprep.subr.mxu0 0.0
      %3255 = vmatpush1.msra.mxu0 0.0
      %3256 = vmatprep.subr.mxu0 0.0
      %3257 = vmatpush1.msra.mxu0 0.0
      %3258 = vmatprep.subr.mxu0 0.0
      %3259 = vmatpush1.msra.mxu0 0.0
      %3260 = vmatprep.subr.mxu0 0.0
      %3261 = vmatpush1.msra.mxu0 0.0
      %3262 = vmatprep.mubr.f32.mxu0 0.0
      %3263 = vmatmul.mubr.f32.gmra.mrb[0].mxu0 %v3012
      %v3264 = vpop.f32.mrb[0].mxu0
      %v3265 = vadd.f32 %v2995, %v3264
      %v3266 = vpop.f32.mrb[0].mxu0
      %v3267 = vadd.f32 %v2995, %v3266
      %3268 = vmatprep.mubr.f32.mxu0 0.0
      %3269 = vmatmul.mubr.f32.gmra.mrb[0].mxu0 %v3014
      %v3270 = vpop.f32.mrb[0].mxu0
      %v3271 = vadd.f32 %v3000, %v3270
      %v3272 = vpop.f32.mrb[0].mxu0
      %v3273 = vadd.f32 %v3000, %v3272
      %3274 = vmatprep.mubr.f32.mxu0 0.0
      %3275 = vmatmul.mubr.f32.gmra.mrb[0].mxu0 %v3016
      %v3276 = vpop.f32.mrb[0].mxu0
      %v3277 = vadd.f32 %v3005, %v3276
      %v3278 = vpop.f32.mrb[0].mxu0
      %v3279 = vadd.f32 %v3005, %v3278
      %3280 = vmatprep.mubr.f32.mxu0 0.0
      %3281 = vmatmul.mubr.f32.gmra.mrb[0].mxu0 %v3018
      %v3282 = vpop.f32.mrb[0].mxu0
      %v3283 = vadd.f32 %v3010, %v3282
      %v3284 = vpop.f32.mrb[0].mxu0
      %v3285 = vadd.f32 %v3010, %v3284
      %3286 = vdwg.mxu0
      %3287 = vmatprep.subr.mxu0 %v2944
      %3288 = vmatpush1.msra.mxu0 %v2943
      %3289 = vmatprep.subr.mxu0 %v2968
      %3290 = vmatpush1.msra.mxu0 %v2967
      %3291 = vmatprep.subr.mxu0 %v2948
      %3292 = vmatpush1.msra.mxu0 %v2947
      %3293 = vmatprep.subr.mxu0 %v2972
      %3294 = vmatpush1.msra.mxu0 %v2971
      %3295 = vmatprep.subr.mxu0 0.0
      %3296 = vmatpush1.msra.mxu0 0.0
      %3297 = vmatprep.subr.mxu0 0.0
      %3298 = vmatpush1.msra.mxu0 0.0
      %3299 = vmatprep.subr.mxu0 0.0
      %3300 = vmatpush1.msra.mxu0 0.0
      %3301 = vmatprep.subr.mxu0 0.0
      %3302 = vmatpush1.msra.mxu0 0.0
      %3303 = vmatprep.subr.mxu0 0.0
      %3304 = vmatpush1.msra.mxu0 0.0
      %3305 = vmatprep.subr.mxu0 0.0
      %3306 = vmatpush1.msra.mxu0 0.0
      %3307 = vmatprep.subr.mxu0 0.0
      %3308 = vmatpush1.msra.mxu0 0.0
      %3309 = vmatprep.subr.mxu0 0.0
      %3310 = vmatpush1.msra.mxu0 0.0
      %3311 = vmatprep.subr.mxu0 0.0
      %3312 = vmatpush1.msra.mxu0 0.0
      %3313 = vmatprep.subr.mxu0 0.0
      %3314 = vmatpush1.msra.mxu0 0.0
      %3315 = vmatprep.subr.mxu0 0.0
      %3316 = vmatpush1.msra.mxu0 0.0
      %3317 = vmatprep.subr.mxu0 0.0
      %3318 = vmatpush1.msra.mxu0 0.0
      %3319 = vmatprep.subr.mxu0 0.0
      %3320 = vmatpush1.msra.mxu0 0.0
      %3321 = vmatprep.subr.mxu0 0.0
      %3322 = vmatpush1.msra.mxu0 0.0
      %3323 = vmatprep.subr.mxu0 0.0
      %3324 = vmatpush1.msra.mxu0 0.0
      %3325 = vmatprep.subr.mxu0 0.0
      %3326 = vmatpush1.msra.mxu0 0.0
      %3327 = vmatprep.subr.mxu0 0.0
      %3328 = vmatpush1.msra.mxu0 0.0
      %3329 = vmatprep.subr.mxu0 0.0
      %3330 = vmatpush1.msra.mxu0 0.0
      %3331 = vmatprep.subr.mxu0 0.0
      %3332 = vmatpush1.msra.mxu0 0.0
      %3333 = vmatprep.subr.mxu0 0.0
      %3334 = vmatpush1.msra.mxu0 0.0
      %3335 = vmatprep.subr.mxu0 0.0
      %3336 = vmatpush1.msra.mxu0 0.0
      %3337 = vmatprep.subr.mxu0 0.0
      %3338 = vmatpush1.msra.mxu0 0.0
      %3339 = vmatprep.subr.mxu0 0.0
      %3340 = vmatpush1.msra.mxu0 0.0
      %3341 = vmatprep.subr.mxu0 0.0
      %3342 = vmatpush1.msra.mxu0 0.0
      %3343 = vmatprep.subr.mxu0 0.0
      %3344 = vmatpush1.msra.mxu0 0.0
      %3345 = vmatprep.subr.mxu0 0.0
      %3346 = vmatpush1.msra.mxu0 0.0
      %3347 = vmatprep.subr.mxu0 0.0
      %3348 = vmatpush1.msra.mxu0 0.0
      %3349 = vmatprep.subr.mxu0 0.0
      %3350 = vmatpush1.msra.mxu0 0.0
      %3351 = vmatprep.mubr.f32.mxu0 0.0
      %3352 = vmatmul.mubr.f32.gmra.mrb[0].mxu0 %v3012
      %v3353 = vpop.f32.mrb[0].mxu0
      %v3354 = vadd.f32 %v2995, %v3353
      %v3355 = vpop.f32.mrb[0].mxu0
      %v3356 = vadd.f32 %v2995, %v3355
      %3357 = vmatprep.mubr.f32.mxu0 0.0
      %3358 = vmatmul.mubr.f32.gmra.mrb[0].mxu0 %v3014
      %v3359 = vpop.f32.mrb[0].mxu0
      %v3360 = vadd.f32 %v3000, %v3359
      %v3361 = vpop.f32.mrb[0].mxu0
      %v3362 = vadd.f32 %v3000, %v3361
      %3363 = vmatprep.mubr.f32.mxu0 0.0
      %3364 = vmatmul.mubr.f32.gmra.mrb[0].mxu0 %v3016
      %v3365 = vpop.f32.mrb[0].mxu0
      %v3366 = vadd.f32 %v3005, %v3365
      %v3367 = vpop.f32.mrb[0].mxu0
      %v3368 = vadd.f32 %v3005, %v3367
      %3369 = vmatprep.mubr.f32.mxu0 0.0
      %3370 = vmatmul.mubr.f32.gmra.mrb[0].mxu0 %v3018
      %v3371 = vpop.f32.mrb[0].mxu0
      %v3372 = vadd.f32 %v3010, %v3371
      %v3373 = vpop.f32.mrb[0].mxu0
      %v3374 = vadd.f32 %v3010, %v3373
      %3375 = vdwg.mxu0
      %3376 = vmatprep.subr.mxu0 %v2946
      %3377 = vmatpush1.msra.mxu0 %v2945
      %3378 = vmatprep.subr.mxu0 %v2970
      %3379 = vmatpush1.msra.mxu0 %v2969
      %3380 = vmatprep.subr.mxu0 %v2950
      %3381 = vmatpush1.msra.mxu0 %v2949
      %3382 = vmatprep.subr.mxu0 %v2974
      %3383 = vmatpush1.msra.mxu0 %v2973
      %3384 = vmatprep.subr.mxu0 0.0
      %3385 = vmatpush1.msra.mxu0 0.0
      %3386 = vmatprep.subr.mxu0 0.0
      %3387 = vmatpush1.msra.mxu0 0.0
      %3388 = vmatprep.subr.mxu0 0.0
      %3389 = vmatpush1.msra.mxu0 0.0
      %3390 = vmatprep.subr.mxu0 0.0
      %3391 = vmatpush1.msra.mxu0 0.0
      %3392 = vmatprep.subr.mxu0 0.0
      %3393 = vmatpush1.msra.mxu0 0.0
      %3394 = vmatprep.subr.mxu0 0.0
      %3395 = vmatpush1.msra.mxu0 0.0
      %3396 = vmatprep.subr.mxu0 0.0
      %3397 = vmatpush1.msra.mxu0 0.0
      %3398 = vmatprep.subr.mxu0 0.0
      %3399 = vmatpush1.msra.mxu0 0.0
      %3400 = vmatprep.subr.mxu0 0.0
      %3401 = vmatpush1.msra.mxu0 0.0
      %3402 = vmatprep.subr.mxu0 0.0
      %3403 = vmatpush1.msra.mxu0 0.0
      %3404 = vmatprep.subr.mxu0 0.0
      %3405 = vmatpush1.msra.mxu0 0.0
      %3406 = vmatprep.subr.mxu0 0.0
      %3407 = vmatpush1.msra.mxu0 0.0
      %3408 = vmatprep.subr.mxu0 0.0
      %3409 = vmatpush1.msra.mxu0 0.0
      %3410 = vmatprep.subr.mxu0 0.0
      %3411 = vmatpush1.msra.mxu0 0.0
      %3412 = vmatprep.subr.mxu0 0.0
      %3413 = vmatpush1.msra.mxu0 0.0
      %3414 = vmatprep.subr.mxu0 0.0
      %3415 = vmatpush1.msra.mxu0 0.0
      %3416 = vmatprep.subr.mxu0 0.0
      %3417 = vmatpush1.msra.mxu0 0.0
      %3418 = vmatprep.subr.mxu0 0.0
      %3419 = vmatpush1.msra.mxu0 0.0
      %3420 = vmatprep.subr.mxu0 0.0
      %3421 = vmatpush1.msra.mxu0 0.0
      %3422 = vmatprep.subr.mxu0 0.0
      %3423 = vmatpush1.msra.mxu0 0.0
      %3424 = vmatprep.subr.mxu0 0.0
      %3425 = vmatpush1.msra.mxu0 0.0
      %3426 = vmatprep.subr.mxu0 0.0
      %3427 = vmatpush1.msra.mxu0 0.0
      %3428 = vmatprep.subr.mxu0 0.0
      %3429 = vmatpush1.msra.mxu0 0.0
      %3430 = vmatprep.subr.mxu0 0.0
      %3431 = vmatpush1.msra.mxu0 0.0
      %3432 = vmatprep.subr.mxu0 0.0
      %3433 = vmatpush1.msra.mxu0 0.0
      %3434 = vmatprep.subr.mxu0 0.0
      %3435 = vmatpush1.msra.mxu0 0.0
      %3436 = vmatprep.subr.mxu0 0.0
      %3437 = vmatpush1.msra.mxu0 0.0
      %3438 = vmatprep.subr.mxu0 0.0
      %3439 = vmatpush1.msra.mxu0 0.0
      %3440 = vmatprep.mubr.f32.mxu0 0.0
      %3441 = vmatmul.mubr.f32.gmra.mrb[0].mxu0 %v3012
      %v3442 = vpop.f32.mrb[0].mxu0
      %v3443 = vadd.f32 %v2995, %v3442
      %v3444 = vpop.f32.mrb[0].mxu0
      %v3445 = vadd.f32 %v2995, %v3444
      %3446 = vmatprep.mubr.f32.mxu0 0.0
      %3447 = vmatmul.mubr.f32.gmra.mrb[0].mxu0 %v3014
      %v3448 = vpop.f32.mrb[0].mxu0
      %v3449 = vadd.f32 %v3000, %v3448
      %v3450 = vpop.f32.mrb[0].mxu0
      %v3451 = vadd.f32 %v3000, %v3450
      %3452 = vmatprep.mubr.f32.mxu0 0.0
      %3453 = vmatmul.mubr.f32.gmra.mrb[0].mxu0 %v3016
      %v3454 = vpop.f32.mrb[0].mxu0
      %v3455 = vadd.f32 %v3005, %v3454
      %v3456 = vpop.f32.mrb[0].mxu0
      %v3457 = vadd.f32 %v3005, %v3456
      %3458 = vmatprep.mubr.f32.mxu0 0.0
      %3459 = vmatmul.mubr.f32.gmra.mrb[0].mxu0 %v3018
      %v3460 = vpop.f32.mrb[0].mxu0
      %v3461 = vadd.f32 %v3010, %v3460
      %v3462 = vpop.f32.mrb[0].mxu0
      %v3463 = vadd.f32 %v3010, %v3462
      %3464 = vdwg.mxu0
      %3465 = vmatprep.subr.mxu0 %v2948
      %3466 = vmatpush1.msra.mxu0 %v2947
      %3467 = vmatprep.subr.mxu0 %v2972
      %3468 = vmatpush1.msra.mxu0 %v2971
      %3469 = vmatprep.subr.mxu0 %v2952
      %3470 = vmatpush1.msra.mxu0 %v2951
      %3471 = vmatprep.subr.mxu0 %v2976
      %3472 = vmatpush1.msra.mxu0 %v2975
      %3473 = vmatprep.subr.mxu0 0.0
      %3474 = vmatpush1.msra.mxu0 0.0
      %3475 = vmatprep.subr.mxu0 0.0
      %3476 = vmatpush1.msra.mxu0 0.0
      %3477 = vmatprep.subr.mxu0 0.0
      %3478 = vmatpush1.msra.mxu0 0.0
      %3479 = vmatprep.subr.mxu0 0.0
      %3480 = vmatpush1.msra.mxu0 0.0
      %3481 = vmatprep.subr.mxu0 0.0
      %3482 = vmatpush1.msra.mxu0 0.0
      %3483 = vmatprep.subr.mxu0 0.0
      %3484 = vmatpush1.msra.mxu0 0.0
      %3485 = vmatprep.subr.mxu0 0.0
      %3486 = vmatpush1.msra.mxu0 0.0
      %3487 = vmatprep.subr.mxu0 0.0
      %3488 = vmatpush1.msra.mxu0 0.0
      %3489 = vmatprep.subr.mxu0 0.0
      %3490 = vmatpush1.msra.mxu0 0.0
      %3491 = vmatprep.subr.mxu0 0.0
      %3492 = vmatpush1.msra.mxu0 0.0
      %3493 = vmatprep.subr.mxu0 0.0
      %3494 = vmatpush1.msra.mxu0 0.0
      %3495 = vmatprep.subr.mxu0 0.0
      %3496 = vmatpush1.msra.mxu0 0.0
      %3497 = vmatprep.subr.mxu0 0.0
      %3498 = vmatpush1.msra.mxu0 0.0
      %3499 = vmatprep.subr.mxu0 0.0
      %3500 = vmatpush1.msra.mxu0 0.0
      %3501 = vmatprep.subr.mxu0 0.0
      %3502 = vmatpush1.msra.mxu0 0.0
      %3503 = vmatprep.subr.mxu0 0.0
      %3504 = vmatpush1.msra.mxu0 0.0
      %3505 = vmatprep.subr.mxu0 0.0
      %3506 = vmatpush1.msra.mxu0 0.0
      %3507 = vmatprep.subr.mxu0 0.0
      %3508 = vmatpush1.msra.mxu0 0.0
      %3509 = vmatprep.subr.mxu0 0.0
      %3510 = vmatpush1.msra.mxu0 0.0
      %3511 = vmatprep.subr.mxu0 0.0
      %3512 = vmatpush1.msra.mxu0 0.0
      %3513 = vmatprep.subr.mxu0 0.0
      %3514 = vmatpush1.msra.mxu0 0.0
      %3515 = vmatprep.subr.mxu0 0.0
      %3516 = vmatpush1.msra.mxu0 0.0
      %3517 = vmatprep.subr.mxu0 0.0
      %3518 = vmatpush1.msra.mxu0 0.0
      %3519 = vmatprep.subr.mxu0 0.0
      %3520 = vmatpush1.msra.mxu0 0.0
      %3521 = vmatprep.subr.mxu0 0.0
      %3522 = vmatpush1.msra.mxu0 0.0
      %3523 = vmatprep.subr.mxu0 0.0
      %3524 = vmatpush1.msra.mxu0 0.0
      %3525 = vmatprep.subr.mxu0 0.0
      %3526 = vmatpush1.msra.mxu0 0.0
      %3527 = vmatprep.subr.mxu0 0.0
      %3528 = vmatpush1.msra.mxu0 0.0
      %3529 = vmatprep.mubr.f32.mxu0 0.0
      %3530 = vmatmul.mubr.f32.gmra.mrb[0].mxu0 %v3012
      %v3531 = vpop.f32.mrb[0].mxu0
      %v3532 = vadd.f32 %v2995, %v3531
      %v3533 = vpop.f32.mrb[0].mxu0
      %v3534 = vadd.f32 %v2995, %v3533
      %3535 = vmatprep.mubr.f32.mxu0 0.0
      %3536 = vmatmul.mubr.f32.gmra.mrb[0].mxu0 %v3014
      %v3537 = vpop.f32.mrb[0].mxu0
      %v3538 = vadd.f32 %v3000, %v3537
      %v3539 = vpop.f32.mrb[0].mxu0
      %v3540 = vadd.f32 %v3000, %v3539
      %3541 = vmatprep.mubr.f32.mxu0 0.0
      %3542 = vmatmul.mubr.f32.gmra.mrb[0].mxu0 %v3016
      %v3543 = vpop.f32.mrb[0].mxu0
      %v3544 = vadd.f32 %v3005, %v3543
      %v3545 = vpop.f32.mrb[0].mxu0
      %v3546 = vadd.f32 %v3005, %v3545
      %3547 = vmatprep.mubr.f32.mxu0 0.0
      %3548 = vmatmul.mubr.f32.gmra.mrb[0].mxu0 %v3018
      %v3549 = vpop.f32.mrb[0].mxu0
      %v3550 = vadd.f32 %v3010, %v3549
      %v3551 = vpop.f32.mrb[0].mxu0
      %v3552 = vadd.f32 %v3010, %v3551
      %3553 = vdwg.mxu0
      %3554 = vmatprep.subr.mxu0 %v2950
      %3555 = vmatpush1.msra.mxu0 %v2949
      %3556 = vmatprep.subr.mxu0 %v2974
      %3557 = vmatpush1.msra.mxu0 %v2973
      %3558 = vmatprep.subr.mxu0 %v2954
      %3559 = vmatpush1.msra.mxu0 %v2953
      %3560 = vmatprep.subr.mxu0 %v2978
      %3561 = vmatpush1.msra.mxu0 %v2977
      %3562 = vmatprep.subr.mxu0 0.0
      %3563 = vmatpush1.msra.mxu0 0.0
      %3564 = vmatprep.subr.mxu0 0.0
      %3565 = vmatpush1.msra.mxu0 0.0
      %3566 = vmatprep.subr.mxu0 0.0
      %3567 = vmatpush1.msra.mxu0 0.0
      %3568 = vmatprep.subr.mxu0 0.0
      %3569 = vmatpush1.msra.mxu0 0.0
      %3570 = vmatprep.subr.mxu0 0.0
      %3571 = vmatpush1.msra.mxu0 0.0
      %3572 = vmatprep.subr.mxu0 0.0
      %3573 = vmatpush1.msra.mxu0 0.0
      %3574 = vmatprep.subr.mxu0 0.0
      %3575 = vmatpush1.msra.mxu0 0.0
      %3576 = vmatprep.subr.mxu0 0.0
      %3577 = vmatpush1.msra.mxu0 0.0
      %3578 = vmatprep.subr.mxu0 0.0
      %3579 = vmatpush1.msra.mxu0 0.0
      %3580 = vmatprep.subr.mxu0 0.0
      %3581 = vmatpush1.msra.mxu0 0.0
      %3582 = vmatprep.subr.mxu0 0.0
      %3583 = vmatpush1.msra.mxu0 0.0
      %3584 = vmatprep.subr.mxu0 0.0
      %3585 = vmatpush1.msra.mxu0 0.0
      %3586 = vmatprep.subr.mxu0 0.0
      %3587 = vmatpush1.msra.mxu0 0.0
      %3588 = vmatprep.subr.mxu0 0.0
      %3589 = vmatpush1.msra.mxu0 0.0
      %3590 = vmatprep.subr.mxu0 0.0
      %3591 = vmatpush1.msra.mxu0 0.0
      %3592 = vmatprep.subr.mxu0 0.0
      %3593 = vmatpush1.msra.mxu0 0.0
      %3594 = vmatprep.subr.mxu0 0.0
      %3595 = vmatpush1.msra.mxu0 0.0
      %3596 = vmatprep.subr.mxu0 0.0
      %3597 = vmatpush1.msra.mxu0 0.0
      %3598 = vmatprep.subr.mxu0 0.0
      %3599 = vmatpush1.msra.mxu0 0.0
      %3600 = vmatprep.subr.mxu0 0.0
      %3601 = vmatpush1.msra.mxu0 0.0
      %3602 = vmatprep.subr.mxu0 0.0
      %3603 = vmatpush1.msra.mxu0 0.0
      %3604 = vmatprep.subr.mxu0 0.0
      %3605 = vmatpush1.msra.mxu0 0.0
      %3606 = vmatprep.subr.mxu0 0.0
      %3607 = vmatpush1.msra.mxu0 0.0
      %3608 = vmatprep.subr.mxu0 0.0
      %3609 = vmatpush1.msra.mxu0 0.0
      %3610 = vmatprep.subr.mxu0 0.0
      %3611 = vmatpush1.msra.mxu0 0.0
      %3612 = vmatprep.subr.mxu0 0.0
      %3613 = vmatpush1.msra.mxu0 0.0
      %3614 = vmatprep.subr.mxu0 0.0
      %3615 = vmatpush1.msra.mxu0 0.0
      %3616 = vmatprep.subr.mxu0 0.0
      %3617 = vmatpush1.msra.mxu0 0.0
      %3618 = vmatprep.mubr.f32.mxu0 0.0
      %3619 = vmatmul.mubr.f32.gmra.mrb[0].mxu0 %v3012
      %v3620 = vpop.f32.mrb[0].mxu0
      %v3621 = vadd.f32 %v2995, %v3620
      %v3622 = vpop.f32.mrb[0].mxu0
      %v3623 = vadd.f32 %v2995, %v3622
      %3624 = vmatprep.mubr.f32.mxu0 0.0
      %3625 = vmatmul.mubr.f32.gmra.mrb[0].mxu0 %v3014
      %v3626 = vpop.f32.mrb[0].mxu0
      %v3627 = vadd.f32 %v3000, %v3626
      %v3628 = vpop.f32.mrb[0].mxu0
      %v3629 = vadd.f32 %v3000, %v3628
      %3630 = vmatprep.mubr.f32.mxu0 0.0
      %3631 = vmatmul.mubr.f32.gmra.mrb[0].mxu0 %v3016
      %v3632 = vpop.f32.mrb[0].mxu0
      %v3633 = vadd.f32 %v3005, %v3632
      %v3634 = vpop.f32.mrb[0].mxu0
      %v3635 = vadd.f32 %v3005, %v3634
      %3636 = vmatprep.mubr.f32.mxu0 0.0
      %3637 = vmatmul.mubr.f32.gmra.mrb[0].mxu0 %v3018
      %v3638 = vpop.f32.mrb[0].mxu0
      %v3639 = vadd.f32 %v3010, %v3638
      %v3640 = vpop.f32.mrb[0].mxu0
      %v3641 = vadd.f32 %v3010, %v3640
      %3642 = vdwg.mxu0
      %3643 = vmatprep.subr.mxu0 %v2952
      %3644 = vmatpush1.msra.mxu0 %v2951
      %3645 = vmatprep.subr.mxu0 %v2976
      %3646 = vmatpush1.msra.mxu0 %v2975
      %3647 = vmatprep.subr.mxu0 %v2956
      %3648 = vmatpush1.msra.mxu0 %v2955
      %3649 = vmatprep.subr.mxu0 %v2980
      %3650 = vmatpush1.msra.mxu0 %v2979
      %3651 = vmatprep.subr.mxu0 0.0
      %3652 = vmatpush1.msra.mxu0 0.0
      %3653 = vmatprep.subr.mxu0 0.0
      %3654 = vmatpush1.msra.mxu0 0.0
      %3655 = vmatprep.subr.mxu0 0.0
      %3656 = vmatpush1.msra.mxu0 0.0
      %3657 = vmatprep.subr.mxu0 0.0
      %3658 = vmatpush1.msra.mxu0 0.0
      %3659 = vmatprep.subr.mxu0 0.0
      %3660 = vmatpush1.msra.mxu0 0.0
      %3661 = vmatprep.subr.mxu0 0.0
      %3662 = vmatpush1.msra.mxu0 0.0
      %3663 = vmatprep.subr.mxu0 0.0
      %3664 = vmatpush1.msra.mxu0 0.0
      %3665 = vmatprep.subr.mxu0 0.0
      %3666 = vmatpush1.msra.mxu0 0.0
      %3667 = vmatprep.subr.mxu0 0.0
      %3668 = vmatpush1.msra.mxu0 0.0
      %3669 = vmatprep.subr.mxu0 0.0
      %3670 = vmatpush1.msra.mxu0 0.0
      %3671 = vmatprep.subr.mxu0 0.0
      %3672 = vmatpush1.msra.mxu0 0.0
      %3673 = vmatprep.subr.mxu0 0.0
      %3674 = vmatpush1.msra.mxu0 0.0
      %3675 = vmatprep.subr.mxu0 0.0
      %3676 = vmatpush1.msra.mxu0 0.0
      %3677 = vmatprep.subr.mxu0 0.0
      %3678 = vmatpush1.msra.mxu0 0.0
      %3679 = vmatprep.subr.mxu0 0.0
      %3680 = vmatpush1.msra.mxu0 0.0
      %3681 = vmatprep.subr.mxu0 0.0
      %3682 = vmatpush1.msra.mxu0 0.0
      %3683 = vmatprep.subr.mxu0 0.0
      %3684 = vmatpush1.msra.mxu0 0.0
      %3685 = vmatprep.subr.mxu0 0.0
      %3686 = vmatpush1.msra.mxu0 0.0
      %3687 = vmatprep.subr.mxu0 0.0
      %3688 = vmatpush1.msra.mxu0 0.0
      %3689 = vmatprep.subr.mxu0 0.0
      %3690 = vmatpush1.msra.mxu0 0.0
      %3691 = vmatprep.subr.mxu0 0.0
      %3692 = vmatpush1.msra.mxu0 0.0
      %3693 = vmatprep.subr.mxu0 0.0
      %3694 = vmatpush1.msra.mxu0 0.0
      %3695 = vmatprep.subr.mxu0 0.0
      %3696 = vmatpush1.msra.mxu0 0.0
      %3697 = vmatprep.subr.mxu0 0.0
      %3698 = vmatpush1.msra.mxu0 0.0
      %3699 = vmatprep.subr.mxu0 0.0
      %3700 = vmatpush1.msra.mxu0 0.0
      %3701 = vmatprep.subr.mxu0 0.0
      %3702 = vmatpush1.msra.mxu0 0.0
      %3703 = vmatprep.subr.mxu0 0.0
      %3704 = vmatpush1.msra.mxu0 0.0
      %3705 = vmatprep.subr.mxu0 0.0
      %3706 = vmatpush1.msra.mxu0 0.0
      %3707 = vmatprep.mubr.f32.mxu0 0.0
      %3708 = vmatmul.mubr.f32.gmra.mrb[0].mxu0 %v3012
      %v3709 = vpop.f32.mrb[0].mxu0
      %v3710 = vadd.f32 %v2995, %v3709
      %v3711 = vpop.f32.mrb[0].mxu0
      %v3712 = vadd.f32 %v2995, %v3711
      %3713 = vmatprep.mubr.f32.mxu0 0.0
      %3714 = vmatmul.mubr.f32.gmra.mrb[0].mxu0 %v3014
      %v3715 = vpop.f32.mrb[0].mxu0
      %v3716 = vadd.f32 %v3000, %v3715
      %v3717 = vpop.f32.mrb[0].mxu0
      %v3718 = vadd.f32 %v3000, %v3717
      %3719 = vmatprep.mubr.f32.mxu0 0.0
      %3720 = vmatmul.mubr.f32.gmra.mrb[0].mxu0 %v3016
      %v3721 = vpop.f32.mrb[0].mxu0
      %v3722 = vadd.f32 %v3005, %v3721
      %v3723 = vpop.f32.mrb[0].mxu0
      %v3724 = vadd.f32 %v3005, %v3723
      %3725 = vmatprep.mubr.f32.mxu0 0.0
      %3726 = vmatmul.mubr.f32.gmra.mrb[0].mxu0 %v3018
      %v3727 = vpop.f32.mrb[0].mxu0
      %v3728 = vadd.f32 %v3010, %v3727
      %v3729 = vpop.f32.mrb[0].mxu0
      %v3730 = vadd.f32 %v3010, %v3729
      %3731 = vdwg.mxu0
      %3732 = vmatprep.subr.mxu0 %v2954
      %3733 = vmatpush1.msra.mxu0 %v2953
      %3734 = vmatprep.subr.mxu0 %v2978
      %3735 = vmatpush1.msra.mxu0 %v2977
      %3736 = vmatprep.subr.mxu0 %v2958
      %3737 = vmatpush1.msra.mxu0 %v2957
      %3738 = vmatprep.subr.mxu0 %v2982
      %3739 = vmatpush1.msra.mxu0 %v2981
      %3740 = vmatprep.subr.mxu0 0.0
      %3741 = vmatpush1.msra.mxu0 0.0
      %3742 = vmatprep.subr.mxu0 0.0
      %3743 = vmatpush1.msra.mxu0 0.0
      %3744 = vmatprep.subr.mxu0 0.0
      %3745 = vmatpush1.msra.mxu0 0.0
      %3746 = vmatprep.subr.mxu0 0.0
      %3747 = vmatpush1.msra.mxu0 0.0
      %3748 = vmatprep.subr.mxu0 0.0
      %3749 = vmatpush1.msra.mxu0 0.0
      %3750 = vmatprep.subr.mxu0 0.0
      %3751 = vmatpush1.msra.mxu0 0.0
      %3752 = vmatprep.subr.mxu0 0.0
      %3753 = vmatpush1.msra.mxu0 0.0
      %3754 = vmatprep.subr.mxu0 0.0
      %3755 = vmatpush1.msra.mxu0 0.0
      %3756 = vmatprep.subr.mxu0 0.0
      %3757 = vmatpush1.msra.mxu0 0.0
      %3758 = vmatprep.subr.mxu0 0.0
      %3759 = vmatpush1.msra.mxu0 0.0
      %3760 = vmatprep.subr.mxu0 0.0
      %3761 = vmatpush1.msra.mxu0 0.0
      %3762 = vmatprep.subr.mxu0 0.0
      %3763 = vmatpush1.msra.mxu0 0.0
      %3764 = vmatprep.subr.mxu0 0.0
      %3765 = vmatpush1.msra.mxu0 0.0
      %3766 = vmatprep.subr.mxu0 0.0
      %3767 = vmatpush1.msra.mxu0 0.0
      %3768 = vmatprep.subr.mxu0 0.0
      %3769 = vmatpush1.msra.mxu0 0.0
      %3770 = vmatprep.subr.mxu0 0.0
      %3771 = vmatpush1.msra.mxu0 0.0
      %3772 = vmatprep.subr.mxu0 0.0
      %3773 = vmatpush1.msra.mxu0 0.0
      %3774 = vmatprep.subr.mxu0 0.0
      %3775 = vmatpush1.msra.mxu0 0.0
      %3776 = vmatprep.subr.mxu0 0.0
      %3777 = vmatpush1.msra.mxu0 0.0
      %3778 = vmatprep.subr.mxu0 0.0
      %3779 = vmatpush1.msra.mxu0 0.0
      %3780 = vmatprep.subr.mxu0 0.0
      %3781 = vmatpush1.msra.mxu0 0.0
      %3782 = vmatprep.subr.mxu0 0.0
      %3783 = vmatpush1.msra.mxu0 0.0
      %3784 = vmatprep.subr.mxu0 0.0
      %3785 = vmatpush1.msra.mxu0 0.0
      %3786 = vmatprep.subr.mxu0 0.0
      %3787 = vmatpush1.msra.mxu0 0.0
      %3788 = vmatprep.subr.mxu0 0.0
      %3789 = vmatpush1.msra.mxu0 0.0
      %3790 = vmatprep.subr.mxu0 0.0
      %3791 = vmatpush1.msra.mxu0 0.0
      %3792 = vmatprep.subr.mxu0 0.0
      %3793 = vmatpush1.msra.mxu0 0.0
      %3794 = vmatprep.subr.mxu0 0.0
      %3795 = vmatpush1.msra.mxu0 0.0
      %3796 = vmatprep.mubr.f32.mxu0 0.0
      %3797 = vmatmul.mubr.f32.gmra.mrb[0].mxu0 %v3012
      %v3798 = vpop.f32.mrb[0].mxu0
      %v3799 = vadd.f32 %v2995, %v3798
      %v3800 = vpop.f32.mrb[0].mxu0
      %v3801 = vadd.f32 %v2995, %v3800
      %3802 = vmatprep.mubr.f32.mxu0 0.0
      %3803 = vmatmul.mubr.f32.gmra.mrb[0].mxu0 %v3014
      %v3804 = vpop.f32.mrb[0].mxu0
      %v3805 = vadd.f32 %v3000, %v3804
      %v3806 = vpop.f32.mrb[0].mxu0
      %v3807 = vadd.f32 %v3000, %v3806
      %3808 = vmatprep.mubr.f32.mxu0 0.0
      %3809 = vmatmul.mubr.f32.gmra.mrb[0].mxu0 %v3016
      %v3810 = vpop.f32.mrb[0].mxu0
      %v3811 = vadd.f32 %v3005, %v3810
      %v3812 = vpop.f32.mrb[0].mxu0
      %v3813 = vadd.f32 %v3005, %v3812
      %3814 = vmatprep.mubr.f32.mxu0 0.0
      %3815 = vmatmul.mubr.f32.gmra.mrb[0].mxu0 %v3018
      %v3816 = vpop.f32.mrb[0].mxu0
      %v3817 = vadd.f32 %v3010, %v3816
      %v3818 = vpop.f32.mrb[0].mxu0
      %v3819 = vadd.f32 %v3010, %v3818
      %3820 = vdwg.mxu0
      %3821 = vmatprep.subr.mxu0 %v2956
      %3822 = vmatpush1.msra.mxu0 %v2955
      %3823 = vmatprep.subr.mxu0 %v2980
      %3824 = vmatpush1.msra.mxu0 %v2979
      %3825 = vmatprep.subr.mxu0 %v2960
      %3826 = vmatpush1.msra.mxu0 %v2959
      %3827 = vmatprep.subr.mxu0 %v2984
      %3828 = vmatpush1.msra.mxu0 %v2983
      %3829 = vmatprep.subr.mxu0 0.0
      %3830 = vmatpush1.msra.mxu0 0.0
      %3831 = vmatprep.subr.mxu0 0.0
      %3832 = vmatpush1.msra.mxu0 0.0
      %3833 = vmatprep.subr.mxu0 0.0
      %3834 = vmatpush1.msra.mxu0 0.0
      %3835 = vmatprep.subr.mxu0 0.0
      %3836 = vmatpush1.msra.mxu0 0.0
      %3837 = vmatprep.subr.mxu0 0.0
      %3838 = vmatpush1.msra.mxu0 0.0
      %3839 = vmatprep.subr.mxu0 0.0
      %3840 = vmatpush1.msra.mxu0 0.0
      %3841 = vmatprep.subr.mxu0 0.0
      %3842 = vmatpush1.msra.mxu0 0.0
      %3843 = vmatprep.subr.mxu0 0.0
      %3844 = vmatpush1.msra.mxu0 0.0
      %3845 = vmatprep.subr.mxu0 0.0
      %3846 = vmatpush1.msra.mxu0 0.0
      %3847 = vmatprep.subr.mxu0 0.0
      %3848 = vmatpush1.msra.mxu0 0.0
      %3849 = vmatprep.subr.mxu0 0.0
      %3850 = vmatpush1.msra.mxu0 0.0
      %3851 = vmatprep.subr.mxu0 0.0
      %3852 = vmatpush1.msra.mxu0 0.0
      %3853 = vmatprep.subr.mxu0 0.0
      %3854 = vmatpush1.msra.mxu0 0.0
      %3855 = vmatprep.subr.mxu0 0.0
      %3856 = vmatpush1.msra.mxu0 0.0
      %3857 = vmatprep.subr.mxu0 0.0
      %3858 = vmatpush1.msra.mxu0 0.0
      %3859 = vmatprep.subr.mxu0 0.0
      %3860 = vmatpush1.msra.mxu0 0.0
      %3861 = vmatprep.subr.mxu0 0.0
      %3862 = vmatpush1.msra.mxu0 0.0
      %3863 = vmatprep.subr.mxu0 0.0
      %3864 = vmatpush1.msra.mxu0 0.0
      %3865 = vmatprep.subr.mxu0 0.0
      %3866 = vmatpush1.msra.mxu0 0.0
      %3867 = vmatprep.subr.mxu0 0.0
      %3868 = vmatpush1.msra.mxu0 0.0
      %3869 = vmatprep.subr.mxu0 0.0
      %3870 = vmatpush1.msra.mxu0 0.0
      %3871 = vmatprep.subr.mxu0 0.0
      %3872 = vmatpush1.msra.mxu0 0.0
      %3873 = vmatprep.subr.mxu0 0.0
      %3874 = vmatpush1.msra.mxu0 0.0
      %3875 = vmatprep.subr.mxu0 0.0
      %3876 = vmatpush1.msra.mxu0 0.0
      %3877 = vmatprep.subr.mxu0 0.0
      %3878 = vmatpush1.msra.mxu0 0.0
      %3879 = vmatprep.subr.mxu0 0.0
      %3880 = vmatpush1.msra.mxu0 0.0
      %3881 = vmatprep.subr.mxu0 0.0
      %3882 = vmatpush1.msra.mxu0 0.0
      %3883 = vmatprep.subr.mxu0 0.0
      %3884 = vmatpush1.msra.mxu0 0.0
      %3885 = vmatprep.mubr.f32.mxu0 0.0
      %3886 = vmatmul.mubr.f32.gmra.mrb[0].mxu0 %v3012
      %v3887 = vpop.f32.mrb[0].mxu0
      %v3888 = vadd.f32 %v2995, %v3887
      %v3889 = vpop.f32.mrb[0].mxu0
      %v3890 = vadd.f32 %v2995, %v3889
      %3891 = vmatprep.mubr.f32.mxu0 0.0
      %3892 = vmatmul.mubr.f32.gmra.mrb[0].mxu0 %v3014
      %v3893 = vpop.f32.mrb[0].mxu0
      %v3894 = vadd.f32 %v3000, %v3893
      %v3895 = vpop.f32.mrb[0].mxu0
      %v3896 = vadd.f32 %v3000, %v3895
      %3897 = vmatprep.mubr.f32.mxu0 0.0
      %3898 = vmatmul.mubr.f32.gmra.mrb[0].mxu0 %v3016
      %v3899 = vpop.f32.mrb[0].mxu0
      %v3900 = vadd.f32 %v3005, %v3899
      %v3901 = vpop.f32.mrb[0].mxu0
      %v3902 = vadd.f32 %v3005, %v3901
      %3903 = vmatprep.mubr.f32.mxu0 0.0
      %3904 = vmatmul.mubr.f32.gmra.mrb[0].mxu0 %v3018
      %v3905 = vpop.f32.mrb[0].mxu0
      %v3906 = vadd.f32 %v3010, %v3905
      %v3907 = vpop.f32.mrb[0].mxu0
      %v3908 = vadd.f32 %v3010, %v3907
      %3909 = vdwg.mxu0
      %v3910 = vtanh.pop %v3087
      %v3911 = vtanh.pop %v3089
      %v3912 = vtanh.pop %v3176
      %v3913 = vtanh.pop %v3178
      %v3914 = vtanh.pop %v3265
      %v3915 = vtanh.pop %v3267
      %v3916 = vtanh.pop %v3354
      %v3917 = vtanh.pop %v3356
      %v3918 = vtanh.pop %v3443
      %v3919 = vtanh.pop %v3445
      %v3920 = vtanh.pop %v3532
      %v3921 = vtanh.pop %v3534
      %v3922 = vtanh.pop %v3621
      %v3923 = vtanh.pop %v3623
      %v3924 = vtanh.pop %v3710
      %v3925 = vtanh.pop %v3712
      %v3926 = vtanh.pop %v3799
      %v3927 = vtanh.pop %v3801
      %v3928 = vtanh.pop %v3888
      %v3929 = vtanh.pop %v3890
      %v3930 = vtanh.pop %v3093
      %v3931 = vtanh.pop %v3095
      %v3932 = vtanh.pop %v3182
      %v3933 = vtanh.pop %v3184
      %v3934 = vtanh.pop %v3271
      %v3935 = vtanh.pop %v3273
      %v3936 = vtanh.pop %v3360
      %v3937 = vtanh.pop %v3362
      %v3938 = vtanh.pop %v3449
      %v3939 = vtanh.pop %v3451
      %v3940 = vtanh.pop %v3538
      %v3941 = vtanh.pop %v3540
      %v3942 = vtanh.pop %v3627
      %v3943 = vtanh.pop %v3629
      %v3944 = vtanh.pop %v3716
      %v3945 = vtanh.pop %v3718
      %v3946 = vtanh.pop %v3805
      %v3947 = vtanh.pop %v3807
      %v3948 = vtanh.pop %v3894
      %v3949 = vtanh.pop %v3896
      %v3950 = vxor.u32 %v3099, 2147483648
      %v3951 = vxor.u32 %v3101, 2147483648
      %v3952 = vxor.u32 %v3188, 2147483648
      %v3953 = vxor.u32 %v3190, 2147483648
      %v3954 = vxor.u32 %v3277, 2147483648
      %v3955 = vxor.u32 %v3279, 2147483648
      %v3956 = vxor.u32 %v3366, 2147483648
      %v3957 = vxor.u32 %v3368, 2147483648
      %v3958 = vxor.u32 %v3455, 2147483648
      %v3959 = vxor.u32 %v3457, 2147483648
      %v3960 = vxor.u32 %v3544, 2147483648
      %v3961 = vxor.u32 %v3546, 2147483648
      %v3962 = vxor.u32 %v3633, 2147483648
      %v3963 = vxor.u32 %v3635, 2147483648
      %v3964 = vxor.u32 %v3722, 2147483648
      %v3965 = vxor.u32 %v3724, 2147483648
      %v3966 = vxor.u32 %v3811, 2147483648
      %v3967 = vxor.u32 %v3813, 2147483648
      %v3968 = vxor.u32 %v3900, 2147483648
      %v3969 = vxor.u32 %v3902, 2147483648
      %v3970 = vxor.u32 %v3105, 2147483648
      %v3971 = vxor.u32 %v3107, 2147483648
      %v3972 = vxor.u32 %v3194, 2147483648
      %v3973 = vxor.u32 %v3196, 2147483648
      %v3974 = vxor.u32 %v3283, 2147483648
      %v3975 = vxor.u32 %v3285, 2147483648
      %v3976 = vxor.u32 %v3372, 2147483648
      %v3977 = vxor.u32 %v3374, 2147483648
      %v3978 = vxor.u32 %v3461, 2147483648
      %v3979 = vxor.u32 %v3463, 2147483648
      %v3980 = vxor.u32 %v3550, 2147483648
      %v3981 = vxor.u32 %v3552, 2147483648
      %v3982 = vxor.u32 %v3639, 2147483648
      %v3983 = vxor.u32 %v3641, 2147483648
      %v3984 = vxor.u32 %v3728, 2147483648
      %v3985 = vxor.u32 %v3730, 2147483648
      %v3986 = vxor.u32 %v3817, 2147483648
      %v3987 = vxor.u32 %v3819, 2147483648
      %v3988 = vxor.u32 %v3906, 2147483648
      %v3989 = vxor.u32 %v3908, 2147483648
      %v3990 = vmul.f32 %v3950, 1.442695
      %v3991 = vpow.pop %v3990
      %v3992 = vmul.f32 %v3951, 1.442695
      %v3993 = vpow.pop %v3992
      %v3994 = vmul.f32 %v3952, 1.442695
      %v3995 = vpow.pop %v3994
      %v3996 = vmul.f32 %v3953, 1.442695
      %v3997 = vpow.pop %v3996
      %v3998 = vmul.f32 %v3954, 1.442695
      %v3999 = vpow.pop %v3998
      %v4000 = vmul.f32 %v3955, 1.442695
      %v4001 = vpow.pop %v4000
      %v4002 = vmul.f32 %v3956, 1.442695
      %v4003 = vpow.pop %v4002
      %v4004 = vmul.f32 %v3957, 1.442695
      %v4005 = vpow.pop %v4004
      %v4006 = vmul.f32 %v3958, 1.442695
      %v4007 = vpow.pop %v4006
      %v4008 = vmul.f32 %v3959, 1.442695
      %v4009 = vpow.pop %v4008
      %v4010 = vmul.f32 %v3960, 1.442695
      %v4011 = vpow.pop %v4010
      %v4012 = vmul.f32 %v3961, 1.442695
      %v4013 = vpow.pop %v4012
      %v4014 = vmul.f32 %v3962, 1.442695
      %v4015 = vpow.pop %v4014
      %v4016 = vmul.f32 %v3963, 1.442695
      %v4017 = vpow.pop %v4016
      %v4018 = vmul.f32 %v3964, 1.442695
      %v4019 = vpow.pop %v4018
      %v4020 = vmul.f32 %v3965, 1.442695
      %v4021 = vpow.pop %v4020
      %v4022 = vmul.f32 %v3966, 1.442695
      %v4023 = vpow.pop %v4022
      %v4024 = vmul.f32 %v3967, 1.442695
      %v4025 = vpow.pop %v4024
      %v4026 = vmul.f32 %v3968, 1.442695
      %v4027 = vpow.pop %v4026
      %v4028 = vmul.f32 %v3969, 1.442695
      %v4029 = vpow.pop %v4028
      %v4030 = vmul.f32 %v3970, 1.442695
      %v4031 = vpow.pop %v4030
      %v4032 = vmul.f32 %v3971, 1.442695
      %v4033 = vpow.pop %v4032
      %v4034 = vmul.f32 %v3972, 1.442695
      %v4035 = vpow.pop %v4034
      %v4036 = vmul.f32 %v3973, 1.442695
      %v4037 = vpow.pop %v4036
      %v4038 = vmul.f32 %v3974, 1.442695
      %v4039 = vpow.pop %v4038
      %v4040 = vmul.f32 %v3975, 1.442695
      %v4041 = vpow.pop %v4040
      %v4042 = vmul.f32 %v3976, 1.442695
      %v4043 = vpow.pop %v4042
      %v4044 = vmul.f32 %v3977, 1.442695
      %v4045 = vpow.pop %v4044
      %v4046 = vmul.f32 %v3978, 1.442695
      %v4047 = vpow.pop %v4046
      %v4048 = vmul.f32 %v3979, 1.442695
      %v4049 = vpow.pop %v4048
      %v4050 = vmul.f32 %v3980, 1.442695
      %v4051 = vpow.pop %v4050
      %v4052 = vmul.f32 %v3981, 1.442695
      %v4053 = vpow.pop %v4052
      %v4054 = vmul.f32 %v3982, 1.442695
      %v4055 = vpow.pop %v4054
      %v4056 = vmul.f32 %v3983, 1.442695
      %v4057 = vpow.pop %v4056
      %v4058 = vmul.f32 %v3984, 1.442695
      %v4059 = vpow.pop %v4058
      %v4060 = vmul.f32 %v3985, 1.442695
      %v4061 = vpow.pop %v4060
      %v4062 = vmul.f32 %v3986, 1.442695
      %v4063 = vpow.pop %v4062
      %v4064 = vmul.f32 %v3987, 1.442695
      %v4065 = vpow.pop %v4064
      %v4066 = vmul.f32 %v3988, 1.442695
      %v4067 = vpow.pop %v4066
      %v4068 = vmul.f32 %v3989, 1.442695
      %v4069 = vpow.pop %v4068
      %v4070 = vadd.f32 %v3991, 1.0
      %v4071 = vadd.f32 %v3993, 1.0
      %v4072 = vadd.f32 %v3995, 1.0
      %v4073 = vadd.f32 %v3997, 1.0
      %v4074 = vadd.f32 %v3999, 1.0
      %v4075 = vadd.f32 %v4001, 1.0
      %v4076 = vadd.f32 %v4003, 1.0
      %v4077 = vadd.f32 %v4005, 1.0
      %v4078 = vadd.f32 %v4007, 1.0
      %v4079 = vadd.f32 %v4009, 1.0
      %v4080 = vadd.f32 %v4011, 1.0
      %v4081 = vadd.f32 %v4013, 1.0
      %v4082 = vadd.f32 %v4015, 1.0
      %v4083 = vadd.f32 %v4017, 1.0
      %v4084 = vadd.f32 %v4019, 1.0
      %v4085 = vadd.f32 %v4021, 1.0
      %v4086 = vadd.f32 %v4023, 1.0
      %v4087 = vadd.f32 %v4025, 1.0
      %v4088 = vadd.f32 %v4027, 1.0
      %v4089 = vadd.f32 %v4029, 1.0
      %v4090 = vadd.f32 %v4031, 1.0
      %v4091 = vadd.f32 %v4033, 1.0
      %v4092 = vadd.f32 %v4035, 1.0
      %v4093 = vadd.f32 %v4037, 1.0
      %v4094 = vadd.f32 %v4039, 1.0
      %v4095 = vadd.f32 %v4041, 1.0
      %v4096 = vadd.f32 %v4043, 1.0
      %v4097 = vadd.f32 %v4045, 1.0
      %v4098 = vadd.f32 %v4047, 1.0
      %v4099 = vadd.f32 %v4049, 1.0
      %v4100 = vadd.f32 %v4051, 1.0
      %v4101 = vadd.f32 %v4053, 1.0
      %v4102 = vadd.f32 %v4055, 1.0
      %v4103 = vadd.f32 %v4057, 1.0
      %v4104 = vadd.f32 %v4059, 1.0
      %v4105 = vadd.f32 %v4061, 1.0
      %v4106 = vadd.f32 %v4063, 1.0
      %v4107 = vadd.f32 %v4065, 1.0
      %v4108 = vadd.f32 %v4067, 1.0
      %v4109 = vadd.f32 %v4069, 1.0
      %v4110 = vrcp.pop %v4070
      %v4111 = vmul.f32 1.0, %v4110
      %v4112 = vrcp.pop %v4071
      %v4113 = vmul.f32 1.0, %v4112
      %v4114 = vrcp.pop %v4072
      %v4115 = vmul.f32 1.0, %v4114
      %v4116 = vrcp.pop %v4073
      %v4117 = vmul.f32 1.0, %v4116
      %v4118 = vrcp.pop %v4074
      %v4119 = vmul.f32 1.0, %v4118
      %v4120 = vrcp.pop %v4075
      %v4121 = vmul.f32 1.0, %v4120
      %v4122 = vrcp.pop %v4076
      %v4123 = vmul.f32 1.0, %v4122
      %v4124 = vrcp.pop %v4077
      %v4125 = vmul.f32 1.0, %v4124
      %v4126 = vrcp.pop %v4078
      %v4127 = vmul.f32 1.0, %v4126
      %v4128 = vrcp.pop %v4079
      %v4129 = vmul.f32 1.0, %v4128
      %v4130 = vrcp.pop %v4080
      %v4131 = vmul.f32 1.0, %v4130
      %v4132 = vrcp.pop %v4081
      %v4133 = vmul.f32 1.0, %v4132
      %v4134 = vrcp.pop %v4082
      %v4135 = vmul.f32 1.0, %v4134
      %v4136 = vrcp.pop %v4083
      %v4137 = vmul.f32 1.0, %v4136
      %v4138 = vrcp.pop %v4084
      %v4139 = vmul.f32 1.0, %v4138
      %v4140 = vrcp.pop %v4085
      %v4141 = vmul.f32 1.0, %v4140
      %v4142 = vrcp.pop %v4086
      %v4143 = vmul.f32 1.0, %v4142
      %v4144 = vrcp.pop %v4087
      %v4145 = vmul.f32 1.0, %v4144
      %v4146 = vrcp.pop %v4088
      %v4147 = vmul.f32 1.0, %v4146
      %v4148 = vrcp.pop %v4089
      %v4149 = vmul.f32 1.0, %v4148
      %v4150 = vrcp.pop %v4090
      %v4151 = vmul.f32 1.0, %v4150
      %v4152 = vrcp.pop %v4091
      %v4153 = vmul.f32 1.0, %v4152
      %v4154 = vrcp.pop %v4092
      %v4155 = vmul.f32 1.0, %v4154
      %v4156 = vrcp.pop %v4093
      %v4157 = vmul.f32 1.0, %v4156
      %v4158 = vrcp.pop %v4094
      %v4159 = vmul.f32 1.0, %v4158
      %v4160 = vrcp.pop %v4095
      %v4161 = vmul.f32 1.0, %v4160
      %v4162 = vrcp.pop %v4096
      %v4163 = vmul.f32 1.0, %v4162
      %v4164 = vrcp.pop %v4097
      %v4165 = vmul.f32 1.0, %v4164
      %v4166 = vrcp.pop %v4098
      %v4167 = vmul.f32 1.0, %v4166
      %v4168 = vrcp.pop %v4099
      %v4169 = vmul.f32 1.0, %v4168
      %v4170 = vrcp.pop %v4100
      %v4171 = vmul.f32 1.0, %v4170
      %v4172 = vrcp.pop %v4101
      %v4173 = vmul.f32 1.0, %v4172
      %v4174 = vrcp.pop %v4102
      %v4175 = vmul.f32 1.0, %v4174
      %v4176 = vrcp.pop %v4103
      %v4177 = vmul.f32 1.0, %v4176
      %v4178 = vrcp.pop %v4104
      %v4179 = vmul.f32 1.0, %v4178
      %v4180 = vrcp.pop %v4105
      %v4181 = vmul.f32 1.0, %v4180
      %v4182 = vrcp.pop %v4106
      %v4183 = vmul.f32 1.0, %v4182
      %v4184 = vrcp.pop %v4107
      %v4185 = vmul.f32 1.0, %v4184
      %v4186 = vrcp.pop %v4108
      %v4187 = vmul.f32 1.0, %v4186
      %v4188 = vrcp.pop %v4109
      %v4189 = vmul.f32 1.0, %v4188
      %v4190 = vmul.f32 %v3910, %v4111
      %v4191 = vmul.f32 %v3911, %v4113
      %v4192 = vmul.f32 %v3912, %v4115
      %v4193 = vmul.f32 %v3913, %v4117
      %v4194 = vmul.f32 %v3914, %v4119
      %v4195 = vmul.f32 %v3915, %v4121
      %v4196 = vmul.f32 %v3916, %v4123
      %v4197 = vmul.f32 %v3917, %v4125
      %v4198 = vmul.f32 %v3918, %v4127
      %v4199 = vmul.f32 %v3919, %v4129
      %v4200 = vmul.f32 %v3920, %v4131
      %v4201 = vmul.f32 %v3921, %v4133
      %v4202 = vmul.f32 %v3922, %v4135
      %v4203 = vmul.f32 %v3923, %v4137
      %v4204 = vmul.f32 %v3924, %v4139
      %v4205 = vmul.f32 %v3925, %v4141
      %v4206 = vmul.f32 %v3926, %v4143
      %v4207 = vmul.f32 %v3927, %v4145
      %v4208 = vmul.f32 %v3928, %v4147
      %v4209 = vmul.f32 %v3929, %v4149
      %v4210 = vmul.f32 %v3930, %v4151
      %v4211 = vmul.f32 %v3931, %v4153
      %v4212 = vmul.f32 %v3932, %v4155
      %v4213 = vmul.f32 %v3933, %v4157
      %v4214 = vmul.f32 %v3934, %v4159
      %v4215 = vmul.f32 %v3935, %v4161
      %v4216 = vmul.f32 %v3936, %v4163
      %v4217 = vmul.f32 %v3937, %v4165
      %v4218 = vmul.f32 %v3938, %v4167
      %v4219 = vmul.f32 %v3939, %v4169
      %v4220 = vmul.f32 %v3940, %v4171
      %v4221 = vmul.f32 %v3941, %v4173
      %v4222 = vmul.f32 %v3942, %v4175
      %v4223 = vmul.f32 %v3943, %v4177
      %v4224 = vmul.f32 %v3944, %v4179
      %v4225 = vmul.f32 %v3945, %v4181
      %v4226 = vmul.f32 %v3946, %v4183
      %v4227 = vmul.f32 %v3947, %v4185
      %v4228 = vmul.f32 %v3948, %v4187
      %v4229 = vmul.f32 %v3949, %v4189
      %4231 = vset.pattern.permute.xlu0 32
      %4232 = vperm.xlu0 %4231, %v2990
      %v4233 = vpop.permute.xlu0 %4232
      %4236 = vset.pattern.permute.xlu0 32
      %4237 = vperm.xlu0 %4236, %v2991
      %v4238 = vpop.permute.xlu0 %4237
      %v4240 = vsel %vm2008, %v2990, 0
      %v4242 = vsel %vm2008, %v2991, 0
      %4244 = vmatprep.subr.mxu0 %v4191
      %4245 = vmatpush1.msra.mxu0 %v4190
      %4246 = vmatprep.subr.mxu0 %v4211
      %4247 = vmatpush1.msra.mxu0 %v4210
      %4248 = vmatprep.subr.mxu0 0.0
      %4249 = vmatpush1.msra.mxu0 0.0
      %4250 = vmatprep.subr.mxu0 0.0
      %4251 = vmatpush1.msra.mxu0 0.0
      %4252 = vmatprep.subr.mxu0 0.0
      %4253 = vmatpush1.msra.mxu0 0.0
      %4254 = vmatprep.subr.mxu0 0.0
      %4255 = vmatpush1.msra.mxu0 0.0
      %4256 = vmatprep.subr.mxu0 0.0
      %4257 = vmatpush1.msra.mxu0 0.0
      %4258 = vmatprep.subr.mxu0 0.0
      %4259 = vmatpush1.msra.mxu0 0.0
      %4260 = vmatprep.subr.mxu0 0.0
      %4261 = vmatpush1.msra.mxu0 0.0
      %4262 = vmatprep.subr.mxu0 0.0
      %4263 = vmatpush1.msra.mxu0 0.0
      %4264 = vmatprep.subr.mxu0 0.0
      %4265 = vmatpush1.msra.mxu0 0.0
      %4266 = vmatprep.subr.mxu0 0.0
      %4267 = vmatpush1.msra.mxu0 0.0
      %4268 = vmatprep.subr.mxu0 0.0
      %4269 = vmatpush1.msra.mxu0 0.0
      %4270 = vmatprep.subr.mxu0 0.0
      %4271 = vmatpush1.msra.mxu0 0.0
      %4272 = vmatprep.subr.mxu0 0.0
      %4273 = vmatpush1.msra.mxu0 0.0
      %4274 = vmatprep.subr.mxu0 0.0
      %4275 = vmatpush1.msra.mxu0 0.0
      %4276 = vmatprep.subr.mxu0 0.0
      %4277 = vmatpush1.msra.mxu0 0.0
      %4278 = vmatprep.subr.mxu0 0.0
      %4279 = vmatpush1.msra.mxu0 0.0
      %4280 = vmatprep.subr.mxu0 0.0
      %4281 = vmatpush1.msra.mxu0 0.0
      %4282 = vmatprep.subr.mxu0 0.0
      %4283 = vmatpush1.msra.mxu0 0.0
      %4284 = vmatprep.subr.mxu0 0.0
      %4285 = vmatpush1.msra.mxu0 0.0
      %4286 = vmatprep.subr.mxu0 0.0
      %4287 = vmatpush1.msra.mxu0 0.0
      %4288 = vmatprep.subr.mxu0 0.0
      %4289 = vmatpush1.msra.mxu0 0.0
      %4290 = vmatprep.subr.mxu0 0.0
      %4291 = vmatpush1.msra.mxu0 0.0
      %4292 = vmatprep.subr.mxu0 0.0
      %4293 = vmatpush1.msra.mxu0 0.0
      %4294 = vmatprep.subr.mxu0 0.0
      %4295 = vmatpush1.msra.mxu0 0.0
      %4296 = vmatprep.subr.mxu0 0.0
      %4297 = vmatpush1.msra.mxu0 0.0
      %4298 = vmatprep.subr.mxu0 0.0
      %4299 = vmatpush1.msra.mxu0 0.0
      %4300 = vmatprep.subr.mxu0 0.0
      %4301 = vmatpush1.msra.mxu0 0.0
      %4302 = vmatprep.subr.mxu0 0.0
      %4303 = vmatpush1.msra.mxu0 0.0
      %4304 = vmatprep.subr.mxu0 0.0
      %4305 = vmatpush1.msra.mxu0 0.0
      %4306 = vmatprep.subr.mxu0 0.0
      %4307 = vmatpush1.msra.mxu0 0.0
      %4308 = vmatprep.mubr.f32.mxu0 0.0
      %4309 = vmatmul.mubr.f32.gmra.mrb[0].mxu0 %v4240
      %v4310 = vpop.f32.mrb[0].mxu0
      %v4311 = vadd.f32 %v4233, %v4310
      %v4312 = vpop.f32.mrb[0].mxu0
      %v4313 = vadd.f32 %v4233, %v4312
      %4314 = vmatprep.mubr.f32.mxu0 0.0
      %4315 = vmatmul.mubr.f32.gmra.mrb[0].mxu0 %v4242
      %v4316 = vpop.f32.mrb[0].mxu0
      %v4317 = vadd.f32 %v4238, %v4316
      %v4318 = vpop.f32.mrb[0].mxu0
      %v4319 = vadd.f32 %v4238, %v4318
      %4320 = vdwg.mxu0
      %4321 = vmatprep.subr.mxu0 %v4193
      %4322 = vmatpush1.msra.mxu0 %v4192
      %4323 = vmatprep.subr.mxu0 %v4213
      %4324 = vmatpush1.msra.mxu0 %v4212
      %4325 = vmatprep.subr.mxu0 0.0
      %4326 = vmatpush1.msra.mxu0 0.0
      %4327 = vmatprep.subr.mxu0 0.0
      %4328 = vmatpush1.msra.mxu0 0.0
      %4329 = vmatprep.subr.mxu0 0.0
      %4330 = vmatpush1.msra.mxu0 0.0
      %4331 = vmatprep.subr.mxu0 0.0
      %4332 = vmatpush1.msra.mxu0 0.0
      %4333 = vmatprep.subr.mxu0 0.0
      %4334 = vmatpush1.msra.mxu0 0.0
      %4335 = vmatprep.subr.mxu0 0.0
      %4336 = vmatpush1.msra.mxu0 0.0
      %4337 = vmatprep.subr.mxu0 0.0
      %4338 = vmatpush1.msra.mxu0 0.0
      %4339 = vmatprep.subr.mxu0 0.0
      %4340 = vmatpush1.msra.mxu0 0.0
      %4341 = vmatprep.subr.mxu0 0.0
      %4342 = vmatpush1.msra.mxu0 0.0
      %4343 = vmatprep.subr.mxu0 0.0
      %4344 = vmatpush1.msra.mxu0 0.0
      %4345 = vmatprep.subr.mxu0 0.0
      %4346 = vmatpush1.msra.mxu0 0.0
      %4347 = vmatprep.subr.mxu0 0.0
      %4348 = vmatpush1.msra.mxu0 0.0
      %4349 = vmatprep.subr.mxu0 0.0
      %4350 = vmatpush1.msra.mxu0 0.0
      %4351 = vmatprep.subr.mxu0 0.0
      %4352 = vmatpush1.msra.mxu0 0.0
      %4353 = vmatprep.subr.mxu0 0.0
      %4354 = vmatpush1.msra.mxu0 0.0
      %4355 = vmatprep.subr.mxu0 0.0
      %4356 = vmatpush1.msra.mxu0 0.0
      %4357 = vmatprep.subr.mxu0 0.0
      %4358 = vmatpush1.msra.mxu0 0.0
      %4359 = vmatprep.subr.mxu0 0.0
      %4360 = vmatpush1.msra.mxu0 0.0
      %4361 = vmatprep.subr.mxu0 0.0
      %4362 = vmatpush1.msra.mxu0 0.0
      %4363 = vmatprep.subr.mxu0 0.0
      %4364 = vmatpush1.msra.mxu0 0.0
      %4365 = vmatprep.subr.mxu0 0.0
      %4366 = vmatpush1.msra.mxu0 0.0
      %4367 = vmatprep.subr.mxu0 0.0
      %4368 = vmatpush1.msra.mxu0 0.0
      %4369 = vmatprep.subr.mxu0 0.0
      %4370 = vmatpush1.msra.mxu0 0.0
      %4371 = vmatprep.subr.mxu0 0.0
      %4372 = vmatpush1.msra.mxu0 0.0
      %4373 = vmatprep.subr.mxu0 0.0
      %4374 = vmatpush1.msra.mxu0 0.0
      %4375 = vmatprep.subr.mxu0 0.0
      %4376 = vmatpush1.msra.mxu0 0.0
      %4377 = vmatprep.subr.mxu0 0.0
      %4378 = vmatpush1.msra.mxu0 0.0
      %4379 = vmatprep.subr.mxu0 0.0
      %4380 = vmatpush1.msra.mxu0 0.0
      %4381 = vmatprep.subr.mxu0 0.0
      %4382 = vmatpush1.msra.mxu0 0.0
      %4383 = vmatprep.subr.mxu0 0.0
      %4384 = vmatpush1.msra.mxu0 0.0
      %4385 = vmatprep.mubr.f32.mxu0 0.0
      %4386 = vmatmul.mubr.f32.gmra.mrb[0].mxu0 %v4240
      %v4387 = vpop.f32.mrb[0].mxu0
      %v4388 = vadd.f32 %v4233, %v4387
      %v4389 = vpop.f32.mrb[0].mxu0
      %v4390 = vadd.f32 %v4233, %v4389
      %4391 = vmatprep.mubr.f32.mxu0 0.0
      %4392 = vmatmul.mubr.f32.gmra.mrb[0].mxu0 %v4242
      %v4393 = vpop.f32.mrb[0].mxu0
      %v4394 = vadd.f32 %v4238, %v4393
      %v4395 = vpop.f32.mrb[0].mxu0
      %v4396 = vadd.f32 %v4238, %v4395
      %4397 = vdwg.mxu0
      %4398 = vmatprep.subr.mxu0 %v4195
      %4399 = vmatpush1.msra.mxu0 %v4194
      %4400 = vmatprep.subr.mxu0 %v4215
      %4401 = vmatpush1.msra.mxu0 %v4214
      %4402 = vmatprep.subr.mxu0 0.0
      %4403 = vmatpush1.msra.mxu0 0.0
      %4404 = vmatprep.subr.mxu0 0.0
      %4405 = vmatpush1.msra.mxu0 0.0
      %4406 = vmatprep.subr.mxu0 0.0
      %4407 = vmatpush1.msra.mxu0 0.0
      %4408 = vmatprep.subr.mxu0 0.0
      %4409 = vmatpush1.msra.mxu0 0.0
      %4410 = vmatprep.subr.mxu0 0.0
      %4411 = vmatpush1.msra.mxu0 0.0
      %4412 = vmatprep.subr.mxu0 0.0
      %4413 = vmatpush1.msra.mxu0 0.0
      %4414 = vmatprep.subr.mxu0 0.0
      %4415 = vmatpush1.msra.mxu0 0.0
      %4416 = vmatprep.subr.mxu0 0.0
      %4417 = vmatpush1.msra.mxu0 0.0
      %4418 = vmatprep.subr.mxu0 0.0
      %4419 = vmatpush1.msra.mxu0 0.0
      %4420 = vmatprep.subr.mxu0 0.0
      %4421 = vmatpush1.msra.mxu0 0.0
      %4422 = vmatprep.subr.mxu0 0.0
      %4423 = vmatpush1.msra.mxu0 0.0
      %4424 = vmatprep.subr.mxu0 0.0
      %4425 = vmatpush1.msra.mxu0 0.0
      %4426 = vmatprep.subr.mxu0 0.0
      %4427 = vmatpush1.msra.mxu0 0.0
      %4428 = vmatprep.subr.mxu0 0.0
      %4429 = vmatpush1.msra.mxu0 0.0
      %4430 = vmatprep.subr.mxu0 0.0
      %4431 = vmatpush1.msra.mxu0 0.0
      %4432 = vmatprep.subr.mxu0 0.0
      %4433 = vmatpush1.msra.mxu0 0.0
      %4434 = vmatprep.subr.mxu0 0.0
      %4435 = vmatpush1.msra.mxu0 0.0
      %4436 = vmatprep.subr.mxu0 0.0
      %4437 = vmatpush1.msra.mxu0 0.0
      %4438 = vmatprep.subr.mxu0 0.0
      %4439 = vmatpush1.msra.mxu0 0.0
      %4440 = vmatprep.subr.mxu0 0.0
      %4441 = vmatpush1.msra.mxu0 0.0
      %4442 = vmatprep.subr.mxu0 0.0
      %4443 = vmatpush1.msra.mxu0 0.0
      %4444 = vmatprep.subr.mxu0 0.0
      %4445 = vmatpush1.msra.mxu0 0.0
      %4446 = vmatprep.subr.mxu0 0.0
      %4447 = vmatpush1.msra.mxu0 0.0
      %4448 = vmatprep.subr.mxu0 0.0
      %4449 = vmatpush1.msra.mxu0 0.0
      %4450 = vmatprep.subr.mxu0 0.0
      %4451 = vmatpush1.msra.mxu0 0.0
      %4452 = vmatprep.subr.mxu0 0.0
      %4453 = vmatpush1.msra.mxu0 0.0
      %4454 = vmatprep.subr.mxu0 0.0
      %4455 = vmatpush1.msra.mxu0 0.0
      %4456 = vmatprep.subr.mxu0 0.0
      %4457 = vmatpush1.msra.mxu0 0.0
      %4458 = vmatprep.subr.mxu0 0.0
      %4459 = vmatpush1.msra.mxu0 0.0
      %4460 = vmatprep.subr.mxu0 0.0
      %4461 = vmatpush1.msra.mxu0 0.0
      %4462 = vmatprep.mubr.f32.mxu0 0.0
      %4463 = vmatmul.mubr.f32.gmra.mrb[0].mxu0 %v4240
      %v4464 = vpop.f32.mrb[0].mxu0
      %v4465 = vadd.f32 %v4233, %v4464
      %v4466 = vpop.f32.mrb[0].mxu0
      %v4467 = vadd.f32 %v4233, %v4466
      %4468 = vmatprep.mubr.f32.mxu0 0.0
      %4469 = vmatmul.mubr.f32.gmra.mrb[0].mxu0 %v4242
      %v4470 = vpop.f32.mrb[0].mxu0
      %v4471 = vadd.f32 %v4238, %v4470
      %v4472 = vpop.f32.mrb[0].mxu0
      %v4473 = vadd.f32 %v4238, %v4472
      %4474 = vdwg.mxu0
      %4475 = vmatprep.subr.mxu0 %v4197
      %4476 = vmatpush1.msra.mxu0 %v4196
      %4477 = vmatprep.subr.mxu0 %v4217
      %4478 = vmatpush1.msra.mxu0 %v4216
      %4479 = vmatprep.subr.mxu0 0.0
      %4480 = vmatpush1.msra.mxu0 0.0
      %4481 = vmatprep.subr.mxu0 0.0
      %4482 = vmatpush1.msra.mxu0 0.0
      %4483 = vmatprep.subr.mxu0 0.0
      %4484 = vmatpush1.msra.mxu0 0.0
      %4485 = vmatprep.subr.mxu0 0.0
      %4486 = vmatpush1.msra.mxu0 0.0
      %4487 = vmatprep.subr.mxu0 0.0
      %4488 = vmatpush1.msra.mxu0 0.0
      %4489 = vmatprep.subr.mxu0 0.0
      %4490 = vmatpush1.msra.mxu0 0.0
      %4491 = vmatprep.subr.mxu0 0.0
      %4492 = vmatpush1.msra.mxu0 0.0
      %4493 = vmatprep.subr.mxu0 0.0
      %4494 = vmatpush1.msra.mxu0 0.0
      %4495 = vmatprep.subr.mxu0 0.0
      %4496 = vmatpush1.msra.mxu0 0.0
      %4497 = vmatprep.subr.mxu0 0.0
      %4498 = vmatpush1.msra.mxu0 0.0
      %4499 = vmatprep.subr.mxu0 0.0
      %4500 = vmatpush1.msra.mxu0 0.0
      %4501 = vmatprep.subr.mxu0 0.0
      %4502 = vmatpush1.msra.mxu0 0.0
      %4503 = vmatprep.subr.mxu0 0.0
      %4504 = vmatpush1.msra.mxu0 0.0
      %4505 = vmatprep.subr.mxu0 0.0
      %4506 = vmatpush1.msra.mxu0 0.0
      %4507 = vmatprep.subr.mxu0 0.0
      %4508 = vmatpush1.msra.mxu0 0.0
      %4509 = vmatprep.subr.mxu0 0.0
      %4510 = vmatpush1.msra.mxu0 0.0
      %4511 = vmatprep.subr.mxu0 0.0
      %4512 = vmatpush1.msra.mxu0 0.0
      %4513 = vmatprep.subr.mxu0 0.0
      %4514 = vmatpush1.msra.mxu0 0.0
      %4515 = vmatprep.subr.mxu0 0.0
      %4516 = vmatpush1.msra.mxu0 0.0
      %4517 = vmatprep.subr.mxu0 0.0
      %4518 = vmatpush1.msra.mxu0 0.0
      %4519 = vmatprep.subr.mxu0 0.0
      %4520 = vmatpush1.msra.mxu0 0.0
      %4521 = vmatprep.subr.mxu0 0.0
      %4522 = vmatpush1.msra.mxu0 0.0
      %4523 = vmatprep.subr.mxu0 0.0
      %4524 = vmatpush1.msra.mxu0 0.0
      %4525 = vmatprep.subr.mxu0 0.0
      %4526 = vmatpush1.msra.mxu0 0.0
      %4527 = vmatprep.subr.mxu0 0.0
      %4528 = vmatpush1.msra.mxu0 0.0
      %4529 = vmatprep.subr.mxu0 0.0
      %4530 = vmatpush1.msra.mxu0 0.0
      %4531 = vmatprep.subr.mxu0 0.0
      %4532 = vmatpush1.msra.mxu0 0.0
      %4533 = vmatprep.subr.mxu0 0.0
      %4534 = vmatpush1.msra.mxu0 0.0
      %4535 = vmatprep.subr.mxu0 0.0
      %4536 = vmatpush1.msra.mxu0 0.0
      %4537 = vmatprep.subr.mxu0 0.0
      %4538 = vmatpush1.msra.mxu0 0.0
      %4539 = vmatprep.mubr.f32.mxu0 0.0
      %4540 = vmatmul.mubr.f32.gmra.mrb[0].mxu0 %v4240
      %v4541 = vpop.f32.mrb[0].mxu0
      %v4542 = vadd.f32 %v4233, %v4541
      %v4543 = vpop.f32.mrb[0].mxu0
      %v4544 = vadd.f32 %v4233, %v4543
      %4545 = vmatprep.mubr.f32.mxu0 0.0
      %4546 = vmatmul.mubr.f32.gmra.mrb[0].mxu0 %v4242
      %v4547 = vpop.f32.mrb[0].mxu0
      %v4548 = vadd.f32 %v4238, %v4547
      %v4549 = vpop.f32.mrb[0].mxu0
      %v4550 = vadd.f32 %v4238, %v4549
      %4551 = vdwg.mxu0
      %4552 = vmatprep.subr.mxu0 %v4199
      %4553 = vmatpush1.msra.mxu0 %v4198
      %4554 = vmatprep.subr.mxu0 %v4219
      %4555 = vmatpush1.msra.mxu0 %v4218
      %4556 = vmatprep.subr.mxu0 0.0
      %4557 = vmatpush1.msra.mxu0 0.0
      %4558 = vmatprep.subr.mxu0 0.0
      %4559 = vmatpush1.msra.mxu0 0.0
      %4560 = vmatprep.subr.mxu0 0.0
      %4561 = vmatpush1.msra.mxu0 0.0
      %4562 = vmatprep.subr.mxu0 0.0
      %4563 = vmatpush1.msra.mxu0 0.0
      %4564 = vmatprep.subr.mxu0 0.0
      %4565 = vmatpush1.msra.mxu0 0.0
      %4566 = vmatprep.subr.mxu0 0.0
      %4567 = vmatpush1.msra.mxu0 0.0
      %4568 = vmatprep.subr.mxu0 0.0
      %4569 = vmatpush1.msra.mxu0 0.0
      %4570 = vmatprep.subr.mxu0 0.0
      %4571 = vmatpush1.msra.mxu0 0.0
      %4572 = vmatprep.subr.mxu0 0.0
      %4573 = vmatpush1.msra.mxu0 0.0
      %4574 = vmatprep.subr.mxu0 0.0
      %4575 = vmatpush1.msra.mxu0 0.0
      %4576 = vmatprep.subr.mxu0 0.0
      %4577 = vmatpush1.msra.mxu0 0.0
      %4578 = vmatprep.subr.mxu0 0.0
      %4579 = vmatpush1.msra.mxu0 0.0
      %4580 = vmatprep.subr.mxu0 0.0
      %4581 = vmatpush1.msra.mxu0 0.0
      %4582 = vmatprep.subr.mxu0 0.0
      %4583 = vmatpush1.msra.mxu0 0.0
      %4584 = vmatprep.subr.mxu0 0.0
      %4585 = vmatpush1.msra.mxu0 0.0
      %4586 = vmatprep.subr.mxu0 0.0
      %4587 = vmatpush1.msra.mxu0 0.0
      %4588 = vmatprep.subr.mxu0 0.0
      %4589 = vmatpush1.msra.mxu0 0.0
      %4590 = vmatprep.subr.mxu0 0.0
      %4591 = vmatpush1.msra.mxu0 0.0
      %4592 = vmatprep.subr.mxu0 0.0
      %4593 = vmatpush1.msra.mxu0 0.0
      %4594 = vmatprep.subr.mxu0 0.0
      %4595 = vmatpush1.msra.mxu0 0.0
      %4596 = vmatprep.subr.mxu0 0.0
      %4597 = vmatpush1.msra.mxu0 0.0
      %4598 = vmatprep.subr.mxu0 0.0
      %4599 = vmatpush1.msra.mxu0 0.0
      %4600 = vmatprep.subr.mxu0 0.0
      %4601 = vmatpush1.msra.mxu0 0.0
      %4602 = vmatprep.subr.mxu0 0.0
      %4603 = vmatpush1.msra.mxu0 0.0
      %4604 = vmatprep.subr.mxu0 0.0
      %4605 = vmatpush1.msra.mxu0 0.0
      %4606 = vmatprep.subr.mxu0 0.0
      %4607 = vmatpush1.msra.mxu0 0.0
      %4608 = vmatprep.subr.mxu0 0.0
      %4609 = vmatpush1.msra.mxu0 0.0
      %4610 = vmatprep.subr.mxu0 0.0
      %4611 = vmatpush1.msra.mxu0 0.0
      %4612 = vmatprep.subr.mxu0 0.0
      %4613 = vmatpush1.msra.mxu0 0.0
      %4614 = vmatprep.subr.mxu0 0.0
      %4615 = vmatpush1.msra.mxu0 0.0
      %4616 = vmatprep.mubr.f32.mxu0 0.0
      %4617 = vmatmul.mubr.f32.gmra.mrb[0].mxu0 %v4240
      %v4618 = vpop.f32.mrb[0].mxu0
      %v4619 = vadd.f32 %v4233, %v4618
      %v4620 = vpop.f32.mrb[0].mxu0
      %v4621 = vadd.f32 %v4233, %v4620
      %4622 = vmatprep.mubr.f32.mxu0 0.0
      %4623 = vmatmul.mubr.f32.gmra.mrb[0].mxu0 %v4242
      %v4624 = vpop.f32.mrb[0].mxu0
      %v4625 = vadd.f32 %v4238, %v4624
      %v4626 = vpop.f32.mrb[0].mxu0
      %v4627 = vadd.f32 %v4238, %v4626
      %4628 = vdwg.mxu0
      %4629 = vmatprep.subr.mxu0 %v4201
      %4630 = vmatpush1.msra.mxu0 %v4200
      %4631 = vmatprep.subr.mxu0 %v4221
      %4632 = vmatpush1.msra.mxu0 %v4220
      %4633 = vmatprep.subr.mxu0 0.0
      %4634 = vmatpush1.msra.mxu0 0.0
      %4635 = vmatprep.subr.mxu0 0.0
      %4636 = vmatpush1.msra.mxu0 0.0
      %4637 = vmatprep.subr.mxu0 0.0
      %4638 = vmatpush1.msra.mxu0 0.0
      %4639 = vmatprep.subr.mxu0 0.0
      %4640 = vmatpush1.msra.mxu0 0.0
      %4641 = vmatprep.subr.mxu0 0.0
      %4642 = vmatpush1.msra.mxu0 0.0
      %4643 = vmatprep.subr.mxu0 0.0
      %4644 = vmatpush1.msra.mxu0 0.0
      %4645 = vmatprep.subr.mxu0 0.0
      %4646 = vmatpush1.msra.mxu0 0.0
      %4647 = vmatprep.subr.mxu0 0.0
      %4648 = vmatpush1.msra.mxu0 0.0
      %4649 = vmatprep.subr.mxu0 0.0
      %4650 = vmatpush1.msra.mxu0 0.0
      %4651 = vmatprep.subr.mxu0 0.0
      %4652 = vmatpush1.msra.mxu0 0.0
      %4653 = vmatprep.subr.mxu0 0.0
      %4654 = vmatpush1.msra.mxu0 0.0
      %4655 = vmatprep.subr.mxu0 0.0
      %4656 = vmatpush1.msra.mxu0 0.0
      %4657 = vmatprep.subr.mxu0 0.0
      %4658 = vmatpush1.msra.mxu0 0.0
      %4659 = vmatprep.subr.mxu0 0.0
      %4660 = vmatpush1.msra.mxu0 0.0
      %4661 = vmatprep.subr.mxu0 0.0
      %4662 = vmatpush1.msra.mxu0 0.0
      %4663 = vmatprep.subr.mxu0 0.0
      %4664 = vmatpush1.msra.mxu0 0.0
      %4665 = vmatprep.subr.mxu0 0.0
      %4666 = vmatpush1.msra.mxu0 0.0
      %4667 = vmatprep.subr.mxu0 0.0
      %4668 = vmatpush1.msra.mxu0 0.0
      %4669 = vmatprep.subr.mxu0 0.0
      %4670 = vmatpush1.msra.mxu0 0.0
      %4671 = vmatprep.subr.mxu0 0.0
      %4672 = vmatpush1.msra.mxu0 0.0
      %4673 = vmatprep.subr.mxu0 0.0
      %4674 = vmatpush1.msra.mxu0 0.0
      %4675 = vmatprep.subr.mxu0 0.0
      %4676 = vmatpush1.msra.mxu0 0.0
      %4677 = vmatprep.subr.mxu0 0.0
      %4678 = vmatpush1.msra.mxu0 0.0
      %4679 = vmatprep.subr.mxu0 0.0
      %4680 = vmatpush1.msra.mxu0 0.0
      %4681 = vmatprep.subr.mxu0 0.0
      %4682 = vmatpush1.msra.mxu0 0.0
      %4683 = vmatprep.subr.mxu0 0.0
      %4684 = vmatpush1.msra.mxu0 0.0
      %4685 = vmatprep.subr.mxu0 0.0
      %4686 = vmatpush1.msra.mxu0 0.0
      %4687 = vmatprep.subr.mxu0 0.0
      %4688 = vmatpush1.msra.mxu0 0.0
      %4689 = vmatprep.subr.mxu0 0.0
      %4690 = vmatpush1.msra.mxu0 0.0
      %4691 = vmatprep.subr.mxu0 0.0
      %4692 = vmatpush1.msra.mxu0 0.0
      %4693 = vmatprep.mubr.f32.mxu0 0.0
      %4694 = vmatmul.mubr.f32.gmra.mrb[0].mxu0 %v4240
      %v4695 = vpop.f32.mrb[0].mxu0
      %v4696 = vadd.f32 %v4233, %v4695
      %v4697 = vpop.f32.mrb[0].mxu0
      %v4698 = vadd.f32 %v4233, %v4697
      %4699 = vmatprep.mubr.f32.mxu0 0.0
      %4700 = vmatmul.mubr.f32.gmra.mrb[0].mxu0 %v4242
      %v4701 = vpop.f32.mrb[0].mxu0
      %v4702 = vadd.f32 %v4238, %v4701
      %v4703 = vpop.f32.mrb[0].mxu0
      %v4704 = vadd.f32 %v4238, %v4703
      %4705 = vdwg.mxu0
      %4706 = vmatprep.subr.mxu0 %v4203
      %4707 = vmatpush1.msra.mxu0 %v4202
      %4708 = vmatprep.subr.mxu0 %v4223
      %4709 = vmatpush1.msra.mxu0 %v4222
      %4710 = vmatprep.subr.mxu0 0.0
      %4711 = vmatpush1.msra.mxu0 0.0
      %4712 = vmatprep.subr.mxu0 0.0
      %4713 = vmatpush1.msra.mxu0 0.0
      %4714 = vmatprep.subr.mxu0 0.0
      %4715 = vmatpush1.msra.mxu0 0.0
      %4716 = vmatprep.subr.mxu0 0.0
      %4717 = vmatpush1.msra.mxu0 0.0
      %4718 = vmatprep.subr.mxu0 0.0
      %4719 = vmatpush1.msra.mxu0 0.0
      %4720 = vmatprep.subr.mxu0 0.0
      %4721 = vmatpush1.msra.mxu0 0.0
      %4722 = vmatprep.subr.mxu0 0.0
      %4723 = vmatpush1.msra.mxu0 0.0
      %4724 = vmatprep.subr.mxu0 0.0
      %4725 = vmatpush1.msra.mxu0 0.0
      %4726 = vmatprep.subr.mxu0 0.0
      %4727 = vmatpush1.msra.mxu0 0.0
      %4728 = vmatprep.subr.mxu0 0.0
      %4729 = vmatpush1.msra.mxu0 0.0
      %4730 = vmatprep.subr.mxu0 0.0
      %4731 = vmatpush1.msra.mxu0 0.0
      %4732 = vmatprep.subr.mxu0 0.0
      %4733 = vmatpush1.msra.mxu0 0.0
      %4734 = vmatprep.subr.mxu0 0.0
      %4735 = vmatpush1.msra.mxu0 0.0
      %4736 = vmatprep.subr.mxu0 0.0
      %4737 = vmatpush1.msra.mxu0 0.0
      %4738 = vmatprep.subr.mxu0 0.0
      %4739 = vmatpush1.msra.mxu0 0.0
      %4740 = vmatprep.subr.mxu0 0.0
      %4741 = vmatpush1.msra.mxu0 0.0
      %4742 = vmatprep.subr.mxu0 0.0
      %4743 = vmatpush1.msra.mxu0 0.0
      %4744 = vmatprep.subr.mxu0 0.0
      %4745 = vmatpush1.msra.mxu0 0.0
      %4746 = vmatprep.subr.mxu0 0.0
      %4747 = vmatpush1.msra.mxu0 0.0
      %4748 = vmatprep.subr.mxu0 0.0
      %4749 = vmatpush1.msra.mxu0 0.0
      %4750 = vmatprep.subr.mxu0 0.0
      %4751 = vmatpush1.msra.mxu0 0.0
      %4752 = vmatprep.subr.mxu0 0.0
      %4753 = vmatpush1.msra.mxu0 0.0
      %4754 = vmatprep.subr.mxu0 0.0
      %4755 = vmatpush1.msra.mxu0 0.0
      %4756 = vmatprep.subr.mxu0 0.0
      %4757 = vmatpush1.msra.mxu0 0.0
      %4758 = vmatprep.subr.mxu0 0.0
      %4759 = vmatpush1.msra.mxu0 0.0
      %4760 = vmatprep.subr.mxu0 0.0
      %4761 = vmatpush1.msra.mxu0 0.0
      %4762 = vmatprep.subr.mxu0 0.0
      %4763 = vmatpush1.msra.mxu0 0.0
      %4764 = vmatprep.subr.mxu0 0.0
      %4765 = vmatpush1.msra.mxu0 0.0
      %4766 = vmatprep.subr.mxu0 0.0
      %4767 = vmatpush1.msra.mxu0 0.0
      %4768 = vmatprep.subr.mxu0 0.0
      %4769 = vmatpush1.msra.mxu0 0.0
      %4770 = vmatprep.mubr.f32.mxu0 0.0
      %4771 = vmatmul.mubr.f32.gmra.mrb[0].mxu0 %v4240
      %v4772 = vpop.f32.mrb[0].mxu0
      %v4773 = vadd.f32 %v4233, %v4772
      %v4774 = vpop.f32.mrb[0].mxu0
      %v4775 = vadd.f32 %v4233, %v4774
      %4776 = vmatprep.mubr.f32.mxu0 0.0
      %4777 = vmatmul.mubr.f32.gmra.mrb[0].mxu0 %v4242
      %v4778 = vpop.f32.mrb[0].mxu0
      %v4779 = vadd.f32 %v4238, %v4778
      %v4780 = vpop.f32.mrb[0].mxu0
      %v4781 = vadd.f32 %v4238, %v4780
      %4782 = vdwg.mxu0
      %4783 = vmatprep.subr.mxu0 %v4205
      %4784 = vmatpush1.msra.mxu0 %v4204
      %4785 = vmatprep.subr.mxu0 %v4225
      %4786 = vmatpush1.msra.mxu0 %v4224
      %4787 = vmatprep.subr.mxu0 0.0
      %4788 = vmatpush1.msra.mxu0 0.0
      %4789 = vmatprep.subr.mxu0 0.0
      %4790 = vmatpush1.msra.mxu0 0.0
      %4791 = vmatprep.subr.mxu0 0.0
      %4792 = vmatpush1.msra.mxu0 0.0
      %4793 = vmatprep.subr.mxu0 0.0
      %4794 = vmatpush1.msra.mxu0 0.0
      %4795 = vmatprep.subr.mxu0 0.0
      %4796 = vmatpush1.msra.mxu0 0.0
      %4797 = vmatprep.subr.mxu0 0.0
      %4798 = vmatpush1.msra.mxu0 0.0
      %4799 = vmatprep.subr.mxu0 0.0
      %4800 = vmatpush1.msra.mxu0 0.0
      %4801 = vmatprep.subr.mxu0 0.0
      %4802 = vmatpush1.msra.mxu0 0.0
      %4803 = vmatprep.subr.mxu0 0.0
      %4804 = vmatpush1.msra.mxu0 0.0
      %4805 = vmatprep.subr.mxu0 0.0
      %4806 = vmatpush1.msra.mxu0 0.0
      %4807 = vmatprep.subr.mxu0 0.0
      %4808 = vmatpush1.msra.mxu0 0.0
      %4809 = vmatprep.subr.mxu0 0.0
      %4810 = vmatpush1.msra.mxu0 0.0
      %4811 = vmatprep.subr.mxu0 0.0
      %4812 = vmatpush1.msra.mxu0 0.0
      %4813 = vmatprep.subr.mxu0 0.0
      %4814 = vmatpush1.msra.mxu0 0.0
      %4815 = vmatprep.subr.mxu0 0.0
      %4816 = vmatpush1.msra.mxu0 0.0
      %4817 = vmatprep.subr.mxu0 0.0
      %4818 = vmatpush1.msra.mxu0 0.0
      %4819 = vmatprep.subr.mxu0 0.0
      %4820 = vmatpush1.msra.mxu0 0.0
      %4821 = vmatprep.subr.mxu0 0.0
      %4822 = vmatpush1.msra.mxu0 0.0
      %4823 = vmatprep.subr.mxu0 0.0
      %4824 = vmatpush1.msra.mxu0 0.0
      %4825 = vmatprep.subr.mxu0 0.0
      %4826 = vmatpush1.msra.mxu0 0.0
      %4827 = vmatprep.subr.mxu0 0.0
      %4828 = vmatpush1.msra.mxu0 0.0
      %4829 = vmatprep.subr.mxu0 0.0
      %4830 = vmatpush1.msra.mxu0 0.0
      %4831 = vmatprep.subr.mxu0 0.0
      %4832 = vmatpush1.msra.mxu0 0.0
      %4833 = vmatprep.subr.mxu0 0.0
      %4834 = vmatpush1.msra.mxu0 0.0
      %4835 = vmatprep.subr.mxu0 0.0
      %4836 = vmatpush1.msra.mxu0 0.0
      %4837 = vmatprep.subr.mxu0 0.0
      %4838 = vmatpush1.msra.mxu0 0.0
      %4839 = vmatprep.subr.mxu0 0.0
      %4840 = vmatpush1.msra.mxu0 0.0
      %4841 = vmatprep.subr.mxu0 0.0
      %4842 = vmatpush1.msra.mxu0 0.0
      %4843 = vmatprep.subr.mxu0 0.0
      %4844 = vmatpush1.msra.mxu0 0.0
      %4845 = vmatprep.subr.mxu0 0.0
      %4846 = vmatpush1.msra.mxu0 0.0
      %4847 = vmatprep.mubr.f32.mxu0 0.0
      %4848 = vmatmul.mubr.f32.gmra.mrb[0].mxu0 %v4240
      %v4849 = vpop.f32.mrb[0].mxu0
      %v4850 = vadd.f32 %v4233, %v4849
      %v4851 = vpop.f32.mrb[0].mxu0
      %v4852 = vadd.f32 %v4233, %v4851
      %4853 = vmatprep.mubr.f32.mxu0 0.0
      %4854 = vmatmul.mubr.f32.gmra.mrb[0].mxu0 %v4242
      %v4855 = vpop.f32.mrb[0].mxu0
      %v4856 = vadd.f32 %v4238, %v4855
      %v4857 = vpop.f32.mrb[0].mxu0
      %v4858 = vadd.f32 %v4238, %v4857
      %4859 = vdwg.mxu0
      %4860 = vmatprep.subr.mxu0 %v4207
      %4861 = vmatpush1.msra.mxu0 %v4206
      %4862 = vmatprep.subr.mxu0 %v4227
      %4863 = vmatpush1.msra.mxu0 %v4226
      %4864 = vmatprep.subr.mxu0 0.0
      %4865 = vmatpush1.msra.mxu0 0.0
      %4866 = vmatprep.subr.mxu0 0.0
      %4867 = vmatpush1.msra.mxu0 0.0
      %4868 = vmatprep.subr.mxu0 0.0
      %4869 = vmatpush1.msra.mxu0 0.0
      %4870 = vmatprep.subr.mxu0 0.0
      %4871 = vmatpush1.msra.mxu0 0.0
      %4872 = vmatprep.subr.mxu0 0.0
      %4873 = vmatpush1.msra.mxu0 0.0
      %4874 = vmatprep.subr.mxu0 0.0
      %4875 = vmatpush1.msra.mxu0 0.0
      %4876 = vmatprep.subr.mxu0 0.0
      %4877 = vmatpush1.msra.mxu0 0.0
      %4878 = vmatprep.subr.mxu0 0.0
      %4879 = vmatpush1.msra.mxu0 0.0
      %4880 = vmatprep.subr.mxu0 0.0
      %4881 = vmatpush1.msra.mxu0 0.0
      %4882 = vmatprep.subr.mxu0 0.0
      %4883 = vmatpush1.msra.mxu0 0.0
      %4884 = vmatprep.subr.mxu0 0.0
      %4885 = vmatpush1.msra.mxu0 0.0
      %4886 = vmatprep.subr.mxu0 0.0
      %4887 = vmatpush1.msra.mxu0 0.0
      %4888 = vmatprep.subr.mxu0 0.0
      %4889 = vmatpush1.msra.mxu0 0.0
      %4890 = vmatprep.subr.mxu0 0.0
      %4891 = vmatpush1.msra.mxu0 0.0
      %4892 = vmatprep.subr.mxu0 0.0
      %4893 = vmatpush1.msra.mxu0 0.0
      %4894 = vmatprep.subr.mxu0 0.0
      %4895 = vmatpush1.msra.mxu0 0.0
      %4896 = vmatprep.subr.mxu0 0.0
      %4897 = vmatpush1.msra.mxu0 0.0
      %4898 = vmatprep.subr.mxu0 0.0
      %4899 = vmatpush1.msra.mxu0 0.0
      %4900 = vmatprep.subr.mxu0 0.0
      %4901 = vmatpush1.msra.mxu0 0.0
      %4902 = vmatprep.subr.mxu0 0.0
      %4903 = vmatpush1.msra.mxu0 0.0
      %4904 = vmatprep.subr.mxu0 0.0
      %4905 = vmatpush1.msra.mxu0 0.0
      %4906 = vmatprep.subr.mxu0 0.0
      %4907 = vmatpush1.msra.mxu0 0.0
      %4908 = vmatprep.subr.mxu0 0.0
      %4909 = vmatpush1.msra.mxu0 0.0
      %4910 = vmatprep.subr.mxu0 0.0
      %4911 = vmatpush1.msra.mxu0 0.0
      %4912 = vmatprep.subr.mxu0 0.0
      %4913 = vmatpush1.msra.mxu0 0.0
      %4914 = vmatprep.subr.mxu0 0.0
      %4915 = vmatpush1.msra.mxu0 0.0
      %4916 = vmatprep.subr.mxu0 0.0
      %4917 = vmatpush1.msra.mxu0 0.0
      %4918 = vmatprep.subr.mxu0 0.0
      %4919 = vmatpush1.msra.mxu0 0.0
      %4920 = vmatprep.subr.mxu0 0.0
      %4921 = vmatpush1.msra.mxu0 0.0
      %4922 = vmatprep.subr.mxu0 0.0
      %4923 = vmatpush1.msra.mxu0 0.0
      %4924 = vmatprep.mubr.f32.mxu0 0.0
      %4925 = vmatmul.mubr.f32.gmra.mrb[0].mxu0 %v4240
      %v4926 = vpop.f32.mrb[0].mxu0
      %v4927 = vadd.f32 %v4233, %v4926
      %v4928 = vpop.f32.mrb[0].mxu0
      %v4929 = vadd.f32 %v4233, %v4928
      %4930 = vmatprep.mubr.f32.mxu0 0.0
      %4931 = vmatmul.mubr.f32.gmra.mrb[0].mxu0 %v4242
      %v4932 = vpop.f32.mrb[0].mxu0
      %v4933 = vadd.f32 %v4238, %v4932
      %v4934 = vpop.f32.mrb[0].mxu0
      %v4935 = vadd.f32 %v4238, %v4934
      %4936 = vdwg.mxu0
      %4937 = vmatprep.subr.mxu0 %v4209
      %4938 = vmatpush1.msra.mxu0 %v4208
      %4939 = vmatprep.subr.mxu0 %v4229
      %4940 = vmatpush1.msra.mxu0 %v4228
      %4941 = vmatprep.subr.mxu0 0.0
      %4942 = vmatpush1.msra.mxu0 0.0
      %4943 = vmatprep.subr.mxu0 0.0
      %4944 = vmatpush1.msra.mxu0 0.0
      %4945 = vmatprep.subr.mxu0 0.0
      %4946 = vmatpush1.msra.mxu0 0.0
      %4947 = vmatprep.subr.mxu0 0.0
      %4948 = vmatpush1.msra.mxu0 0.0
      %4949 = vmatprep.subr.mxu0 0.0
      %4950 = vmatpush1.msra.mxu0 0.0
      %4951 = vmatprep.subr.mxu0 0.0
      %4952 = vmatpush1.msra.mxu0 0.0
      %4953 = vmatprep.subr.mxu0 0.0
      %4954 = vmatpush1.msra.mxu0 0.0
      %4955 = vmatprep.subr.mxu0 0.0
      %4956 = vmatpush1.msra.mxu0 0.0
      %4957 = vmatprep.subr.mxu0 0.0
      %4958 = vmatpush1.msra.mxu0 0.0
      %4959 = vmatprep.subr.mxu0 0.0
      %4960 = vmatpush1.msra.mxu0 0.0
      %4961 = vmatprep.subr.mxu0 0.0
      %4962 = vmatpush1.msra.mxu0 0.0
      %4963 = vmatprep.subr.mxu0 0.0
      %4964 = vmatpush1.msra.mxu0 0.0
      %4965 = vmatprep.subr.mxu0 0.0
      %4966 = vmatpush1.msra.mxu0 0.0
      %4967 = vmatprep.subr.mxu0 0.0
      %4968 = vmatpush1.msra.mxu0 0.0
      %4969 = vmatprep.subr.mxu0 0.0
      %4970 = vmatpush1.msra.mxu0 0.0
      %4971 = vmatprep.subr.mxu0 0.0
      %4972 = vmatpush1.msra.mxu0 0.0
      %4973 = vmatprep.subr.mxu0 0.0
      %4974 = vmatpush1.msra.mxu0 0.0
      %4975 = vmatprep.subr.mxu0 0.0
      %4976 = vmatpush1.msra.mxu0 0.0
      %4977 = vmatprep.subr.mxu0 0.0
      %4978 = vmatpush1.msra.mxu0 0.0
      %4979 = vmatprep.subr.mxu0 0.0
      %4980 = vmatpush1.msra.mxu0 0.0
      %4981 = vmatprep.subr.mxu0 0.0
      %4982 = vmatpush1.msra.mxu0 0.0
      %4983 = vmatprep.subr.mxu0 0.0
      %4984 = vmatpush1.msra.mxu0 0.0
      %4985 = vmatprep.subr.mxu0 0.0
      %4986 = vmatpush1.msra.mxu0 0.0
      %4987 = vmatprep.subr.mxu0 0.0
      %4988 = vmatpush1.msra.mxu0 0.0
      %4989 = vmatprep.subr.mxu0 0.0
      %4990 = vmatpush1.msra.mxu0 0.0
      %4991 = vmatprep.subr.mxu0 0.0
      %4992 = vmatpush1.msra.mxu0 0.0
      %4993 = vmatprep.subr.mxu0 0.0
      %4994 = vmatpush1.msra.mxu0 0.0
      %4995 = vmatprep.subr.mxu0 0.0
      %4996 = vmatpush1.msra.mxu0 0.0
      %4997 = vmatprep.subr.mxu0 0.0
      %4998 = vmatpush1.msra.mxu0 0.0
      %4999 = vmatprep.subr.mxu0 0.0
      %5000 = vmatpush1.msra.mxu0 0.0
      %5001 = vmatprep.mubr.f32.mxu0 0.0
      %5002 = vmatmul.mubr.f32.gmra.mrb[0].mxu0 %v4240
      %v5003 = vpop.f32.mrb[0].mxu0
      %v5004 = vadd.f32 %v4233, %v5003
      %v5005 = vpop.f32.mrb[0].mxu0
      %v5006 = vadd.f32 %v4233, %v5005
      %5007 = vmatprep.mubr.f32.mxu0 0.0
      %5008 = vmatmul.mubr.f32.gmra.mrb[0].mxu0 %v4242
      %v5009 = vpop.f32.mrb[0].mxu0
      %v5010 = vadd.f32 %v4238, %v5009
      %v5011 = vpop.f32.mrb[0].mxu0
      %v5012 = vadd.f32 %v4238, %v5011
      %5013 = vdwg.mxu0
      %v5014 = vadd.f32 %v4311, %v2941
      %v5015 = vadd.f32 %v4313, %v2942
      %v5016 = vadd.f32 %v4388, %v2943
      %v5017 = vadd.f32 %v4390, %v2944
      %v5018 = vadd.f32 %v4465, %v2945
      %v5019 = vadd.f32 %v4467, %v2946
      %v5020 = vadd.f32 %v4542, %v2947
      %v5021 = vadd.f32 %v4544, %v2948
      %v5022 = vadd.f32 %v4619, %v2949
      %v5023 = vadd.f32 %v4621, %v2950
      %v5024 = vadd.f32 %v4696, %v2951
      %v5025 = vadd.f32 %v4698, %v2952
      %v5026 = vadd.f32 %v4773, %v2953
      %v5027 = vadd.f32 %v4775, %v2954
      %v5028 = vadd.f32 %v4850, %v2955
      %v5029 = vadd.f32 %v4852, %v2956
      %v5030 = vadd.f32 %v4927, %v2957
      %v5031 = vadd.f32 %v4929, %v2958
      %v5032 = vadd.f32 %v5004, %v2959
      %v5033 = vadd.f32 %v5006, %v2960
      %v5034 = vadd.f32 %v4317, %v2965
      %v5035 = vadd.f32 %v4319, %v2966
      %v5036 = vadd.f32 %v4394, %v2967
      %v5037 = vadd.f32 %v4396, %v2968
      %v5038 = vadd.f32 %v4471, %v2969
      %v5039 = vadd.f32 %v4473, %v2970
      %v5040 = vadd.f32 %v4548, %v2971
      %v5041 = vadd.f32 %v4550, %v2972
      %v5042 = vadd.f32 %v4625, %v2973
      %v5043 = vadd.f32 %v4627, %v2974
      %v5044 = vadd.f32 %v4702, %v2975
      %v5045 = vadd.f32 %v4704, %v2976
      %v5046 = vadd.f32 %v4779, %v2977
      %v5047 = vadd.f32 %v4781, %v2978
      %v5048 = vadd.f32 %v4856, %v2979
      %v5049 = vadd.f32 %v4858, %v2980
      %v5050 = vadd.f32 %v4933, %v2981
      %v5051 = vadd.f32 %v4935, %v2982
      %v5052 = vadd.f32 %v5010, %v2983
      %v5053 = vadd.f32 %v5012, %v2984
      %s5054 = scalar_lea.vmem %s1, 96
      %v5055 = vld [vmem:[%s5054] sm:$0xff]
      %v5056 = vld [vmem:[%s5054 + $0x8] sm:$0xff]
      %v5057 = vld [vmem:[%s5054 + $0x10] sm:$0xff]
      %v5058 = vld [vmem:[%s5054 + $0x18] sm:$0xff]
      %v5059 = vld [vmem:[%s5054 + $0x20] sm:$0xff]
      %v5060 = vld [vmem:[%s5054 + $0x28] sm:$0xff]
      %5062 = vset.pattern.permute.xlu0 32
      %5063 = vperm.xlu0 %5062, %v5055
      %v5064 = vpop.permute.xlu0 %5063
      %5067 = vset.pattern.permute.xlu0 32
      %5068 = vperm.xlu0 %5067, %v5056
      %v5069 = vpop.permute.xlu0 %5068
      %5072 = vset.pattern.permute.xlu0 32
      %5073 = vperm.xlu0 %5072, %v5057
      %v5074 = vpop.permute.xlu0 %5073
      %5077 = vset.pattern.permute.xlu0 32
      %5078 = vperm.xlu0 %5077, %v5058
      %v5079 = vpop.permute.xlu0 %5078
      %v5081 = vsel %vm537, %v5055, 0
      %v5083 = vsel %vm537, %v5056, 0
      %v5085 = vsel %vm537, %v5057, 0
      %v5087 = vsel %vm537, %v5058, 0
      %5089 = vmatprep.subr.mxu0 %v5015
      %5090 = vmatpush1.msra.mxu0 %v5014
      %5091 = vmatprep.subr.mxu0 %v5035
      %5092 = vmatpush1.msra.mxu0 %v5034
      %5093 = vmatprep.subr.mxu0 %v5017
      %5094 = vmatpush1.msra.mxu0 %v5016
      %5095 = vmatprep.subr.mxu0 %v5037
      %5096 = vmatpush1.msra.mxu0 %v5036
      %5097 = vmatprep.subr.mxu0 0.0
      %5098 = vmatpush1.msra.mxu0 0.0
      %5099 = vmatprep.subr.mxu0 0.0
      %5100 = vmatpush1.msra.mxu0 0.0
      %5101 = vmatprep.subr.mxu0 0.0
      %5102 = vmatpush1.msra.mxu0 0.0
      %5103 = vmatprep.subr.mxu0 0.0
      %5104 = vmatpush1.msra.mxu0 0.0
      %5105 = vmatprep.subr.mxu0 0.0
      %5106 = vmatpush1.msra.mxu0 0.0
      %5107 = vmatprep.subr.mxu0 0.0
      %5108 = vmatpush1.msra.mxu0 0.0
      %5109 = vmatprep.subr.mxu0 0.0
      %5110 = vmatpush1.msra.mxu0 0.0
      %5111 = vmatprep.subr.mxu0 0.0
      %5112 = vmatpush1.msra.mxu0 0.0
      %5113 = vmatprep.subr.mxu0 0.0
      %5114 = vmatpush1.msra.mxu0 0.0
      %5115 = vmatprep.subr.mxu0 0.0
      %5116 = vmatpush1.msra.mxu0 0.0
      %5117 = vmatprep.subr.mxu0 0.0
      %5118 = vmatpush1.msra.mxu0 0.0
      %5119 = vmatprep.subr.mxu0 0.0
      %5120 = vmatpush1.msra.mxu0 0.0
      %5121 = vmatprep.subr.mxu0 0.0
      %5122 = vmatpush1.msra.mxu0 0.0
      %5123 = vmatprep.subr.mxu0 0.0
      %5124 = vmatpush1.msra.mxu0 0.0
      %5125 = vmatprep.subr.mxu0 0.0
      %5126 = vmatpush1.msra.mxu0 0.0
      %5127 = vmatprep.subr.mxu0 0.0
      %5128 = vmatpush1.msra.mxu0 0.0
      %5129 = vmatprep.subr.mxu0 0.0
      %5130 = vmatpush1.msra.mxu0 0.0
      %5131 = vmatprep.subr.mxu0 0.0
      %5132 = vmatpush1.msra.mxu0 0.0
      %5133 = vmatprep.subr.mxu0 0.0
      %5134 = vmatpush1.msra.mxu0 0.0
      %5135 = vmatprep.subr.mxu0 0.0
      %5136 = vmatpush1.msra.mxu0 0.0
      %5137 = vmatprep.subr.mxu0 0.0
      %5138 = vmatpush1.msra.mxu0 0.0
      %5139 = vmatprep.subr.mxu0 0.0
      %5140 = vmatpush1.msra.mxu0 0.0
      %5141 = vmatprep.subr.mxu0 0.0
      %5142 = vmatpush1.msra.mxu0 0.0
      %5143 = vmatprep.subr.mxu0 0.0
      %5144 = vmatpush1.msra.mxu0 0.0
      %5145 = vmatprep.subr.mxu0 0.0
      %5146 = vmatpush1.msra.mxu0 0.0
      %5147 = vmatprep.subr.mxu0 0.0
      %5148 = vmatpush1.msra.mxu0 0.0
      %5149 = vmatprep.subr.mxu0 0.0
      %5150 = vmatpush1.msra.mxu0 0.0
      %5151 = vmatprep.subr.mxu0 0.0
      %5152 = vmatpush1.msra.mxu0 0.0
      %5153 = vmatprep.mubr.f32.mxu0 0.0
      %5154 = vmatmul.mubr.f32.gmra.mrb[0].mxu0 %v5081
      %v5155 = vpop.f32.mrb[0].mxu0
      %v5156 = vadd.f32 %v5064, %v5155
      %v5157 = vpop.f32.mrb[0].mxu0
      %v5158 = vadd.f32 %v5064, %v5157
      %5159 = vmatprep.mubr.f32.mxu0 0.0
      %5160 = vmatmul.mubr.f32.gmra.mrb[0].mxu0 %v5083
      %v5161 = vpop.f32.mrb[0].mxu0
      %v5162 = vadd.f32 %v5069, %v5161
      %v5163 = vpop.f32.mrb[0].mxu0
      %v5164 = vadd.f32 %v5069, %v5163
      %5165 = vmatprep.mubr.f32.mxu0 0.0
      %5166 = vmatmul.mubr.f32.gmra.mrb[0].mxu0 %v5085
      %v5167 = vpop.f32.mrb[0].mxu0
      %v5168 = vadd.f32 %v5074, %v5167
      %v5169 = vpop.f32.mrb[0].mxu0
      %v5170 = vadd.f32 %v5074, %v5169
      %5171 = vmatprep.mubr.f32.mxu0 0.0
      %5172 = vmatmul.mubr.f32.gmra.mrb[0].mxu0 %v5087
      %v5173 = vpop.f32.mrb[0].mxu0
      %v5174 = vadd.f32 %v5079, %v5173
      %v5175 = vpop.f32.mrb[0].mxu0
      %v5176 = vadd.f32 %v5079, %v5175
      %5177 = vdwg.mxu0
      %5178 = vmatprep.subr.mxu0 %v5017
      %5179 = vmatpush1.msra.mxu0 %v5016
      %5180 = vmatprep.subr.mxu0 %v5037
      %5181 = vmatpush1.msra.mxu0 %v5036
      %5182 = vmatprep.subr.mxu0 %v5019
      %5183 = vmatpush1.msra.mxu0 %v5018
      %5184 = vmatprep.subr.mxu0 %v5039
      %5185 = vmatpush1.msra.mxu0 %v5038
      %5186 = vmatprep.subr.mxu0 0.0
      %5187 = vmatpush1.msra.mxu0 0.0
      %5188 = vmatprep.subr.mxu0 0.0
      %5189 = vmatpush1.msra.mxu0 0.0
      %5190 = vmatprep.subr.mxu0 0.0
      %5191 = vmatpush1.msra.mxu0 0.0
      %5192 = vmatprep.subr.mxu0 0.0
      %5193 = vmatpush1.msra.mxu0 0.0
      %5194 = vmatprep.subr.mxu0 0.0
      %5195 = vmatpush1.msra.mxu0 0.0
      %5196 = vmatprep.subr.mxu0 0.0
      %5197 = vmatpush1.msra.mxu0 0.0
      %5198 = vmatprep.subr.mxu0 0.0
      %5199 = vmatpush1.msra.mxu0 0.0
      %5200 = vmatprep.subr.mxu0 0.0
      %5201 = vmatpush1.msra.mxu0 0.0
      %5202 = vmatprep.subr.mxu0 0.0
      %5203 = vmatpush1.msra.mxu0 0.0
      %5204 = vmatprep.subr.mxu0 0.0
      %5205 = vmatpush1.msra.mxu0 0.0
      %5206 = vmatprep.subr.mxu0 0.0
      %5207 = vmatpush1.msra.mxu0 0.0
      %5208 = vmatprep.subr.mxu0 0.0
      %5209 = vmatpush1.msra.mxu0 0.0
      %5210 = vmatprep.subr.mxu0 0.0
      %5211 = vmatpush1.msra.mxu0 0.0
      %5212 = vmatprep.subr.mxu0 0.0
      %5213 = vmatpush1.msra.mxu0 0.0
      %5214 = vmatprep.subr.mxu0 0.0
      %5215 = vmatpush1.msra.mxu0 0.0
      %5216 = vmatprep.subr.mxu0 0.0
      %5217 = vmatpush1.msra.mxu0 0.0
      %5218 = vmatprep.subr.mxu0 0.0
      %5219 = vmatpush1.msra.mxu0 0.0
      %5220 = vmatprep.subr.mxu0 0.0
      %5221 = vmatpush1.msra.mxu0 0.0
      %5222 = vmatprep.subr.mxu0 0.0
      %5223 = vmatpush1.msra.mxu0 0.0
      %5224 = vmatprep.subr.mxu0 0.0
      %5225 = vmatpush1.msra.mxu0 0.0
      %5226 = vmatprep.subr.mxu0 0.0
      %5227 = vmatpush1.msra.mxu0 0.0
      %5228 = vmatprep.subr.mxu0 0.0
      %5229 = vmatpush1.msra.mxu0 0.0
      %5230 = vmatprep.subr.mxu0 0.0
      %5231 = vmatpush1.msra.mxu0 0.0
      %5232 = vmatprep.subr.mxu0 0.0
      %5233 = vmatpush1.msra.mxu0 0.0
      %5234 = vmatprep.subr.mxu0 0.0
      %5235 = vmatpush1.msra.mxu0 0.0
      %5236 = vmatprep.subr.mxu0 0.0
      %5237 = vmatpush1.msra.mxu0 0.0
      %5238 = vmatprep.subr.mxu0 0.0
      %5239 = vmatpush1.msra.mxu0 0.0
      %5240 = vmatprep.subr.mxu0 0.0
      %5241 = vmatpush1.msra.mxu0 0.0
      %5242 = vmatprep.mubr.f32.mxu0 0.0
      %5243 = vmatmul.mubr.f32.gmra.mrb[0].mxu0 %v5081
      %v5244 = vpop.f32.mrb[0].mxu0
      %v5245 = vadd.f32 %v5064, %v5244
      %v5246 = vpop.f32.mrb[0].mxu0
      %v5247 = vadd.f32 %v5064, %v5246
      %5248 = vmatprep.mubr.f32.mxu0 0.0
      %5249 = vmatmul.mubr.f32.gmra.mrb[0].mxu0 %v5083
      %v5250 = vpop.f32.mrb[0].mxu0
      %v5251 = vadd.f32 %v5069, %v5250
      %v5252 = vpop.f32.mrb[0].mxu0
      %v5253 = vadd.f32 %v5069, %v5252
      %5254 = vmatprep.mubr.f32.mxu0 0.0
      %5255 = vmatmul.mubr.f32.gmra.mrb[0].mxu0 %v5085
      %v5256 = vpop.f32.mrb[0].mxu0
      %v5257 = vadd.f32 %v5074, %v5256
      %v5258 = vpop.f32.mrb[0].mxu0
      %v5259 = vadd.f32 %v5074, %v5258
      %5260 = vmatprep.mubr.f32.mxu0 0.0
      %5261 = vmatmul.mubr.f32.gmra.mrb[0].mxu0 %v5087
      %v5262 = vpop.f32.mrb[0].mxu0
      %v5263 = vadd.f32 %v5079, %v5262
      %v5264 = vpop.f32.mrb[0].mxu0
      %v5265 = vadd.f32 %v5079, %v5264
      %5266 = vdwg.mxu0
      %5267 = vmatprep.subr.mxu0 %v5019
      %5268 = vmatpush1.msra.mxu0 %v5018
      %5269 = vmatprep.subr.mxu0 %v5039
      %5270 = vmatpush1.msra.mxu0 %v5038
      %5271 = vmatprep.subr.mxu0 %v5021
      %5272 = vmatpush1.msra.mxu0 %v5020
      %5273 = vmatprep.subr.mxu0 %v5041
      %5274 = vmatpush1.msra.mxu0 %v5040
      %5275 = vmatprep.subr.mxu0 0.0
      %5276 = vmatpush1.msra.mxu0 0.0
      %5277 = vmatprep.subr.mxu0 0.0
      %5278 = vmatpush1.msra.mxu0 0.0
      %5279 = vmatprep.subr.mxu0 0.0
      %5280 = vmatpush1.msra.mxu0 0.0
      %5281 = vmatprep.subr.mxu0 0.0
      %5282 = vmatpush1.msra.mxu0 0.0
      %5283 = vmatprep.subr.mxu0 0.0
      %5284 = vmatpush1.msra.mxu0 0.0
      %5285 = vmatprep.subr.mxu0 0.0
      %5286 = vmatpush1.msra.mxu0 0.0
      %5287 = vmatprep.subr.mxu0 0.0
      %5288 = vmatpush1.msra.mxu0 0.0
      %5289 = vmatprep.subr.mxu0 0.0
      %5290 = vmatpush1.msra.mxu0 0.0
      %5291 = vmatprep.subr.mxu0 0.0
      %5292 = vmatpush1.msra.mxu0 0.0
      %5293 = vmatprep.subr.mxu0 0.0
      %5294 = vmatpush1.msra.mxu0 0.0
      %5295 = vmatprep.subr.mxu0 0.0
      %5296 = vmatpush1.msra.mxu0 0.0
      %5297 = vmatprep.subr.mxu0 0.0
      %5298 = vmatpush1.msra.mxu0 0.0
      %5299 = vmatprep.subr.mxu0 0.0
      %5300 = vmatpush1.msra.mxu0 0.0
      %5301 = vmatprep.subr.mxu0 0.0
      %5302 = vmatpush1.msra.mxu0 0.0
      %5303 = vmatprep.subr.mxu0 0.0
      %5304 = vmatpush1.msra.mxu0 0.0
      %5305 = vmatprep.subr.mxu0 0.0
      %5306 = vmatpush1.msra.mxu0 0.0
      %5307 = vmatprep.subr.mxu0 0.0
      %5308 = vmatpush1.msra.mxu0 0.0
      %5309 = vmatprep.subr.mxu0 0.0
      %5310 = vmatpush1.msra.mxu0 0.0
      %5311 = vmatprep.subr.mxu0 0.0
      %5312 = vmatpush1.msra.mxu0 0.0
      %5313 = vmatprep.subr.mxu0 0.0
      %5314 = vmatpush1.msra.mxu0 0.0
      %5315 = vmatprep.subr.mxu0 0.0
      %5316 = vmatpush1.msra.mxu0 0.0
      %5317 = vmatprep.subr.mxu0 0.0
      %5318 = vmatpush1.msra.mxu0 0.0
      %5319 = vmatprep.subr.mxu0 0.0
      %5320 = vmatpush1.msra.mxu0 0.0
      %5321 = vmatprep.subr.mxu0 0.0
      %5322 = vmatpush1.msra.mxu0 0.0
      %5323 = vmatprep.subr.mxu0 0.0
      %5324 = vmatpush1.msra.mxu0 0.0
      %5325 = vmatprep.subr.mxu0 0.0
      %5326 = vmatpush1.msra.mxu0 0.0
      %5327 = vmatprep.subr.mxu0 0.0
      %5328 = vmatpush1.msra.mxu0 0.0
      %5329 = vmatprep.subr.mxu0 0.0
      %5330 = vmatpush1.msra.mxu0 0.0
      %5331 = vmatprep.mubr.f32.mxu0 0.0
      %5332 = vmatmul.mubr.f32.gmra.mrb[0].mxu0 %v5081
      %v5333 = vpop.f32.mrb[0].mxu0
      %v5334 = vadd.f32 %v5064, %v5333
      %v5335 = vpop.f32.mrb[0].mxu0
      %v5336 = vadd.f32 %v5064, %v5335
      %5337 = vmatprep.mubr.f32.mxu0 0.0
      %5338 = vmatmul.mubr.f32.gmra.mrb[0].mxu0 %v5083
      %v5339 = vpop.f32.mrb[0].mxu0
      %v5340 = vadd.f32 %v5069, %v5339
      %v5341 = vpop.f32.mrb[0].mxu0
      %v5342 = vadd.f32 %v5069, %v5341
      %5343 = vmatprep.mubr.f32.mxu0 0.0
      %5344 = vmatmul.mubr.f32.gmra.mrb[0].mxu0 %v5085
      %v5345 = vpop.f32.mrb[0].mxu0
      %v5346 = vadd.f32 %v5074, %v5345
      %v5347 = vpop.f32.mrb[0].mxu0
      %v5348 = vadd.f32 %v5074, %v5347
      %5349 = vmatprep.mubr.f32.mxu0 0.0
      %5350 = vmatmul.mubr.f32.gmra.mrb[0].mxu0 %v5087
      %v5351 = vpop.f32.mrb[0].mxu0
      %v5352 = vadd.f32 %v5079, %v5351
      %v5353 = vpop.f32.mrb[0].mxu0
      %v5354 = vadd.f32 %v5079, %v5353
      %5355 = vdwg.mxu0
      %5356 = vmatprep.subr.mxu0 %v5021
      %5357 = vmatpush1.msra.mxu0 %v5020
      %5358 = vmatprep.subr.mxu0 %v5041
      %5359 = vmatpush1.msra.mxu0 %v5040
      %5360 = vmatprep.subr.mxu0 %v5023
      %5361 = vmatpush1.msra.mxu0 %v5022
      %5362 = vmatprep.subr.mxu0 %v5043
      %5363 = vmatpush1.msra.mxu0 %v5042
      %5364 = vmatprep.subr.mxu0 0.0
      %5365 = vmatpush1.msra.mxu0 0.0
      %5366 = vmatprep.subr.mxu0 0.0
      %5367 = vmatpush1.msra.mxu0 0.0
      %5368 = vmatprep.subr.mxu0 0.0
      %5369 = vmatpush1.msra.mxu0 0.0
      %5370 = vmatprep.subr.mxu0 0.0
      %5371 = vmatpush1.msra.mxu0 0.0
      %5372 = vmatprep.subr.mxu0 0.0
      %5373 = vmatpush1.msra.mxu0 0.0
      %5374 = vmatprep.subr.mxu0 0.0
      %5375 = vmatpush1.msra.mxu0 0.0
      %5376 = vmatprep.subr.mxu0 0.0
      %5377 = vmatpush1.msra.mxu0 0.0
      %5378 = vmatprep.subr.mxu0 0.0
      %5379 = vmatpush1.msra.mxu0 0.0
      %5380 = vmatprep.subr.mxu0 0.0
      %5381 = vmatpush1.msra.mxu0 0.0
      %5382 = vmatprep.subr.mxu0 0.0
      %5383 = vmatpush1.msra.mxu0 0.0
      %5384 = vmatprep.subr.mxu0 0.0
      %5385 = vmatpush1.msra.mxu0 0.0
      %5386 = vmatprep.subr.mxu0 0.0
      %5387 = vmatpush1.msra.mxu0 0.0
      %5388 = vmatprep.subr.mxu0 0.0
      %5389 = vmatpush1.msra.mxu0 0.0
      %5390 = vmatprep.subr.mxu0 0.0
      %5391 = vmatpush1.msra.mxu0 0.0
      %5392 = vmatprep.subr.mxu0 0.0
      %5393 = vmatpush1.msra.mxu0 0.0
      %5394 = vmatprep.subr.mxu0 0.0
      %5395 = vmatpush1.msra.mxu0 0.0
      %5396 = vmatprep.subr.mxu0 0.0
      %5397 = vmatpush1.msra.mxu0 0.0
      %5398 = vmatprep.subr.mxu0 0.0
      %5399 = vmatpush1.msra.mxu0 0.0
      %5400 = vmatprep.subr.mxu0 0.0
      %5401 = vmatpush1.msra.mxu0 0.0
      %5402 = vmatprep.subr.mxu0 0.0
      %5403 = vmatpush1.msra.mxu0 0.0
      %5404 = vmatprep.subr.mxu0 0.0
      %5405 = vmatpush1.msra.mxu0 0.0
      %5406 = vmatprep.subr.mxu0 0.0
      %5407 = vmatpush1.msra.mxu0 0.0
      %5408 = vmatprep.subr.mxu0 0.0
      %5409 = vmatpush1.msra.mxu0 0.0
      %5410 = vmatprep.subr.mxu0 0.0
      %5411 = vmatpush1.msra.mxu0 0.0
      %5412 = vmatprep.subr.mxu0 0.0
      %5413 = vmatpush1.msra.mxu0 0.0
      %5414 = vmatprep.subr.mxu0 0.0
      %5415 = vmatpush1.msra.mxu0 0.0
      %5416 = vmatprep.subr.mxu0 0.0
      %5417 = vmatpush1.msra.mxu0 0.0
      %5418 = vmatprep.subr.mxu0 0.0
      %5419 = vmatpush1.msra.mxu0 0.0
      %5420 = vmatprep.mubr.f32.mxu0 0.0
      %5421 = vmatmul.mubr.f32.gmra.mrb[0].mxu0 %v5081
      %v5422 = vpop.f32.mrb[0].mxu0
      %v5423 = vadd.f32 %v5064, %v5422
      %v5424 = vpop.f32.mrb[0].mxu0
      %v5425 = vadd.f32 %v5064, %v5424
      %5426 = vmatprep.mubr.f32.mxu0 0.0
      %5427 = vmatmul.mubr.f32.gmra.mrb[0].mxu0 %v5083
      %v5428 = vpop.f32.mrb[0].mxu0
      %v5429 = vadd.f32 %v5069, %v5428
      %v5430 = vpop.f32.mrb[0].mxu0
      %v5431 = vadd.f32 %v5069, %v5430
      %5432 = vmatprep.mubr.f32.mxu0 0.0
      %5433 = vmatmul.mubr.f32.gmra.mrb[0].mxu0 %v5085
      %v5434 = vpop.f32.mrb[0].mxu0
      %v5435 = vadd.f32 %v5074, %v5434
      %v5436 = vpop.f32.mrb[0].mxu0
      %v5437 = vadd.f32 %v5074, %v5436
      %5438 = vmatprep.mubr.f32.mxu0 0.0
      %5439 = vmatmul.mubr.f32.gmra.mrb[0].mxu0 %v5087
      %v5440 = vpop.f32.mrb[0].mxu0
      %v5441 = vadd.f32 %v5079, %v5440
      %v5442 = vpop.f32.mrb[0].mxu0
      %v5443 = vadd.f32 %v5079, %v5442
      %5444 = vdwg.mxu0
      %5445 = vmatprep.subr.mxu0 %v5023
      %5446 = vmatpush1.msra.mxu0 %v5022
      %5447 = vmatprep.subr.mxu0 %v5043
      %5448 = vmatpush1.msra.mxu0 %v5042
      %5449 = vmatprep.subr.mxu0 %v5025
      %5450 = vmatpush1.msra.mxu0 %v5024
      %5451 = vmatprep.subr.mxu0 %v5045
      %5452 = vmatpush1.msra.mxu0 %v5044
      %5453 = vmatprep.subr.mxu0 0.0
      %5454 = vmatpush1.msra.mxu0 0.0
      %5455 = vmatprep.subr.mxu0 0.0
      %5456 = vmatpush1.msra.mxu0 0.0
      %5457 = vmatprep.subr.mxu0 0.0
      %5458 = vmatpush1.msra.mxu0 0.0
      %5459 = vmatprep.subr.mxu0 0.0
      %5460 = vmatpush1.msra.mxu0 0.0
      %5461 = vmatprep.subr.mxu0 0.0
      %5462 = vmatpush1.msra.mxu0 0.0
      %5463 = vmatprep.subr.mxu0 0.0
      %5464 = vmatpush1.msra.mxu0 0.0
      %5465 = vmatprep.subr.mxu0 0.0
      %5466 = vmatpush1.msra.mxu0 0.0
      %5467 = vmatprep.subr.mxu0 0.0
      %5468 = vmatpush1.msra.mxu0 0.0
      %5469 = vmatprep.subr.mxu0 0.0
      %5470 = vmatpush1.msra.mxu0 0.0
      %5471 = vmatprep.subr.mxu0 0.0
      %5472 = vmatpush1.msra.mxu0 0.0
      %5473 = vmatprep.subr.mxu0 0.0
      %5474 = vmatpush1.msra.mxu0 0.0
      %5475 = vmatprep.subr.mxu0 0.0
      %5476 = vmatpush1.msra.mxu0 0.0
      %5477 = vmatprep.subr.mxu0 0.0
      %5478 = vmatpush1.msra.mxu0 0.0
      %5479 = vmatprep.subr.mxu0 0.0
      %5480 = vmatpush1.msra.mxu0 0.0
      %5481 = vmatprep.subr.mxu0 0.0
      %5482 = vmatpush1.msra.mxu0 0.0
      %5483 = vmatprep.subr.mxu0 0.0
      %5484 = vmatpush1.msra.mxu0 0.0
      %5485 = vmatprep.subr.mxu0 0.0
      %5486 = vmatpush1.msra.mxu0 0.0
      %5487 = vmatprep.subr.mxu0 0.0
      %5488 = vmatpush1.msra.mxu0 0.0
      %5489 = vmatprep.subr.mxu0 0.0
      %5490 = vmatpush1.msra.mxu0 0.0
      %5491 = vmatprep.subr.mxu0 0.0
      %5492 = vmatpush1.msra.mxu0 0.0
      %5493 = vmatprep.subr.mxu0 0.0
      %5494 = vmatpush1.msra.mxu0 0.0
      %5495 = vmatprep.subr.mxu0 0.0
      %5496 = vmatpush1.msra.mxu0 0.0
      %5497 = vmatprep.subr.mxu0 0.0
      %5498 = vmatpush1.msra.mxu0 0.0
      %5499 = vmatprep.subr.mxu0 0.0
      %5500 = vmatpush1.msra.mxu0 0.0
      %5501 = vmatprep.subr.mxu0 0.0
      %5502 = vmatpush1.msra.mxu0 0.0
      %5503 = vmatprep.subr.mxu0 0.0
      %5504 = vmatpush1.msra.mxu0 0.0
      %5505 = vmatprep.subr.mxu0 0.0
      %5506 = vmatpush1.msra.mxu0 0.0
      %5507 = vmatprep.subr.mxu0 0.0
      %5508 = vmatpush1.msra.mxu0 0.0
      %5509 = vmatprep.mubr.f32.mxu0 0.0
      %5510 = vmatmul.mubr.f32.gmra.mrb[0].mxu0 %v5081
      %v5511 = vpop.f32.mrb[0].mxu0
      %v5512 = vadd.f32 %v5064, %v5511
      %v5513 = vpop.f32.mrb[0].mxu0
      %v5514 = vadd.f32 %v5064, %v5513
      %5515 = vmatprep.mubr.f32.mxu0 0.0
      %5516 = vmatmul.mubr.f32.gmra.mrb[0].mxu0 %v5083
      %v5517 = vpop.f32.mrb[0].mxu0
      %v5518 = vadd.f32 %v5069, %v5517
      %v5519 = vpop.f32.mrb[0].mxu0
      %v5520 = vadd.f32 %v5069, %v5519
      %5521 = vmatprep.mubr.f32.mxu0 0.0
      %5522 = vmatmul.mubr.f32.gmra.mrb[0].mxu0 %v5085
      %v5523 = vpop.f32.mrb[0].mxu0
      %v5524 = vadd.f32 %v5074, %v5523
      %v5525 = vpop.f32.mrb[0].mxu0
      %v5526 = vadd.f32 %v5074, %v5525
      %5527 = vmatprep.mubr.f32.mxu0 0.0
      %5528 = vmatmul.mubr.f32.gmra.mrb[0].mxu0 %v5087
      %v5529 = vpop.f32.mrb[0].mxu0
      %v5530 = vadd.f32 %v5079, %v5529
      %v5531 = vpop.f32.mrb[0].mxu0
      %v5532 = vadd.f32 %v5079, %v5531
      %5533 = vdwg.mxu0
      %5534 = vmatprep.subr.mxu0 %v5025
      %5535 = vmatpush1.msra.mxu0 %v5024
      %5536 = vmatprep.subr.mxu0 %v5045
      %5537 = vmatpush1.msra.mxu0 %v5044
      %5538 = vmatprep.subr.mxu0 %v5027
      %5539 = vmatpush1.msra.mxu0 %v5026
      %5540 = vmatprep.subr.mxu0 %v5047
      %5541 = vmatpush1.msra.mxu0 %v5046
      %5542 = vmatprep.subr.mxu0 0.0
      %5543 = vmatpush1.msra.mxu0 0.0
      %5544 = vmatprep.subr.mxu0 0.0
      %5545 = vmatpush1.msra.mxu0 0.0
      %5546 = vmatprep.subr.mxu0 0.0
      %5547 = vmatpush1.msra.mxu0 0.0
      %5548 = vmatprep.subr.mxu0 0.0
      %5549 = vmatpush1.msra.mxu0 0.0
      %5550 = vmatprep.subr.mxu0 0.0
      %5551 = vmatpush1.msra.mxu0 0.0
      %5552 = vmatprep.subr.mxu0 0.0
      %5553 = vmatpush1.msra.mxu0 0.0
      %5554 = vmatprep.subr.mxu0 0.0
      %5555 = vmatpush1.msra.mxu0 0.0
      %5556 = vmatprep.subr.mxu0 0.0
      %5557 = vmatpush1.msra.mxu0 0.0
      %5558 = vmatprep.subr.mxu0 0.0
      %5559 = vmatpush1.msra.mxu0 0.0
      %5560 = vmatprep.subr.mxu0 0.0
      %5561 = vmatpush1.msra.mxu0 0.0
      %5562 = vmatprep.subr.mxu0 0.0
      %5563 = vmatpush1.msra.mxu0 0.0
      %5564 = vmatprep.subr.mxu0 0.0
      %5565 = vmatpush1.msra.mxu0 0.0
      %5566 = vmatprep.subr.mxu0 0.0
      %5567 = vmatpush1.msra.mxu0 0.0
      %5568 = vmatprep.subr.mxu0 0.0
      %5569 = vmatpush1.msra.mxu0 0.0
      %5570 = vmatprep.subr.mxu0 0.0
      %5571 = vmatpush1.msra.mxu0 0.0
      %5572 = vmatprep.subr.mxu0 0.0
      %5573 = vmatpush1.msra.mxu0 0.0
      %5574 = vmatprep.subr.mxu0 0.0
      %5575 = vmatpush1.msra.mxu0 0.0
      %5576 = vmatprep.subr.mxu0 0.0
      %5577 = vmatpush1.msra.mxu0 0.0
      %5578 = vmatprep.subr.mxu0 0.0
      %5579 = vmatpush1.msra.mxu0 0.0
      %5580 = vmatprep.subr.mxu0 0.0
      %5581 = vmatpush1.msra.mxu0 0.0
      %5582 = vmatprep.subr.mxu0 0.0
      %5583 = vmatpush1.msra.mxu0 0.0
      %5584 = vmatprep.subr.mxu0 0.0
      %5585 = vmatpush1.msra.mxu0 0.0
      %5586 = vmatprep.subr.mxu0 0.0
      %5587 = vmatpush1.msra.mxu0 0.0
      %5588 = vmatprep.subr.mxu0 0.0
      %5589 = vmatpush1.msra.mxu0 0.0
      %5590 = vmatprep.subr.mxu0 0.0
      %5591 = vmatpush1.msra.mxu0 0.0
      %5592 = vmatprep.subr.mxu0 0.0
      %5593 = vmatpush1.msra.mxu0 0.0
      %5594 = vmatprep.subr.mxu0 0.0
      %5595 = vmatpush1.msra.mxu0 0.0
      %5596 = vmatprep.subr.mxu0 0.0
      %5597 = vmatpush1.msra.mxu0 0.0
      %5598 = vmatprep.mubr.f32.mxu0 0.0
      %5599 = vmatmul.mubr.f32.gmra.mrb[0].mxu0 %v5081
      %v5600 = vpop.f32.mrb[0].mxu0
      %v5601 = vadd.f32 %v5064, %v5600
      %v5602 = vpop.f32.mrb[0].mxu0
      %v5603 = vadd.f32 %v5064, %v5602
      %5604 = vmatprep.mubr.f32.mxu0 0.0
      %5605 = vmatmul.mubr.f32.gmra.mrb[0].mxu0 %v5083
      %v5606 = vpop.f32.mrb[0].mxu0
      %v5607 = vadd.f32 %v5069, %v5606
      %v5608 = vpop.f32.mrb[0].mxu0
      %v5609 = vadd.f32 %v5069, %v5608
      %5610 = vmatprep.mubr.f32.mxu0 0.0
      %5611 = vmatmul.mubr.f32.gmra.mrb[0].mxu0 %v5085
      %v5612 = vpop.f32.mrb[0].mxu0
      %v5613 = vadd.f32 %v5074, %v5612
      %v5614 = vpop.f32.mrb[0].mxu0
      %v5615 = vadd.f32 %v5074, %v5614
      %5616 = vmatprep.mubr.f32.mxu0 0.0
      %5617 = vmatmul.mubr.f32.gmra.mrb[0].mxu0 %v5087
      %v5618 = vpop.f32.mrb[0].mxu0
      %v5619 = vadd.f32 %v5079, %v5618
      %v5620 = vpop.f32.mrb[0].mxu0
      %v5621 = vadd.f32 %v5079, %v5620
      %5622 = vdwg.mxu0
      %5623 = vmatprep.subr.mxu0 %v5027
      %5624 = vmatpush1.msra.mxu0 %v5026
      %5625 = vmatprep.subr.mxu0 %v5047
      %5626 = vmatpush1.msra.mxu0 %v5046
      %5627 = vmatprep.subr.mxu0 %v5029
      %5628 = vmatpush1.msra.mxu0 %v5028
      %5629 = vmatprep.subr.mxu0 %v5049
      %5630 = vmatpush1.msra.mxu0 %v5048
      %5631 = vmatprep.subr.mxu0 0.0
      %5632 = vmatpush1.msra.mxu0 0.0
      %5633 = vmatprep.subr.mxu0 0.0
      %5634 = vmatpush1.msra.mxu0 0.0
      %5635 = vmatprep.subr.mxu0 0.0
      %5636 = vmatpush1.msra.mxu0 0.0
      %5637 = vmatprep.subr.mxu0 0.0
      %5638 = vmatpush1.msra.mxu0 0.0
      %5639 = vmatprep.subr.mxu0 0.0
      %5640 = vmatpush1.msra.mxu0 0.0
      %5641 = vmatprep.subr.mxu0 0.0
      %5642 = vmatpush1.msra.mxu0 0.0
      %5643 = vmatprep.subr.mxu0 0.0
      %5644 = vmatpush1.msra.mxu0 0.0
      %5645 = vmatprep.subr.mxu0 0.0
      %5646 = vmatpush1.msra.mxu0 0.0
      %5647 = vmatprep.subr.mxu0 0.0
      %5648 = vmatpush1.msra.mxu0 0.0
      %5649 = vmatprep.subr.mxu0 0.0
      %5650 = vmatpush1.msra.mxu0 0.0
      %5651 = vmatprep.subr.mxu0 0.0
      %5652 = vmatpush1.msra.mxu0 0.0
      %5653 = vmatprep.subr.mxu0 0.0
      %5654 = vmatpush1.msra.mxu0 0.0
      %5655 = vmatprep.subr.mxu0 0.0
      %5656 = vmatpush1.msra.mxu0 0.0
      %5657 = vmatprep.subr.mxu0 0.0
      %5658 = vmatpush1.msra.mxu0 0.0
      %5659 = vmatprep.subr.mxu0 0.0
      %5660 = vmatpush1.msra.mxu0 0.0
      %5661 = vmatprep.subr.mxu0 0.0
      %5662 = vmatpush1.msra.mxu0 0.0
      %5663 = vmatprep.subr.mxu0 0.0
      %5664 = vmatpush1.msra.mxu0 0.0
      %5665 = vmatprep.subr.mxu0 0.0
      %5666 = vmatpush1.msra.mxu0 0.0
      %5667 = vmatprep.subr.mxu0 0.0
      %5668 = vmatpush1.msra.mxu0 0.0
      %5669 = vmatprep.subr.mxu0 0.0
      %5670 = vmatpush1.msra.mxu0 0.0
      %5671 = vmatprep.subr.mxu0 0.0
      %5672 = vmatpush1.msra.mxu0 0.0
      %5673 = vmatprep.subr.mxu0 0.0
      %5674 = vmatpush1.msra.mxu0 0.0
      %5675 = vmatprep.subr.mxu0 0.0
      %5676 = vmatpush1.msra.mxu0 0.0
      %5677 = vmatprep.subr.mxu0 0.0
      %5678 = vmatpush1.msra.mxu0 0.0
      %5679 = vmatprep.subr.mxu0 0.0
      %5680 = vmatpush1.msra.mxu0 0.0
      %5681 = vmatprep.subr.mxu0 0.0
      %5682 = vmatpush1.msra.mxu0 0.0
      %5683 = vmatprep.subr.mxu0 0.0
      %5684 = vmatpush1.msra.mxu0 0.0
      %5685 = vmatprep.subr.mxu0 0.0
      %5686 = vmatpush1.msra.mxu0 0.0
      %5687 = vmatprep.mubr.f32.mxu0 0.0
      %5688 = vmatmul.mubr.f32.gmra.mrb[0].mxu0 %v5081
      %v5689 = vpop.f32.mrb[0].mxu0
      %v5690 = vadd.f32 %v5064, %v5689
      %v5691 = vpop.f32.mrb[0].mxu0
      %v5692 = vadd.f32 %v5064, %v5691
      %5693 = vmatprep.mubr.f32.mxu0 0.0
      %5694 = vmatmul.mubr.f32.gmra.mrb[0].mxu0 %v5083
      %v5695 = vpop.f32.mrb[0].mxu0
      %v5696 = vadd.f32 %v5069, %v5695
      %v5697 = vpop.f32.mrb[0].mxu0
      %v5698 = vadd.f32 %v5069, %v5697
      %5699 = vmatprep.mubr.f32.mxu0 0.0
      %5700 = vmatmul.mubr.f32.gmra.mrb[0].mxu0 %v5085
      %v5701 = vpop.f32.mrb[0].mxu0
      %v5702 = vadd.f32 %v5074, %v5701
      %v5703 = vpop.f32.mrb[0].mxu0
      %v5704 = vadd.f32 %v5074, %v5703
      %5705 = vmatprep.mubr.f32.mxu0 0.0
      %5706 = vmatmul.mubr.f32.gmra.mrb[0].mxu0 %v5087
      %v5707 = vpop.f32.mrb[0].mxu0
      %v5708 = vadd.f32 %v5079, %v5707
      %v5709 = vpop.f32.mrb[0].mxu0
      %v5710 = vadd.f32 %v5079, %v5709
      %5711 = vdwg.mxu0
      %5712 = vmatprep.subr.mxu0 %v5029
      %5713 = vmatpush1.msra.mxu0 %v5028
      %5714 = vmatprep.subr.mxu0 %v5049
      %5715 = vmatpush1.msra.mxu0 %v5048
      %5716 = vmatprep.subr.mxu0 %v5031
      %5717 = vmatpush1.msra.mxu0 %v5030
      %5718 = vmatprep.subr.mxu0 %v5051
      %5719 = vmatpush1.msra.mxu0 %v5050
      %5720 = vmatprep.subr.mxu0 0.0
      %5721 = vmatpush1.msra.mxu0 0.0
      %5722 = vmatprep.subr.mxu0 0.0
      %5723 = vmatpush1.msra.mxu0 0.0
      %5724 = vmatprep.subr.mxu0 0.0
      %5725 = vmatpush1.msra.mxu0 0.0
      %5726 = vmatprep.subr.mxu0 0.0
      %5727 = vmatpush1.msra.mxu0 0.0
      %5728 = vmatprep.subr.mxu0 0.0
      %5729 = vmatpush1.msra.mxu0 0.0
      %5730 = vmatprep.subr.mxu0 0.0
      %5731 = vmatpush1.msra.mxu0 0.0
      %5732 = vmatprep.subr.mxu0 0.0
      %5733 = vmatpush1.msra.mxu0 0.0
      %5734 = vmatprep.subr.mxu0 0.0
      %5735 = vmatpush1.msra.mxu0 0.0
      %5736 = vmatprep.subr.mxu0 0.0
      %5737 = vmatpush1.msra.mxu0 0.0
      %5738 = vmatprep.subr.mxu0 0.0
      %5739 = vmatpush1.msra.mxu0 0.0
      %5740 = vmatprep.subr.mxu0 0.0
      %5741 = vmatpush1.msra.mxu0 0.0
      %5742 = vmatprep.subr.mxu0 0.0
      %5743 = vmatpush1.msra.mxu0 0.0
      %5744 = vmatprep.subr.mxu0 0.0
      %5745 = vmatpush1.msra.mxu0 0.0
      %5746 = vmatprep.subr.mxu0 0.0
      %5747 = vmatpush1.msra.mxu0 0.0
      %5748 = vmatprep.subr.mxu0 0.0
      %5749 = vmatpush1.msra.mxu0 0.0
      %5750 = vmatprep.subr.mxu0 0.0
      %5751 = vmatpush1.msra.mxu0 0.0
      %5752 = vmatprep.subr.mxu0 0.0
      %5753 = vmatpush1.msra.mxu0 0.0
      %5754 = vmatprep.subr.mxu0 0.0
      %5755 = vmatpush1.msra.mxu0 0.0
      %5756 = vmatprep.subr.mxu0 0.0
      %5757 = vmatpush1.msra.mxu0 0.0
      %5758 = vmatprep.subr.mxu0 0.0
      %5759 = vmatpush1.msra.mxu0 0.0
      %5760 = vmatprep.subr.mxu0 0.0
      %5761 = vmatpush1.msra.mxu0 0.0
      %5762 = vmatprep.subr.mxu0 0.0
      %5763 = vmatpush1.msra.mxu0 0.0
      %5764 = vmatprep.subr.mxu0 0.0
      %5765 = vmatpush1.msra.mxu0 0.0
      %5766 = vmatprep.subr.mxu0 0.0
      %5767 = vmatpush1.msra.mxu0 0.0
      %5768 = vmatprep.subr.mxu0 0.0
      %5769 = vmatpush1.msra.mxu0 0.0
      %5770 = vmatprep.subr.mxu0 0.0
      %5771 = vmatpush1.msra.mxu0 0.0
      %5772 = vmatprep.subr.mxu0 0.0
      %5773 = vmatpush1.msra.mxu0 0.0
      %5774 = vmatprep.subr.mxu0 0.0
      %5775 = vmatpush1.msra.mxu0 0.0
      %5776 = vmatprep.mubr.f32.mxu0 0.0
      %5777 = vmatmul.mubr.f32.gmra.mrb[0].mxu0 %v5081
      %v5778 = vpop.f32.mrb[0].mxu0
      %v5779 = vadd.f32 %v5064, %v5778
      %v5780 = vpop.f32.mrb[0].mxu0
      %v5781 = vadd.f32 %v5064, %v5780
      %5782 = vmatprep.mubr.f32.mxu0 0.0
      %5783 = vmatmul.mubr.f32.gmra.mrb[0].mxu0 %v5083
      %v5784 = vpop.f32.mrb[0].mxu0
      %v5785 = vadd.f32 %v5069, %v5784
      %v5786 = vpop.f32.mrb[0].mxu0
      %v5787 = vadd.f32 %v5069, %v5786
      %5788 = vmatprep.mubr.f32.mxu0 0.0
      %5789 = vmatmul.mubr.f32.gmra.mrb[0].mxu0 %v5085
      %v5790 = vpop.f32.mrb[0].mxu0
      %v5791 = vadd.f32 %v5074, %v5790
      %v5792 = vpop.f32.mrb[0].mxu0
      %v5793 = vadd.f32 %v5074, %v5792
      %5794 = vmatprep.mubr.f32.mxu0 0.0
      %5795 = vmatmul.mubr.f32.gmra.mrb[0].mxu0 %v5087
      %v5796 = vpop.f32.mrb[0].mxu0
      %v5797 = vadd.f32 %v5079, %v5796
      %v5798 = vpop.f32.mrb[0].mxu0
      %v5799 = vadd.f32 %v5079, %v5798
      %5800 = vdwg.mxu0
      %5801 = vmatprep.subr.mxu0 %v5031
      %5802 = vmatpush1.msra.mxu0 %v5030
      %5803 = vmatprep.subr.mxu0 %v5051
      %5804 = vmatpush1.msra.mxu0 %v5050
      %5805 = vmatprep.subr.mxu0 %v5033
      %5806 = vmatpush1.msra.mxu0 %v5032
      %5807 = vmatprep.subr.mxu0 %v5053
      %5808 = vmatpush1.msra.mxu0 %v5052
      %5809 = vmatprep.subr.mxu0 0.0
      %5810 = vmatpush1.msra.mxu0 0.0
      %5811 = vmatprep.subr.mxu0 0.0
      %5812 = vmatpush1.msra.mxu0 0.0
      %5813 = vmatprep.subr.mxu0 0.0
      %5814 = vmatpush1.msra.mxu0 0.0
      %5815 = vmatprep.subr.mxu0 0.0
      %5816 = vmatpush1.msra.mxu0 0.0
      %5817 = vmatprep.subr.mxu0 0.0
      %5818 = vmatpush1.msra.mxu0 0.0
      %5819 = vmatprep.subr.mxu0 0.0
      %5820 = vmatpush1.msra.mxu0 0.0
      %5821 = vmatprep.subr.mxu0 0.0
      %5822 = vmatpush1.msra.mxu0 0.0
      %5823 = vmatprep.subr.mxu0 0.0
      %5824 = vmatpush1.msra.mxu0 0.0
      %5825 = vmatprep.subr.mxu0 0.0
      %5826 = vmatpush1.msra.mxu0 0.0
      %5827 = vmatprep.subr.mxu0 0.0
      %5828 = vmatpush1.msra.mxu0 0.0
      %5829 = vmatprep.subr.mxu0 0.0
      %5830 = vmatpush1.msra.mxu0 0.0
      %5831 = vmatprep.subr.mxu0 0.0
      %5832 = vmatpush1.msra.mxu0 0.0
      %5833 = vmatprep.subr.mxu0 0.0
      %5834 = vmatpush1.msra.mxu0 0.0
      %5835 = vmatprep.subr.mxu0 0.0
      %5836 = vmatpush1.msra.mxu0 0.0
      %5837 = vmatprep.subr.mxu0 0.0
      %5838 = vmatpush1.msra.mxu0 0.0
      %5839 = vmatprep.subr.mxu0 0.0
      %5840 = vmatpush1.msra.mxu0 0.0
      %5841 = vmatprep.subr.mxu0 0.0
      %5842 = vmatpush1.msra.mxu0 0.0
      %5843 = vmatprep.subr.mxu0 0.0
      %5844 = vmatpush1.msra.mxu0 0.0
      %5845 = vmatprep.subr.mxu0 0.0
      %5846 = vmatpush1.msra.mxu0 0.0
      %5847 = vmatprep.subr.mxu0 0.0
      %5848 = vmatpush1.msra.mxu0 0.0
      %5849 = vmatprep.subr.mxu0 0.0
      %5850 = vmatpush1.msra.mxu0 0.0
      %5851 = vmatprep.subr.mxu0 0.0
      %5852 = vmatpush1.msra.mxu0 0.0
      %5853 = vmatprep.subr.mxu0 0.0
      %5854 = vmatpush1.msra.mxu0 0.0
      %5855 = vmatprep.subr.mxu0 0.0
      %5856 = vmatpush1.msra.mxu0 0.0
      %5857 = vmatprep.subr.mxu0 0.0
      %5858 = vmatpush1.msra.mxu0 0.0
      %5859 = vmatprep.subr.mxu0 0.0
      %5860 = vmatpush1.msra.mxu0 0.0
      %5861 = vmatprep.subr.mxu0 0.0
      %5862 = vmatpush1.msra.mxu0 0.0
      %5863 = vmatprep.subr.mxu0 0.0
      %5864 = vmatpush1.msra.mxu0 0.0
      %5865 = vmatprep.mubr.f32.mxu0 0.0
      %5866 = vmatmul.mubr.f32.gmra.mrb[0].mxu0 %v5081
      %v5867 = vpop.f32.mrb[0].mxu0
      %v5868 = vadd.f32 %v5064, %v5867
      %v5869 = vpop.f32.mrb[0].mxu0
      %v5870 = vadd.f32 %v5064, %v5869
      %5871 = vmatprep.mubr.f32.mxu0 0.0
      %5872 = vmatmul.mubr.f32.gmra.mrb[0].mxu0 %v5083
      %v5873 = vpop.f32.mrb[0].mxu0
      %v5874 = vadd.f32 %v5069, %v5873
      %v5875 = vpop.f32.mrb[0].mxu0
      %v5876 = vadd.f32 %v5069, %v5875
      %5877 = vmatprep.mubr.f32.mxu0 0.0
      %5878 = vmatmul.mubr.f32.gmra.mrb[0].mxu0 %v5085
      %v5879 = vpop.f32.mrb[0].mxu0
      %v5880 = vadd.f32 %v5074, %v5879
      %v5881 = vpop.f32.mrb[0].mxu0
      %v5882 = vadd.f32 %v5074, %v5881
      %5883 = vmatprep.mubr.f32.mxu0 0.0
      %5884 = vmatmul.mubr.f32.gmra.mrb[0].mxu0 %v5087
      %v5885 = vpop.f32.mrb[0].mxu0
      %v5886 = vadd.f32 %v5079, %v5885
      %v5887 = vpop.f32.mrb[0].mxu0
      %v5888 = vadd.f32 %v5079, %v5887
      %5889 = vdwg.mxu0
      %v5890 = vtanh.pop %v5156
      %v5891 = vtanh.pop %v5158
      %v5892 = vtanh.pop %v5245
      %v5893 = vtanh.pop %v5247
      %v5894 = vtanh.pop %v5334
      %v5895 = vtanh.pop %v5336
      %v5896 = vtanh.pop %v5423
      %v5897 = vtanh.pop %v5425
      %v5898 = vtanh.pop %v5512
      %v5899 = vtanh.pop %v5514
      %v5900 = vtanh.pop %v5601
      %v5901 = vtanh.pop %v5603
      %v5902 = vtanh.pop %v5690
      %v5903 = vtanh.pop %v5692
      %v5904 = vtanh.pop %v5779
      %v5905 = vtanh.pop %v5781
      %v5906 = vtanh.pop %v5868
      %v5907 = vtanh.pop %v5870
      %v5908 = vtanh.pop %v5162
      %v5909 = vtanh.pop %v5164
      %v5910 = vtanh.pop %v5251
      %v5911 = vtanh.pop %v5253
      %v5912 = vtanh.pop %v5340
      %v5913 = vtanh.pop %v5342
      %v5914 = vtanh.pop %v5429
      %v5915 = vtanh.pop %v5431
      %v5916 = vtanh.pop %v5518
      %v5917 = vtanh.pop %v5520
      %v5918 = vtanh.pop %v5607
      %v5919 = vtanh.pop %v5609
      %v5920 = vtanh.pop %v5696
      %v5921 = vtanh.pop %v5698
      %v5922 = vtanh.pop %v5785
      %v5923 = vtanh.pop %v5787
      %v5924 = vtanh.pop %v5874
      %v5925 = vtanh.pop %v5876
      %v5926 = vxor.u32 %v5168, 2147483648
      %v5927 = vxor.u32 %v5170, 2147483648
      %v5928 = vxor.u32 %v5257, 2147483648
      %v5929 = vxor.u32 %v5259, 2147483648
      %v5930 = vxor.u32 %v5346, 2147483648
      %v5931 = vxor.u32 %v5348, 2147483648
      %v5932 = vxor.u32 %v5435, 2147483648
      %v5933 = vxor.u32 %v5437, 2147483648
      %v5934 = vxor.u32 %v5524, 2147483648
      %v5935 = vxor.u32 %v5526, 2147483648
      %v5936 = vxor.u32 %v5613, 2147483648
      %v5937 = vxor.u32 %v5615, 2147483648
      %v5938 = vxor.u32 %v5702, 2147483648
      %v5939 = vxor.u32 %v5704, 2147483648
      %v5940 = vxor.u32 %v5791, 2147483648
      %v5941 = vxor.u32 %v5793, 2147483648
      %v5942 = vxor.u32 %v5880, 2147483648
      %v5943 = vxor.u32 %v5882, 2147483648
      %v5944 = vxor.u32 %v5174, 2147483648
      %v5945 = vxor.u32 %v5176, 2147483648
      %v5946 = vxor.u32 %v5263, 2147483648
      %v5947 = vxor.u32 %v5265, 2147483648
      %v5948 = vxor.u32 %v5352, 2147483648
      %v5949 = vxor.u32 %v5354, 2147483648
      %v5950 = vxor.u32 %v5441, 2147483648
      %v5951 = vxor.u32 %v5443, 2147483648
      %v5952 = vxor.u32 %v5530, 2147483648
      %v5953 = vxor.u32 %v5532, 2147483648
      %v5954 = vxor.u32 %v5619, 2147483648
      %v5955 = vxor.u32 %v5621, 2147483648
      %v5956 = vxor.u32 %v5708, 2147483648
      %v5957 = vxor.u32 %v5710, 2147483648
      %v5958 = vxor.u32 %v5797, 2147483648
      %v5959 = vxor.u32 %v5799, 2147483648
      %v5960 = vxor.u32 %v5886, 2147483648
      %v5961 = vxor.u32 %v5888, 2147483648
      %v5962 = vmul.f32 %v5926, 1.442695
      %v5963 = vpow.pop %v5962
      %v5964 = vmul.f32 %v5927, 1.442695
      %v5965 = vpow.pop %v5964
      %v5966 = vmul.f32 %v5928, 1.442695
      %v5967 = vpow.pop %v5966
      %v5968 = vmul.f32 %v5929, 1.442695
      %v5969 = vpow.pop %v5968
      %v5970 = vmul.f32 %v5930, 1.442695
      %v5971 = vpow.pop %v5970
      %v5972 = vmul.f32 %v5931, 1.442695
      %v5973 = vpow.pop %v5972
      %v5974 = vmul.f32 %v5932, 1.442695
      %v5975 = vpow.pop %v5974
      %v5976 = vmul.f32 %v5933, 1.442695
      %v5977 = vpow.pop %v5976
      %v5978 = vmul.f32 %v5934, 1.442695
      %v5979 = vpow.pop %v5978
      %v5980 = vmul.f32 %v5935, 1.442695
      %v5981 = vpow.pop %v5980
      %v5982 = vmul.f32 %v5936, 1.442695
      %v5983 = vpow.pop %v5982
      %v5984 = vmul.f32 %v5937, 1.442695
      %v5985 = vpow.pop %v5984
      %v5986 = vmul.f32 %v5938, 1.442695
      %v5987 = vpow.pop %v5986
      %v5988 = vmul.f32 %v5939, 1.442695
      %v5989 = vpow.pop %v5988
      %v5990 = vmul.f32 %v5940, 1.442695
      %v5991 = vpow.pop %v5990
      %v5992 = vmul.f32 %v5941, 1.442695
      %v5993 = vpow.pop %v5992
      %v5994 = vmul.f32 %v5942, 1.442695
      %v5995 = vpow.pop %v5994
      %v5996 = vmul.f32 %v5943, 1.442695
      %v5997 = vpow.pop %v5996
      %v5998 = vmul.f32 %v5944, 1.442695
      %v5999 = vpow.pop %v5998
      %v6000 = vmul.f32 %v5945, 1.442695
      %v6001 = vpow.pop %v6000
      %v6002 = vmul.f32 %v5946, 1.442695
      %v6003 = vpow.pop %v6002
      %v6004 = vmul.f32 %v5947, 1.442695
      %v6005 = vpow.pop %v6004
      %v6006 = vmul.f32 %v5948, 1.442695
      %v6007 = vpow.pop %v6006
      %v6008 = vmul.f32 %v5949, 1.442695
      %v6009 = vpow.pop %v6008
      %v6010 = vmul.f32 %v5950, 1.442695
      %v6011 = vpow.pop %v6010
      %v6012 = vmul.f32 %v5951, 1.442695
      %v6013 = vpow.pop %v6012
      %v6014 = vmul.f32 %v5952, 1.442695
      %v6015 = vpow.pop %v6014
      %v6016 = vmul.f32 %v5953, 1.442695
      %v6017 = vpow.pop %v6016
      %v6018 = vmul.f32 %v5954, 1.442695
      %v6019 = vpow.pop %v6018
      %v6020 = vmul.f32 %v5955, 1.442695
      %v6021 = vpow.pop %v6020
      %v6022 = vmul.f32 %v5956, 1.442695
      %v6023 = vpow.pop %v6022
      %v6024 = vmul.f32 %v5957, 1.442695
      %v6025 = vpow.pop %v6024
      %v6026 = vmul.f32 %v5958, 1.442695
      %v6027 = vpow.pop %v6026
      %v6028 = vmul.f32 %v5959, 1.442695
      %v6029 = vpow.pop %v6028
      %v6030 = vmul.f32 %v5960, 1.442695
      %v6031 = vpow.pop %v6030
      %v6032 = vmul.f32 %v5961, 1.442695
      %v6033 = vpow.pop %v6032
      %v6034 = vadd.f32 %v5963, 1.0
      %v6035 = vadd.f32 %v5965, 1.0
      %v6036 = vadd.f32 %v5967, 1.0
      %v6037 = vadd.f32 %v5969, 1.0
      %v6038 = vadd.f32 %v5971, 1.0
      %v6039 = vadd.f32 %v5973, 1.0
      %v6040 = vadd.f32 %v5975, 1.0
      %v6041 = vadd.f32 %v5977, 1.0
      %v6042 = vadd.f32 %v5979, 1.0
      %v6043 = vadd.f32 %v5981, 1.0
      %v6044 = vadd.f32 %v5983, 1.0
      %v6045 = vadd.f32 %v5985, 1.0
      %v6046 = vadd.f32 %v5987, 1.0
      %v6047 = vadd.f32 %v5989, 1.0
      %v6048 = vadd.f32 %v5991, 1.0
      %v6049 = vadd.f32 %v5993, 1.0
      %v6050 = vadd.f32 %v5995, 1.0
      %v6051 = vadd.f32 %v5997, 1.0
      %v6052 = vadd.f32 %v5999, 1.0
      %v6053 = vadd.f32 %v6001, 1.0
      %v6054 = vadd.f32 %v6003, 1.0
      %v6055 = vadd.f32 %v6005, 1.0
      %v6056 = vadd.f32 %v6007, 1.0
      %v6057 = vadd.f32 %v6009, 1.0
      %v6058 = vadd.f32 %v6011, 1.0
      %v6059 = vadd.f32 %v6013, 1.0
      %v6060 = vadd.f32 %v6015, 1.0
      %v6061 = vadd.f32 %v6017, 1.0
      %v6062 = vadd.f32 %v6019, 1.0
      %v6063 = vadd.f32 %v6021, 1.0
      %v6064 = vadd.f32 %v6023, 1.0
      %v6065 = vadd.f32 %v6025, 1.0
      %v6066 = vadd.f32 %v6027, 1.0
      %v6067 = vadd.f32 %v6029, 1.0
      %v6068 = vadd.f32 %v6031, 1.0
      %v6069 = vadd.f32 %v6033, 1.0
      %v6070 = vrcp.pop %v6034
      %v6071 = vmul.f32 1.0, %v6070
      %v6072 = vrcp.pop %v6035
      %v6073 = vmul.f32 1.0, %v6072
      %v6074 = vrcp.pop %v6036
      %v6075 = vmul.f32 1.0, %v6074
      %v6076 = vrcp.pop %v6037
      %v6077 = vmul.f32 1.0, %v6076
      %v6078 = vrcp.pop %v6038
      %v6079 = vmul.f32 1.0, %v6078
      %v6080 = vrcp.pop %v6039
      %v6081 = vmul.f32 1.0, %v6080
      %v6082 = vrcp.pop %v6040
      %v6083 = vmul.f32 1.0, %v6082
      %v6084 = vrcp.pop %v6041
      %v6085 = vmul.f32 1.0, %v6084
      %v6086 = vrcp.pop %v6042
      %v6087 = vmul.f32 1.0, %v6086
      %v6088 = vrcp.pop %v6043
      %v6089 = vmul.f32 1.0, %v6088
      %v6090 = vrcp.pop %v6044
      %v6091 = vmul.f32 1.0, %v6090
      %v6092 = vrcp.pop %v6045
      %v6093 = vmul.f32 1.0, %v6092
      %v6094 = vrcp.pop %v6046
      %v6095 = vmul.f32 1.0, %v6094
      %v6096 = vrcp.pop %v6047
      %v6097 = vmul.f32 1.0, %v6096
      %v6098 = vrcp.pop %v6048
      %v6099 = vmul.f32 1.0, %v6098
      %v6100 = vrcp.pop %v6049
      %v6101 = vmul.f32 1.0, %v6100
      %v6102 = vrcp.pop %v6050
      %v6103 = vmul.f32 1.0, %v6102
      %v6104 = vrcp.pop %v6051
      %v6105 = vmul.f32 1.0, %v6104
      %v6106 = vrcp.pop %v6052
      %v6107 = vmul.f32 1.0, %v6106
      %v6108 = vrcp.pop %v6053
      %v6109 = vmul.f32 1.0, %v6108
      %v6110 = vrcp.pop %v6054
      %v6111 = vmul.f32 1.0, %v6110
      %v6112 = vrcp.pop %v6055
      %v6113 = vmul.f32 1.0, %v6112
      %v6114 = vrcp.pop %v6056
      %v6115 = vmul.f32 1.0, %v6114
      %v6116 = vrcp.pop %v6057
      %v6117 = vmul.f32 1.0, %v6116
      %v6118 = vrcp.pop %v6058
      %v6119 = vmul.f32 1.0, %v6118
      %v6120 = vrcp.pop %v6059
      %v6121 = vmul.f32 1.0, %v6120
      %v6122 = vrcp.pop %v6060
      %v6123 = vmul.f32 1.0, %v6122
      %v6124 = vrcp.pop %v6061
      %v6125 = vmul.f32 1.0, %v6124
      %v6126 = vrcp.pop %v6062
      %v6127 = vmul.f32 1.0, %v6126
      %v6128 = vrcp.pop %v6063
      %v6129 = vmul.f32 1.0, %v6128
      %v6130 = vrcp.pop %v6064
      %v6131 = vmul.f32 1.0, %v6130
      %v6132 = vrcp.pop %v6065
      %v6133 = vmul.f32 1.0, %v6132
      %v6134 = vrcp.pop %v6066
      %v6135 = vmul.f32 1.0, %v6134
      %v6136 = vrcp.pop %v6067
      %v6137 = vmul.f32 1.0, %v6136
      %v6138 = vrcp.pop %v6068
      %v6139 = vmul.f32 1.0, %v6138
      %v6140 = vrcp.pop %v6069
      %v6141 = vmul.f32 1.0, %v6140
      %v6142 = vmul.f32 %v5890, %v6071
      %v6143 = vmul.f32 %v5891, %v6073
      %v6144 = vmul.f32 %v5892, %v6075
      %v6145 = vmul.f32 %v5893, %v6077
      %v6146 = vmul.f32 %v5894, %v6079
      %v6147 = vmul.f32 %v5895, %v6081
      %v6148 = vmul.f32 %v5896, %v6083
      %v6149 = vmul.f32 %v5897, %v6085
      %v6150 = vmul.f32 %v5898, %v6087
      %v6151 = vmul.f32 %v5899, %v6089
      %v6152 = vmul.f32 %v5900, %v6091
      %v6153 = vmul.f32 %v5901, %v6093
      %v6154 = vmul.f32 %v5902, %v6095
      %v6155 = vmul.f32 %v5903, %v6097
      %v6156 = vmul.f32 %v5904, %v6099
      %v6157 = vmul.f32 %v5905, %v6101
      %v6158 = vmul.f32 %v5906, %v6103
      %v6159 = vmul.f32 %v5907, %v6105
      %v6160 = vmul.f32 %v5908, %v6107
      %v6161 = vmul.f32 %v5909, %v6109
      %v6162 = vmul.f32 %v5910, %v6111
      %v6163 = vmul.f32 %v5911, %v6113
      %v6164 = vmul.f32 %v5912, %v6115
      %v6165 = vmul.f32 %v5913, %v6117
      %v6166 = vmul.f32 %v5914, %v6119
      %v6167 = vmul.f32 %v5915, %v6121
      %v6168 = vmul.f32 %v5916, %v6123
      %v6169 = vmul.f32 %v5917, %v6125
      %v6170 = vmul.f32 %v5918, %v6127
      %v6171 = vmul.f32 %v5919, %v6129
      %v6172 = vmul.f32 %v5920, %v6131
      %v6173 = vmul.f32 %v5921, %v6133
      %v6174 = vmul.f32 %v5922, %v6135
      %v6175 = vmul.f32 %v5923, %v6137
      %v6176 = vmul.f32 %v5924, %v6139
      %v6177 = vmul.f32 %v5925, %v6141
      %6179 = vset.pattern.permute.xlu0 32
      %6180 = vperm.xlu0 %6179, %v5059
      %v6181 = vpop.permute.xlu0 %6180
      %6184 = vset.pattern.permute.xlu0 32
      %6185 = vperm.xlu0 %6184, %v5060
      %v6186 = vpop.permute.xlu0 %6185
      %v6188 = vsel %vm2008, %v5059, 0
      %v6190 = vsel %vm2008, %v5060, 0
      %6192 = vmatprep.subr.mxu0 %v6143
      %6193 = vmatpush1.msra.mxu0 %v6142
      %6194 = vmatprep.subr.mxu0 %v6161
      %6195 = vmatpush1.msra.mxu0 %v6160
      %6196 = vmatprep.subr.mxu0 0.0
      %6197 = vmatpush1.msra.mxu0 0.0
      %6198 = vmatprep.subr.mxu0 0.0
      %6199 = vmatpush1.msra.mxu0 0.0
      %6200 = vmatprep.subr.mxu0 0.0
      %6201 = vmatpush1.msra.mxu0 0.0
      %6202 = vmatprep.subr.mxu0 0.0
      %6203 = vmatpush1.msra.mxu0 0.0
      %6204 = vmatprep.subr.mxu0 0.0
      %6205 = vmatpush1.msra.mxu0 0.0
      %6206 = vmatprep.subr.mxu0 0.0
      %6207 = vmatpush1.msra.mxu0 0.0
      %6208 = vmatprep.subr.mxu0 0.0
      %6209 = vmatpush1.msra.mxu0 0.0
      %6210 = vmatprep.subr.mxu0 0.0
      %6211 = vmatpush1.msra.mxu0 0.0
      %6212 = vmatprep.subr.mxu0 0.0
      %6213 = vmatpush1.msra.mxu0 0.0
      %6214 = vmatprep.subr.mxu0 0.0
      %6215 = vmatpush1.msra.mxu0 0.0
      %6216 = vmatprep.subr.mxu0 0.0
      %6217 = vmatpush1.msra.mxu0 0.0
      %6218 = vmatprep.subr.mxu0 0.0
      %6219 = vmatpush1.msra.mxu0 0.0
      %6220 = vmatprep.subr.mxu0 0.0
      %6221 = vmatpush1.msra.mxu0 0.0
      %6222 = vmatprep.subr.mxu0 0.0
      %6223 = vmatpush1.msra.mxu0 0.0
      %6224 = vmatprep.subr.mxu0 0.0
      %6225 = vmatpush1.msra.mxu0 0.0
      %6226 = vmatprep.subr.mxu0 0.0
      %6227 = vmatpush1.msra.mxu0 0.0
      %6228 = vmatprep.subr.mxu0 0.0
      %6229 = vmatpush1.msra.mxu0 0.0
      %6230 = vmatprep.subr.mxu0 0.0
      %6231 = vmatpush1.msra.mxu0 0.0
      %6232 = vmatprep.subr.mxu0 0.0
      %6233 = vmatpush1.msra.mxu0 0.0
      %6234 = vmatprep.subr.mxu0 0.0
      %6235 = vmatpush1.msra.mxu0 0.0
      %6236 = vmatprep.subr.mxu0 0.0
      %6237 = vmatpush1.msra.mxu0 0.0
      %6238 = vmatprep.subr.mxu0 0.0
      %6239 = vmatpush1.msra.mxu0 0.0
      %6240 = vmatprep.subr.mxu0 0.0
      %6241 = vmatpush1.msra.mxu0 0.0
      %6242 = vmatprep.subr.mxu0 0.0
      %6243 = vmatpush1.msra.mxu0 0.0
      %6244 = vmatprep.subr.mxu0 0.0
      %6245 = vmatpush1.msra.mxu0 0.0
      %6246 = vmatprep.subr.mxu0 0.0
      %6247 = vmatpush1.msra.mxu0 0.0
      %6248 = vmatprep.subr.mxu0 0.0
      %6249 = vmatpush1.msra.mxu0 0.0
      %6250 = vmatprep.subr.mxu0 0.0
      %6251 = vmatpush1.msra.mxu0 0.0
      %6252 = vmatprep.subr.mxu0 0.0
      %6253 = vmatpush1.msra.mxu0 0.0
      %6254 = vmatprep.subr.mxu0 0.0
      %6255 = vmatpush1.msra.mxu0 0.0
      %6256 = vmatprep.mubr.f32.mxu0 0.0
      %6257 = vmatmul.mubr.f32.gmra.mrb[0].mxu0 %v6188
      %v6258 = vpop.f32.mrb[0].mxu0
      %v6259 = vadd.f32 %v6181, %v6258
      %v6260 = vpop.f32.mrb[0].mxu0
      %v6261 = vadd.f32 %v6181, %v6260
      %6262 = vmatprep.mubr.f32.mxu0 0.0
      %6263 = vmatmul.mubr.f32.gmra.mrb[0].mxu0 %v6190
      %v6264 = vpop.f32.mrb[0].mxu0
      %v6265 = vadd.f32 %v6186, %v6264
      %v6266 = vpop.f32.mrb[0].mxu0
      %v6267 = vadd.f32 %v6186, %v6266
      %6268 = vdwg.mxu0
      %6269 = vmatprep.subr.mxu0 %v6145
      %6270 = vmatpush1.msra.mxu0 %v6144
      %6271 = vmatprep.subr.mxu0 %v6163
      %6272 = vmatpush1.msra.mxu0 %v6162
      %6273 = vmatprep.subr.mxu0 0.0
      %6274 = vmatpush1.msra.mxu0 0.0
      %6275 = vmatprep.subr.mxu0 0.0
      %6276 = vmatpush1.msra.mxu0 0.0
      %6277 = vmatprep.subr.mxu0 0.0
      %6278 = vmatpush1.msra.mxu0 0.0
      %6279 = vmatprep.subr.mxu0 0.0
      %6280 = vmatpush1.msra.mxu0 0.0
      %6281 = vmatprep.subr.mxu0 0.0
      %6282 = vmatpush1.msra.mxu0 0.0
      %6283 = vmatprep.subr.mxu0 0.0
      %6284 = vmatpush1.msra.mxu0 0.0
      %6285 = vmatprep.subr.mxu0 0.0
      %6286 = vmatpush1.msra.mxu0 0.0
      %6287 = vmatprep.subr.mxu0 0.0
      %6288 = vmatpush1.msra.mxu0 0.0
      %6289 = vmatprep.subr.mxu0 0.0
      %6290 = vmatpush1.msra.mxu0 0.0
      %6291 = vmatprep.subr.mxu0 0.0
      %6292 = vmatpush1.msra.mxu0 0.0
      %6293 = vmatprep.subr.mxu0 0.0
      %6294 = vmatpush1.msra.mxu0 0.0
      %6295 = vmatprep.subr.mxu0 0.0
      %6296 = vmatpush1.msra.mxu0 0.0
      %6297 = vmatprep.subr.mxu0 0.0
      %6298 = vmatpush1.msra.mxu0 0.0
      %6299 = vmatprep.subr.mxu0 0.0
      %6300 = vmatpush1.msra.mxu0 0.0
      %6301 = vmatprep.subr.mxu0 0.0
      %6302 = vmatpush1.msra.mxu0 0.0
      %6303 = vmatprep.subr.mxu0 0.0
      %6304 = vmatpush1.msra.mxu0 0.0
      %6305 = vmatprep.subr.mxu0 0.0
      %6306 = vmatpush1.msra.mxu0 0.0
      %6307 = vmatprep.subr.mxu0 0.0
      %6308 = vmatpush1.msra.mxu0 0.0
      %6309 = vmatprep.subr.mxu0 0.0
      %6310 = vmatpush1.msra.mxu0 0.0
      %6311 = vmatprep.subr.mxu0 0.0
      %6312 = vmatpush1.msra.mxu0 0.0
      %6313 = vmatprep.subr.mxu0 0.0
      %6314 = vmatpush1.msra.mxu0 0.0
      %6315 = vmatprep.subr.mxu0 0.0
      %6316 = vmatpush1.msra.mxu0 0.0
      %6317 = vmatprep.subr.mxu0 0.0
      %6318 = vmatpush1.msra.mxu0 0.0
      %6319 = vmatprep.subr.mxu0 0.0
      %6320 = vmatpush1.msra.mxu0 0.0
      %6321 = vmatprep.subr.mxu0 0.0
      %6322 = vmatpush1.msra.mxu0 0.0
      %6323 = vmatprep.subr.mxu0 0.0
      %6324 = vmatpush1.msra.mxu0 0.0
      %6325 = vmatprep.subr.mxu0 0.0
      %6326 = vmatpush1.msra.mxu0 0.0
      %6327 = vmatprep.subr.mxu0 0.0
      %6328 = vmatpush1.msra.mxu0 0.0
      %6329 = vmatprep.subr.mxu0 0.0
      %6330 = vmatpush1.msra.mxu0 0.0
      %6331 = vmatprep.subr.mxu0 0.0
      %6332 = vmatpush1.msra.mxu0 0.0
      %6333 = vmatprep.mubr.f32.mxu0 0.0
      %6334 = vmatmul.mubr.f32.gmra.mrb[0].mxu0 %v6188
      %v6335 = vpop.f32.mrb[0].mxu0
      %v6336 = vadd.f32 %v6181, %v6335
      %v6337 = vpop.f32.mrb[0].mxu0
      %v6338 = vadd.f32 %v6181, %v6337
      %6339 = vmatprep.mubr.f32.mxu0 0.0
      %6340 = vmatmul.mubr.f32.gmra.mrb[0].mxu0 %v6190
      %v6341 = vpop.f32.mrb[0].mxu0
      %v6342 = vadd.f32 %v6186, %v6341
      %v6343 = vpop.f32.mrb[0].mxu0
      %v6344 = vadd.f32 %v6186, %v6343
      %6345 = vdwg.mxu0
      %6346 = vmatprep.subr.mxu0 %v6147
      %6347 = vmatpush1.msra.mxu0 %v6146
      %6348 = vmatprep.subr.mxu0 %v6165
      %6349 = vmatpush1.msra.mxu0 %v6164
      %6350 = vmatprep.subr.mxu0 0.0
      %6351 = vmatpush1.msra.mxu0 0.0
      %6352 = vmatprep.subr.mxu0 0.0
      %6353 = vmatpush1.msra.mxu0 0.0
      %6354 = vmatprep.subr.mxu0 0.0
      %6355 = vmatpush1.msra.mxu0 0.0
      %6356 = vmatprep.subr.mxu0 0.0
      %6357 = vmatpush1.msra.mxu0 0.0
      %6358 = vmatprep.subr.mxu0 0.0
      %6359 = vmatpush1.msra.mxu0 0.0
      %6360 = vmatprep.subr.mxu0 0.0
      %6361 = vmatpush1.msra.mxu0 0.0
      %6362 = vmatprep.subr.mxu0 0.0
      %6363 = vmatpush1.msra.mxu0 0.0
      %6364 = vmatprep.subr.mxu0 0.0
      %6365 = vmatpush1.msra.mxu0 0.0
      %6366 = vmatprep.subr.mxu0 0.0
      %6367 = vmatpush1.msra.mxu0 0.0
      %6368 = vmatprep.subr.mxu0 0.0
      %6369 = vmatpush1.msra.mxu0 0.0
      %6370 = vmatprep.subr.mxu0 0.0
      %6371 = vmatpush1.msra.mxu0 0.0
      %6372 = vmatprep.subr.mxu0 0.0
      %6373 = vmatpush1.msra.mxu0 0.0
      %6374 = vmatprep.subr.mxu0 0.0
      %6375 = vmatpush1.msra.mxu0 0.0
      %6376 = vmatprep.subr.mxu0 0.0
      %6377 = vmatpush1.msra.mxu0 0.0
      %6378 = vmatprep.subr.mxu0 0.0
      %6379 = vmatpush1.msra.mxu0 0.0
      %6380 = vmatprep.subr.mxu0 0.0
      %6381 = vmatpush1.msra.mxu0 0.0
      %6382 = vmatprep.subr.mxu0 0.0
      %6383 = vmatpush1.msra.mxu0 0.0
      %6384 = vmatprep.subr.mxu0 0.0
      %6385 = vmatpush1.msra.mxu0 0.0
      %6386 = vmatprep.subr.mxu0 0.0
      %6387 = vmatpush1.msra.mxu0 0.0
      %6388 = vmatprep.subr.mxu0 0.0
      %6389 = vmatpush1.msra.mxu0 0.0
      %6390 = vmatprep.subr.mxu0 0.0
      %6391 = vmatpush1.msra.mxu0 0.0
      %6392 = vmatprep.subr.mxu0 0.0
      %6393 = vmatpush1.msra.mxu0 0.0
      %6394 = vmatprep.subr.mxu0 0.0
      %6395 = vmatpush1.msra.mxu0 0.0
      %6396 = vmatprep.subr.mxu0 0.0
      %6397 = vmatpush1.msra.mxu0 0.0
      %6398 = vmatprep.subr.mxu0 0.0
      %6399 = vmatpush1.msra.mxu0 0.0
      %6400 = vmatprep.subr.mxu0 0.0
      %6401 = vmatpush1.msra.mxu0 0.0
      %6402 = vmatprep.subr.mxu0 0.0
      %6403 = vmatpush1.msra.mxu0 0.0
      %6404 = vmatprep.subr.mxu0 0.0
      %6405 = vmatpush1.msra.mxu0 0.0
      %6406 = vmatprep.subr.mxu0 0.0
      %6407 = vmatpush1.msra.mxu0 0.0
      %6408 = vmatprep.subr.mxu0 0.0
      %6409 = vmatpush1.msra.mxu0 0.0
      %6410 = vmatprep.mubr.f32.mxu0 0.0
      %6411 = vmatmul.mubr.f32.gmra.mrb[0].mxu0 %v6188
      %v6412 = vpop.f32.mrb[0].mxu0
      %v6413 = vadd.f32 %v6181, %v6412
      %v6414 = vpop.f32.mrb[0].mxu0
      %v6415 = vadd.f32 %v6181, %v6414
      %6416 = vmatprep.mubr.f32.mxu0 0.0
      %6417 = vmatmul.mubr.f32.gmra.mrb[0].mxu0 %v6190
      %v6418 = vpop.f32.mrb[0].mxu0
      %v6419 = vadd.f32 %v6186, %v6418
      %v6420 = vpop.f32.mrb[0].mxu0
      %v6421 = vadd.f32 %v6186, %v6420
      %6422 = vdwg.mxu0
      %6423 = vmatprep.subr.mxu0 %v6149
      %6424 = vmatpush1.msra.mxu0 %v6148
      %6425 = vmatprep.subr.mxu0 %v6167
      %6426 = vmatpush1.msra.mxu0 %v6166
      %6427 = vmatprep.subr.mxu0 0.0
      %6428 = vmatpush1.msra.mxu0 0.0
      %6429 = vmatprep.subr.mxu0 0.0
      %6430 = vmatpush1.msra.mxu0 0.0
      %6431 = vmatprep.subr.mxu0 0.0
      %6432 = vmatpush1.msra.mxu0 0.0
      %6433 = vmatprep.subr.mxu0 0.0
      %6434 = vmatpush1.msra.mxu0 0.0
      %6435 = vmatprep.subr.mxu0 0.0
      %6436 = vmatpush1.msra.mxu0 0.0
      %6437 = vmatprep.subr.mxu0 0.0
      %6438 = vmatpush1.msra.mxu0 0.0
      %6439 = vmatprep.subr.mxu0 0.0
      %6440 = vmatpush1.msra.mxu0 0.0
      %6441 = vmatprep.subr.mxu0 0.0
      %6442 = vmatpush1.msra.mxu0 0.0
      %6443 = vmatprep.subr.mxu0 0.0
      %6444 = vmatpush1.msra.mxu0 0.0
      %6445 = vmatprep.subr.mxu0 0.0
      %6446 = vmatpush1.msra.mxu0 0.0
      %6447 = vmatprep.subr.mxu0 0.0
      %6448 = vmatpush1.msra.mxu0 0.0
      %6449 = vmatprep.subr.mxu0 0.0
      %6450 = vmatpush1.msra.mxu0 0.0
      %6451 = vmatprep.subr.mxu0 0.0
      %6452 = vmatpush1.msra.mxu0 0.0
      %6453 = vmatprep.subr.mxu0 0.0
      %6454 = vmatpush1.msra.mxu0 0.0
      %6455 = vmatprep.subr.mxu0 0.0
      %6456 = vmatpush1.msra.mxu0 0.0
      %6457 = vmatprep.subr.mxu0 0.0
      %6458 = vmatpush1.msra.mxu0 0.0
      %6459 = vmatprep.subr.mxu0 0.0
      %6460 = vmatpush1.msra.mxu0 0.0
      %6461 = vmatprep.subr.mxu0 0.0
      %6462 = vmatpush1.msra.mxu0 0.0
      %6463 = vmatprep.subr.mxu0 0.0
      %6464 = vmatpush1.msra.mxu0 0.0
      %6465 = vmatprep.subr.mxu0 0.0
      %6466 = vmatpush1.msra.mxu0 0.0
      %6467 = vmatprep.subr.mxu0 0.0
      %6468 = vmatpush1.msra.mxu0 0.0
      %6469 = vmatprep.subr.mxu0 0.0
      %6470 = vmatpush1.msra.mxu0 0.0
      %6471 = vmatprep.subr.mxu0 0.0
      %6472 = vmatpush1.msra.mxu0 0.0
      %6473 = vmatprep.subr.mxu0 0.0
      %6474 = vmatpush1.msra.mxu0 0.0
      %6475 = vmatprep.subr.mxu0 0.0
      %6476 = vmatpush1.msra.mxu0 0.0
      %6477 = vmatprep.subr.mxu0 0.0
      %6478 = vmatpush1.msra.mxu0 0.0
      %6479 = vmatprep.subr.mxu0 0.0
      %6480 = vmatpush1.msra.mxu0 0.0
      %6481 = vmatprep.subr.mxu0 0.0
      %6482 = vmatpush1.msra.mxu0 0.0
      %6483 = vmatprep.subr.mxu0 0.0
      %6484 = vmatpush1.msra.mxu0 0.0
      %6485 = vmatprep.subr.mxu0 0.0
      %6486 = vmatpush1.msra.mxu0 0.0
      %6487 = vmatprep.mubr.f32.mxu0 0.0
      %6488 = vmatmul.mubr.f32.gmra.mrb[0].mxu0 %v6188
      %v6489 = vpop.f32.mrb[0].mxu0
      %v6490 = vadd.f32 %v6181, %v6489
      %v6491 = vpop.f32.mrb[0].mxu0
      %v6492 = vadd.f32 %v6181, %v6491
      %6493 = vmatprep.mubr.f32.mxu0 0.0
      %6494 = vmatmul.mubr.f32.gmra.mrb[0].mxu0 %v6190
      %v6495 = vpop.f32.mrb[0].mxu0
      %v6496 = vadd.f32 %v6186, %v6495
      %v6497 = vpop.f32.mrb[0].mxu0
      %v6498 = vadd.f32 %v6186, %v6497
      %6499 = vdwg.mxu0
      %6500 = vmatprep.subr.mxu0 %v6151
      %6501 = vmatpush1.msra.mxu0 %v6150
      %6502 = vmatprep.subr.mxu0 %v6169
      %6503 = vmatpush1.msra.mxu0 %v6168
      %6504 = vmatprep.subr.mxu0 0.0
      %6505 = vmatpush1.msra.mxu0 0.0
      %6506 = vmatprep.subr.mxu0 0.0
      %6507 = vmatpush1.msra.mxu0 0.0
      %6508 = vmatprep.subr.mxu0 0.0
      %6509 = vmatpush1.msra.mxu0 0.0
      %6510 = vmatprep.subr.mxu0 0.0
      %6511 = vmatpush1.msra.mxu0 0.0
      %6512 = vmatprep.subr.mxu0 0.0
      %6513 = vmatpush1.msra.mxu0 0.0
      %6514 = vmatprep.subr.mxu0 0.0
      %6515 = vmatpush1.msra.mxu0 0.0
      %6516 = vmatprep.subr.mxu0 0.0
      %6517 = vmatpush1.msra.mxu0 0.0
      %6518 = vmatprep.subr.mxu0 0.0
      %6519 = vmatpush1.msra.mxu0 0.0
      %6520 = vmatprep.subr.mxu0 0.0
      %6521 = vmatpush1.msra.mxu0 0.0
      %6522 = vmatprep.subr.mxu0 0.0
      %6523 = vmatpush1.msra.mxu0 0.0
      %6524 = vmatprep.subr.mxu0 0.0
      %6525 = vmatpush1.msra.mxu0 0.0
      %6526 = vmatprep.subr.mxu0 0.0
      %6527 = vmatpush1.msra.mxu0 0.0
      %6528 = vmatprep.subr.mxu0 0.0
      %6529 = vmatpush1.msra.mxu0 0.0
      %6530 = vmatprep.subr.mxu0 0.0
      %6531 = vmatpush1.msra.mxu0 0.0
      %6532 = vmatprep.subr.mxu0 0.0
      %6533 = vmatpush1.msra.mxu0 0.0
      %6534 = vmatprep.subr.mxu0 0.0
      %6535 = vmatpush1.msra.mxu0 0.0
      %6536 = vmatprep.subr.mxu0 0.0
      %6537 = vmatpush1.msra.mxu0 0.0
      %6538 = vmatprep.subr.mxu0 0.0
      %6539 = vmatpush1.msra.mxu0 0.0
      %6540 = vmatprep.subr.mxu0 0.0
      %6541 = vmatpush1.msra.mxu0 0.0
      %6542 = vmatprep.subr.mxu0 0.0
      %6543 = vmatpush1.msra.mxu0 0.0
      %6544 = vmatprep.subr.mxu0 0.0
      %6545 = vmatpush1.msra.mxu0 0.0
      %6546 = vmatprep.subr.mxu0 0.0
      %6547 = vmatpush1.msra.mxu0 0.0
      %6548 = vmatprep.subr.mxu0 0.0
      %6549 = vmatpush1.msra.mxu0 0.0
      %6550 = vmatprep.subr.mxu0 0.0
      %6551 = vmatpush1.msra.mxu0 0.0
      %6552 = vmatprep.subr.mxu0 0.0
      %6553 = vmatpush1.msra.mxu0 0.0
      %6554 = vmatprep.subr.mxu0 0.0
      %6555 = vmatpush1.msra.mxu0 0.0
      %6556 = vmatprep.subr.mxu0 0.0
      %6557 = vmatpush1.msra.mxu0 0.0
      %6558 = vmatprep.subr.mxu0 0.0
      %6559 = vmatpush1.msra.mxu0 0.0
      %6560 = vmatprep.subr.mxu0 0.0
      %6561 = vmatpush1.msra.mxu0 0.0
      %6562 = vmatprep.subr.mxu0 0.0
      %6563 = vmatpush1.msra.mxu0 0.0
      %6564 = vmatprep.mubr.f32.mxu0 0.0
      %6565 = vmatmul.mubr.f32.gmra.mrb[0].mxu0 %v6188
      %v6566 = vpop.f32.mrb[0].mxu0
      %v6567 = vadd.f32 %v6181, %v6566
      %v6568 = vpop.f32.mrb[0].mxu0
      %v6569 = vadd.f32 %v6181, %v6568
      %6570 = vmatprep.mubr.f32.mxu0 0.0
      %6571 = vmatmul.mubr.f32.gmra.mrb[0].mxu0 %v6190
      %v6572 = vpop.f32.mrb[0].mxu0
      %v6573 = vadd.f32 %v6186, %v6572
      %v6574 = vpop.f32.mrb[0].mxu0
      %v6575 = vadd.f32 %v6186, %v6574
      %6576 = vdwg.mxu0
      %6577 = vmatprep.subr.mxu0 %v6153
      %6578 = vmatpush1.msra.mxu0 %v6152
      %6579 = vmatprep.subr.mxu0 %v6171
      %6580 = vmatpush1.msra.mxu0 %v6170
      %6581 = vmatprep.subr.mxu0 0.0
      %6582 = vmatpush1.msra.mxu0 0.0
      %6583 = vmatprep.subr.mxu0 0.0
      %6584 = vmatpush1.msra.mxu0 0.0
      %6585 = vmatprep.subr.mxu0 0.0
      %6586 = vmatpush1.msra.mxu0 0.0
      %6587 = vmatprep.subr.mxu0 0.0
      %6588 = vmatpush1.msra.mxu0 0.0
      %6589 = vmatprep.subr.mxu0 0.0
      %6590 = vmatpush1.msra.mxu0 0.0
      %6591 = vmatprep.subr.mxu0 0.0
      %6592 = vmatpush1.msra.mxu0 0.0
      %6593 = vmatprep.subr.mxu0 0.0
      %6594 = vmatpush1.msra.mxu0 0.0
      %6595 = vmatprep.subr.mxu0 0.0
      %6596 = vmatpush1.msra.mxu0 0.0
      %6597 = vmatprep.subr.mxu0 0.0
      %6598 = vmatpush1.msra.mxu0 0.0
      %6599 = vmatprep.subr.mxu0 0.0
      %6600 = vmatpush1.msra.mxu0 0.0
      %6601 = vmatprep.subr.mxu0 0.0
      %6602 = vmatpush1.msra.mxu0 0.0
      %6603 = vmatprep.subr.mxu0 0.0
      %6604 = vmatpush1.msra.mxu0 0.0
      %6605 = vmatprep.subr.mxu0 0.0
      %6606 = vmatpush1.msra.mxu0 0.0
      %6607 = vmatprep.subr.mxu0 0.0
      %6608 = vmatpush1.msra.mxu0 0.0
      %6609 = vmatprep.subr.mxu0 0.0
      %6610 = vmatpush1.msra.mxu0 0.0
      %6611 = vmatprep.subr.mxu0 0.0
      %6612 = vmatpush1.msra.mxu0 0.0
      %6613 = vmatprep.subr.mxu0 0.0
      %6614 = vmatpush1.msra.mxu0 0.0
      %6615 = vmatprep.subr.mxu0 0.0
      %6616 = vmatpush1.msra.mxu0 0.0
      %6617 = vmatprep.subr.mxu0 0.0
      %6618 = vmatpush1.msra.mxu0 0.0
      %6619 = vmatprep.subr.mxu0 0.0
      %6620 = vmatpush1.msra.mxu0 0.0
      %6621 = vmatprep.subr.mxu0 0.0
      %6622 = vmatpush1.msra.mxu0 0.0
      %6623 = vmatprep.subr.mxu0 0.0
      %6624 = vmatpush1.msra.mxu0 0.0
      %6625 = vmatprep.subr.mxu0 0.0
      %6626 = vmatpush1.msra.mxu0 0.0
      %6627 = vmatprep.subr.mxu0 0.0
      %6628 = vmatpush1.msra.mxu0 0.0
      %6629 = vmatprep.subr.mxu0 0.0
      %6630 = vmatpush1.msra.mxu0 0.0
      %6631 = vmatprep.subr.mxu0 0.0
      %6632 = vmatpush1.msra.mxu0 0.0
      %6633 = vmatprep.subr.mxu0 0.0
      %6634 = vmatpush1.msra.mxu0 0.0
      %6635 = vmatprep.subr.mxu0 0.0
      %6636 = vmatpush1.msra.mxu0 0.0
      %6637 = vmatprep.subr.mxu0 0.0
      %6638 = vmatpush1.msra.mxu0 0.0
      %6639 = vmatprep.subr.mxu0 0.0
      %6640 = vmatpush1.msra.mxu0 0.0
      %6641 = vmatprep.mubr.f32.mxu0 0.0
      %6642 = vmatmul.mubr.f32.gmra.mrb[0].mxu0 %v6188
      %v6643 = vpop.f32.mrb[0].mxu0
      %v6644 = vadd.f32 %v6181, %v6643
      %v6645 = vpop.f32.mrb[0].mxu0
      %v6646 = vadd.f32 %v6181, %v6645
      %6647 = vmatprep.mubr.f32.mxu0 0.0
      %6648 = vmatmul.mubr.f32.gmra.mrb[0].mxu0 %v6190
      %v6649 = vpop.f32.mrb[0].mxu0
      %v6650 = vadd.f32 %v6186, %v6649
      %v6651 = vpop.f32.mrb[0].mxu0
      %v6652 = vadd.f32 %v6186, %v6651
      %6653 = vdwg.mxu0
      %6654 = vmatprep.subr.mxu0 %v6155
      %6655 = vmatpush1.msra.mxu0 %v6154
      %6656 = vmatprep.subr.mxu0 %v6173
      %6657 = vmatpush1.msra.mxu0 %v6172
      %6658 = vmatprep.subr.mxu0 0.0
      %6659 = vmatpush1.msra.mxu0 0.0
      %6660 = vmatprep.subr.mxu0 0.0
      %6661 = vmatpush1.msra.mxu0 0.0
      %6662 = vmatprep.subr.mxu0 0.0
      %6663 = vmatpush1.msra.mxu0 0.0
      %6664 = vmatprep.subr.mxu0 0.0
      %6665 = vmatpush1.msra.mxu0 0.0
      %6666 = vmatprep.subr.mxu0 0.0
      %6667 = vmatpush1.msra.mxu0 0.0
      %6668 = vmatprep.subr.mxu0 0.0
      %6669 = vmatpush1.msra.mxu0 0.0
      %6670 = vmatprep.subr.mxu0 0.0
      %6671 = vmatpush1.msra.mxu0 0.0
      %6672 = vmatprep.subr.mxu0 0.0
      %6673 = vmatpush1.msra.mxu0 0.0
      %6674 = vmatprep.subr.mxu0 0.0
      %6675 = vmatpush1.msra.mxu0 0.0
      %6676 = vmatprep.subr.mxu0 0.0
      %6677 = vmatpush1.msra.mxu0 0.0
      %6678 = vmatprep.subr.mxu0 0.0
      %6679 = vmatpush1.msra.mxu0 0.0
      %6680 = vmatprep.subr.mxu0 0.0
      %6681 = vmatpush1.msra.mxu0 0.0
      %6682 = vmatprep.subr.mxu0 0.0
      %6683 = vmatpush1.msra.mxu0 0.0
      %6684 = vmatprep.subr.mxu0 0.0
      %6685 = vmatpush1.msra.mxu0 0.0
      %6686 = vmatprep.subr.mxu0 0.0
      %6687 = vmatpush1.msra.mxu0 0.0
      %6688 = vmatprep.subr.mxu0 0.0
      %6689 = vmatpush1.msra.mxu0 0.0
      %6690 = vmatprep.subr.mxu0 0.0
      %6691 = vmatpush1.msra.mxu0 0.0
      %6692 = vmatprep.subr.mxu0 0.0
      %6693 = vmatpush1.msra.mxu0 0.0
      %6694 = vmatprep.subr.mxu0 0.0
      %6695 = vmatpush1.msra.mxu0 0.0
      %6696 = vmatprep.subr.mxu0 0.0
      %6697 = vmatpush1.msra.mxu0 0.0
      %6698 = vmatprep.subr.mxu0 0.0
      %6699 = vmatpush1.msra.mxu0 0.0
      %6700 = vmatprep.subr.mxu0 0.0
      %6701 = vmatpush1.msra.mxu0 0.0
      %6702 = vmatprep.subr.mxu0 0.0
      %6703 = vmatpush1.msra.mxu0 0.0
      %6704 = vmatprep.subr.mxu0 0.0
      %6705 = vmatpush1.msra.mxu0 0.0
      %6706 = vmatprep.subr.mxu0 0.0
      %6707 = vmatpush1.msra.mxu0 0.0
      %6708 = vmatprep.subr.mxu0 0.0
      %6709 = vmatpush1.msra.mxu0 0.0
      %6710 = vmatprep.subr.mxu0 0.0
      %6711 = vmatpush1.msra.mxu0 0.0
      %6712 = vmatprep.subr.mxu0 0.0
      %6713 = vmatpush1.msra.mxu0 0.0
      %6714 = vmatprep.subr.mxu0 0.0
      %6715 = vmatpush1.msra.mxu0 0.0
      %6716 = vmatprep.subr.mxu0 0.0
      %6717 = vmatpush1.msra.mxu0 0.0
      %6718 = vmatprep.mubr.f32.mxu0 0.0
      %6719 = vmatmul.mubr.f32.gmra.mrb[0].mxu0 %v6188
      %v6720 = vpop.f32.mrb[0].mxu0
      %v6721 = vadd.f32 %v6181, %v6720
      %v6722 = vpop.f32.mrb[0].mxu0
      %v6723 = vadd.f32 %v6181, %v6722
      %6724 = vmatprep.mubr.f32.mxu0 0.0
      %6725 = vmatmul.mubr.f32.gmra.mrb[0].mxu0 %v6190
      %v6726 = vpop.f32.mrb[0].mxu0
      %v6727 = vadd.f32 %v6186, %v6726
      %v6728 = vpop.f32.mrb[0].mxu0
      %v6729 = vadd.f32 %v6186, %v6728
      %6730 = vdwg.mxu0
      %6731 = vmatprep.subr.mxu0 %v6157
      %6732 = vmatpush1.msra.mxu0 %v6156
      %6733 = vmatprep.subr.mxu0 %v6175
      %6734 = vmatpush1.msra.mxu0 %v6174
      %6735 = vmatprep.subr.mxu0 0.0
      %6736 = vmatpush1.msra.mxu0 0.0
      %6737 = vmatprep.subr.mxu0 0.0
      %6738 = vmatpush1.msra.mxu0 0.0
      %6739 = vmatprep.subr.mxu0 0.0
      %6740 = vmatpush1.msra.mxu0 0.0
      %6741 = vmatprep.subr.mxu0 0.0
      %6742 = vmatpush1.msra.mxu0 0.0
      %6743 = vmatprep.subr.mxu0 0.0
      %6744 = vmatpush1.msra.mxu0 0.0
      %6745 = vmatprep.subr.mxu0 0.0
      %6746 = vmatpush1.msra.mxu0 0.0
      %6747 = vmatprep.subr.mxu0 0.0
      %6748 = vmatpush1.msra.mxu0 0.0
      %6749 = vmatprep.subr.mxu0 0.0
      %6750 = vmatpush1.msra.mxu0 0.0
      %6751 = vmatprep.subr.mxu0 0.0
      %6752 = vmatpush1.msra.mxu0 0.0
      %6753 = vmatprep.subr.mxu0 0.0
      %6754 = vmatpush1.msra.mxu0 0.0
      %6755 = vmatprep.subr.mxu0 0.0
      %6756 = vmatpush1.msra.mxu0 0.0
      %6757 = vmatprep.subr.mxu0 0.0
      %6758 = vmatpush1.msra.mxu0 0.0
      %6759 = vmatprep.subr.mxu0 0.0
      %6760 = vmatpush1.msra.mxu0 0.0
      %6761 = vmatprep.subr.mxu0 0.0
      %6762 = vmatpush1.msra.mxu0 0.0
      %6763 = vmatprep.subr.mxu0 0.0
      %6764 = vmatpush1.msra.mxu0 0.0
      %6765 = vmatprep.subr.mxu0 0.0
      %6766 = vmatpush1.msra.mxu0 0.0
      %6767 = vmatprep.subr.mxu0 0.0
      %6768 = vmatpush1.msra.mxu0 0.0
      %6769 = vmatprep.subr.mxu0 0.0
      %6770 = vmatpush1.msra.mxu0 0.0
      %6771 = vmatprep.subr.mxu0 0.0
      %6772 = vmatpush1.msra.mxu0 0.0
      %6773 = vmatprep.subr.mxu0 0.0
      %6774 = vmatpush1.msra.mxu0 0.0
      %6775 = vmatprep.subr.mxu0 0.0
      %6776 = vmatpush1.msra.mxu0 0.0
      %6777 = vmatprep.subr.mxu0 0.0
      %6778 = vmatpush1.msra.mxu0 0.0
      %6779 = vmatprep.subr.mxu0 0.0
      %6780 = vmatpush1.msra.mxu0 0.0
      %6781 = vmatprep.subr.mxu0 0.0
      %6782 = vmatpush1.msra.mxu0 0.0
      %6783 = vmatprep.subr.mxu0 0.0
      %6784 = vmatpush1.msra.mxu0 0.0
      %6785 = vmatprep.subr.mxu0 0.0
      %6786 = vmatpush1.msra.mxu0 0.0
      %6787 = vmatprep.subr.mxu0 0.0
      %6788 = vmatpush1.msra.mxu0 0.0
      %6789 = vmatprep.subr.mxu0 0.0
      %6790 = vmatpush1.msra.mxu0 0.0
      %6791 = vmatprep.subr.mxu0 0.0
      %6792 = vmatpush1.msra.mxu0 0.0
      %6793 = vmatprep.subr.mxu0 0.0
      %6794 = vmatpush1.msra.mxu0 0.0
      %6795 = vmatprep.mubr.f32.mxu0 0.0
      %6796 = vmatmul.mubr.f32.gmra.mrb[0].mxu0 %v6188
      %v6797 = vpop.f32.mrb[0].mxu0
      %v6798 = vadd.f32 %v6181, %v6797
      %v6799 = vpop.f32.mrb[0].mxu0
      %v6800 = vadd.f32 %v6181, %v6799
      %6801 = vmatprep.mubr.f32.mxu0 0.0
      %6802 = vmatmul.mubr.f32.gmra.mrb[0].mxu0 %v6190
      %v6803 = vpop.f32.mrb[0].mxu0
      %v6804 = vadd.f32 %v6186, %v6803
      %v6805 = vpop.f32.mrb[0].mxu0
      %v6806 = vadd.f32 %v6186, %v6805
      %6807 = vdwg.mxu0
      %6808 = vmatprep.subr.mxu0 %v6159
      %6809 = vmatpush1.msra.mxu0 %v6158
      %6810 = vmatprep.subr.mxu0 %v6177
      %6811 = vmatpush1.msra.mxu0 %v6176
      %6812 = vmatprep.subr.mxu0 0.0
      %6813 = vmatpush1.msra.mxu0 0.0
      %6814 = vmatprep.subr.mxu0 0.0
      %6815 = vmatpush1.msra.mxu0 0.0
      %6816 = vmatprep.subr.mxu0 0.0
      %6817 = vmatpush1.msra.mxu0 0.0
      %6818 = vmatprep.subr.mxu0 0.0
      %6819 = vmatpush1.msra.mxu0 0.0
      %6820 = vmatprep.subr.mxu0 0.0
      %6821 = vmatpush1.msra.mxu0 0.0
      %6822 = vmatprep.subr.mxu0 0.0
      %6823 = vmatpush1.msra.mxu0 0.0
      %6824 = vmatprep.subr.mxu0 0.0
      %6825 = vmatpush1.msra.mxu0 0.0
      %6826 = vmatprep.subr.mxu0 0.0
      %6827 = vmatpush1.msra.mxu0 0.0
      %6828 = vmatprep.subr.mxu0 0.0
      %6829 = vmatpush1.msra.mxu0 0.0
      %6830 = vmatprep.subr.mxu0 0.0
      %6831 = vmatpush1.msra.mxu0 0.0
      %6832 = vmatprep.subr.mxu0 0.0
      %6833 = vmatpush1.msra.mxu0 0.0
      %6834 = vmatprep.subr.mxu0 0.0
      %6835 = vmatpush1.msra.mxu0 0.0
      %6836 = vmatprep.subr.mxu0 0.0
      %6837 = vmatpush1.msra.mxu0 0.0
      %6838 = vmatprep.subr.mxu0 0.0
      %6839 = vmatpush1.msra.mxu0 0.0
      %6840 = vmatprep.subr.mxu0 0.0
      %6841 = vmatpush1.msra.mxu0 0.0
      %6842 = vmatprep.subr.mxu0 0.0
      %6843 = vmatpush1.msra.mxu0 0.0
      %6844 = vmatprep.subr.mxu0 0.0
      %6845 = vmatpush1.msra.mxu0 0.0
      %6846 = vmatprep.subr.mxu0 0.0
      %6847 = vmatpush1.msra.mxu0 0.0
      %6848 = vmatprep.subr.mxu0 0.0
      %6849 = vmatpush1.msra.mxu0 0.0
      %6850 = vmatprep.subr.mxu0 0.0
      %6851 = vmatpush1.msra.mxu0 0.0
      %6852 = vmatprep.subr.mxu0 0.0
      %6853 = vmatpush1.msra.mxu0 0.0
      %6854 = vmatprep.subr.mxu0 0.0
      %6855 = vmatpush1.msra.mxu0 0.0
      %6856 = vmatprep.subr.mxu0 0.0
      %6857 = vmatpush1.msra.mxu0 0.0
      %6858 = vmatprep.subr.mxu0 0.0
      %6859 = vmatpush1.msra.mxu0 0.0
      %6860 = vmatprep.subr.mxu0 0.0
      %6861 = vmatpush1.msra.mxu0 0.0
      %6862 = vmatprep.subr.mxu0 0.0
      %6863 = vmatpush1.msra.mxu0 0.0
      %6864 = vmatprep.subr.mxu0 0.0
      %6865 = vmatpush1.msra.mxu0 0.0
      %6866 = vmatprep.subr.mxu0 0.0
      %6867 = vmatpush1.msra.mxu0 0.0
      %6868 = vmatprep.subr.mxu0 0.0
      %6869 = vmatpush1.msra.mxu0 0.0
      %6870 = vmatprep.subr.mxu0 0.0
      %6871 = vmatpush1.msra.mxu0 0.0
      %6872 = vmatprep.mubr.f32.mxu0 0.0
      %6873 = vmatmul.mubr.f32.gmra.mrb[0].mxu0 %v6188
      %v6874 = vpop.f32.mrb[0].mxu0
      %v6875 = vadd.f32 %v6181, %v6874
      %v6876 = vpop.f32.mrb[0].mxu0
      %v6877 = vadd.f32 %v6181, %v6876
      %6878 = vmatprep.mubr.f32.mxu0 0.0
      %6879 = vmatmul.mubr.f32.gmra.mrb[0].mxu0 %v6190
      %v6880 = vpop.f32.mrb[0].mxu0
      %v6881 = vadd.f32 %v6186, %v6880
      %v6882 = vpop.f32.mrb[0].mxu0
      %v6883 = vadd.f32 %v6186, %v6882
      %6884 = vdwg.mxu0
      %v6885 = vadd.f32 %v6259, %v5016
      %v6886 = vadd.f32 %v6261, %v5017
      %v6887 = vadd.f32 %v6336, %v5018
      %v6888 = vadd.f32 %v6338, %v5019
      %v6889 = vadd.f32 %v6413, %v5020
      %v6890 = vadd.f32 %v6415, %v5021
      %v6891 = vadd.f32 %v6490, %v5022
      %v6892 = vadd.f32 %v6492, %v5023
      %v6893 = vadd.f32 %v6567, %v5024
      %v6894 = vadd.f32 %v6569, %v5025
      %v6895 = vadd.f32 %v6644, %v5026
      %v6896 = vadd.f32 %v6646, %v5027
      %v6897 = vadd.f32 %v6721, %v5028
      %v6898 = vadd.f32 %v6723, %v5029
      %v6899 = vadd.f32 %v6798, %v5030
      %v6900 = vadd.f32 %v6800, %v5031
      %v6901 = vadd.f32 %v6875, %v5032
      %v6902 = vadd.f32 %v6877, %v5033
      %v6903 = vadd.f32 %v6265, %v5036
      %v6904 = vadd.f32 %v6267, %v5037
      %v6905 = vadd.f32 %v6342, %v5038
      %v6906 = vadd.f32 %v6344, %v5039
      %v6907 = vadd.f32 %v6419, %v5040
      %v6908 = vadd.f32 %v6421, %v5041
      %v6909 = vadd.f32 %v6496, %v5042
      %v6910 = vadd.f32 %v6498, %v5043
      %v6911 = vadd.f32 %v6573, %v5044
      %v6912 = vadd.f32 %v6575, %v5045
      %v6913 = vadd.f32 %v6650, %v5046
      %v6914 = vadd.f32 %v6652, %v5047
      %v6915 = vadd.f32 %v6727, %v5048
      %v6916 = vadd.f32 %v6729, %v5049
      %v6917 = vadd.f32 %v6804, %v5050
      %v6918 = vadd.f32 %v6806, %v5051
      %v6919 = vadd.f32 %v6881, %v5052
      %v6920 = vadd.f32 %v6883, %v5053
      %s6921 = scalar_lea.vmem %s1, 144
      %v6922 = vld [vmem:[%s6921] sm:$0xff]
      %v6923 = vld [vmem:[%s6921 + $0x8] sm:$0xff]
      %v6924 = vld [vmem:[%s6921 + $0x10] sm:$0xff]
      %v6925 = vld [vmem:[%s6921 + $0x18] sm:$0xff]
      %v6926 = vld [vmem:[%s6921 + $0x20] sm:$0xff]
      %v6927 = vld [vmem:[%s6921 + $0x28] sm:$0xff]
      %6929 = vset.pattern.permute.xlu0 32
      %6930 = vperm.xlu0 %6929, %v6922
      %v6931 = vpop.permute.xlu0 %6930
      %6934 = vset.pattern.permute.xlu0 32
      %6935 = vperm.xlu0 %6934, %v6923
      %v6936 = vpop.permute.xlu0 %6935
      %6939 = vset.pattern.permute.xlu0 32
      %6940 = vperm.xlu0 %6939, %v6924
      %v6941 = vpop.permute.xlu0 %6940
      %6944 = vset.pattern.permute.xlu0 32
      %6945 = vperm.xlu0 %6944, %v6925
      %v6946 = vpop.permute.xlu0 %6945
      %v6948 = vsel %vm537, %v6922, 0
      %v6950 = vsel %vm537, %v6923, 0
      %v6952 = vsel %vm537, %v6924, 0
      %v6954 = vsel %vm537, %v6925, 0
      %6956 = vmatprep.subr.mxu0 %v6886
      %6957 = vmatpush1.msra.mxu0 %v6885
      %6958 = vmatprep.subr.mxu0 %v6904
      %6959 = vmatpush1.msra.mxu0 %v6903
      %6960 = vmatprep.subr.mxu0 %v6890
      %6961 = vmatpush1.msra.mxu0 %v6889
      %6962 = vmatprep.subr.mxu0 %v6908
      %6963 = vmatpush1.msra.mxu0 %v6907
      %6964 = vmatprep.subr.mxu0 0.0
      %6965 = vmatpush1.msra.mxu0 0.0
      %6966 = vmatprep.subr.mxu0 0.0
      %6967 = vmatpush1.msra.mxu0 0.0
      %6968 = vmatprep.subr.mxu0 0.0
      %6969 = vmatpush1.msra.mxu0 0.0
      %6970 = vmatprep.subr.mxu0 0.0
      %6971 = vmatpush1.msra.mxu0 0.0
      %6972 = vmatprep.subr.mxu0 0.0
      %6973 = vmatpush1.msra.mxu0 0.0
      %6974 = vmatprep.subr.mxu0 0.0
      %6975 = vmatpush1.msra.mxu0 0.0
      %6976 = vmatprep.subr.mxu0 0.0
      %6977 = vmatpush1.msra.mxu0 0.0
      %6978 = vmatprep.subr.mxu0 0.0
      %6979 = vmatpush1.msra.mxu0 0.0
      %6980 = vmatprep.subr.mxu0 0.0
      %6981 = vmatpush1.msra.mxu0 0.0
      %6982 = vmatprep.subr.mxu0 0.0
      %6983 = vmatpush1.msra.mxu0 0.0
      %6984 = vmatprep.subr.mxu0 0.0
      %6985 = vmatpush1.msra.mxu0 0.0
      %6986 = vmatprep.subr.mxu0 0.0
      %6987 = vmatpush1.msra.mxu0 0.0
      %6988 = vmatprep.subr.mxu0 0.0
      %6989 = vmatpush1.msra.mxu0 0.0
      %6990 = vmatprep.subr.mxu0 0.0
      %6991 = vmatpush1.msra.mxu0 0.0
      %6992 = vmatprep.subr.mxu0 0.0
      %6993 = vmatpush1.msra.mxu0 0.0
      %6994 = vmatprep.subr.mxu0 0.0
      %6995 = vmatpush1.msra.mxu0 0.0
      %6996 = vmatprep.subr.mxu0 0.0
      %6997 = vmatpush1.msra.mxu0 0.0
      %6998 = vmatprep.subr.mxu0 0.0
      %6999 = vmatpush1.msra.mxu0 0.0
      %7000 = vmatprep.subr.mxu0 0.0
      %7001 = vmatpush1.msra.mxu0 0.0
      %7002 = vmatprep.subr.mxu0 0.0
      %7003 = vmatpush1.msra.mxu0 0.0
      %7004 = vmatprep.subr.mxu0 0.0
      %7005 = vmatpush1.msra.mxu0 0.0
      %7006 = vmatprep.subr.mxu0 0.0
      %7007 = vmatpush1.msra.mxu0 0.0
      %7008 = vmatprep.subr.mxu0 0.0
      %7009 = vmatpush1.msra.mxu0 0.0
      %7010 = vmatprep.subr.mxu0 0.0
      %7011 = vmatpush1.msra.mxu0 0.0
      %7012 = vmatprep.subr.mxu0 0.0
      %7013 = vmatpush1.msra.mxu0 0.0
      %7014 = vmatprep.subr.mxu0 0.0
      %7015 = vmatpush1.msra.mxu0 0.0
      %7016 = vmatprep.subr.mxu0 0.0
      %7017 = vmatpush1.msra.mxu0 0.0
      %7018 = vmatprep.subr.mxu0 0.0
      %7019 = vmatpush1.msra.mxu0 0.0
      %7020 = vmatprep.mubr.f32.mxu0 0.0
      %7021 = vmatmul.mubr.f32.gmra.mrb[0].mxu0 %v6948
      %v7022 = vpop.f32.mrb[0].mxu0
      %v7023 = vadd.f32 %v6931, %v7022
      %v7024 = vpop.f32.mrb[0].mxu0
      %v7025 = vadd.f32 %v6931, %v7024
      %7026 = vmatprep.mubr.f32.mxu0 0.0
      %7027 = vmatmul.mubr.f32.gmra.mrb[0].mxu0 %v6950
      %v7028 = vpop.f32.mrb[0].mxu0
      %v7029 = vadd.f32 %v6936, %v7028
      %v7030 = vpop.f32.mrb[0].mxu0
      %v7031 = vadd.f32 %v6936, %v7030
      %7032 = vmatprep.mubr.f32.mxu0 0.0
      %7033 = vmatmul.mubr.f32.gmra.mrb[0].mxu0 %v6952
      %v7034 = vpop.f32.mrb[0].mxu0
      %v7035 = vadd.f32 %v6941, %v7034
      %v7036 = vpop.f32.mrb[0].mxu0
      %v7037 = vadd.f32 %v6941, %v7036
      %7038 = vmatprep.mubr.f32.mxu0 0.0
      %7039 = vmatmul.mubr.f32.gmra.mrb[0].mxu0 %v6954
      %v7040 = vpop.f32.mrb[0].mxu0
      %v7041 = vadd.f32 %v6946, %v7040
      %v7042 = vpop.f32.mrb[0].mxu0
      %v7043 = vadd.f32 %v6946, %v7042
      %7044 = vdwg.mxu0
      %7045 = vmatprep.subr.mxu0 %v6888
      %7046 = vmatpush1.msra.mxu0 %v6887
      %7047 = vmatprep.subr.mxu0 %v6906
      %7048 = vmatpush1.msra.mxu0 %v6905
      %7049 = vmatprep.subr.mxu0 %v6892
      %7050 = vmatpush1.msra.mxu0 %v6891
      %7051 = vmatprep.subr.mxu0 %v6910
      %7052 = vmatpush1.msra.mxu0 %v6909
      %7053 = vmatprep.subr.mxu0 0.0
      %7054 = vmatpush1.msra.mxu0 0.0
      %7055 = vmatprep.subr.mxu0 0.0
      %7056 = vmatpush1.msra.mxu0 0.0
      %7057 = vmatprep.subr.mxu0 0.0
      %7058 = vmatpush1.msra.mxu0 0.0
      %7059 = vmatprep.subr.mxu0 0.0
      %7060 = vmatpush1.msra.mxu0 0.0
      %7061 = vmatprep.subr.mxu0 0.0
      %7062 = vmatpush1.msra.mxu0 0.0
      %7063 = vmatprep.subr.mxu0 0.0
      %7064 = vmatpush1.msra.mxu0 0.0
      %7065 = vmatprep.subr.mxu0 0.0
      %7066 = vmatpush1.msra.mxu0 0.0
      %7067 = vmatprep.subr.mxu0 0.0
      %7068 = vmatpush1.msra.mxu0 0.0
      %7069 = vmatprep.subr.mxu0 0.0
      %7070 = vmatpush1.msra.mxu0 0.0
      %7071 = vmatprep.subr.mxu0 0.0
      %7072 = vmatpush1.msra.mxu0 0.0
      %7073 = vmatprep.subr.mxu0 0.0
      %7074 = vmatpush1.msra.mxu0 0.0
      %7075 = vmatprep.subr.mxu0 0.0
      %7076 = vmatpush1.msra.mxu0 0.0
      %7077 = vmatprep.subr.mxu0 0.0
      %7078 = vmatpush1.msra.mxu0 0.0
      %7079 = vmatprep.subr.mxu0 0.0
      %7080 = vmatpush1.msra.mxu0 0.0
      %7081 = vmatprep.subr.mxu0 0.0
      %7082 = vmatpush1.msra.mxu0 0.0
      %7083 = vmatprep.subr.mxu0 0.0
      %7084 = vmatpush1.msra.mxu0 0.0
      %7085 = vmatprep.subr.mxu0 0.0
      %7086 = vmatpush1.msra.mxu0 0.0
      %7087 = vmatprep.subr.mxu0 0.0
      %7088 = vmatpush1.msra.mxu0 0.0
      %7089 = vmatprep.subr.mxu0 0.0
      %7090 = vmatpush1.msra.mxu0 0.0
      %7091 = vmatprep.subr.mxu0 0.0
      %7092 = vmatpush1.msra.mxu0 0.0
      %7093 = vmatprep.subr.mxu0 0.0
      %7094 = vmatpush1.msra.mxu0 0.0
      %7095 = vmatprep.subr.mxu0 0.0
      %7096 = vmatpush1.msra.mxu0 0.0
      %7097 = vmatprep.subr.mxu0 0.0
      %7098 = vmatpush1.msra.mxu0 0.0
      %7099 = vmatprep.subr.mxu0 0.0
      %7100 = vmatpush1.msra.mxu0 0.0
      %7101 = vmatprep.subr.mxu0 0.0
      %7102 = vmatpush1.msra.mxu0 0.0
      %7103 = vmatprep.subr.mxu0 0.0
      %7104 = vmatpush1.msra.mxu0 0.0
      %7105 = vmatprep.subr.mxu0 0.0
      %7106 = vmatpush1.msra.mxu0 0.0
      %7107 = vmatprep.subr.mxu0 0.0
      %7108 = vmatpush1.msra.mxu0 0.0
      %7109 = vmatprep.mubr.f32.mxu0 0.0
      %7110 = vmatmul.mubr.f32.gmra.mrb[0].mxu0 %v6948
      %v7111 = vpop.f32.mrb[0].mxu0
      %v7112 = vadd.f32 %v6931, %v7111
      %v7113 = vpop.f32.mrb[0].mxu0
      %v7114 = vadd.f32 %v6931, %v7113
      %7115 = vmatprep.mubr.f32.mxu0 0.0
      %7116 = vmatmul.mubr.f32.gmra.mrb[0].mxu0 %v6950
      %v7117 = vpop.f32.mrb[0].mxu0
      %v7118 = vadd.f32 %v6936, %v7117
      %v7119 = vpop.f32.mrb[0].mxu0
      %v7120 = vadd.f32 %v6936, %v7119
      %7121 = vmatprep.mubr.f32.mxu0 0.0
      %7122 = vmatmul.mubr.f32.gmra.mrb[0].mxu0 %v6952
      %v7123 = vpop.f32.mrb[0].mxu0
      %v7124 = vadd.f32 %v6941, %v7123
      %v7125 = vpop.f32.mrb[0].mxu0
      %v7126 = vadd.f32 %v6941, %v7125
      %7127 = vmatprep.mubr.f32.mxu0 0.0
      %7128 = vmatmul.mubr.f32.gmra.mrb[0].mxu0 %v6954
      %v7129 = vpop.f32.mrb[0].mxu0
      %v7130 = vadd.f32 %v6946, %v7129
      %v7131 = vpop.f32.mrb[0].mxu0
      %v7132 = vadd.f32 %v6946, %v7131
      %7133 = vdwg.mxu0
      %7134 = vmatprep.subr.mxu0 %v6890
      %7135 = vmatpush1.msra.mxu0 %v6889
      %7136 = vmatprep.subr.mxu0 %v6908
      %7137 = vmatpush1.msra.mxu0 %v6907
      %7138 = vmatprep.subr.mxu0 %v6894
      %7139 = vmatpush1.msra.mxu0 %v6893
      %7140 = vmatprep.subr.mxu0 %v6912
      %7141 = vmatpush1.msra.mxu0 %v6911
      %7142 = vmatprep.subr.mxu0 0.0
      %7143 = vmatpush1.msra.mxu0 0.0
      %7144 = vmatprep.subr.mxu0 0.0
      %7145 = vmatpush1.msra.mxu0 0.0
      %7146 = vmatprep.subr.mxu0 0.0
      %7147 = vmatpush1.msra.mxu0 0.0
      %7148 = vmatprep.subr.mxu0 0.0
      %7149 = vmatpush1.msra.mxu0 0.0
      %7150 = vmatprep.subr.mxu0 0.0
      %7151 = vmatpush1.msra.mxu0 0.0
      %7152 = vmatprep.subr.mxu0 0.0
      %7153 = vmatpush1.msra.mxu0 0.0
      %7154 = vmatprep.subr.mxu0 0.0
      %7155 = vmatpush1.msra.mxu0 0.0
      %7156 = vmatprep.subr.mxu0 0.0
      %7157 = vmatpush1.msra.mxu0 0.0
      %7158 = vmatprep.subr.mxu0 0.0
      %7159 = vmatpush1.msra.mxu0 0.0
      %7160 = vmatprep.subr.mxu0 0.0
      %7161 = vmatpush1.msra.mxu0 0.0
      %7162 = vmatprep.subr.mxu0 0.0
      %7163 = vmatpush1.msra.mxu0 0.0
      %7164 = vmatprep.subr.mxu0 0.0
      %7165 = vmatpush1.msra.mxu0 0.0
      %7166 = vmatprep.subr.mxu0 0.0
      %7167 = vmatpush1.msra.mxu0 0.0
      %7168 = vmatprep.subr.mxu0 0.0
      %7169 = vmatpush1.msra.mxu0 0.0
      %7170 = vmatprep.subr.mxu0 0.0
      %7171 = vmatpush1.msra.mxu0 0.0
      %7172 = vmatprep.subr.mxu0 0.0
      %7173 = vmatpush1.msra.mxu0 0.0
      %7174 = vmatprep.subr.mxu0 0.0
      %7175 = vmatpush1.msra.mxu0 0.0
      %7176 = vmatprep.subr.mxu0 0.0
      %7177 = vmatpush1.msra.mxu0 0.0
      %7178 = vmatprep.subr.mxu0 0.0
      %7179 = vmatpush1.msra.mxu0 0.0
      %7180 = vmatprep.subr.mxu0 0.0
      %7181 = vmatpush1.msra.mxu0 0.0
      %7182 = vmatprep.subr.mxu0 0.0
      %7183 = vmatpush1.msra.mxu0 0.0
      %7184 = vmatprep.subr.mxu0 0.0
      %7185 = vmatpush1.msra.mxu0 0.0
      %7186 = vmatprep.subr.mxu0 0.0
      %7187 = vmatpush1.msra.mxu0 0.0
      %7188 = vmatprep.subr.mxu0 0.0
      %7189 = vmatpush1.msra.mxu0 0.0
      %7190 = vmatprep.subr.mxu0 0.0
      %7191 = vmatpush1.msra.mxu0 0.0
      %7192 = vmatprep.subr.mxu0 0.0
      %7193 = vmatpush1.msra.mxu0 0.0
      %7194 = vmatprep.subr.mxu0 0.0
      %7195 = vmatpush1.msra.mxu0 0.0
      %7196 = vmatprep.subr.mxu0 0.0
      %7197 = vmatpush1.msra.mxu0 0.0
      %7198 = vmatprep.mubr.f32.mxu0 0.0
      %7199 = vmatmul.mubr.f32.gmra.mrb[0].mxu0 %v6948
      %v7200 = vpop.f32.mrb[0].mxu0
      %v7201 = vadd.f32 %v6931, %v7200
      %v7202 = vpop.f32.mrb[0].mxu0
      %v7203 = vadd.f32 %v6931, %v7202
      %7204 = vmatprep.mubr.f32.mxu0 0.0
      %7205 = vmatmul.mubr.f32.gmra.mrb[0].mxu0 %v6950
      %v7206 = vpop.f32.mrb[0].mxu0
      %v7207 = vadd.f32 %v6936, %v7206
      %v7208 = vpop.f32.mrb[0].mxu0
      %v7209 = vadd.f32 %v6936, %v7208
      %7210 = vmatprep.mubr.f32.mxu0 0.0
      %7211 = vmatmul.mubr.f32.gmra.mrb[0].mxu0 %v6952
      %v7212 = vpop.f32.mrb[0].mxu0
      %v7213 = vadd.f32 %v6941, %v7212
      %v7214 = vpop.f32.mrb[0].mxu0
      %v7215 = vadd.f32 %v6941, %v7214
      %7216 = vmatprep.mubr.f32.mxu0 0.0
      %7217 = vmatmul.mubr.f32.gmra.mrb[0].mxu0 %v6954
      %v7218 = vpop.f32.mrb[0].mxu0
      %v7219 = vadd.f32 %v6946, %v7218
      %v7220 = vpop.f32.mrb[0].mxu0
      %v7221 = vadd.f32 %v6946, %v7220
      %7222 = vdwg.mxu0
      %7223 = vmatprep.subr.mxu0 %v6892
      %7224 = vmatpush1.msra.mxu0 %v6891
      %7225 = vmatprep.subr.mxu0 %v6910
      %7226 = vmatpush1.msra.mxu0 %v6909
      %7227 = vmatprep.subr.mxu0 %v6896
      %7228 = vmatpush1.msra.mxu0 %v6895
      %7229 = vmatprep.subr.mxu0 %v6914
      %7230 = vmatpush1.msra.mxu0 %v6913
      %7231 = vmatprep.subr.mxu0 0.0
      %7232 = vmatpush1.msra.mxu0 0.0
      %7233 = vmatprep.subr.mxu0 0.0
      %7234 = vmatpush1.msra.mxu0 0.0
      %7235 = vmatprep.subr.mxu0 0.0
      %7236 = vmatpush1.msra.mxu0 0.0
      %7237 = vmatprep.subr.mxu0 0.0
      %7238 = vmatpush1.msra.mxu0 0.0
      %7239 = vmatprep.subr.mxu0 0.0
      %7240 = vmatpush1.msra.mxu0 0.0
      %7241 = vmatprep.subr.mxu0 0.0
      %7242 = vmatpush1.msra.mxu0 0.0
      %7243 = vmatprep.subr.mxu0 0.0
      %7244 = vmatpush1.msra.mxu0 0.0
      %7245 = vmatprep.subr.mxu0 0.0
      %7246 = vmatpush1.msra.mxu0 0.0
      %7247 = vmatprep.subr.mxu0 0.0
      %7248 = vmatpush1.msra.mxu0 0.0
      %7249 = vmatprep.subr.mxu0 0.0
      %7250 = vmatpush1.msra.mxu0 0.0
      %7251 = vmatprep.subr.mxu0 0.0
      %7252 = vmatpush1.msra.mxu0 0.0
      %7253 = vmatprep.subr.mxu0 0.0
      %7254 = vmatpush1.msra.mxu0 0.0
      %7255 = vmatprep.subr.mxu0 0.0
      %7256 = vmatpush1.msra.mxu0 0.0
      %7257 = vmatprep.subr.mxu0 0.0
      %7258 = vmatpush1.msra.mxu0 0.0
      %7259 = vmatprep.subr.mxu0 0.0
      %7260 = vmatpush1.msra.mxu0 0.0
      %7261 = vmatprep.subr.mxu0 0.0
      %7262 = vmatpush1.msra.mxu0 0.0
      %7263 = vmatprep.subr.mxu0 0.0
      %7264 = vmatpush1.msra.mxu0 0.0
      %7265 = vmatprep.subr.mxu0 0.0
      %7266 = vmatpush1.msra.mxu0 0.0
      %7267 = vmatprep.subr.mxu0 0.0
      %7268 = vmatpush1.msra.mxu0 0.0
      %7269 = vmatprep.subr.mxu0 0.0
      %7270 = vmatpush1.msra.mxu0 0.0
      %7271 = vmatprep.subr.mxu0 0.0
      %7272 = vmatpush1.msra.mxu0 0.0
      %7273 = vmatprep.subr.mxu0 0.0
      %7274 = vmatpush1.msra.mxu0 0.0
      %7275 = vmatprep.subr.mxu0 0.0
      %7276 = vmatpush1.msra.mxu0 0.0
      %7277 = vmatprep.subr.mxu0 0.0
      %7278 = vmatpush1.msra.mxu0 0.0
      %7279 = vmatprep.subr.mxu0 0.0
      %7280 = vmatpush1.msra.mxu0 0.0
      %7281 = vmatprep.subr.mxu0 0.0
      %7282 = vmatpush1.msra.mxu0 0.0
      %7283 = vmatprep.subr.mxu0 0.0
      %7284 = vmatpush1.msra.mxu0 0.0
      %7285 = vmatprep.subr.mxu0 0.0
      %7286 = vmatpush1.msra.mxu0 0.0
      %7287 = vmatprep.mubr.f32.mxu0 0.0
      %7288 = vmatmul.mubr.f32.gmra.mrb[0].mxu0 %v6948
      %v7289 = vpop.f32.mrb[0].mxu0
      %v7290 = vadd.f32 %v6931, %v7289
      %v7291 = vpop.f32.mrb[0].mxu0
      %v7292 = vadd.f32 %v6931, %v7291
      %7293 = vmatprep.mubr.f32.mxu0 0.0
      %7294 = vmatmul.mubr.f32.gmra.mrb[0].mxu0 %v6950
      %v7295 = vpop.f32.mrb[0].mxu0
      %v7296 = vadd.f32 %v6936, %v7295
      %v7297 = vpop.f32.mrb[0].mxu0
      %v7298 = vadd.f32 %v6936, %v7297
      %7299 = vmatprep.mubr.f32.mxu0 0.0
      %7300 = vmatmul.mubr.f32.gmra.mrb[0].mxu0 %v6952
      %v7301 = vpop.f32.mrb[0].mxu0
      %v7302 = vadd.f32 %v6941, %v7301
      %v7303 = vpop.f32.mrb[0].mxu0
      %v7304 = vadd.f32 %v6941, %v7303
      %7305 = vmatprep.mubr.f32.mxu0 0.0
      %7306 = vmatmul.mubr.f32.gmra.mrb[0].mxu0 %v6954
      %v7307 = vpop.f32.mrb[0].mxu0
      %v7308 = vadd.f32 %v6946, %v7307
      %v7309 = vpop.f32.mrb[0].mxu0
      %v7310 = vadd.f32 %v6946, %v7309
      %7311 = vdwg.mxu0
      %7312 = vmatprep.subr.mxu0 %v6894
      %7313 = vmatpush1.msra.mxu0 %v6893
      %7314 = vmatprep.subr.mxu0 %v6912
      %7315 = vmatpush1.msra.mxu0 %v6911
      %7316 = vmatprep.subr.mxu0 %v6898
      %7317 = vmatpush1.msra.mxu0 %v6897
      %7318 = vmatprep.subr.mxu0 %v6916
      %7319 = vmatpush1.msra.mxu0 %v6915
      %7320 = vmatprep.subr.mxu0 0.0
      %7321 = vmatpush1.msra.mxu0 0.0
      %7322 = vmatprep.subr.mxu0 0.0
      %7323 = vmatpush1.msra.mxu0 0.0
      %7324 = vmatprep.subr.mxu0 0.0
      %7325 = vmatpush1.msra.mxu0 0.0
      %7326 = vmatprep.subr.mxu0 0.0
      %7327 = vmatpush1.msra.mxu0 0.0
      %7328 = vmatprep.subr.mxu0 0.0
      %7329 = vmatpush1.msra.mxu0 0.0
      %7330 = vmatprep.subr.mxu0 0.0
      %7331 = vmatpush1.msra.mxu0 0.0
      %7332 = vmatprep.subr.mxu0 0.0
      %7333 = vmatpush1.msra.mxu0 0.0
      %7334 = vmatprep.subr.mxu0 0.0
      %7335 = vmatpush1.msra.mxu0 0.0
      %7336 = vmatprep.subr.mxu0 0.0
      %7337 = vmatpush1.msra.mxu0 0.0
      %7338 = vmatprep.subr.mxu0 0.0
      %7339 = vmatpush1.msra.mxu0 0.0
      %7340 = vmatprep.subr.mxu0 0.0
      %7341 = vmatpush1.msra.mxu0 0.0
      %7342 = vmatprep.subr.mxu0 0.0
      %7343 = vmatpush1.msra.mxu0 0.0
      %7344 = vmatprep.subr.mxu0 0.0
      %7345 = vmatpush1.msra.mxu0 0.0
      %7346 = vmatprep.subr.mxu0 0.0
      %7347 = vmatpush1.msra.mxu0 0.0
      %7348 = vmatprep.subr.mxu0 0.0
      %7349 = vmatpush1.msra.mxu0 0.0
      %7350 = vmatprep.subr.mxu0 0.0
      %7351 = vmatpush1.msra.mxu0 0.0
      %7352 = vmatprep.subr.mxu0 0.0
      %7353 = vmatpush1.msra.mxu0 0.0
      %7354 = vmatprep.subr.mxu0 0.0
      %7355 = vmatpush1.msra.mxu0 0.0
      %7356 = vmatprep.subr.mxu0 0.0
      %7357 = vmatpush1.msra.mxu0 0.0
      %7358 = vmatprep.subr.mxu0 0.0
      %7359 = vmatpush1.msra.mxu0 0.0
      %7360 = vmatprep.subr.mxu0 0.0
      %7361 = vmatpush1.msra.mxu0 0.0
      %7362 = vmatprep.subr.mxu0 0.0
      %7363 = vmatpush1.msra.mxu0 0.0
      %7364 = vmatprep.subr.mxu0 0.0
      %7365 = vmatpush1.msra.mxu0 0.0
      %7366 = vmatprep.subr.mxu0 0.0
      %7367 = vmatpush1.msra.mxu0 0.0
      %7368 = vmatprep.subr.mxu0 0.0
      %7369 = vmatpush1.msra.mxu0 0.0
      %7370 = vmatprep.subr.mxu0 0.0
      %7371 = vmatpush1.msra.mxu0 0.0
      %7372 = vmatprep.subr.mxu0 0.0
      %7373 = vmatpush1.msra.mxu0 0.0
      %7374 = vmatprep.subr.mxu0 0.0
      %7375 = vmatpush1.msra.mxu0 0.0
      %7376 = vmatprep.mubr.f32.mxu0 0.0
      %7377 = vmatmul.mubr.f32.gmra.mrb[0].mxu0 %v6948
      %v7378 = vpop.f32.mrb[0].mxu0
      %v7379 = vadd.f32 %v6931, %v7378
      %v7380 = vpop.f32.mrb[0].mxu0
      %v7381 = vadd.f32 %v6931, %v7380
      %7382 = vmatprep.mubr.f32.mxu0 0.0
      %7383 = vmatmul.mubr.f32.gmra.mrb[0].mxu0 %v6950
      %v7384 = vpop.f32.mrb[0].mxu0
      %v7385 = vadd.f32 %v6936, %v7384
      %v7386 = vpop.f32.mrb[0].mxu0
      %v7387 = vadd.f32 %v6936, %v7386
      %7388 = vmatprep.mubr.f32.mxu0 0.0
      %7389 = vmatmul.mubr.f32.gmra.mrb[0].mxu0 %v6952
      %v7390 = vpop.f32.mrb[0].mxu0
      %v7391 = vadd.f32 %v6941, %v7390
      %v7392 = vpop.f32.mrb[0].mxu0
      %v7393 = vadd.f32 %v6941, %v7392
      %7394 = vmatprep.mubr.f32.mxu0 0.0
      %7395 = vmatmul.mubr.f32.gmra.mrb[0].mxu0 %v6954
      %v7396 = vpop.f32.mrb[0].mxu0
      %v7397 = vadd.f32 %v6946, %v7396
      %v7398 = vpop.f32.mrb[0].mxu0
      %v7399 = vadd.f32 %v6946, %v7398
      %7400 = vdwg.mxu0
      %7401 = vmatprep.subr.mxu0 %v6896
      %7402 = vmatpush1.msra.mxu0 %v6895
      %7403 = vmatprep.subr.mxu0 %v6914
      %7404 = vmatpush1.msra.mxu0 %v6913
      %7405 = vmatprep.subr.mxu0 %v6900
      %7406 = vmatpush1.msra.mxu0 %v6899
      %7407 = vmatprep.subr.mxu0 %v6918
      %7408 = vmatpush1.msra.mxu0 %v6917
      %7409 = vmatprep.subr.mxu0 0.0
      %7410 = vmatpush1.msra.mxu0 0.0
      %7411 = vmatprep.subr.mxu0 0.0
      %7412 = vmatpush1.msra.mxu0 0.0
      %7413 = vmatprep.subr.mxu0 0.0
      %7414 = vmatpush1.msra.mxu0 0.0
      %7415 = vmatprep.subr.mxu0 0.0
      %7416 = vmatpush1.msra.mxu0 0.0
      %7417 = vmatprep.subr.mxu0 0.0
      %7418 = vmatpush1.msra.mxu0 0.0
      %7419 = vmatprep.subr.mxu0 0.0
      %7420 = vmatpush1.msra.mxu0 0.0
      %7421 = vmatprep.subr.mxu0 0.0
      %7422 = vmatpush1.msra.mxu0 0.0
      %7423 = vmatprep.subr.mxu0 0.0
      %7424 = vmatpush1.msra.mxu0 0.0
      %7425 = vmatprep.subr.mxu0 0.0
      %7426 = vmatpush1.msra.mxu0 0.0
      %7427 = vmatprep.subr.mxu0 0.0
      %7428 = vmatpush1.msra.mxu0 0.0
      %7429 = vmatprep.subr.mxu0 0.0
      %7430 = vmatpush1.msra.mxu0 0.0
      %7431 = vmatprep.subr.mxu0 0.0
      %7432 = vmatpush1.msra.mxu0 0.0
      %7433 = vmatprep.subr.mxu0 0.0
      %7434 = vmatpush1.msra.mxu0 0.0
      %7435 = vmatprep.subr.mxu0 0.0
      %7436 = vmatpush1.msra.mxu0 0.0
      %7437 = vmatprep.subr.mxu0 0.0
      %7438 = vmatpush1.msra.mxu0 0.0
      %7439 = vmatprep.subr.mxu0 0.0
      %7440 = vmatpush1.msra.mxu0 0.0
      %7441 = vmatprep.subr.mxu0 0.0
      %7442 = vmatpush1.msra.mxu0 0.0
      %7443 = vmatprep.subr.mxu0 0.0
      %7444 = vmatpush1.msra.mxu0 0.0
      %7445 = vmatprep.subr.mxu0 0.0
      %7446 = vmatpush1.msra.mxu0 0.0
      %7447 = vmatprep.subr.mxu0 0.0
      %7448 = vmatpush1.msra.mxu0 0.0
      %7449 = vmatprep.subr.mxu0 0.0
      %7450 = vmatpush1.msra.mxu0 0.0
      %7451 = vmatprep.subr.mxu0 0.0
      %7452 = vmatpush1.msra.mxu0 0.0
      %7453 = vmatprep.subr.mxu0 0.0
      %7454 = vmatpush1.msra.mxu0 0.0
      %7455 = vmatprep.subr.mxu0 0.0
      %7456 = vmatpush1.msra.mxu0 0.0
      %7457 = vmatprep.subr.mxu0 0.0
      %7458 = vmatpush1.msra.mxu0 0.0
      %7459 = vmatprep.subr.mxu0 0.0
      %7460 = vmatpush1.msra.mxu0 0.0
      %7461 = vmatprep.subr.mxu0 0.0
      %7462 = vmatpush1.msra.mxu0 0.0
      %7463 = vmatprep.subr.mxu0 0.0
      %7464 = vmatpush1.msra.mxu0 0.0
      %7465 = vmatprep.mubr.f32.mxu0 0.0
      %7466 = vmatmul.mubr.f32.gmra.mrb[0].mxu0 %v6948
      %v7467 = vpop.f32.mrb[0].mxu0
      %v7468 = vadd.f32 %v6931, %v7467
      %v7469 = vpop.f32.mrb[0].mxu0
      %v7470 = vadd.f32 %v6931, %v7469
      %7471 = vmatprep.mubr.f32.mxu0 0.0
      %7472 = vmatmul.mubr.f32.gmra.mrb[0].mxu0 %v6950
      %v7473 = vpop.f32.mrb[0].mxu0
      %v7474 = vadd.f32 %v6936, %v7473
      %v7475 = vpop.f32.mrb[0].mxu0
      %v7476 = vadd.f32 %v6936, %v7475
      %7477 = vmatprep.mubr.f32.mxu0 0.0
      %7478 = vmatmul.mubr.f32.gmra.mrb[0].mxu0 %v6952
      %v7479 = vpop.f32.mrb[0].mxu0
      %v7480 = vadd.f32 %v6941, %v7479
      %v7481 = vpop.f32.mrb[0].mxu0
      %v7482 = vadd.f32 %v6941, %v7481
      %7483 = vmatprep.mubr.f32.mxu0 0.0
      %7484 = vmatmul.mubr.f32.gmra.mrb[0].mxu0 %v6954
      %v7485 = vpop.f32.mrb[0].mxu0
      %v7486 = vadd.f32 %v6946, %v7485
      %v7487 = vpop.f32.mrb[0].mxu0
      %v7488 = vadd.f32 %v6946, %v7487
      %7489 = vdwg.mxu0
      %7490 = vmatprep.subr.mxu0 %v6898
      %7491 = vmatpush1.msra.mxu0 %v6897
      %7492 = vmatprep.subr.mxu0 %v6916
      %7493 = vmatpush1.msra.mxu0 %v6915
      %7494 = vmatprep.subr.mxu0 %v6902
      %7495 = vmatpush1.msra.mxu0 %v6901
      %7496 = vmatprep.subr.mxu0 %v6920
      %7497 = vmatpush1.msra.mxu0 %v6919
      %7498 = vmatprep.subr.mxu0 0.0
      %7499 = vmatpush1.msra.mxu0 0.0
      %7500 = vmatprep.subr.mxu0 0.0
      %7501 = vmatpush1.msra.mxu0 0.0
      %7502 = vmatprep.subr.mxu0 0.0
      %7503 = vmatpush1.msra.mxu0 0.0
      %7504 = vmatprep.subr.mxu0 0.0
      %7505 = vmatpush1.msra.mxu0 0.0
      %7506 = vmatprep.subr.mxu0 0.0
      %7507 = vmatpush1.msra.mxu0 0.0
      %7508 = vmatprep.subr.mxu0 0.0
      %7509 = vmatpush1.msra.mxu0 0.0
      %7510 = vmatprep.subr.mxu0 0.0
      %7511 = vmatpush1.msra.mxu0 0.0
      %7512 = vmatprep.subr.mxu0 0.0
      %7513 = vmatpush1.msra.mxu0 0.0
      %7514 = vmatprep.subr.mxu0 0.0
      %7515 = vmatpush1.msra.mxu0 0.0
      %7516 = vmatprep.subr.mxu0 0.0
      %7517 = vmatpush1.msra.mxu0 0.0
      %7518 = vmatprep.subr.mxu0 0.0
      %7519 = vmatpush1.msra.mxu0 0.0
      %7520 = vmatprep.subr.mxu0 0.0
      %7521 = vmatpush1.msra.mxu0 0.0
      %7522 = vmatprep.subr.mxu0 0.0
      %7523 = vmatpush1.msra.mxu0 0.0
      %7524 = vmatprep.subr.mxu0 0.0
      %7525 = vmatpush1.msra.mxu0 0.0
      %7526 = vmatprep.subr.mxu0 0.0
      %7527 = vmatpush1.msra.mxu0 0.0
      %7528 = vmatprep.subr.mxu0 0.0
      %7529 = vmatpush1.msra.mxu0 0.0
      %7530 = vmatprep.subr.mxu0 0.0
      %7531 = vmatpush1.msra.mxu0 0.0
      %7532 = vmatprep.subr.mxu0 0.0
      %7533 = vmatpush1.msra.mxu0 0.0
      %7534 = vmatprep.subr.mxu0 0.0
      %7535 = vmatpush1.msra.mxu0 0.0
      %7536 = vmatprep.subr.mxu0 0.0
      %7537 = vmatpush1.msra.mxu0 0.0
      %7538 = vmatprep.subr.mxu0 0.0
      %7539 = vmatpush1.msra.mxu0 0.0
      %7540 = vmatprep.subr.mxu0 0.0
      %7541 = vmatpush1.msra.mxu0 0.0
      %7542 = vmatprep.subr.mxu0 0.0
      %7543 = vmatpush1.msra.mxu0 0.0
      %7544 = vmatprep.subr.mxu0 0.0
      %7545 = vmatpush1.msra.mxu0 0.0
      %7546 = vmatprep.subr.mxu0 0.0
      %7547 = vmatpush1.msra.mxu0 0.0
      %7548 = vmatprep.subr.mxu0 0.0
      %7549 = vmatpush1.msra.mxu0 0.0
      %7550 = vmatprep.subr.mxu0 0.0
      %7551 = vmatpush1.msra.mxu0 0.0
      %7552 = vmatprep.subr.mxu0 0.0
      %7553 = vmatpush1.msra.mxu0 0.0
      %7554 = vmatprep.mubr.f32.mxu0 0.0
      %7555 = vmatmul.mubr.f32.gmra.mrb[0].mxu0 %v6948
      %v7556 = vpop.f32.mrb[0].mxu0
      %v7557 = vadd.f32 %v6931, %v7556
      %v7558 = vpop.f32.mrb[0].mxu0
      %v7559 = vadd.f32 %v6931, %v7558
      %7560 = vmatprep.mubr.f32.mxu0 0.0
      %7561 = vmatmul.mubr.f32.gmra.mrb[0].mxu0 %v6950
      %v7562 = vpop.f32.mrb[0].mxu0
      %v7563 = vadd.f32 %v6936, %v7562
      %v7564 = vpop.f32.mrb[0].mxu0
      %v7565 = vadd.f32 %v6936, %v7564
      %7566 = vmatprep.mubr.f32.mxu0 0.0
      %7567 = vmatmul.mubr.f32.gmra.mrb[0].mxu0 %v6952
      %v7568 = vpop.f32.mrb[0].mxu0
      %v7569 = vadd.f32 %v6941, %v7568
      %v7570 = vpop.f32.mrb[0].mxu0
      %v7571 = vadd.f32 %v6941, %v7570
      %7572 = vmatprep.mubr.f32.mxu0 0.0
      %7573 = vmatmul.mubr.f32.gmra.mrb[0].mxu0 %v6954
      %v7574 = vpop.f32.mrb[0].mxu0
      %v7575 = vadd.f32 %v6946, %v7574
      %v7576 = vpop.f32.mrb[0].mxu0
      %v7577 = vadd.f32 %v6946, %v7576
      %7578 = vdwg.mxu0
      %v7579 = vtanh.pop %v7023
      %v7580 = vtanh.pop %v7025
      %v7581 = vtanh.pop %v7112
      %v7582 = vtanh.pop %v7114
      %v7583 = vtanh.pop %v7201
      %v7584 = vtanh.pop %v7203
      %v7585 = vtanh.pop %v7290
      %v7586 = vtanh.pop %v7292
      %v7587 = vtanh.pop %v7379
      %v7588 = vtanh.pop %v7381
      %v7589 = vtanh.pop %v7468
      %v7590 = vtanh.pop %v7470
      %v7591 = vtanh.pop %v7557
      %v7592 = vtanh.pop %v7559
      %v7593 = vtanh.pop %v7029
      %v7594 = vtanh.pop %v7031
      %v7595 = vtanh.pop %v7118
      %v7596 = vtanh.pop %v7120
      %v7597 = vtanh.pop %v7207
      %v7598 = vtanh.pop %v7209
      %v7599 = vtanh.pop %v7296
      %v7600 = vtanh.pop %v7298
      %v7601 = vtanh.pop %v7385
      %v7602 = vtanh.pop %v7387
      %v7603 = vtanh.pop %v7474
      %v7604 = vtanh.pop %v7476
      %v7605 = vtanh.pop %v7563
      %v7606 = vtanh.pop %v7565
      %v7607 = vxor.u32 %v7035, 2147483648
      %v7608 = vxor.u32 %v7037, 2147483648
      %v7609 = vxor.u32 %v7124, 2147483648
      %v7610 = vxor.u32 %v7126, 2147483648
      %v7611 = vxor.u32 %v7213, 2147483648
      %v7612 = vxor.u32 %v7215, 2147483648
      %v7613 = vxor.u32 %v7302, 2147483648
      %v7614 = vxor.u32 %v7304, 2147483648
      %v7615 = vxor.u32 %v7391, 2147483648
      %v7616 = vxor.u32 %v7393, 2147483648
      %v7617 = vxor.u32 %v7480, 2147483648
      %v7618 = vxor.u32 %v7482, 2147483648
      %v7619 = vxor.u32 %v7569, 2147483648
      %v7620 = vxor.u32 %v7571, 2147483648
      %v7621 = vxor.u32 %v7041, 2147483648
      %v7622 = vxor.u32 %v7043, 2147483648
      %v7623 = vxor.u32 %v7130, 2147483648
      %v7624 = vxor.u32 %v7132, 2147483648
      %v7625 = vxor.u32 %v7219, 2147483648
      %v7626 = vxor.u32 %v7221, 2147483648
      %v7627 = vxor.u32 %v7308, 2147483648
      %v7628 = vxor.u32 %v7310, 2147483648
      %v7629 = vxor.u32 %v7397, 2147483648
      %v7630 = vxor.u32 %v7399, 2147483648
      %v7631 = vxor.u32 %v7486, 2147483648
      %v7632 = vxor.u32 %v7488, 2147483648
      %v7633 = vxor.u32 %v7575, 2147483648
      %v7634 = vxor.u32 %v7577, 2147483648
      %v7635 = vmul.f32 %v7607, 1.442695
      %v7636 = vpow.pop %v7635
      %v7637 = vmul.f32 %v7608, 1.442695
      %v7638 = vpow.pop %v7637
      %v7639 = vmul.f32 %v7609, 1.442695
      %v7640 = vpow.pop %v7639
      %v7641 = vmul.f32 %v7610, 1.442695
      %v7642 = vpow.pop %v7641
      %v7643 = vmul.f32 %v7611, 1.442695
      %v7644 = vpow.pop %v7643
      %v7645 = vmul.f32 %v7612, 1.442695
      %v7646 = vpow.pop %v7645
      %v7647 = vmul.f32 %v7613, 1.442695
      %v7648 = vpow.pop %v7647
      %v7649 = vmul.f32 %v7614, 1.442695
      %v7650 = vpow.pop %v7649
      %v7651 = vmul.f32 %v7615, 1.442695
      %v7652 = vpow.pop %v7651
      %v7653 = vmul.f32 %v7616, 1.442695
      %v7654 = vpow.pop %v7653
      %v7655 = vmul.f32 %v7617, 1.442695
      %v7656 = vpow.pop %v7655
      %v7657 = vmul.f32 %v7618, 1.442695
      %v7658 = vpow.pop %v7657
      %v7659 = vmul.f32 %v7619, 1.442695
      %v7660 = vpow.pop %v7659
      %v7661 = vmul.f32 %v7620, 1.442695
      %v7662 = vpow.pop %v7661
      %v7663 = vmul.f32 %v7621, 1.442695
      %v7664 = vpow.pop %v7663
      %v7665 = vmul.f32 %v7622, 1.442695
      %v7666 = vpow.pop %v7665
      %v7667 = vmul.f32 %v7623, 1.442695
      %v7668 = vpow.pop %v7667
      %v7669 = vmul.f32 %v7624, 1.442695
      %v7670 = vpow.pop %v7669
      %v7671 = vmul.f32 %v7625, 1.442695
      %v7672 = vpow.pop %v7671
      %v7673 = vmul.f32 %v7626, 1.442695
      %v7674 = vpow.pop %v7673
      %v7675 = vmul.f32 %v7627, 1.442695
      %v7676 = vpow.pop %v7675
      %v7677 = vmul.f32 %v7628, 1.442695
      %v7678 = vpow.pop %v7677
      %v7679 = vmul.f32 %v7629, 1.442695
      %v7680 = vpow.pop %v7679
      %v7681 = vmul.f32 %v7630, 1.442695
      %v7682 = vpow.pop %v7681
      %v7683 = vmul.f32 %v7631, 1.442695
      %v7684 = vpow.pop %v7683
      %v7685 = vmul.f32 %v7632, 1.442695
      %v7686 = vpow.pop %v7685
      %v7687 = vmul.f32 %v7633, 1.442695
      %v7688 = vpow.pop %v7687
      %v7689 = vmul.f32 %v7634, 1.442695
      %v7690 = vpow.pop %v7689
      %v7691 = vadd.f32 %v7636, 1.0
      %v7692 = vadd.f32 %v7638, 1.0
      %v7693 = vadd.f32 %v7640, 1.0
      %v7694 = vadd.f32 %v7642, 1.0
      %v7695 = vadd.f32 %v7644, 1.0
      %v7696 = vadd.f32 %v7646, 1.0
      %v7697 = vadd.f32 %v7648, 1.0
      %v7698 = vadd.f32 %v7650, 1.0
      %v7699 = vadd.f32 %v7652, 1.0
      %v7700 = vadd.f32 %v7654, 1.0
      %v7701 = vadd.f32 %v7656, 1.0
      %v7702 = vadd.f32 %v7658, 1.0
      %v7703 = vadd.f32 %v7660, 1.0
      %v7704 = vadd.f32 %v7662, 1.0
      %v7705 = vadd.f32 %v7664, 1.0
      %v7706 = vadd.f32 %v7666, 1.0
      %v7707 = vadd.f32 %v7668, 1.0
      %v7708 = vadd.f32 %v7670, 1.0
      %v7709 = vadd.f32 %v7672, 1.0
      %v7710 = vadd.f32 %v7674, 1.0
      %v7711 = vadd.f32 %v7676, 1.0
      %v7712 = vadd.f32 %v7678, 1.0
      %v7713 = vadd.f32 %v7680, 1.0
      %v7714 = vadd.f32 %v7682, 1.0
      %v7715 = vadd.f32 %v7684, 1.0
      %v7716 = vadd.f32 %v7686, 1.0
      %v7717 = vadd.f32 %v7688, 1.0
      %v7718 = vadd.f32 %v7690, 1.0
      %v7719 = vrcp.pop %v7691
      %v7720 = vmul.f32 1.0, %v7719
      %v7721 = vrcp.pop %v7692
      %v7722 = vmul.f32 1.0, %v7721
      %v7723 = vrcp.pop %v7693
      %v7724 = vmul.f32 1.0, %v7723
      %v7725 = vrcp.pop %v7694
      %v7726 = vmul.f32 1.0, %v7725
      %v7727 = vrcp.pop %v7695
      %v7728 = vmul.f32 1.0, %v7727
      %v7729 = vrcp.pop %v7696
      %v7730 = vmul.f32 1.0, %v7729
      %v7731 = vrcp.pop %v7697
      %v7732 = vmul.f32 1.0, %v7731
      %v7733 = vrcp.pop %v7698
      %v7734 = vmul.f32 1.0, %v7733
      %v7735 = vrcp.pop %v7699
      %v7736 = vmul.f32 1.0, %v7735
      %v7737 = vrcp.pop %v7700
      %v7738 = vmul.f32 1.0, %v7737
      %v7739 = vrcp.pop %v7701
      %v7740 = vmul.f32 1.0, %v7739
      %v7741 = vrcp.pop %v7702
      %v7742 = vmul.f32 1.0, %v7741
      %v7743 = vrcp.pop %v7703
      %v7744 = vmul.f32 1.0, %v7743
      %v7745 = vrcp.pop %v7704
      %v7746 = vmul.f32 1.0, %v7745
      %v7747 = vrcp.pop %v7705
      %v7748 = vmul.f32 1.0, %v7747
      %v7749 = vrcp.pop %v7706
      %v7750 = vmul.f32 1.0, %v7749
      %v7751 = vrcp.pop %v7707
      %v7752 = vmul.f32 1.0, %v7751
      %v7753 = vrcp.pop %v7708
      %v7754 = vmul.f32 1.0, %v7753
      %v7755 = vrcp.pop %v7709
      %v7756 = vmul.f32 1.0, %v7755
      %v7757 = vrcp.pop %v7710
      %v7758 = vmul.f32 1.0, %v7757
      %v7759 = vrcp.pop %v7711
      %v7760 = vmul.f32 1.0, %v7759
      %v7761 = vrcp.pop %v7712
      %v7762 = vmul.f32 1.0, %v7761
      %v7763 = vrcp.pop %v7713
      %v7764 = vmul.f32 1.0, %v7763
      %v7765 = vrcp.pop %v7714
      %v7766 = vmul.f32 1.0, %v7765
      %v7767 = vrcp.pop %v7715
      %v7768 = vmul.f32 1.0, %v7767
      %v7769 = vrcp.pop %v7716
      %v7770 = vmul.f32 1.0, %v7769
      %v7771 = vrcp.pop %v7717
      %v7772 = vmul.f32 1.0, %v7771
      %v7773 = vrcp.pop %v7718
      %v7774 = vmul.f32 1.0, %v7773
      %v7775 = vmul.f32 %v7579, %v7720
      %v7776 = vmul.f32 %v7580, %v7722
      %v7777 = vmul.f32 %v7581, %v7724
      %v7778 = vmul.f32 %v7582, %v7726
      %v7779 = vmul.f32 %v7583, %v7728
      %v7780 = vmul.f32 %v7584, %v7730
      %v7781 = vmul.f32 %v7585, %v7732
      %v7782 = vmul.f32 %v7586, %v7734
      %v7783 = vmul.f32 %v7587, %v7736
      %v7784 = vmul.f32 %v7588, %v7738
      %v7785 = vmul.f32 %v7589, %v7740
      %v7786 = vmul.f32 %v7590, %v7742
      %v7787 = vmul.f32 %v7591, %v7744
      %v7788 = vmul.f32 %v7592, %v7746
      %v7789 = vmul.f32 %v7593, %v7748
      %v7790 = vmul.f32 %v7594, %v7750
      %v7791 = vmul.f32 %v7595, %v7752
      %v7792 = vmul.f32 %v7596, %v7754
      %v7793 = vmul.f32 %v7597, %v7756
      %v7794 = vmul.f32 %v7598, %v7758
      %v7795 = vmul.f32 %v7599, %v7760
      %v7796 = vmul.f32 %v7600, %v7762
      %v7797 = vmul.f32 %v7601, %v7764
      %v7798 = vmul.f32 %v7602, %v7766
      %v7799 = vmul.f32 %v7603, %v7768
      %v7800 = vmul.f32 %v7604, %v7770
      %v7801 = vmul.f32 %v7605, %v7772
      %v7802 = vmul.f32 %v7606, %v7774
      %7804 = vset.pattern.permute.xlu0 32
      %7805 = vperm.xlu0 %7804, %v6926
      %v7806 = vpop.permute.xlu0 %7805
      %7809 = vset.pattern.permute.xlu0 32
      %7810 = vperm.xlu0 %7809, %v6927
      %v7811 = vpop.permute.xlu0 %7810
      %v7813 = vsel %vm2008, %v6926, 0
      %v7815 = vsel %vm2008, %v6927, 0
      %7817 = vmatprep.subr.mxu0 %v7776
      %7818 = vmatpush1.msra.mxu0 %v7775
      %7819 = vmatprep.subr.mxu0 %v7790
      %7820 = vmatpush1.msra.mxu0 %v7789
      %7821 = vmatprep.subr.mxu0 0.0
      %7822 = vmatpush1.msra.mxu0 0.0
      %7823 = vmatprep.subr.mxu0 0.0
      %7824 = vmatpush1.msra.mxu0 0.0
      %7825 = vmatprep.subr.mxu0 0.0
      %7826 = vmatpush1.msra.mxu0 0.0
      %7827 = vmatprep.subr.mxu0 0.0
      %7828 = vmatpush1.msra.mxu0 0.0
      %7829 = vmatprep.subr.mxu0 0.0
      %7830 = vmatpush1.msra.mxu0 0.0
      %7831 = vmatprep.subr.mxu0 0.0
      %7832 = vmatpush1.msra.mxu0 0.0
      %7833 = vmatprep.subr.mxu0 0.0
      %7834 = vmatpush1.msra.mxu0 0.0
      %7835 = vmatprep.subr.mxu0 0.0
      %7836 = vmatpush1.msra.mxu0 0.0
      %7837 = vmatprep.subr.mxu0 0.0
      %7838 = vmatpush1.msra.mxu0 0.0
      %7839 = vmatprep.subr.mxu0 0.0
      %7840 = vmatpush1.msra.mxu0 0.0
      %7841 = vmatprep.subr.mxu0 0.0
      %7842 = vmatpush1.msra.mxu0 0.0
      %7843 = vmatprep.subr.mxu0 0.0
      %7844 = vmatpush1.msra.mxu0 0.0
      %7845 = vmatprep.subr.mxu0 0.0
      %7846 = vmatpush1.msra.mxu0 0.0
      %7847 = vmatprep.subr.mxu0 0.0
      %7848 = vmatpush1.msra.mxu0 0.0
      %7849 = vmatprep.subr.mxu0 0.0
      %7850 = vmatpush1.msra.mxu0 0.0
      %7851 = vmatprep.subr.mxu0 0.0
      %7852 = vmatpush1.msra.mxu0 0.0
      %7853 = vmatprep.subr.mxu0 0.0
      %7854 = vmatpush1.msra.mxu0 0.0
      %7855 = vmatprep.subr.mxu0 0.0
      %7856 = vmatpush1.msra.mxu0 0.0
      %7857 = vmatprep.subr.mxu0 0.0
      %7858 = vmatpush1.msra.mxu0 0.0
      %7859 = vmatprep.subr.mxu0 0.0
      %7860 = vmatpush1.msra.mxu0 0.0
      %7861 = vmatprep.subr.mxu0 0.0
      %7862 = vmatpush1.msra.mxu0 0.0
      %7863 = vmatprep.subr.mxu0 0.0
      %7864 = vmatpush1.msra.mxu0 0.0
      %7865 = vmatprep.subr.mxu0 0.0
      %7866 = vmatpush1.msra.mxu0 0.0
      %7867 = vmatprep.subr.mxu0 0.0
      %7868 = vmatpush1.msra.mxu0 0.0
      %7869 = vmatprep.subr.mxu0 0.0
      %7870 = vmatpush1.msra.mxu0 0.0
      %7871 = vmatprep.subr.mxu0 0.0
      %7872 = vmatpush1.msra.mxu0 0.0
      %7873 = vmatprep.subr.mxu0 0.0
      %7874 = vmatpush1.msra.mxu0 0.0
      %7875 = vmatprep.subr.mxu0 0.0
      %7876 = vmatpush1.msra.mxu0 0.0
      %7877 = vmatprep.subr.mxu0 0.0
      %7878 = vmatpush1.msra.mxu0 0.0
      %7879 = vmatprep.subr.mxu0 0.0
      %7880 = vmatpush1.msra.mxu0 0.0
      %7881 = vmatprep.mubr.f32.mxu0 0.0
      %7882 = vmatmul.mubr.f32.gmra.mrb[0].mxu0 %v7813
      %v7883 = vpop.f32.mrb[0].mxu0
      %v7884 = vadd.f32 %v7806, %v7883
      %v7885 = vpop.f32.mrb[0].mxu0
      %v7886 = vadd.f32 %v7806, %v7885
      %7887 = vmatprep.mubr.f32.mxu0 0.0
      %7888 = vmatmul.mubr.f32.gmra.mrb[0].mxu0 %v7815
      %v7889 = vpop.f32.mrb[0].mxu0
      %v7890 = vadd.f32 %v7811, %v7889
      %v7891 = vpop.f32.mrb[0].mxu0
      %v7892 = vadd.f32 %v7811, %v7891
      %7893 = vdwg.mxu0
      %7894 = vmatprep.subr.mxu0 %v7778
      %7895 = vmatpush1.msra.mxu0 %v7777
      %7896 = vmatprep.subr.mxu0 %v7792
      %7897 = vmatpush1.msra.mxu0 %v7791
      %7898 = vmatprep.subr.mxu0 0.0
      %7899 = vmatpush1.msra.mxu0 0.0
      %7900 = vmatprep.subr.mxu0 0.0
      %7901 = vmatpush1.msra.mxu0 0.0
      %7902 = vmatprep.subr.mxu0 0.0
      %7903 = vmatpush1.msra.mxu0 0.0
      %7904 = vmatprep.subr.mxu0 0.0
      %7905 = vmatpush1.msra.mxu0 0.0
      %7906 = vmatprep.subr.mxu0 0.0
      %7907 = vmatpush1.msra.mxu0 0.0
      %7908 = vmatprep.subr.mxu0 0.0
      %7909 = vmatpush1.msra.mxu0 0.0
      %7910 = vmatprep.subr.mxu0 0.0
      %7911 = vmatpush1.msra.mxu0 0.0
      %7912 = vmatprep.subr.mxu0 0.0
      %7913 = vmatpush1.msra.mxu0 0.0
      %7914 = vmatprep.subr.mxu0 0.0
      %7915 = vmatpush1.msra.mxu0 0.0
      %7916 = vmatprep.subr.mxu0 0.0
      %7917 = vmatpush1.msra.mxu0 0.0
      %7918 = vmatprep.subr.mxu0 0.0
      %7919 = vmatpush1.msra.mxu0 0.0
      %7920 = vmatprep.subr.mxu0 0.0
      %7921 = vmatpush1.msra.mxu0 0.0
      %7922 = vmatprep.subr.mxu0 0.0
      %7923 = vmatpush1.msra.mxu0 0.0
      %7924 = vmatprep.subr.mxu0 0.0
      %7925 = vmatpush1.msra.mxu0 0.0
      %7926 = vmatprep.subr.mxu0 0.0
      %7927 = vmatpush1.msra.mxu0 0.0
      %7928 = vmatprep.subr.mxu0 0.0
      %7929 = vmatpush1.msra.mxu0 0.0
      %7930 = vmatprep.subr.mxu0 0.0
      %7931 = vmatpush1.msra.mxu0 0.0
      %7932 = vmatprep.subr.mxu0 0.0
      %7933 = vmatpush1.msra.mxu0 0.0
      %7934 = vmatprep.subr.mxu0 0.0
      %7935 = vmatpush1.msra.mxu0 0.0
      %7936 = vmatprep.subr.mxu0 0.0
      %7937 = vmatpush1.msra.mxu0 0.0
      %7938 = vmatprep.subr.mxu0 0.0
      %7939 = vmatpush1.msra.mxu0 0.0
      %7940 = vmatprep.subr.mxu0 0.0
      %7941 = vmatpush1.msra.mxu0 0.0
      %7942 = vmatprep.subr.mxu0 0.0
      %7943 = vmatpush1.msra.mxu0 0.0
      %7944 = vmatprep.subr.mxu0 0.0
      %7945 = vmatpush1.msra.mxu0 0.0
      %7946 = vmatprep.subr.mxu0 0.0
      %7947 = vmatpush1.msra.mxu0 0.0
      %7948 = vmatprep.subr.mxu0 0.0
      %7949 = vmatpush1.msra.mxu0 0.0
      %7950 = vmatprep.subr.mxu0 0.0
      %7951 = vmatpush1.msra.mxu0 0.0
      %7952 = vmatprep.subr.mxu0 0.0
      %7953 = vmatpush1.msra.mxu0 0.0
      %7954 = vmatprep.subr.mxu0 0.0
      %7955 = vmatpush1.msra.mxu0 0.0
      %7956 = vmatprep.subr.mxu0 0.0
      %7957 = vmatpush1.msra.mxu0 0.0
      %7958 = vmatprep.mubr.f32.mxu0 0.0
      %7959 = vmatmul.mubr.f32.gmra.mrb[0].mxu0 %v7813
      %v7960 = vpop.f32.mrb[0].mxu0
      %v7961 = vadd.f32 %v7806, %v7960
      %v7962 = vpop.f32.mrb[0].mxu0
      %v7963 = vadd.f32 %v7806, %v7962
      %7964 = vmatprep.mubr.f32.mxu0 0.0
      %7965 = vmatmul.mubr.f32.gmra.mrb[0].mxu0 %v7815
      %v7966 = vpop.f32.mrb[0].mxu0
      %v7967 = vadd.f32 %v7811, %v7966
      %v7968 = vpop.f32.mrb[0].mxu0
      %v7969 = vadd.f32 %v7811, %v7968
      %7970 = vdwg.mxu0
      %7971 = vmatprep.subr.mxu0 %v7780
      %7972 = vmatpush1.msra.mxu0 %v7779
      %7973 = vmatprep.subr.mxu0 %v7794
      %7974 = vmatpush1.msra.mxu0 %v7793
      %7975 = vmatprep.subr.mxu0 0.0
      %7976 = vmatpush1.msra.mxu0 0.0
      %7977 = vmatprep.subr.mxu0 0.0
      %7978 = vmatpush1.msra.mxu0 0.0
      %7979 = vmatprep.subr.mxu0 0.0
      %7980 = vmatpush1.msra.mxu0 0.0
      %7981 = vmatprep.subr.mxu0 0.0
      %7982 = vmatpush1.msra.mxu0 0.0
      %7983 = vmatprep.subr.mxu0 0.0
      %7984 = vmatpush1.msra.mxu0 0.0
      %7985 = vmatprep.subr.mxu0 0.0
      %7986 = vmatpush1.msra.mxu0 0.0
      %7987 = vmatprep.subr.mxu0 0.0
      %7988 = vmatpush1.msra.mxu0 0.0
      %7989 = vmatprep.subr.mxu0 0.0
      %7990 = vmatpush1.msra.mxu0 0.0
      %7991 = vmatprep.subr.mxu0 0.0
      %7992 = vmatpush1.msra.mxu0 0.0
      %7993 = vmatprep.subr.mxu0 0.0
      %7994 = vmatpush1.msra.mxu0 0.0
      %7995 = vmatprep.subr.mxu0 0.0
      %7996 = vmatpush1.msra.mxu0 0.0
      %7997 = vmatprep.subr.mxu0 0.0
      %7998 = vmatpush1.msra.mxu0 0.0
      %7999 = vmatprep.subr.mxu0 0.0
      %8000 = vmatpush1.msra.mxu0 0.0
      %8001 = vmatprep.subr.mxu0 0.0
      %8002 = vmatpush1.msra.mxu0 0.0
      %8003 = vmatprep.subr.mxu0 0.0
      %8004 = vmatpush1.msra.mxu0 0.0
      %8005 = vmatprep.subr.mxu0 0.0
      %8006 = vmatpush1.msra.mxu0 0.0
      %8007 = vmatprep.subr.mxu0 0.0
      %8008 = vmatpush1.msra.mxu0 0.0
      %8009 = vmatprep.subr.mxu0 0.0
      %8010 = vmatpush1.msra.mxu0 0.0
      %8011 = vmatprep.subr.mxu0 0.0
      %8012 = vmatpush1.msra.mxu0 0.0
      %8013 = vmatprep.subr.mxu0 0.0
      %8014 = vmatpush1.msra.mxu0 0.0
      %8015 = vmatprep.subr.mxu0 0.0
      %8016 = vmatpush1.msra.mxu0 0.0
      %8017 = vmatprep.subr.mxu0 0.0
      %8018 = vmatpush1.msra.mxu0 0.0
      %8019 = vmatprep.subr.mxu0 0.0
      %8020 = vmatpush1.msra.mxu0 0.0
      %8021 = vmatprep.subr.mxu0 0.0
      %8022 = vmatpush1.msra.mxu0 0.0
      %8023 = vmatprep.subr.mxu0 0.0
      %8024 = vmatpush1.msra.mxu0 0.0
      %8025 = vmatprep.subr.mxu0 0.0
      %8026 = vmatpush1.msra.mxu0 0.0
      %8027 = vmatprep.subr.mxu0 0.0
      %8028 = vmatpush1.msra.mxu0 0.0
      %8029 = vmatprep.subr.mxu0 0.0
      %8030 = vmatpush1.msra.mxu0 0.0
      %8031 = vmatprep.subr.mxu0 0.0
      %8032 = vmatpush1.msra.mxu0 0.0
      %8033 = vmatprep.subr.mxu0 0.0
      %8034 = vmatpush1.msra.mxu0 0.0
      %8035 = vmatprep.mubr.f32.mxu0 0.0
      %8036 = vmatmul.mubr.f32.gmra.mrb[0].mxu0 %v7813
      %v8037 = vpop.f32.mrb[0].mxu0
      %v8038 = vadd.f32 %v7806, %v8037
      %v8039 = vpop.f32.mrb[0].mxu0
      %v8040 = vadd.f32 %v7806, %v8039
      %8041 = vmatprep.mubr.f32.mxu0 0.0
      %8042 = vmatmul.mubr.f32.gmra.mrb[0].mxu0 %v7815
      %v8043 = vpop.f32.mrb[0].mxu0
      %v8044 = vadd.f32 %v7811, %v8043
      %v8045 = vpop.f32.mrb[0].mxu0
      %v8046 = vadd.f32 %v7811, %v8045
      %8047 = vdwg.mxu0
      %8048 = vmatprep.subr.mxu0 %v7782
      %8049 = vmatpush1.msra.mxu0 %v7781
      %8050 = vmatprep.subr.mxu0 %v7796
      %8051 = vmatpush1.msra.mxu0 %v7795
      %8052 = vmatprep.subr.mxu0 0.0
      %8053 = vmatpush1.msra.mxu0 0.0
      %8054 = vmatprep.subr.mxu0 0.0
      %8055 = vmatpush1.msra.mxu0 0.0
      %8056 = vmatprep.subr.mxu0 0.0
      %8057 = vmatpush1.msra.mxu0 0.0
      %8058 = vmatprep.subr.mxu0 0.0
      %8059 = vmatpush1.msra.mxu0 0.0
      %8060 = vmatprep.subr.mxu0 0.0
      %8061 = vmatpush1.msra.mxu0 0.0
      %8062 = vmatprep.subr.mxu0 0.0
      %8063 = vmatpush1.msra.mxu0 0.0
      %8064 = vmatprep.subr.mxu0 0.0
      %8065 = vmatpush1.msra.mxu0 0.0
      %8066 = vmatprep.subr.mxu0 0.0
      %8067 = vmatpush1.msra.mxu0 0.0
      %8068 = vmatprep.subr.mxu0 0.0
      %8069 = vmatpush1.msra.mxu0 0.0
      %8070 = vmatprep.subr.mxu0 0.0
      %8071 = vmatpush1.msra.mxu0 0.0
      %8072 = vmatprep.subr.mxu0 0.0
      %8073 = vmatpush1.msra.mxu0 0.0
      %8074 = vmatprep.subr.mxu0 0.0
      %8075 = vmatpush1.msra.mxu0 0.0
      %8076 = vmatprep.subr.mxu0 0.0
      %8077 = vmatpush1.msra.mxu0 0.0
      %8078 = vmatprep.subr.mxu0 0.0
      %8079 = vmatpush1.msra.mxu0 0.0
      %8080 = vmatprep.subr.mxu0 0.0
      %8081 = vmatpush1.msra.mxu0 0.0
      %8082 = vmatprep.subr.mxu0 0.0
      %8083 = vmatpush1.msra.mxu0 0.0
      %8084 = vmatprep.subr.mxu0 0.0
      %8085 = vmatpush1.msra.mxu0 0.0
      %8086 = vmatprep.subr.mxu0 0.0
      %8087 = vmatpush1.msra.mxu0 0.0
      %8088 = vmatprep.subr.mxu0 0.0
      %8089 = vmatpush1.msra.mxu0 0.0
      %8090 = vmatprep.subr.mxu0 0.0
      %8091 = vmatpush1.msra.mxu0 0.0
      %8092 = vmatprep.subr.mxu0 0.0
      %8093 = vmatpush1.msra.mxu0 0.0
      %8094 = vmatprep.subr.mxu0 0.0
      %8095 = vmatpush1.msra.mxu0 0.0
      %8096 = vmatprep.subr.mxu0 0.0
      %8097 = vmatpush1.msra.mxu0 0.0
      %8098 = vmatprep.subr.mxu0 0.0
      %8099 = vmatpush1.msra.mxu0 0.0
      %8100 = vmatprep.subr.mxu0 0.0
      %8101 = vmatpush1.msra.mxu0 0.0
      %8102 = vmatprep.subr.mxu0 0.0
      %8103 = vmatpush1.msra.mxu0 0.0
      %8104 = vmatprep.subr.mxu0 0.0
      %8105 = vmatpush1.msra.mxu0 0.0
      %8106 = vmatprep.subr.mxu0 0.0
      %8107 = vmatpush1.msra.mxu0 0.0
      %8108 = vmatprep.subr.mxu0 0.0
      %8109 = vmatpush1.msra.mxu0 0.0
      %8110 = vmatprep.subr.mxu0 0.0
      %8111 = vmatpush1.msra.mxu0 0.0
      %8112 = vmatprep.mubr.f32.mxu0 0.0
      %8113 = vmatmul.mubr.f32.gmra.mrb[0].mxu0 %v7813
      %v8114 = vpop.f32.mrb[0].mxu0
      %v8115 = vadd.f32 %v7806, %v8114
      %v8116 = vpop.f32.mrb[0].mxu0
      %v8117 = vadd.f32 %v7806, %v8116
      %8118 = vmatprep.mubr.f32.mxu0 0.0
      %8119 = vmatmul.mubr.f32.gmra.mrb[0].mxu0 %v7815
      %v8120 = vpop.f32.mrb[0].mxu0
      %v8121 = vadd.f32 %v7811, %v8120
      %v8122 = vpop.f32.mrb[0].mxu0
      %v8123 = vadd.f32 %v7811, %v8122
      %8124 = vdwg.mxu0
      %8125 = vmatprep.subr.mxu0 %v7784
      %8126 = vmatpush1.msra.mxu0 %v7783
      %8127 = vmatprep.subr.mxu0 %v7798
      %8128 = vmatpush1.msra.mxu0 %v7797
      %8129 = vmatprep.subr.mxu0 0.0
      %8130 = vmatpush1.msra.mxu0 0.0
      %8131 = vmatprep.subr.mxu0 0.0
      %8132 = vmatpush1.msra.mxu0 0.0
      %8133 = vmatprep.subr.mxu0 0.0
      %8134 = vmatpush1.msra.mxu0 0.0
      %8135 = vmatprep.subr.mxu0 0.0
      %8136 = vmatpush1.msra.mxu0 0.0
      %8137 = vmatprep.subr.mxu0 0.0
      %8138 = vmatpush1.msra.mxu0 0.0
      %8139 = vmatprep.subr.mxu0 0.0
      %8140 = vmatpush1.msra.mxu0 0.0
      %8141 = vmatprep.subr.mxu0 0.0
      %8142 = vmatpush1.msra.mxu0 0.0
      %8143 = vmatprep.subr.mxu0 0.0
      %8144 = vmatpush1.msra.mxu0 0.0
      %8145 = vmatprep.subr.mxu0 0.0
      %8146 = vmatpush1.msra.mxu0 0.0
      %8147 = vmatprep.subr.mxu0 0.0
      %8148 = vmatpush1.msra.mxu0 0.0
      %8149 = vmatprep.subr.mxu0 0.0
      %8150 = vmatpush1.msra.mxu0 0.0
      %8151 = vmatprep.subr.mxu0 0.0
      %8152 = vmatpush1.msra.mxu0 0.0
      %8153 = vmatprep.subr.mxu0 0.0
      %8154 = vmatpush1.msra.mxu0 0.0
      %8155 = vmatprep.subr.mxu0 0.0
      %8156 = vmatpush1.msra.mxu0 0.0
      %8157 = vmatprep.subr.mxu0 0.0
      %8158 = vmatpush1.msra.mxu0 0.0
      %8159 = vmatprep.subr.mxu0 0.0
      %8160 = vmatpush1.msra.mxu0 0.0
      %8161 = vmatprep.subr.mxu0 0.0
      %8162 = vmatpush1.msra.mxu0 0.0
      %8163 = vmatprep.subr.mxu0 0.0
      %8164 = vmatpush1.msra.mxu0 0.0
      %8165 = vmatprep.subr.mxu0 0.0
      %8166 = vmatpush1.msra.mxu0 0.0
      %8167 = vmatprep.subr.mxu0 0.0
      %8168 = vmatpush1.msra.mxu0 0.0
      %8169 = vmatprep.subr.mxu0 0.0
      %8170 = vmatpush1.msra.mxu0 0.0
      %8171 = vmatprep.subr.mxu0 0.0
      %8172 = vmatpush1.msra.mxu0 0.0
      %8173 = vmatprep.subr.mxu0 0.0
      %8174 = vmatpush1.msra.mxu0 0.0
      %8175 = vmatprep.subr.mxu0 0.0
      %8176 = vmatpush1.msra.mxu0 0.0
      %8177 = vmatprep.subr.mxu0 0.0
      %8178 = vmatpush1.msra.mxu0 0.0
      %8179 = vmatprep.subr.mxu0 0.0
      %8180 = vmatpush1.msra.mxu0 0.0
      %8181 = vmatprep.subr.mxu0 0.0
      %8182 = vmatpush1.msra.mxu0 0.0
      %8183 = vmatprep.subr.mxu0 0.0
      %8184 = vmatpush1.msra.mxu0 0.0
      %8185 = vmatprep.subr.mxu0 0.0
      %8186 = vmatpush1.msra.mxu0 0.0
      %8187 = vmatprep.subr.mxu0 0.0
      %8188 = vmatpush1.msra.mxu0 0.0
      %8189 = vmatprep.mubr.f32.mxu0 0.0
      %8190 = vmatmul.mubr.f32.gmra.mrb[0].mxu0 %v7813
      %v8191 = vpop.f32.mrb[0].mxu0
      %v8192 = vadd.f32 %v7806, %v8191
      %v8193 = vpop.f32.mrb[0].mxu0
      %v8194 = vadd.f32 %v7806, %v8193
      %8195 = vmatprep.mubr.f32.mxu0 0.0
      %8196 = vmatmul.mubr.f32.gmra.mrb[0].mxu0 %v7815
      %v8197 = vpop.f32.mrb[0].mxu0
      %v8198 = vadd.f32 %v7811, %v8197
      %v8199 = vpop.f32.mrb[0].mxu0
      %v8200 = vadd.f32 %v7811, %v8199
      %8201 = vdwg.mxu0
      %8202 = vmatprep.subr.mxu0 %v7786
      %8203 = vmatpush1.msra.mxu0 %v7785
      %8204 = vmatprep.subr.mxu0 %v7800
      %8205 = vmatpush1.msra.mxu0 %v7799
      %8206 = vmatprep.subr.mxu0 0.0
      %8207 = vmatpush1.msra.mxu0 0.0
      %8208 = vmatprep.subr.mxu0 0.0
      %8209 = vmatpush1.msra.mxu0 0.0
      %8210 = vmatprep.subr.mxu0 0.0
      %8211 = vmatpush1.msra.mxu0 0.0
      %8212 = vmatprep.subr.mxu0 0.0
      %8213 = vmatpush1.msra.mxu0 0.0
      %8214 = vmatprep.subr.mxu0 0.0
      %8215 = vmatpush1.msra.mxu0 0.0
      %8216 = vmatprep.subr.mxu0 0.0
      %8217 = vmatpush1.msra.mxu0 0.0
      %8218 = vmatprep.subr.mxu0 0.0
      %8219 = vmatpush1.msra.mxu0 0.0
      %8220 = vmatprep.subr.mxu0 0.0
      %8221 = vmatpush1.msra.mxu0 0.0
      %8222 = vmatprep.subr.mxu0 0.0
      %8223 = vmatpush1.msra.mxu0 0.0
      %8224 = vmatprep.subr.mxu0 0.0
      %8225 = vmatpush1.msra.mxu0 0.0
      %8226 = vmatprep.subr.mxu0 0.0
      %8227 = vmatpush1.msra.mxu0 0.0
      %8228 = vmatprep.subr.mxu0 0.0
      %8229 = vmatpush1.msra.mxu0 0.0
      %8230 = vmatprep.subr.mxu0 0.0
      %8231 = vmatpush1.msra.mxu0 0.0
      %8232 = vmatprep.subr.mxu0 0.0
      %8233 = vmatpush1.msra.mxu0 0.0
      %8234 = vmatprep.subr.mxu0 0.0
      %8235 = vmatpush1.msra.mxu0 0.0
      %8236 = vmatprep.subr.mxu0 0.0
      %8237 = vmatpush1.msra.mxu0 0.0
      %8238 = vmatprep.subr.mxu0 0.0
      %8239 = vmatpush1.msra.mxu0 0.0
      %8240 = vmatprep.subr.mxu0 0.0
      %8241 = vmatpush1.msra.mxu0 0.0
      %8242 = vmatprep.subr.mxu0 0.0
      %8243 = vmatpush1.msra.mxu0 0.0
      %8244 = vmatprep.subr.mxu0 0.0
      %8245 = vmatpush1.msra.mxu0 0.0
      %8246 = vmatprep.subr.mxu0 0.0
      %8247 = vmatpush1.msra.mxu0 0.0
      %8248 = vmatprep.subr.mxu0 0.0
      %8249 = vmatpush1.msra.mxu0 0.0
      %8250 = vmatprep.subr.mxu0 0.0
      %8251 = vmatpush1.msra.mxu0 0.0
      %8252 = vmatprep.subr.mxu0 0.0
      %8253 = vmatpush1.msra.mxu0 0.0
      %8254 = vmatprep.subr.mxu0 0.0
      %8255 = vmatpush1.msra.mxu0 0.0
      %8256 = vmatprep.subr.mxu0 0.0
      %8257 = vmatpush1.msra.mxu0 0.0
      %8258 = vmatprep.subr.mxu0 0.0
      %8259 = vmatpush1.msra.mxu0 0.0
      %8260 = vmatprep.subr.mxu0 0.0
      %8261 = vmatpush1.msra.mxu0 0.0
      %8262 = vmatprep.subr.mxu0 0.0
      %8263 = vmatpush1.msra.mxu0 0.0
      %8264 = vmatprep.subr.mxu0 0.0
      %8265 = vmatpush1.msra.mxu0 0.0
      %8266 = vmatprep.mubr.f32.mxu0 0.0
      %8267 = vmatmul.mubr.f32.gmra.mrb[0].mxu0 %v7813
      %v8268 = vpop.f32.mrb[0].mxu0
      %v8269 = vadd.f32 %v7806, %v8268
      %v8270 = vpop.f32.mrb[0].mxu0
      %v8271 = vadd.f32 %v7806, %v8270
      %8272 = vmatprep.mubr.f32.mxu0 0.0
      %8273 = vmatmul.mubr.f32.gmra.mrb[0].mxu0 %v7815
      %v8274 = vpop.f32.mrb[0].mxu0
      %v8275 = vadd.f32 %v7811, %v8274
      %v8276 = vpop.f32.mrb[0].mxu0
      %v8277 = vadd.f32 %v7811, %v8276
      %8278 = vdwg.mxu0
      %8279 = vmatprep.subr.mxu0 %v7788
      %8280 = vmatpush1.msra.mxu0 %v7787
      %8281 = vmatprep.subr.mxu0 %v7802
      %8282 = vmatpush1.msra.mxu0 %v7801
      %8283 = vmatprep.subr.mxu0 0.0
      %8284 = vmatpush1.msra.mxu0 0.0
      %8285 = vmatprep.subr.mxu0 0.0
      %8286 = vmatpush1.msra.mxu0 0.0
      %8287 = vmatprep.subr.mxu0 0.0
      %8288 = vmatpush1.msra.mxu0 0.0
      %8289 = vmatprep.subr.mxu0 0.0
      %8290 = vmatpush1.msra.mxu0 0.0
      %8291 = vmatprep.subr.mxu0 0.0
      %8292 = vmatpush1.msra.mxu0 0.0
      %8293 = vmatprep.subr.mxu0 0.0
      %8294 = vmatpush1.msra.mxu0 0.0
      %8295 = vmatprep.subr.mxu0 0.0
      %8296 = vmatpush1.msra.mxu0 0.0
      %8297 = vmatprep.subr.mxu0 0.0
      %8298 = vmatpush1.msra.mxu0 0.0
      %8299 = vmatprep.subr.mxu0 0.0
      %8300 = vmatpush1.msra.mxu0 0.0
      %8301 = vmatprep.subr.mxu0 0.0
      %8302 = vmatpush1.msra.mxu0 0.0
      %8303 = vmatprep.subr.mxu0 0.0
      %8304 = vmatpush1.msra.mxu0 0.0
      %8305 = vmatprep.subr.mxu0 0.0
      %8306 = vmatpush1.msra.mxu0 0.0
      %8307 = vmatprep.subr.mxu0 0.0
      %8308 = vmatpush1.msra.mxu0 0.0
      %8309 = vmatprep.subr.mxu0 0.0
      %8310 = vmatpush1.msra.mxu0 0.0
      %8311 = vmatprep.subr.mxu0 0.0
      %8312 = vmatpush1.msra.mxu0 0.0
      %8313 = vmatprep.subr.mxu0 0.0
      %8314 = vmatpush1.msra.mxu0 0.0
      %8315 = vmatprep.subr.mxu0 0.0
      %8316 = vmatpush1.msra.mxu0 0.0
      %8317 = vmatprep.subr.mxu0 0.0
      %8318 = vmatpush1.msra.mxu0 0.0
      %8319 = vmatprep.subr.mxu0 0.0
      %8320 = vmatpush1.msra.mxu0 0.0
      %8321 = vmatprep.subr.mxu0 0.0
      %8322 = vmatpush1.msra.mxu0 0.0
      %8323 = vmatprep.subr.mxu0 0.0
      %8324 = vmatpush1.msra.mxu0 0.0
      %8325 = vmatprep.subr.mxu0 0.0
      %8326 = vmatpush1.msra.mxu0 0.0
      %8327 = vmatprep.subr.mxu0 0.0
      %8328 = vmatpush1.msra.mxu0 0.0
      %8329 = vmatprep.subr.mxu0 0.0
      %8330 = vmatpush1.msra.mxu0 0.0
      %8331 = vmatprep.subr.mxu0 0.0
      %8332 = vmatpush1.msra.mxu0 0.0
      %8333 = vmatprep.subr.mxu0 0.0
      %8334 = vmatpush1.msra.mxu0 0.0
      %8335 = vmatprep.subr.mxu0 0.0
      %8336 = vmatpush1.msra.mxu0 0.0
      %8337 = vmatprep.subr.mxu0 0.0
      %8338 = vmatpush1.msra.mxu0 0.0
      %8339 = vmatprep.subr.mxu0 0.0
      %8340 = vmatpush1.msra.mxu0 0.0
      %8341 = vmatprep.subr.mxu0 0.0
      %8342 = vmatpush1.msra.mxu0 0.0
      %8343 = vmatprep.mubr.f32.mxu0 0.0
      %8344 = vmatmul.mubr.f32.gmra.mrb[0].mxu0 %v7813
      %v8345 = vpop.f32.mrb[0].mxu0
      %v8346 = vadd.f32 %v7806, %v8345
      %v8347 = vpop.f32.mrb[0].mxu0
      %v8348 = vadd.f32 %v7806, %v8347
      %8349 = vmatprep.mubr.f32.mxu0 0.0
      %8350 = vmatmul.mubr.f32.gmra.mrb[0].mxu0 %v7815
      %v8351 = vpop.f32.mrb[0].mxu0
      %v8352 = vadd.f32 %v7811, %v8351
      %v8353 = vpop.f32.mrb[0].mxu0
      %v8354 = vadd.f32 %v7811, %v8353
      %8355 = vdwg.mxu0
      %v8356 = vadd.f32 %v7884, %v6889
      %v8357 = vadd.f32 %v7886, %v6890
      %v8358 = vadd.f32 %v7961, %v6891
      %v8359 = vadd.f32 %v7963, %v6892
      %v8360 = vadd.f32 %v8038, %v6893
      %v8361 = vadd.f32 %v8040, %v6894
      %v8362 = vadd.f32 %v8115, %v6895
      %v8363 = vadd.f32 %v8117, %v6896
      %v8364 = vadd.f32 %v8192, %v6897
      %v8365 = vadd.f32 %v8194, %v6898
      %v8366 = vadd.f32 %v8269, %v6899
      %v8367 = vadd.f32 %v8271, %v6900
      %v8368 = vadd.f32 %v8346, %v6901
      %v8369 = vadd.f32 %v8348, %v6902
      %v8370 = vadd.f32 %v7890, %v6907
      %v8371 = vadd.f32 %v7892, %v6908
      %v8372 = vadd.f32 %v7967, %v6909
      %v8373 = vadd.f32 %v7969, %v6910
      %v8374 = vadd.f32 %v8044, %v6911
      %v8375 = vadd.f32 %v8046, %v6912
      %v8376 = vadd.f32 %v8121, %v6913
      %v8377 = vadd.f32 %v8123, %v6914
      %v8378 = vadd.f32 %v8198, %v6915
      %v8379 = vadd.f32 %v8200, %v6916
      %v8380 = vadd.f32 %v8275, %v6917
      %v8381 = vadd.f32 %v8277, %v6918
      %v8382 = vadd.f32 %v8352, %v6919
      %v8383 = vadd.f32 %v8354, %v6920
      %s8384 = scalar_lea.vmem %s1, 192
      %v8385 = vld [vmem:[%s8384] sm:$0xff]
      %v8386 = vld [vmem:[%s8384 + $0x8] sm:$0xff]
      %v8387 = vld [vmem:[%s8384 + $0x10] sm:$0xff]
      %v8388 = vld [vmem:[%s8384 + $0x18] sm:$0xff]
      %v8389 = vld [vmem:[%s8384 + $0x20] sm:$0xff]
      %v8390 = vld [vmem:[%s8384 + $0x28] sm:$0xff]
      %8392 = vset.pattern.permute.xlu0 32
      %8393 = vperm.xlu0 %8392, %v8385
      %v8394 = vpop.permute.xlu0 %8393
      %8397 = vset.pattern.permute.xlu0 32
      %8398 = vperm.xlu0 %8397, %v8386
      %v8399 = vpop.permute.xlu0 %8398
      %8402 = vset.pattern.permute.xlu0 32
      %8403 = vperm.xlu0 %8402, %v8387
      %v8404 = vpop.permute.xlu0 %8403
      %8407 = vset.pattern.permute.xlu0 32
      %8408 = vperm.xlu0 %8407, %v8388
      %v8409 = vpop.permute.xlu0 %8408
      %v8411 = vsel %vm537, %v8385, 0
      %v8413 = vsel %vm537, %v8386, 0
      %v8415 = vsel %vm537, %v8387, 0
      %v8417 = vsel %vm537, %v8388, 0
      %8419 = vmatprep.subr.mxu0 %v8357
      %8420 = vmatpush1.msra.mxu0 %v8356
      %8421 = vmatprep.subr.mxu0 %v8371
      %8422 = vmatpush1.msra.mxu0 %v8370
      %8423 = vmatprep.subr.mxu0 %v8359
      %8424 = vmatpush1.msra.mxu0 %v8358
      %8425 = vmatprep.subr.mxu0 %v8373
      %8426 = vmatpush1.msra.mxu0 %v8372
      %8427 = vmatprep.subr.mxu0 0.0
      %8428 = vmatpush1.msra.mxu0 0.0
      %8429 = vmatprep.subr.mxu0 0.0
      %8430 = vmatpush1.msra.mxu0 0.0
      %8431 = vmatprep.subr.mxu0 0.0
      %8432 = vmatpush1.msra.mxu0 0.0
      %8433 = vmatprep.subr.mxu0 0.0
      %8434 = vmatpush1.msra.mxu0 0.0
      %8435 = vmatprep.subr.mxu0 0.0
      %8436 = vmatpush1.msra.mxu0 0.0
      %8437 = vmatprep.subr.mxu0 0.0
      %8438 = vmatpush1.msra.mxu0 0.0
      %8439 = vmatprep.subr.mxu0 0.0
      %8440 = vmatpush1.msra.mxu0 0.0
      %8441 = vmatprep.subr.mxu0 0.0
      %8442 = vmatpush1.msra.mxu0 0.0
      %8443 = vmatprep.subr.mxu0 0.0
      %8444 = vmatpush1.msra.mxu0 0.0
      %8445 = vmatprep.subr.mxu0 0.0
      %8446 = vmatpush1.msra.mxu0 0.0
      %8447 = vmatprep.subr.mxu0 0.0
      %8448 = vmatpush1.msra.mxu0 0.0
      %8449 = vmatprep.subr.mxu0 0.0
      %8450 = vmatpush1.msra.mxu0 0.0
      %8451 = vmatprep.subr.mxu0 0.0
      %8452 = vmatpush1.msra.mxu0 0.0
      %8453 = vmatprep.subr.mxu0 0.0
      %8454 = vmatpush1.msra.mxu0 0.0
      %8455 = vmatprep.subr.mxu0 0.0
      %8456 = vmatpush1.msra.mxu0 0.0
      %8457 = vmatprep.subr.mxu0 0.0
      %8458 = vmatpush1.msra.mxu0 0.0
      %8459 = vmatprep.subr.mxu0 0.0
      %8460 = vmatpush1.msra.mxu0 0.0
      %8461 = vmatprep.subr.mxu0 0.0
      %8462 = vmatpush1.msra.mxu0 0.0
      %8463 = vmatprep.subr.mxu0 0.0
      %8464 = vmatpush1.msra.mxu0 0.0
      %8465 = vmatprep.subr.mxu0 0.0
      %8466 = vmatpush1.msra.mxu0 0.0
      %8467 = vmatprep.subr.mxu0 0.0
      %8468 = vmatpush1.msra.mxu0 0.0
      %8469 = vmatprep.subr.mxu0 0.0
      %8470 = vmatpush1.msra.mxu0 0.0
      %8471 = vmatprep.subr.mxu0 0.0
      %8472 = vmatpush1.msra.mxu0 0.0
      %8473 = vmatprep.subr.mxu0 0.0
      %8474 = vmatpush1.msra.mxu0 0.0
      %8475 = vmatprep.subr.mxu0 0.0
      %8476 = vmatpush1.msra.mxu0 0.0
      %8477 = vmatprep.subr.mxu0 0.0
      %8478 = vmatpush1.msra.mxu0 0.0
      %8479 = vmatprep.subr.mxu0 0.0
      %8480 = vmatpush1.msra.mxu0 0.0
      %8481 = vmatprep.subr.mxu0 0.0
      %8482 = vmatpush1.msra.mxu0 0.0
      %8483 = vmatprep.mubr.f32.mxu0 0.0
      %8484 = vmatmul.mubr.f32.gmra.mrb[0].mxu0 %v8411
      %v8485 = vpop.f32.mrb[0].mxu0
      %v8486 = vadd.f32 %v8394, %v8485
      %v8487 = vpop.f32.mrb[0].mxu0
      %v8488 = vadd.f32 %v8394, %v8487
      %8489 = vmatprep.mubr.f32.mxu0 0.0
      %8490 = vmatmul.mubr.f32.gmra.mrb[0].mxu0 %v8413
      %v8491 = vpop.f32.mrb[0].mxu0
      %v8492 = vadd.f32 %v8399, %v8491
      %v8493 = vpop.f32.mrb[0].mxu0
      %v8494 = vadd.f32 %v8399, %v8493
      %8495 = vmatprep.mubr.f32.mxu0 0.0
      %8496 = vmatmul.mubr.f32.gmra.mrb[0].mxu0 %v8415
      %v8497 = vpop.f32.mrb[0].mxu0
      %v8498 = vadd.f32 %v8404, %v8497
      %v8499 = vpop.f32.mrb[0].mxu0
      %v8500 = vadd.f32 %v8404, %v8499
      %8501 = vmatprep.mubr.f32.mxu0 0.0
      %8502 = vmatmul.mubr.f32.gmra.mrb[0].mxu0 %v8417
      %v8503 = vpop.f32.mrb[0].mxu0
      %v8504 = vadd.f32 %v8409, %v8503
      %v8505 = vpop.f32.mrb[0].mxu0
      %v8506 = vadd.f32 %v8409, %v8505
      %8507 = vdwg.mxu0
      %8508 = vmatprep.subr.mxu0 %v8359
      %8509 = vmatpush1.msra.mxu0 %v8358
      %8510 = vmatprep.subr.mxu0 %v8373
      %8511 = vmatpush1.msra.mxu0 %v8372
      %8512 = vmatprep.subr.mxu0 %v8361
      %8513 = vmatpush1.msra.mxu0 %v8360
      %8514 = vmatprep.subr.mxu0 %v8375
      %8515 = vmatpush1.msra.mxu0 %v8374
      %8516 = vmatprep.subr.mxu0 0.0
      %8517 = vmatpush1.msra.mxu0 0.0
      %8518 = vmatprep.subr.mxu0 0.0
      %8519 = vmatpush1.msra.mxu0 0.0
      %8520 = vmatprep.subr.mxu0 0.0
      %8521 = vmatpush1.msra.mxu0 0.0
      %8522 = vmatprep.subr.mxu0 0.0
      %8523 = vmatpush1.msra.mxu0 0.0
      %8524 = vmatprep.subr.mxu0 0.0
      %8525 = vmatpush1.msra.mxu0 0.0
      %8526 = vmatprep.subr.mxu0 0.0
      %8527 = vmatpush1.msra.mxu0 0.0
      %8528 = vmatprep.subr.mxu0 0.0
      %8529 = vmatpush1.msra.mxu0 0.0
      %8530 = vmatprep.subr.mxu0 0.0
      %8531 = vmatpush1.msra.mxu0 0.0
      %8532 = vmatprep.subr.mxu0 0.0
      %8533 = vmatpush1.msra.mxu0 0.0
      %8534 = vmatprep.subr.mxu0 0.0
      %8535 = vmatpush1.msra.mxu0 0.0
      %8536 = vmatprep.subr.mxu0 0.0
      %8537 = vmatpush1.msra.mxu0 0.0
      %8538 = vmatprep.subr.mxu0 0.0
      %8539 = vmatpush1.msra.mxu0 0.0
      %8540 = vmatprep.subr.mxu0 0.0
      %8541 = vmatpush1.msra.mxu0 0.0
      %8542 = vmatprep.subr.mxu0 0.0
      %8543 = vmatpush1.msra.mxu0 0.0
      %8544 = vmatprep.subr.mxu0 0.0
      %8545 = vmatpush1.msra.mxu0 0.0
      %8546 = vmatprep.subr.mxu0 0.0
      %8547 = vmatpush1.msra.mxu0 0.0
      %8548 = vmatprep.subr.mxu0 0.0
      %8549 = vmatpush1.msra.mxu0 0.0
      %8550 = vmatprep.subr.mxu0 0.0
      %8551 = vmatpush1.msra.mxu0 0.0
      %8552 = vmatprep.subr.mxu0 0.0
      %8553 = vmatpush1.msra.mxu0 0.0
      %8554 = vmatprep.subr.mxu0 0.0
      %8555 = vmatpush1.msra.mxu0 0.0
      %8556 = vmatprep.subr.mxu0 0.0
      %8557 = vmatpush1.msra.mxu0 0.0
      %8558 = vmatprep.subr.mxu0 0.0
      %8559 = vmatpush1.msra.mxu0 0.0
      %8560 = vmatprep.subr.mxu0 0.0
      %8561 = vmatpush1.msra.mxu0 0.0
      %8562 = vmatprep.subr.mxu0 0.0
      %8563 = vmatpush1.msra.mxu0 0.0
      %8564 = vmatprep.subr.mxu0 0.0
      %8565 = vmatpush1.msra.mxu0 0.0
      %8566 = vmatprep.subr.mxu0 0.0
      %8567 = vmatpush1.msra.mxu0 0.0
      %8568 = vmatprep.subr.mxu0 0.0
      %8569 = vmatpush1.msra.mxu0 0.0
      %8570 = vmatprep.subr.mxu0 0.0
      %8571 = vmatpush1.msra.mxu0 0.0
      %8572 = vmatprep.mubr.f32.mxu0 0.0
      %8573 = vmatmul.mubr.f32.gmra.mrb[0].mxu0 %v8411
      %v8574 = vpop.f32.mrb[0].mxu0
      %v8575 = vadd.f32 %v8394, %v8574
      %v8576 = vpop.f32.mrb[0].mxu0
      %v8577 = vadd.f32 %v8394, %v8576
      %8578 = vmatprep.mubr.f32.mxu0 0.0
      %8579 = vmatmul.mubr.f32.gmra.mrb[0].mxu0 %v8413
      %v8580 = vpop.f32.mrb[0].mxu0
      %v8581 = vadd.f32 %v8399, %v8580
      %v8582 = vpop.f32.mrb[0].mxu0
      %v8583 = vadd.f32 %v8399, %v8582
      %8584 = vmatprep.mubr.f32.mxu0 0.0
      %8585 = vmatmul.mubr.f32.gmra.mrb[0].mxu0 %v8415
      %v8586 = vpop.f32.mrb[0].mxu0
      %v8587 = vadd.f32 %v8404, %v8586
      %v8588 = vpop.f32.mrb[0].mxu0
      %v8589 = vadd.f32 %v8404, %v8588
      %8590 = vmatprep.mubr.f32.mxu0 0.0
      %8591 = vmatmul.mubr.f32.gmra.mrb[0].mxu0 %v8417
      %v8592 = vpop.f32.mrb[0].mxu0
      %v8593 = vadd.f32 %v8409, %v8592
      %v8594 = vpop.f32.mrb[0].mxu0
      %v8595 = vadd.f32 %v8409, %v8594
      %8596 = vdwg.mxu0
      %8597 = vmatprep.subr.mxu0 %v8361
      %8598 = vmatpush1.msra.mxu0 %v8360
      %8599 = vmatprep.subr.mxu0 %v8375
      %8600 = vmatpush1.msra.mxu0 %v8374
      %8601 = vmatprep.subr.mxu0 %v8363
      %8602 = vmatpush1.msra.mxu0 %v8362
      %8603 = vmatprep.subr.mxu0 %v8377
      %8604 = vmatpush1.msra.mxu0 %v8376
      %8605 = vmatprep.subr.mxu0 0.0
      %8606 = vmatpush1.msra.mxu0 0.0
      %8607 = vmatprep.subr.mxu0 0.0
      %8608 = vmatpush1.msra.mxu0 0.0
      %8609 = vmatprep.subr.mxu0 0.0
      %8610 = vmatpush1.msra.mxu0 0.0
      %8611 = vmatprep.subr.mxu0 0.0
      %8612 = vmatpush1.msra.mxu0 0.0
      %8613 = vmatprep.subr.mxu0 0.0
      %8614 = vmatpush1.msra.mxu0 0.0
      %8615 = vmatprep.subr.mxu0 0.0
      %8616 = vmatpush1.msra.mxu0 0.0
      %8617 = vmatprep.subr.mxu0 0.0
      %8618 = vmatpush1.msra.mxu0 0.0
      %8619 = vmatprep.subr.mxu0 0.0
      %8620 = vmatpush1.msra.mxu0 0.0
      %8621 = vmatprep.subr.mxu0 0.0
      %8622 = vmatpush1.msra.mxu0 0.0
      %8623 = vmatprep.subr.mxu0 0.0
      %8624 = vmatpush1.msra.mxu0 0.0
      %8625 = vmatprep.subr.mxu0 0.0
      %8626 = vmatpush1.msra.mxu0 0.0
      %8627 = vmatprep.subr.mxu0 0.0
      %8628 = vmatpush1.msra.mxu0 0.0
      %8629 = vmatprep.subr.mxu0 0.0
      %8630 = vmatpush1.msra.mxu0 0.0
      %8631 = vmatprep.subr.mxu0 0.0
      %8632 = vmatpush1.msra.mxu0 0.0
      %8633 = vmatprep.subr.mxu0 0.0
      %8634 = vmatpush1.msra.mxu0 0.0
      %8635 = vmatprep.subr.mxu0 0.0
      %8636 = vmatpush1.msra.mxu0 0.0
      %8637 = vmatprep.subr.mxu0 0.0
      %8638 = vmatpush1.msra.mxu0 0.0
      %8639 = vmatprep.subr.mxu0 0.0
      %8640 = vmatpush1.msra.mxu0 0.0
      %8641 = vmatprep.subr.mxu0 0.0
      %8642 = vmatpush1.msra.mxu0 0.0
      %8643 = vmatprep.subr.mxu0 0.0
      %8644 = vmatpush1.msra.mxu0 0.0
      %8645 = vmatprep.subr.mxu0 0.0
      %8646 = vmatpush1.msra.mxu0 0.0
      %8647 = vmatprep.subr.mxu0 0.0
      %8648 = vmatpush1.msra.mxu0 0.0
      %8649 = vmatprep.subr.mxu0 0.0
      %8650 = vmatpush1.msra.mxu0 0.0
      %8651 = vmatprep.subr.mxu0 0.0
      %8652 = vmatpush1.msra.mxu0 0.0
      %8653 = vmatprep.subr.mxu0 0.0
      %8654 = vmatpush1.msra.mxu0 0.0
      %8655 = vmatprep.subr.mxu0 0.0
      %8656 = vmatpush1.msra.mxu0 0.0
      %8657 = vmatprep.subr.mxu0 0.0
      %8658 = vmatpush1.msra.mxu0 0.0
      %8659 = vmatprep.subr.mxu0 0.0
      %8660 = vmatpush1.msra.mxu0 0.0
      %8661 = vmatprep.mubr.f32.mxu0 0.0
      %8662 = vmatmul.mubr.f32.gmra.mrb[0].mxu0 %v8411
      %v8663 = vpop.f32.mrb[0].mxu0
      %v8664 = vadd.f32 %v8394, %v8663
      %v8665 = vpop.f32.mrb[0].mxu0
      %v8666 = vadd.f32 %v8394, %v8665
      %8667 = vmatprep.mubr.f32.mxu0 0.0
      %8668 = vmatmul.mubr.f32.gmra.mrb[0].mxu0 %v8413
      %v8669 = vpop.f32.mrb[0].mxu0
      %v8670 = vadd.f32 %v8399, %v8669
      %v8671 = vpop.f32.mrb[0].mxu0
      %v8672 = vadd.f32 %v8399, %v8671
      %8673 = vmatprep.mubr.f32.mxu0 0.0
      %8674 = vmatmul.mubr.f32.gmra.mrb[0].mxu0 %v8415
      %v8675 = vpop.f32.mrb[0].mxu0
      %v8676 = vadd.f32 %v8404, %v8675
      %v8677 = vpop.f32.mrb[0].mxu0
      %v8678 = vadd.f32 %v8404, %v8677
      %8679 = vmatprep.mubr.f32.mxu0 0.0
      %8680 = vmatmul.mubr.f32.gmra.mrb[0].mxu0 %v8417
      %v8681 = vpop.f32.mrb[0].mxu0
      %v8682 = vadd.f32 %v8409, %v8681
      %v8683 = vpop.f32.mrb[0].mxu0
      %v8684 = vadd.f32 %v8409, %v8683
      %8685 = vdwg.mxu0
      %8686 = vmatprep.subr.mxu0 %v8363
      %8687 = vmatpush1.msra.mxu0 %v8362
      %8688 = vmatprep.subr.mxu0 %v8377
      %8689 = vmatpush1.msra.mxu0 %v8376
      %8690 = vmatprep.subr.mxu0 %v8365
      %8691 = vmatpush1.msra.mxu0 %v8364
      %8692 = vmatprep.subr.mxu0 %v8379
      %8693 = vmatpush1.msra.mxu0 %v8378
      %8694 = vmatprep.subr.mxu0 0.0
      %8695 = vmatpush1.msra.mxu0 0.0
      %8696 = vmatprep.subr.mxu0 0.0
      %8697 = vmatpush1.msra.mxu0 0.0
      %8698 = vmatprep.subr.mxu0 0.0
      %8699 = vmatpush1.msra.mxu0 0.0
      %8700 = vmatprep.subr.mxu0 0.0
      %8701 = vmatpush1.msra.mxu0 0.0
      %8702 = vmatprep.subr.mxu0 0.0
      %8703 = vmatpush1.msra.mxu0 0.0
      %8704 = vmatprep.subr.mxu0 0.0
      %8705 = vmatpush1.msra.mxu0 0.0
      %8706 = vmatprep.subr.mxu0 0.0
      %8707 = vmatpush1.msra.mxu0 0.0
      %8708 = vmatprep.subr.mxu0 0.0
      %8709 = vmatpush1.msra.mxu0 0.0
      %8710 = vmatprep.subr.mxu0 0.0
      %8711 = vmatpush1.msra.mxu0 0.0
      %8712 = vmatprep.subr.mxu0 0.0
      %8713 = vmatpush1.msra.mxu0 0.0
      %8714 = vmatprep.subr.mxu0 0.0
      %8715 = vmatpush1.msra.mxu0 0.0
      %8716 = vmatprep.subr.mxu0 0.0
      %8717 = vmatpush1.msra.mxu0 0.0
      %8718 = vmatprep.subr.mxu0 0.0
      %8719 = vmatpush1.msra.mxu0 0.0
      %8720 = vmatprep.subr.mxu0 0.0
      %8721 = vmatpush1.msra.mxu0 0.0
      %8722 = vmatprep.subr.mxu0 0.0
      %8723 = vmatpush1.msra.mxu0 0.0
      %8724 = vmatprep.subr.mxu0 0.0
      %8725 = vmatpush1.msra.mxu0 0.0
      %8726 = vmatprep.subr.mxu0 0.0
      %8727 = vmatpush1.msra.mxu0 0.0
      %8728 = vmatprep.subr.mxu0 0.0
      %8729 = vmatpush1.msra.mxu0 0.0
      %8730 = vmatprep.subr.mxu0 0.0
      %8731 = vmatpush1.msra.mxu0 0.0
      %8732 = vmatprep.subr.mxu0 0.0
      %8733 = vmatpush1.msra.mxu0 0.0
      %8734 = vmatprep.subr.mxu0 0.0
      %8735 = vmatpush1.msra.mxu0 0.0
      %8736 = vmatprep.subr.mxu0 0.0
      %8737 = vmatpush1.msra.mxu0 0.0
      %8738 = vmatprep.subr.mxu0 0.0
      %8739 = vmatpush1.msra.mxu0 0.0
      %8740 = vmatprep.subr.mxu0 0.0
      %8741 = vmatpush1.msra.mxu0 0.0
      %8742 = vmatprep.subr.mxu0 0.0
      %8743 = vmatpush1.msra.mxu0 0.0
      %8744 = vmatprep.subr.mxu0 0.0
      %8745 = vmatpush1.msra.mxu0 0.0
      %8746 = vmatprep.subr.mxu0 0.0
      %8747 = vmatpush1.msra.mxu0 0.0
      %8748 = vmatprep.subr.mxu0 0.0
      %8749 = vmatpush1.msra.mxu0 0.0
      %8750 = vmatprep.mubr.f32.mxu0 0.0
      %8751 = vmatmul.mubr.f32.gmra.mrb[0].mxu0 %v8411
      %v8752 = vpop.f32.mrb[0].mxu0
      %v8753 = vadd.f32 %v8394, %v8752
      %v8754 = vpop.f32.mrb[0].mxu0
      %v8755 = vadd.f32 %v8394, %v8754
      %8756 = vmatprep.mubr.f32.mxu0 0.0
      %8757 = vmatmul.mubr.f32.gmra.mrb[0].mxu0 %v8413
      %v8758 = vpop.f32.mrb[0].mxu0
      %v8759 = vadd.f32 %v8399, %v8758
      %v8760 = vpop.f32.mrb[0].mxu0
      %v8761 = vadd.f32 %v8399, %v8760
      %8762 = vmatprep.mubr.f32.mxu0 0.0
      %8763 = vmatmul.mubr.f32.gmra.mrb[0].mxu0 %v8415
      %v8764 = vpop.f32.mrb[0].mxu0
      %v8765 = vadd.f32 %v8404, %v8764
      %v8766 = vpop.f32.mrb[0].mxu0
      %v8767 = vadd.f32 %v8404, %v8766
      %8768 = vmatprep.mubr.f32.mxu0 0.0
      %8769 = vmatmul.mubr.f32.gmra.mrb[0].mxu0 %v8417
      %v8770 = vpop.f32.mrb[0].mxu0
      %v8771 = vadd.f32 %v8409, %v8770
      %v8772 = vpop.f32.mrb[0].mxu0
      %v8773 = vadd.f32 %v8409, %v8772
      %8774 = vdwg.mxu0
      %8775 = vmatprep.subr.mxu0 %v8365
      %8776 = vmatpush1.msra.mxu0 %v8364
      %8777 = vmatprep.subr.mxu0 %v8379
      %8778 = vmatpush1.msra.mxu0 %v8378
      %8779 = vmatprep.subr.mxu0 %v8367
      %8780 = vmatpush1.msra.mxu0 %v8366
      %8781 = vmatprep.subr.mxu0 %v8381
      %8782 = vmatpush1.msra.mxu0 %v8380
      %8783 = vmatprep.subr.mxu0 0.0
      %8784 = vmatpush1.msra.mxu0 0.0
      %8785 = vmatprep.subr.mxu0 0.0
      %8786 = vmatpush1.msra.mxu0 0.0
      %8787 = vmatprep.subr.mxu0 0.0
      %8788 = vmatpush1.msra.mxu0 0.0
      %8789 = vmatprep.subr.mxu0 0.0
      %8790 = vmatpush1.msra.mxu0 0.0
      %8791 = vmatprep.subr.mxu0 0.0
      %8792 = vmatpush1.msra.mxu0 0.0
      %8793 = vmatprep.subr.mxu0 0.0
      %8794 = vmatpush1.msra.mxu0 0.0
      %8795 = vmatprep.subr.mxu0 0.0
      %8796 = vmatpush1.msra.mxu0 0.0
      %8797 = vmatprep.subr.mxu0 0.0
      %8798 = vmatpush1.msra.mxu0 0.0
      %8799 = vmatprep.subr.mxu0 0.0
      %8800 = vmatpush1.msra.mxu0 0.0
      %8801 = vmatprep.subr.mxu0 0.0
      %8802 = vmatpush1.msra.mxu0 0.0
      %8803 = vmatprep.subr.mxu0 0.0
      %8804 = vmatpush1.msra.mxu0 0.0
      %8805 = vmatprep.subr.mxu0 0.0
      %8806 = vmatpush1.msra.mxu0 0.0
      %8807 = vmatprep.subr.mxu0 0.0
      %8808 = vmatpush1.msra.mxu0 0.0
      %8809 = vmatprep.subr.mxu0 0.0
      %8810 = vmatpush1.msra.mxu0 0.0
      %8811 = vmatprep.subr.mxu0 0.0
      %8812 = vmatpush1.msra.mxu0 0.0
      %8813 = vmatprep.subr.mxu0 0.0
      %8814 = vmatpush1.msra.mxu0 0.0
      %8815 = vmatprep.subr.mxu0 0.0
      %8816 = vmatpush1.msra.mxu0 0.0
      %8817 = vmatprep.subr.mxu0 0.0
      %8818 = vmatpush1.msra.mxu0 0.0
      %8819 = vmatprep.subr.mxu0 0.0
      %8820 = vmatpush1.msra.mxu0 0.0
      %8821 = vmatprep.subr.mxu0 0.0
      %8822 = vmatpush1.msra.mxu0 0.0
      %8823 = vmatprep.subr.mxu0 0.0
      %8824 = vmatpush1.msra.mxu0 0.0
      %8825 = vmatprep.subr.mxu0 0.0
      %8826 = vmatpush1.msra.mxu0 0.0
      %8827 = vmatprep.subr.mxu0 0.0
      %8828 = vmatpush1.msra.mxu0 0.0
      %8829 = vmatprep.subr.mxu0 0.0
      %8830 = vmatpush1.msra.mxu0 0.0
      %8831 = vmatprep.subr.mxu0 0.0
      %8832 = vmatpush1.msra.mxu0 0.0
      %8833 = vmatprep.subr.mxu0 0.0
      %8834 = vmatpush1.msra.mxu0 0.0
      %8835 = vmatprep.subr.mxu0 0.0
      %8836 = vmatpush1.msra.mxu0 0.0
      %8837 = vmatprep.subr.mxu0 0.0
      %8838 = vmatpush1.msra.mxu0 0.0
      %8839 = vmatprep.mubr.f32.mxu0 0.0
      %8840 = vmatmul.mubr.f32.gmra.mrb[0].mxu0 %v8411
      %v8841 = vpop.f32.mrb[0].mxu0
      %v8842 = vadd.f32 %v8394, %v8841
      %v8843 = vpop.f32.mrb[0].mxu0
      %v8844 = vadd.f32 %v8394, %v8843
      %8845 = vmatprep.mubr.f32.mxu0 0.0
      %8846 = vmatmul.mubr.f32.gmra.mrb[0].mxu0 %v8413
      %v8847 = vpop.f32.mrb[0].mxu0
      %v8848 = vadd.f32 %v8399, %v8847
      %v8849 = vpop.f32.mrb[0].mxu0
      %v8850 = vadd.f32 %v8399, %v8849
      %8851 = vmatprep.mubr.f32.mxu0 0.0
      %8852 = vmatmul.mubr.f32.gmra.mrb[0].mxu0 %v8415
      %v8853 = vpop.f32.mrb[0].mxu0
      %v8854 = vadd.f32 %v8404, %v8853
      %v8855 = vpop.f32.mrb[0].mxu0
      %v8856 = vadd.f32 %v8404, %v8855
      %8857 = vmatprep.mubr.f32.mxu0 0.0
      %8858 = vmatmul.mubr.f32.gmra.mrb[0].mxu0 %v8417
      %v8859 = vpop.f32.mrb[0].mxu0
      %v8860 = vadd.f32 %v8409, %v8859
      %v8861 = vpop.f32.mrb[0].mxu0
      %v8862 = vadd.f32 %v8409, %v8861
      %8863 = vdwg.mxu0
      %8864 = vmatprep.subr.mxu0 %v8367
      %8865 = vmatpush1.msra.mxu0 %v8366
      %8866 = vmatprep.subr.mxu0 %v8381
      %8867 = vmatpush1.msra.mxu0 %v8380
      %8868 = vmatprep.subr.mxu0 %v8369
      %8869 = vmatpush1.msra.mxu0 %v8368
      %8870 = vmatprep.subr.mxu0 %v8383
      %8871 = vmatpush1.msra.mxu0 %v8382
      %8872 = vmatprep.subr.mxu0 0.0
      %8873 = vmatpush1.msra.mxu0 0.0
      %8874 = vmatprep.subr.mxu0 0.0
      %8875 = vmatpush1.msra.mxu0 0.0
      %8876 = vmatprep.subr.mxu0 0.0
      %8877 = vmatpush1.msra.mxu0 0.0
      %8878 = vmatprep.subr.mxu0 0.0
      %8879 = vmatpush1.msra.mxu0 0.0
      %8880 = vmatprep.subr.mxu0 0.0
      %8881 = vmatpush1.msra.mxu0 0.0
      %8882 = vmatprep.subr.mxu0 0.0
      %8883 = vmatpush1.msra.mxu0 0.0
      %8884 = vmatprep.subr.mxu0 0.0
      %8885 = vmatpush1.msra.mxu0 0.0
      %8886 = vmatprep.subr.mxu0 0.0
      %8887 = vmatpush1.msra.mxu0 0.0
      %8888 = vmatprep.subr.mxu0 0.0
      %8889 = vmatpush1.msra.mxu0 0.0
      %8890 = vmatprep.subr.mxu0 0.0
      %8891 = vmatpush1.msra.mxu0 0.0
      %8892 = vmatprep.subr.mxu0 0.0
      %8893 = vmatpush1.msra.mxu0 0.0
      %8894 = vmatprep.subr.mxu0 0.0
      %8895 = vmatpush1.msra.mxu0 0.0
      %8896 = vmatprep.subr.mxu0 0.0
      %8897 = vmatpush1.msra.mxu0 0.0
      %8898 = vmatprep.subr.mxu0 0.0
      %8899 = vmatpush1.msra.mxu0 0.0
      %8900 = vmatprep.subr.mxu0 0.0
      %8901 = vmatpush1.msra.mxu0 0.0
      %8902 = vmatprep.subr.mxu0 0.0
      %8903 = vmatpush1.msra.mxu0 0.0
      %8904 = vmatprep.subr.mxu0 0.0
      %8905 = vmatpush1.msra.mxu0 0.0
      %8906 = vmatprep.subr.mxu0 0.0
      %8907 = vmatpush1.msra.mxu0 0.0
      %8908 = vmatprep.subr.mxu0 0.0
      %8909 = vmatpush1.msra.mxu0 0.0
      %8910 = vmatprep.subr.mxu0 0.0
      %8911 = vmatpush1.msra.mxu0 0.0
      %8912 = vmatprep.subr.mxu0 0.0
      %8913 = vmatpush1.msra.mxu0 0.0
      %8914 = vmatprep.subr.mxu0 0.0
      %8915 = vmatpush1.msra.mxu0 0.0
      %8916 = vmatprep.subr.mxu0 0.0
      %8917 = vmatpush1.msra.mxu0 0.0
      %8918 = vmatprep.subr.mxu0 0.0
      %8919 = vmatpush1.msra.mxu0 0.0
      %8920 = vmatprep.subr.mxu0 0.0
      %8921 = vmatpush1.msra.mxu0 0.0
      %8922 = vmatprep.subr.mxu0 0.0
      %8923 = vmatpush1.msra.mxu0 0.0
      %8924 = vmatprep.subr.mxu0 0.0
      %8925 = vmatpush1.msra.mxu0 0.0
      %8926 = vmatprep.subr.mxu0 0.0
      %8927 = vmatpush1.msra.mxu0 0.0
      %8928 = vmatprep.mubr.f32.mxu0 0.0
      %8929 = vmatmul.mubr.f32.gmra.mrb[0].mxu0 %v8411
      %v8930 = vpop.f32.mrb[0].mxu0
      %v8931 = vadd.f32 %v8394, %v8930
      %v8932 = vpop.f32.mrb[0].mxu0
      %v8933 = vadd.f32 %v8394, %v8932
      %8934 = vmatprep.mubr.f32.mxu0 0.0
      %8935 = vmatmul.mubr.f32.gmra.mrb[0].mxu0 %v8413
      %v8936 = vpop.f32.mrb[0].mxu0
      %v8937 = vadd.f32 %v8399, %v8936
      %v8938 = vpop.f32.mrb[0].mxu0
      %v8939 = vadd.f32 %v8399, %v8938
      %8940 = vmatprep.mubr.f32.mxu0 0.0
      %8941 = vmatmul.mubr.f32.gmra.mrb[0].mxu0 %v8415
      %v8942 = vpop.f32.mrb[0].mxu0
      %v8943 = vadd.f32 %v8404, %v8942
      %v8944 = vpop.f32.mrb[0].mxu0
      %v8945 = vadd.f32 %v8404, %v8944
      %8946 = vmatprep.mubr.f32.mxu0 0.0
      %8947 = vmatmul.mubr.f32.gmra.mrb[0].mxu0 %v8417
      %v8948 = vpop.f32.mrb[0].mxu0
      %v8949 = vadd.f32 %v8409, %v8948
      %v8950 = vpop.f32.mrb[0].mxu0
      %v8951 = vadd.f32 %v8409, %v8950
      %8952 = vdwg.mxu0
      %v8953 = vtanh.pop %v8486
      %v8954 = vtanh.pop %v8488
      %v8955 = vtanh.pop %v8575
      %v8956 = vtanh.pop %v8577
      %v8957 = vtanh.pop %v8664
      %v8958 = vtanh.pop %v8666
      %v8959 = vtanh.pop %v8753
      %v8960 = vtanh.pop %v8755
      %v8961 = vtanh.pop %v8842
      %v8962 = vtanh.pop %v8844
      %v8963 = vtanh.pop %v8931
      %v8964 = vtanh.pop %v8933
      %v8965 = vtanh.pop %v8492
      %v8966 = vtanh.pop %v8494
      %v8967 = vtanh.pop %v8581
      %v8968 = vtanh.pop %v8583
      %v8969 = vtanh.pop %v8670
      %v8970 = vtanh.pop %v8672
      %v8971 = vtanh.pop %v8759
      %v8972 = vtanh.pop %v8761
      %v8973 = vtanh.pop %v8848
      %v8974 = vtanh.pop %v8850
      %v8975 = vtanh.pop %v8937
      %v8976 = vtanh.pop %v8939
      %v8977 = vxor.u32 %v8498, 2147483648
      %v8978 = vxor.u32 %v8500, 2147483648
      %v8979 = vxor.u32 %v8587, 2147483648
      %v8980 = vxor.u32 %v8589, 2147483648
      %v8981 = vxor.u32 %v8676, 2147483648
      %v8982 = vxor.u32 %v8678, 2147483648
      %v8983 = vxor.u32 %v8765, 2147483648
      %v8984 = vxor.u32 %v8767, 2147483648
      %v8985 = vxor.u32 %v8854, 2147483648
      %v8986 = vxor.u32 %v8856, 2147483648
      %v8987 = vxor.u32 %v8943, 2147483648
      %v8988 = vxor.u32 %v8945, 2147483648
      %v8989 = vxor.u32 %v8504, 2147483648
      %v8990 = vxor.u32 %v8506, 2147483648
      %v8991 = vxor.u32 %v8593, 2147483648
      %v8992 = vxor.u32 %v8595, 2147483648
      %v8993 = vxor.u32 %v8682, 2147483648
      %v8994 = vxor.u32 %v8684, 2147483648
      %v8995 = vxor.u32 %v8771, 2147483648
      %v8996 = vxor.u32 %v8773, 2147483648
      %v8997 = vxor.u32 %v8860, 2147483648
      %v8998 = vxor.u32 %v8862, 2147483648
      %v8999 = vxor.u32 %v8949, 2147483648
      %v9000 = vxor.u32 %v8951, 2147483648
      %v9001 = vmul.f32 %v8977, 1.442695
      %v9002 = vpow.pop %v9001
      %v9003 = vmul.f32 %v8978, 1.442695
      %v9004 = vpow.pop %v9003
      %v9005 = vmul.f32 %v8979, 1.442695
      %v9006 = vpow.pop %v9005
      %v9007 = vmul.f32 %v8980, 1.442695
      %v9008 = vpow.pop %v9007
      %v9009 = vmul.f32 %v8981, 1.442695
      %v9010 = vpow.pop %v9009
      %v9011 = vmul.f32 %v8982, 1.442695
      %v9012 = vpow.pop %v9011
      %v9013 = vmul.f32 %v8983, 1.442695
      %v9014 = vpow.pop %v9013
      %v9015 = vmul.f32 %v8984, 1.442695
      %v9016 = vpow.pop %v9015
      %v9017 = vmul.f32 %v8985, 1.442695
      %v9018 = vpow.pop %v9017
      %v9019 = vmul.f32 %v8986, 1.442695
      %v9020 = vpow.pop %v9019
      %v9021 = vmul.f32 %v8987, 1.442695
      %v9022 = vpow.pop %v9021
      %v9023 = vmul.f32 %v8988, 1.442695
      %v9024 = vpow.pop %v9023
      %v9025 = vmul.f32 %v8989, 1.442695
      %v9026 = vpow.pop %v9025
      %v9027 = vmul.f32 %v8990, 1.442695
      %v9028 = vpow.pop %v9027
      %v9029 = vmul.f32 %v8991, 1.442695
      %v9030 = vpow.pop %v9029
      %v9031 = vmul.f32 %v8992, 1.442695
      %v9032 = vpow.pop %v9031
      %v9033 = vmul.f32 %v8993, 1.442695
      %v9034 = vpow.pop %v9033
      %v9035 = vmul.f32 %v8994, 1.442695
      %v9036 = vpow.pop %v9035
      %v9037 = vmul.f32 %v8995, 1.442695
      %v9038 = vpow.pop %v9037
      %v9039 = vmul.f32 %v8996, 1.442695
      %v9040 = vpow.pop %v9039
      %v9041 = vmul.f32 %v8997, 1.442695
      %v9042 = vpow.pop %v9041
      %v9043 = vmul.f32 %v8998, 1.442695
      %v9044 = vpow.pop %v9043
      %v9045 = vmul.f32 %v8999, 1.442695
      %v9046 = vpow.pop %v9045
      %v9047 = vmul.f32 %v9000, 1.442695
      %v9048 = vpow.pop %v9047
      %v9049 = vadd.f32 %v9002, 1.0
      %v9050 = vadd.f32 %v9004, 1.0
      %v9051 = vadd.f32 %v9006, 1.0
      %v9052 = vadd.f32 %v9008, 1.0
      %v9053 = vadd.f32 %v9010, 1.0
      %v9054 = vadd.f32 %v9012, 1.0
      %v9055 = vadd.f32 %v9014, 1.0
      %v9056 = vadd.f32 %v9016, 1.0
      %v9057 = vadd.f32 %v9018, 1.0
      %v9058 = vadd.f32 %v9020, 1.0
      %v9059 = vadd.f32 %v9022, 1.0
      %v9060 = vadd.f32 %v9024, 1.0
      %v9061 = vadd.f32 %v9026, 1.0
      %v9062 = vadd.f32 %v9028, 1.0
      %v9063 = vadd.f32 %v9030, 1.0
      %v9064 = vadd.f32 %v9032, 1.0
      %v9065 = vadd.f32 %v9034, 1.0
      %v9066 = vadd.f32 %v9036, 1.0
      %v9067 = vadd.f32 %v9038, 1.0
      %v9068 = vadd.f32 %v9040, 1.0
      %v9069 = vadd.f32 %v9042, 1.0
      %v9070 = vadd.f32 %v9044, 1.0
      %v9071 = vadd.f32 %v9046, 1.0
      %v9072 = vadd.f32 %v9048, 1.0
      %v9073 = vrcp.pop %v9049
      %v9074 = vmul.f32 1.0, %v9073
      %v9075 = vrcp.pop %v9050
      %v9076 = vmul.f32 1.0, %v9075
      %v9077 = vrcp.pop %v9051
      %v9078 = vmul.f32 1.0, %v9077
      %v9079 = vrcp.pop %v9052
      %v9080 = vmul.f32 1.0, %v9079
      %v9081 = vrcp.pop %v9053
      %v9082 = vmul.f32 1.0, %v9081
      %v9083 = vrcp.pop %v9054
      %v9084 = vmul.f32 1.0, %v9083
      %v9085 = vrcp.pop %v9055
      %v9086 = vmul.f32 1.0, %v9085
      %v9087 = vrcp.pop %v9056
      %v9088 = vmul.f32 1.0, %v9087
      %v9089 = vrcp.pop %v9057
      %v9090 = vmul.f32 1.0, %v9089
      %v9091 = vrcp.pop %v9058
      %v9092 = vmul.f32 1.0, %v9091
      %v9093 = vrcp.pop %v9059
      %v9094 = vmul.f32 1.0, %v9093
      %v9095 = vrcp.pop %v9060
      %v9096 = vmul.f32 1.0, %v9095
      %v9097 = vrcp.pop %v9061
      %v9098 = vmul.f32 1.0, %v9097
      %v9099 = vrcp.pop %v9062
      %v9100 = vmul.f32 1.0, %v9099
      %v9101 = vrcp.pop %v9063
      %v9102 = vmul.f32 1.0, %v9101
      %v9103 = vrcp.pop %v9064
      %v9104 = vmul.f32 1.0, %v9103
      %v9105 = vrcp.pop %v9065
      %v9106 = vmul.f32 1.0, %v9105
      %v9107 = vrcp.pop %v9066
      %v9108 = vmul.f32 1.0, %v9107
      %v9109 = vrcp.pop %v9067
      %v9110 = vmul.f32 1.0, %v9109
      %v9111 = vrcp.pop %v9068
      %v9112 = vmul.f32 1.0, %v9111
      %v9113 = vrcp.pop %v9069
      %v9114 = vmul.f32 1.0, %v9113
      %v9115 = vrcp.pop %v9070
      %v9116 = vmul.f32 1.0, %v9115
      %v9117 = vrcp.pop %v9071
      %v9118 = vmul.f32 1.0, %v9117
      %v9119 = vrcp.pop %v9072
      %v9120 = vmul.f32 1.0, %v9119
      %v9121 = vmul.f32 %v8953, %v9074
      %v9122 = vmul.f32 %v8954, %v9076
      %v9123 = vmul.f32 %v8955, %v9078
      %v9124 = vmul.f32 %v8956, %v9080
      %v9125 = vmul.f32 %v8957, %v9082
      %v9126 = vmul.f32 %v8958, %v9084
      %v9127 = vmul.f32 %v8959, %v9086
      %v9128 = vmul.f32 %v8960, %v9088
      %v9129 = vmul.f32 %v8961, %v9090
      %v9130 = vmul.f32 %v8962, %v9092
      %v9131 = vmul.f32 %v8963, %v9094
      %v9132 = vmul.f32 %v8964, %v9096
      %v9133 = vmul.f32 %v8965, %v9098
      %v9134 = vmul.f32 %v8966, %v9100
      %v9135 = vmul.f32 %v8967, %v9102
      %v9136 = vmul.f32 %v8968, %v9104
      %v9137 = vmul.f32 %v8969, %v9106
      %v9138 = vmul.f32 %v8970, %v9108
      %v9139 = vmul.f32 %v8971, %v9110
      %v9140 = vmul.f32 %v8972, %v9112
      %v9141 = vmul.f32 %v8973, %v9114
      %v9142 = vmul.f32 %v8974, %v9116
      %v9143 = vmul.f32 %v8975, %v9118
      %v9144 = vmul.f32 %v8976, %v9120
      %9146 = vset.pattern.permute.xlu0 32
      %9147 = vperm.xlu0 %9146, %v8389
      %v9148 = vpop.permute.xlu0 %9147
      %9151 = vset.pattern.permute.xlu0 32
      %9152 = vperm.xlu0 %9151, %v8390
      %v9153 = vpop.permute.xlu0 %9152
      %v9155 = vsel %vm2008, %v8389, 0
      %v9157 = vsel %vm2008, %v8390, 0
      %9159 = vmatprep.subr.mxu0 %v9122
      %9160 = vmatpush1.msra.mxu0 %v9121
      %9161 = vmatprep.subr.mxu0 %v9134
      %9162 = vmatpush1.msra.mxu0 %v9133
      %9163 = vmatprep.subr.mxu0 0.0
      %9164 = vmatpush1.msra.mxu0 0.0
      %9165 = vmatprep.subr.mxu0 0.0
      %9166 = vmatpush1.msra.mxu0 0.0
      %9167 = vmatprep.subr.mxu0 0.0
      %9168 = vmatpush1.msra.mxu0 0.0
      %9169 = vmatprep.subr.mxu0 0.0
      %9170 = vmatpush1.msra.mxu0 0.0
      %9171 = vmatprep.subr.mxu0 0.0
      %9172 = vmatpush1.msra.mxu0 0.0
      %9173 = vmatprep.subr.mxu0 0.0
      %9174 = vmatpush1.msra.mxu0 0.0
      %9175 = vmatprep.subr.mxu0 0.0
      %9176 = vmatpush1.msra.mxu0 0.0
      %9177 = vmatprep.subr.mxu0 0.0
      %9178 = vmatpush1.msra.mxu0 0.0
      %9179 = vmatprep.subr.mxu0 0.0
      %9180 = vmatpush1.msra.mxu0 0.0
      %9181 = vmatprep.subr.mxu0 0.0
      %9182 = vmatpush1.msra.mxu0 0.0
      %9183 = vmatprep.subr.mxu0 0.0
      %9184 = vmatpush1.msra.mxu0 0.0
      %9185 = vmatprep.subr.mxu0 0.0
      %9186 = vmatpush1.msra.mxu0 0.0
      %9187 = vmatprep.subr.mxu0 0.0
      %9188 = vmatpush1.msra.mxu0 0.0
      %9189 = vmatprep.subr.mxu0 0.0
      %9190 = vmatpush1.msra.mxu0 0.0
      %9191 = vmatprep.subr.mxu0 0.0
      %9192 = vmatpush1.msra.mxu0 0.0
      %9193 = vmatprep.subr.mxu0 0.0
      %9194 = vmatpush1.msra.mxu0 0.0
      %9195 = vmatprep.subr.mxu0 0.0
      %9196 = vmatpush1.msra.mxu0 0.0
      %9197 = vmatprep.subr.mxu0 0.0
      %9198 = vmatpush1.msra.mxu0 0.0
      %9199 = vmatprep.subr.mxu0 0.0
      %9200 = vmatpush1.msra.mxu0 0.0
      %9201 = vmatprep.subr.mxu0 0.0
      %9202 = vmatpush1.msra.mxu0 0.0
      %9203 = vmatprep.subr.mxu0 0.0
      %9204 = vmatpush1.msra.mxu0 0.0
      %9205 = vmatprep.subr.mxu0 0.0
      %9206 = vmatpush1.msra.mxu0 0.0
      %9207 = vmatprep.subr.mxu0 0.0
      %9208 = vmatpush1.msra.mxu0 0.0
      %9209 = vmatprep.subr.mxu0 0.0
      %9210 = vmatpush1.msra.mxu0 0.0
      %9211 = vmatprep.subr.mxu0 0.0
      %9212 = vmatpush1.msra.mxu0 0.0
      %9213 = vmatprep.subr.mxu0 0.0
      %9214 = vmatpush1.msra.mxu0 0.0
      %9215 = vmatprep.subr.mxu0 0.0
      %9216 = vmatpush1.msra.mxu0 0.0
      %9217 = vmatprep.subr.mxu0 0.0
      %9218 = vmatpush1.msra.mxu0 0.0
      %9219 = vmatprep.subr.mxu0 0.0
      %9220 = vmatpush1.msra.mxu0 0.0
      %9221 = vmatprep.subr.mxu0 0.0
      %9222 = vmatpush1.msra.mxu0 0.0
      %9223 = vmatprep.mubr.f32.mxu0 0.0
      %9224 = vmatmul.mubr.f32.gmra.mrb[0].mxu0 %v9155
      %v9225 = vpop.f32.mrb[0].mxu0
      %v9226 = vadd.f32 %v9148, %v9225
      %v9227 = vpop.f32.mrb[0].mxu0
      %v9228 = vadd.f32 %v9148, %v9227
      %9229 = vmatprep.mubr.f32.mxu0 0.0
      %9230 = vmatmul.mubr.f32.gmra.mrb[0].mxu0 %v9157
      %v9231 = vpop.f32.mrb[0].mxu0
      %v9232 = vadd.f32 %v9153, %v9231
      %v9233 = vpop.f32.mrb[0].mxu0
      %v9234 = vadd.f32 %v9153, %v9233
      %9235 = vdwg.mxu0
      %9236 = vmatprep.subr.mxu0 %v9124
      %9237 = vmatpush1.msra.mxu0 %v9123
      %9238 = vmatprep.subr.mxu0 %v9136
      %9239 = vmatpush1.msra.mxu0 %v9135
      %9240 = vmatprep.subr.mxu0 0.0
      %9241 = vmatpush1.msra.mxu0 0.0
      %9242 = vmatprep.subr.mxu0 0.0
      %9243 = vmatpush1.msra.mxu0 0.0
      %9244 = vmatprep.subr.mxu0 0.0
      %9245 = vmatpush1.msra.mxu0 0.0
      %9246 = vmatprep.subr.mxu0 0.0
      %9247 = vmatpush1.msra.mxu0 0.0
      %9248 = vmatprep.subr.mxu0 0.0
      %9249 = vmatpush1.msra.mxu0 0.0
      %9250 = vmatprep.subr.mxu0 0.0
      %9251 = vmatpush1.msra.mxu0 0.0
      %9252 = vmatprep.subr.mxu0 0.0
      %9253 = vmatpush1.msra.mxu0 0.0
      %9254 = vmatprep.subr.mxu0 0.0
      %9255 = vmatpush1.msra.mxu0 0.0
      %9256 = vmatprep.subr.mxu0 0.0
      %9257 = vmatpush1.msra.mxu0 0.0
      %9258 = vmatprep.subr.mxu0 0.0
      %9259 = vmatpush1.msra.mxu0 0.0
      %9260 = vmatprep.subr.mxu0 0.0
      %9261 = vmatpush1.msra.mxu0 0.0
      %9262 = vmatprep.subr.mxu0 0.0
      %9263 = vmatpush1.msra.mxu0 0.0
      %9264 = vmatprep.subr.mxu0 0.0
      %9265 = vmatpush1.msra.mxu0 0.0
      %9266 = vmatprep.subr.mxu0 0.0
      %9267 = vmatpush1.msra.mxu0 0.0
      %9268 = vmatprep.subr.mxu0 0.0
      %9269 = vmatpush1.msra.mxu0 0.0
      %9270 = vmatprep.subr.mxu0 0.0
      %9271 = vmatpush1.msra.mxu0 0.0
      %9272 = vmatprep.subr.mxu0 0.0
      %9273 = vmatpush1.msra.mxu0 0.0
      %9274 = vmatprep.subr.mxu0 0.0
      %9275 = vmatpush1.msra.mxu0 0.0
      %9276 = vmatprep.subr.mxu0 0.0
      %9277 = vmatpush1.msra.mxu0 0.0
      %9278 = vmatprep.subr.mxu0 0.0
      %9279 = vmatpush1.msra.mxu0 0.0
      %9280 = vmatprep.subr.mxu0 0.0
      %9281 = vmatpush1.msra.mxu0 0.0
      %9282 = vmatprep.subr.mxu0 0.0
      %9283 = vmatpush1.msra.mxu0 0.0
      %9284 = vmatprep.subr.mxu0 0.0
      %9285 = vmatpush1.msra.mxu0 0.0
      %9286 = vmatprep.subr.mxu0 0.0
      %9287 = vmatpush1.msra.mxu0 0.0
      %9288 = vmatprep.subr.mxu0 0.0
      %9289 = vmatpush1.msra.mxu0 0.0
      %9290 = vmatprep.subr.mxu0 0.0
      %9291 = vmatpush1.msra.mxu0 0.0
      %9292 = vmatprep.subr.mxu0 0.0
      %9293 = vmatpush1.msra.mxu0 0.0
      %9294 = vmatprep.subr.mxu0 0.0
      %9295 = vmatpush1.msra.mxu0 0.0
      %9296 = vmatprep.subr.mxu0 0.0
      %9297 = vmatpush1.msra.mxu0 0.0
      %9298 = vmatprep.subr.mxu0 0.0
      %9299 = vmatpush1.msra.mxu0 0.0
      %9300 = vmatprep.mubr.f32.mxu0 0.0
      %9301 = vmatmul.mubr.f32.gmra.mrb[0].mxu0 %v9155
      %v9302 = vpop.f32.mrb[0].mxu0
      %v9303 = vadd.f32 %v9148, %v9302
      %v9304 = vpop.f32.mrb[0].mxu0
      %v9305 = vadd.f32 %v9148, %v9304
      %9306 = vmatprep.mubr.f32.mxu0 0.0
      %9307 = vmatmul.mubr.f32.gmra.mrb[0].mxu0 %v9157
      %v9308 = vpop.f32.mrb[0].mxu0
      %v9309 = vadd.f32 %v9153, %v9308
      %v9310 = vpop.f32.mrb[0].mxu0
      %v9311 = vadd.f32 %v9153, %v9310
      %9312 = vdwg.mxu0
      %9313 = vmatprep.subr.mxu0 %v9126
      %9314 = vmatpush1.msra.mxu0 %v9125
      %9315 = vmatprep.subr.mxu0 %v9138
      %9316 = vmatpush1.msra.mxu0 %v9137
      %9317 = vmatprep.subr.mxu0 0.0
      %9318 = vmatpush1.msra.mxu0 0.0
      %9319 = vmatprep.subr.mxu0 0.0
      %9320 = vmatpush1.msra.mxu0 0.0
      %9321 = vmatprep.subr.mxu0 0.0
      %9322 = vmatpush1.msra.mxu0 0.0
      %9323 = vmatprep.subr.mxu0 0.0
      %9324 = vmatpush1.msra.mxu0 0.0
      %9325 = vmatprep.subr.mxu0 0.0
      %9326 = vmatpush1.msra.mxu0 0.0
      %9327 = vmatprep.subr.mxu0 0.0
      %9328 = vmatpush1.msra.mxu0 0.0
      %9329 = vmatprep.subr.mxu0 0.0
      %9330 = vmatpush1.msra.mxu0 0.0
      %9331 = vmatprep.subr.mxu0 0.0
      %9332 = vmatpush1.msra.mxu0 0.0
      %9333 = vmatprep.subr.mxu0 0.0
      %9334 = vmatpush1.msra.mxu0 0.0
      %9335 = vmatprep.subr.mxu0 0.0
      %9336 = vmatpush1.msra.mxu0 0.0
      %9337 = vmatprep.subr.mxu0 0.0
      %9338 = vmatpush1.msra.mxu0 0.0
      %9339 = vmatprep.subr.mxu0 0.0
      %9340 = vmatpush1.msra.mxu0 0.0
      %9341 = vmatprep.subr.mxu0 0.0
      %9342 = vmatpush1.msra.mxu0 0.0
      %9343 = vmatprep.subr.mxu0 0.0
      %9344 = vmatpush1.msra.mxu0 0.0
      %9345 = vmatprep.subr.mxu0 0.0
      %9346 = vmatpush1.msra.mxu0 0.0
      %9347 = vmatprep.subr.mxu0 0.0
      %9348 = vmatpush1.msra.mxu0 0.0
      %9349 = vmatprep.subr.mxu0 0.0
      %9350 = vmatpush1.msra.mxu0 0.0
      %9351 = vmatprep.subr.mxu0 0.0
      %9352 = vmatpush1.msra.mxu0 0.0
      %9353 = vmatprep.subr.mxu0 0.0
      %9354 = vmatpush1.msra.mxu0 0.0
      %9355 = vmatprep.subr.mxu0 0.0
      %9356 = vmatpush1.msra.mxu0 0.0
      %9357 = vmatprep.subr.mxu0 0.0
      %9358 = vmatpush1.msra.mxu0 0.0
      %9359 = vmatprep.subr.mxu0 0.0
      %9360 = vmatpush1.msra.mxu0 0.0
      %9361 = vmatprep.subr.mxu0 0.0
      %9362 = vmatpush1.msra.mxu0 0.0
      %9363 = vmatprep.subr.mxu0 0.0
      %9364 = vmatpush1.msra.mxu0 0.0
      %9365 = vmatprep.subr.mxu0 0.0
      %9366 = vmatpush1.msra.mxu0 0.0
      %9367 = vmatprep.subr.mxu0 0.0
      %9368 = vmatpush1.msra.mxu0 0.0
      %9369 = vmatprep.subr.mxu0 0.0
      %9370 = vmatpush1.msra.mxu0 0.0
      %9371 = vmatprep.subr.mxu0 0.0
      %9372 = vmatpush1.msra.mxu0 0.0
      %9373 = vmatprep.subr.mxu0 0.0
      %9374 = vmatpush1.msra.mxu0 0.0
      %9375 = vmatprep.subr.mxu0 0.0
      %9376 = vmatpush1.msra.mxu0 0.0
      %9377 = vmatprep.mubr.f32.mxu0 0.0
      %9378 = vmatmul.mubr.f32.gmra.mrb[0].mxu0 %v9155
      %v9379 = vpop.f32.mrb[0].mxu0
      %v9380 = vadd.f32 %v9148, %v9379
      %v9381 = vpop.f32.mrb[0].mxu0
      %v9382 = vadd.f32 %v9148, %v9381
      %9383 = vmatprep.mubr.f32.mxu0 0.0
      %9384 = vmatmul.mubr.f32.gmra.mrb[0].mxu0 %v9157
      %v9385 = vpop.f32.mrb[0].mxu0
      %v9386 = vadd.f32 %v9153, %v9385
      %v9387 = vpop.f32.mrb[0].mxu0
      %v9388 = vadd.f32 %v9153, %v9387
      %9389 = vdwg.mxu0
      %9390 = vmatprep.subr.mxu0 %v9128
      %9391 = vmatpush1.msra.mxu0 %v9127
      %9392 = vmatprep.subr.mxu0 %v9140
      %9393 = vmatpush1.msra.mxu0 %v9139
      %9394 = vmatprep.subr.mxu0 0.0
      %9395 = vmatpush1.msra.mxu0 0.0
      %9396 = vmatprep.subr.mxu0 0.0
      %9397 = vmatpush1.msra.mxu0 0.0
      %9398 = vmatprep.subr.mxu0 0.0
      %9399 = vmatpush1.msra.mxu0 0.0
      %9400 = vmatprep.subr.mxu0 0.0
      %9401 = vmatpush1.msra.mxu0 0.0
      %9402 = vmatprep.subr.mxu0 0.0
      %9403 = vmatpush1.msra.mxu0 0.0
      %9404 = vmatprep.subr.mxu0 0.0
      %9405 = vmatpush1.msra.mxu0 0.0
      %9406 = vmatprep.subr.mxu0 0.0
      %9407 = vmatpush1.msra.mxu0 0.0
      %9408 = vmatprep.subr.mxu0 0.0
      %9409 = vmatpush1.msra.mxu0 0.0
      %9410 = vmatprep.subr.mxu0 0.0
      %9411 = vmatpush1.msra.mxu0 0.0
      %9412 = vmatprep.subr.mxu0 0.0
      %9413 = vmatpush1.msra.mxu0 0.0
      %9414 = vmatprep.subr.mxu0 0.0
      %9415 = vmatpush1.msra.mxu0 0.0
      %9416 = vmatprep.subr.mxu0 0.0
      %9417 = vmatpush1.msra.mxu0 0.0
      %9418 = vmatprep.subr.mxu0 0.0
      %9419 = vmatpush1.msra.mxu0 0.0
      %9420 = vmatprep.subr.mxu0 0.0
      %9421 = vmatpush1.msra.mxu0 0.0
      %9422 = vmatprep.subr.mxu0 0.0
      %9423 = vmatpush1.msra.mxu0 0.0
      %9424 = vmatprep.subr.mxu0 0.0
      %9425 = vmatpush1.msra.mxu0 0.0
      %9426 = vmatprep.subr.mxu0 0.0
      %9427 = vmatpush1.msra.mxu0 0.0
      %9428 = vmatprep.subr.mxu0 0.0
      %9429 = vmatpush1.msra.mxu0 0.0
      %9430 = vmatprep.subr.mxu0 0.0
      %9431 = vmatpush1.msra.mxu0 0.0
      %9432 = vmatprep.subr.mxu0 0.0
      %9433 = vmatpush1.msra.mxu0 0.0
      %9434 = vmatprep.subr.mxu0 0.0
      %9435 = vmatpush1.msra.mxu0 0.0
      %9436 = vmatprep.subr.mxu0 0.0
      %9437 = vmatpush1.msra.mxu0 0.0
      %9438 = vmatprep.subr.mxu0 0.0
      %9439 = vmatpush1.msra.mxu0 0.0
      %9440 = vmatprep.subr.mxu0 0.0
      %9441 = vmatpush1.msra.mxu0 0.0
      %9442 = vmatprep.subr.mxu0 0.0
      %9443 = vmatpush1.msra.mxu0 0.0
      %9444 = vmatprep.subr.mxu0 0.0
      %9445 = vmatpush1.msra.mxu0 0.0
      %9446 = vmatprep.subr.mxu0 0.0
      %9447 = vmatpush1.msra.mxu0 0.0
      %9448 = vmatprep.subr.mxu0 0.0
      %9449 = vmatpush1.msra.mxu0 0.0
      %9450 = vmatprep.subr.mxu0 0.0
      %9451 = vmatpush1.msra.mxu0 0.0
      %9452 = vmatprep.subr.mxu0 0.0
      %9453 = vmatpush1.msra.mxu0 0.0
      %9454 = vmatprep.mubr.f32.mxu0 0.0
      %9455 = vmatmul.mubr.f32.gmra.mrb[0].mxu0 %v9155
      %v9456 = vpop.f32.mrb[0].mxu0
      %v9457 = vadd.f32 %v9148, %v9456
      %v9458 = vpop.f32.mrb[0].mxu0
      %v9459 = vadd.f32 %v9148, %v9458
      %9460 = vmatprep.mubr.f32.mxu0 0.0
      %9461 = vmatmul.mubr.f32.gmra.mrb[0].mxu0 %v9157
      %v9462 = vpop.f32.mrb[0].mxu0
      %v9463 = vadd.f32 %v9153, %v9462
      %v9464 = vpop.f32.mrb[0].mxu0
      %v9465 = vadd.f32 %v9153, %v9464
      %9466 = vdwg.mxu0
      %9467 = vmatprep.subr.mxu0 %v9130
      %9468 = vmatpush1.msra.mxu0 %v9129
      %9469 = vmatprep.subr.mxu0 %v9142
      %9470 = vmatpush1.msra.mxu0 %v9141
      %9471 = vmatprep.subr.mxu0 0.0
      %9472 = vmatpush1.msra.mxu0 0.0
      %9473 = vmatprep.subr.mxu0 0.0
      %9474 = vmatpush1.msra.mxu0 0.0
      %9475 = vmatprep.subr.mxu0 0.0
      %9476 = vmatpush1.msra.mxu0 0.0
      %9477 = vmatprep.subr.mxu0 0.0
      %9478 = vmatpush1.msra.mxu0 0.0
      %9479 = vmatprep.subr.mxu0 0.0
      %9480 = vmatpush1.msra.mxu0 0.0
      %9481 = vmatprep.subr.mxu0 0.0
      %9482 = vmatpush1.msra.mxu0 0.0
      %9483 = vmatprep.subr.mxu0 0.0
      %9484 = vmatpush1.msra.mxu0 0.0
      %9485 = vmatprep.subr.mxu0 0.0
      %9486 = vmatpush1.msra.mxu0 0.0
      %9487 = vmatprep.subr.mxu0 0.0
      %9488 = vmatpush1.msra.mxu0 0.0
      %9489 = vmatprep.subr.mxu0 0.0
      %9490 = vmatpush1.msra.mxu0 0.0
      %9491 = vmatprep.subr.mxu0 0.0
      %9492 = vmatpush1.msra.mxu0 0.0
      %9493 = vmatprep.subr.mxu0 0.0
      %9494 = vmatpush1.msra.mxu0 0.0
      %9495 = vmatprep.subr.mxu0 0.0
      %9496 = vmatpush1.msra.mxu0 0.0
      %9497 = vmatprep.subr.mxu0 0.0
      %9498 = vmatpush1.msra.mxu0 0.0
      %9499 = vmatprep.subr.mxu0 0.0
      %9500 = vmatpush1.msra.mxu0 0.0
      %9501 = vmatprep.subr.mxu0 0.0
      %9502 = vmatpush1.msra.mxu0 0.0
      %9503 = vmatprep.subr.mxu0 0.0
      %9504 = vmatpush1.msra.mxu0 0.0
      %9505 = vmatprep.subr.mxu0 0.0
      %9506 = vmatpush1.msra.mxu0 0.0
      %9507 = vmatprep.subr.mxu0 0.0
      %9508 = vmatpush1.msra.mxu0 0.0
      %9509 = vmatprep.subr.mxu0 0.0
      %9510 = vmatpush1.msra.mxu0 0.0
      %9511 = vmatprep.subr.mxu0 0.0
      %9512 = vmatpush1.msra.mxu0 0.0
      %9513 = vmatprep.subr.mxu0 0.0
      %9514 = vmatpush1.msra.mxu0 0.0
      %9515 = vmatprep.subr.mxu0 0.0
      %9516 = vmatpush1.msra.mxu0 0.0
      %9517 = vmatprep.subr.mxu0 0.0
      %9518 = vmatpush1.msra.mxu0 0.0
      %9519 = vmatprep.subr.mxu0 0.0
      %9520 = vmatpush1.msra.mxu0 0.0
      %9521 = vmatprep.subr.mxu0 0.0
      %9522 = vmatpush1.msra.mxu0 0.0
      %9523 = vmatprep.subr.mxu0 0.0
      %9524 = vmatpush1.msra.mxu0 0.0
      %9525 = vmatprep.subr.mxu0 0.0
      %9526 = vmatpush1.msra.mxu0 0.0
      %9527 = vmatprep.subr.mxu0 0.0
      %9528 = vmatpush1.msra.mxu0 0.0
      %9529 = vmatprep.subr.mxu0 0.0
      %9530 = vmatpush1.msra.mxu0 0.0
      %9531 = vmatprep.mubr.f32.mxu0 0.0
      %9532 = vmatmul.mubr.f32.gmra.mrb[0].mxu0 %v9155
      %v9533 = vpop.f32.mrb[0].mxu0
      %v9534 = vadd.f32 %v9148, %v9533
      %v9535 = vpop.f32.mrb[0].mxu0
      %v9536 = vadd.f32 %v9148, %v9535
      %9537 = vmatprep.mubr.f32.mxu0 0.0
      %9538 = vmatmul.mubr.f32.gmra.mrb[0].mxu0 %v9157
      %v9539 = vpop.f32.mrb[0].mxu0
      %v9540 = vadd.f32 %v9153, %v9539
      %v9541 = vpop.f32.mrb[0].mxu0
      %v9542 = vadd.f32 %v9153, %v9541
      %9543 = vdwg.mxu0
      %9544 = vmatprep.subr.mxu0 %v9132
      %9545 = vmatpush1.msra.mxu0 %v9131
      %9546 = vmatprep.subr.mxu0 %v9144
      %9547 = vmatpush1.msra.mxu0 %v9143
      %9548 = vmatprep.subr.mxu0 0.0
      %9549 = vmatpush1.msra.mxu0 0.0
      %9550 = vmatprep.subr.mxu0 0.0
      %9551 = vmatpush1.msra.mxu0 0.0
      %9552 = vmatprep.subr.mxu0 0.0
      %9553 = vmatpush1.msra.mxu0 0.0
      %9554 = vmatprep.subr.mxu0 0.0
      %9555 = vmatpush1.msra.mxu0 0.0
      %9556 = vmatprep.subr.mxu0 0.0
      %9557 = vmatpush1.msra.mxu0 0.0
      %9558 = vmatprep.subr.mxu0 0.0
      %9559 = vmatpush1.msra.mxu0 0.0
      %9560 = vmatprep.subr.mxu0 0.0
      %9561 = vmatpush1.msra.mxu0 0.0
      %9562 = vmatprep.subr.mxu0 0.0
      %9563 = vmatpush1.msra.mxu0 0.0
      %9564 = vmatprep.subr.mxu0 0.0
      %9565 = vmatpush1.msra.mxu0 0.0
      %9566 = vmatprep.subr.mxu0 0.0
      %9567 = vmatpush1.msra.mxu0 0.0
      %9568 = vmatprep.subr.mxu0 0.0
      %9569 = vmatpush1.msra.mxu0 0.0
      %9570 = vmatprep.subr.mxu0 0.0
      %9571 = vmatpush1.msra.mxu0 0.0
      %9572 = vmatprep.subr.mxu0 0.0
      %9573 = vmatpush1.msra.mxu0 0.0
      %9574 = vmatprep.subr.mxu0 0.0
      %9575 = vmatpush1.msra.mxu0 0.0
      %9576 = vmatprep.subr.mxu0 0.0
      %9577 = vmatpush1.msra.mxu0 0.0
      %9578 = vmatprep.subr.mxu0 0.0
      %9579 = vmatpush1.msra.mxu0 0.0
      %9580 = vmatprep.subr.mxu0 0.0
      %9581 = vmatpush1.msra.mxu0 0.0
      %9582 = vmatprep.subr.mxu0 0.0
      %9583 = vmatpush1.msra.mxu0 0.0
      %9584 = vmatprep.subr.mxu0 0.0
      %9585 = vmatpush1.msra.mxu0 0.0
      %9586 = vmatprep.subr.mxu0 0.0
      %9587 = vmatpush1.msra.mxu0 0.0
      %9588 = vmatprep.subr.mxu0 0.0
      %9589 = vmatpush1.msra.mxu0 0.0
      %9590 = vmatprep.subr.mxu0 0.0
      %9591 = vmatpush1.msra.mxu0 0.0
      %9592 = vmatprep.subr.mxu0 0.0
      %9593 = vmatpush1.msra.mxu0 0.0
      %9594 = vmatprep.subr.mxu0 0.0
      %9595 = vmatpush1.msra.mxu0 0.0
      %9596 = vmatprep.subr.mxu0 0.0
      %9597 = vmatpush1.msra.mxu0 0.0
      %9598 = vmatprep.subr.mxu0 0.0
      %9599 = vmatpush1.msra.mxu0 0.0
      %9600 = vmatprep.subr.mxu0 0.0
      %9601 = vmatpush1.msra.mxu0 0.0
      %9602 = vmatprep.subr.mxu0 0.0
      %9603 = vmatpush1.msra.mxu0 0.0
      %9604 = vmatprep.subr.mxu0 0.0
      %9605 = vmatpush1.msra.mxu0 0.0
      %9606 = vmatprep.subr.mxu0 0.0
      %9607 = vmatpush1.msra.mxu0 0.0
      %9608 = vmatprep.mubr.f32.mxu0 0.0
      %9609 = vmatmul.mubr.f32.gmra.mrb[0].mxu0 %v9155
      %v9610 = vpop.f32.mrb[0].mxu0
      %v9611 = vadd.f32 %v9148, %v9610
      %v9612 = vpop.f32.mrb[0].mxu0
      %v9613 = vadd.f32 %v9148, %v9612
      %9614 = vmatprep.mubr.f32.mxu0 0.0
      %9615 = vmatmul.mubr.f32.gmra.mrb[0].mxu0 %v9157
      %v9616 = vpop.f32.mrb[0].mxu0
      %v9617 = vadd.f32 %v9153, %v9616
      %v9618 = vpop.f32.mrb[0].mxu0
      %v9619 = vadd.f32 %v9153, %v9618
      %9620 = vdwg.mxu0
      %v9621 = vadd.f32 %v9226, %v8358
      %v9622 = vadd.f32 %v9228, %v8359
      %v9623 = vadd.f32 %v9303, %v8360
      %v9624 = vadd.f32 %v9305, %v8361
      %v9625 = vadd.f32 %v9380, %v8362
      %v9626 = vadd.f32 %v9382, %v8363
      %v9627 = vadd.f32 %v9457, %v8364
      %v9628 = vadd.f32 %v9459, %v8365
      %v9629 = vadd.f32 %v9534, %v8366
      %v9630 = vadd.f32 %v9536, %v8367
      %v9631 = vadd.f32 %v9611, %v8368
      %v9632 = vadd.f32 %v9613, %v8369
      %v9633 = vadd.f32 %v9232, %v8372
      %v9634 = vadd.f32 %v9234, %v8373
      %v9635 = vadd.f32 %v9309, %v8374
      %v9636 = vadd.f32 %v9311, %v8375
      %v9637 = vadd.f32 %v9386, %v8376
      %v9638 = vadd.f32 %v9388, %v8377
      %v9639 = vadd.f32 %v9463, %v8378
      %v9640 = vadd.f32 %v9465, %v8379
      %v9641 = vadd.f32 %v9540, %v8380
      %v9642 = vadd.f32 %v9542, %v8381
      %v9643 = vadd.f32 %v9617, %v8382
      %v9644 = vadd.f32 %v9619, %v8383
      %s9645 = scalar_lea.vmem %s1, 240
      %v9646 = vld [vmem:[%s9645] sm:$0xff]
      %v9647 = vld [vmem:[%s9645 + $0x8] sm:$0xff]
      %v9648 = vld [vmem:[%s9645 + $0x10] sm:$0xff]
      %v9649 = vld [vmem:[%s9645 + $0x18] sm:$0xff]
      %v9650 = vld [vmem:[%s9645 + $0x20] sm:$0xff]
      %v9651 = vld [vmem:[%s9645 + $0x28] sm:$0xff]
      %9653 = vset.pattern.permute.xlu0 32
      %9654 = vperm.xlu0 %9653, %v9646
      %v9655 = vpop.permute.xlu0 %9654
      %9658 = vset.pattern.permute.xlu0 32
      %9659 = vperm.xlu0 %9658, %v9647
      %v9660 = vpop.permute.xlu0 %9659
      %9663 = vset.pattern.permute.xlu0 32
      %9664 = vperm.xlu0 %9663, %v9648
      %v9665 = vpop.permute.xlu0 %9664
      %9668 = vset.pattern.permute.xlu0 32
      %9669 = vperm.xlu0 %9668, %v9649
      %v9670 = vpop.permute.xlu0 %9669
      %v9672 = vsel %vm537, %v9646, 0
      %v9674 = vsel %vm537, %v9647, 0
      %v9676 = vsel %vm537, %v9648, 0
      %v9678 = vsel %vm537, %v9649, 0
      %9680 = vmatprep.subr.mxu0 %v9622
      %9681 = vmatpush1.msra.mxu0 %v9621
      %9682 = vmatprep.subr.mxu0 %v9634
      %9683 = vmatpush1.msra.mxu0 %v9633
      %9684 = vmatprep.subr.mxu0 %v9626
      %9685 = vmatpush1.msra.mxu0 %v9625
      %9686 = vmatprep.subr.mxu0 %v9638
      %9687 = vmatpush1.msra.mxu0 %v9637
      %9688 = vmatprep.subr.mxu0 0.0
      %9689 = vmatpush1.msra.mxu0 0.0
      %9690 = vmatprep.subr.mxu0 0.0
      %9691 = vmatpush1.msra.mxu0 0.0
      %9692 = vmatprep.subr.mxu0 0.0
      %9693 = vmatpush1.msra.mxu0 0.0
      %9694 = vmatprep.subr.mxu0 0.0
      %9695 = vmatpush1.msra.mxu0 0.0
      %9696 = vmatprep.subr.mxu0 0.0
      %9697 = vmatpush1.msra.mxu0 0.0
      %9698 = vmatprep.subr.mxu0 0.0
      %9699 = vmatpush1.msra.mxu0 0.0
      %9700 = vmatprep.subr.mxu0 0.0
      %9701 = vmatpush1.msra.mxu0 0.0
      %9702 = vmatprep.subr.mxu0 0.0
      %9703 = vmatpush1.msra.mxu0 0.0
      %9704 = vmatprep.subr.mxu0 0.0
      %9705 = vmatpush1.msra.mxu0 0.0
      %9706 = vmatprep.subr.mxu0 0.0
      %9707 = vmatpush1.msra.mxu0 0.0
      %9708 = vmatprep.subr.mxu0 0.0
      %9709 = vmatpush1.msra.mxu0 0.0
      %9710 = vmatprep.subr.mxu0 0.0
      %9711 = vmatpush1.msra.mxu0 0.0
      %9712 = vmatprep.subr.mxu0 0.0
      %9713 = vmatpush1.msra.mxu0 0.0
      %9714 = vmatprep.subr.mxu0 0.0
      %9715 = vmatpush1.msra.mxu0 0.0
      %9716 = vmatprep.subr.mxu0 0.0
      %9717 = vmatpush1.msra.mxu0 0.0
      %9718 = vmatprep.subr.mxu0 0.0
      %9719 = vmatpush1.msra.mxu0 0.0
      %9720 = vmatprep.subr.mxu0 0.0
      %9721 = vmatpush1.msra.mxu0 0.0
      %9722 = vmatprep.subr.mxu0 0.0
      %9723 = vmatpush1.msra.mxu0 0.0
      %9724 = vmatprep.subr.mxu0 0.0
      %9725 = vmatpush1.msra.mxu0 0.0
      %9726 = vmatprep.subr.mxu0 0.0
      %9727 = vmatpush1.msra.mxu0 0.0
      %9728 = vmatprep.subr.mxu0 0.0
      %9729 = vmatpush1.msra.mxu0 0.0
      %9730 = vmatprep.subr.mxu0 0.0
      %9731 = vmatpush1.msra.mxu0 0.0
      %9732 = vmatprep.subr.mxu0 0.0
      %9733 = vmatpush1.msra.mxu0 0.0
      %9734 = vmatprep.subr.mxu0 0.0
      %9735 = vmatpush1.msra.mxu0 0.0
      %9736 = vmatprep.subr.mxu0 0.0
      %9737 = vmatpush1.msra.mxu0 0.0
      %9738 = vmatprep.subr.mxu0 0.0
      %9739 = vmatpush1.msra.mxu0 0.0
      %9740 = vmatprep.subr.mxu0 0.0
      %9741 = vmatpush1.msra.mxu0 0.0
      %9742 = vmatprep.subr.mxu0 0.0
      %9743 = vmatpush1.msra.mxu0 0.0
      %9744 = vmatprep.mubr.f32.mxu0 0.0
      %9745 = vmatmul.mubr.f32.gmra.mrb[0].mxu0 %v9672
      %v9746 = vpop.f32.mrb[0].mxu0
      %v9747 = vadd.f32 %v9655, %v9746
      %v9748 = vpop.f32.mrb[0].mxu0
      %v9749 = vadd.f32 %v9655, %v9748
      %9750 = vmatprep.mubr.f32.mxu0 0.0
      %9751 = vmatmul.mubr.f32.gmra.mrb[0].mxu0 %v9674
      %v9752 = vpop.f32.mrb[0].mxu0
      %v9753 = vadd.f32 %v9660, %v9752
      %v9754 = vpop.f32.mrb[0].mxu0
      %v9755 = vadd.f32 %v9660, %v9754
      %9756 = vmatprep.mubr.f32.mxu0 0.0
      %9757 = vmatmul.mubr.f32.gmra.mrb[0].mxu0 %v9676
      %v9758 = vpop.f32.mrb[0].mxu0
      %v9759 = vadd.f32 %v9665, %v9758
      %v9760 = vpop.f32.mrb[0].mxu0
      %v9761 = vadd.f32 %v9665, %v9760
      %9762 = vmatprep.mubr.f32.mxu0 0.0
      %9763 = vmatmul.mubr.f32.gmra.mrb[0].mxu0 %v9678
      %v9764 = vpop.f32.mrb[0].mxu0
      %v9765 = vadd.f32 %v9670, %v9764
      %v9766 = vpop.f32.mrb[0].mxu0
      %v9767 = vadd.f32 %v9670, %v9766
      %9768 = vdwg.mxu0
      %9769 = vmatprep.subr.mxu0 %v9624
      %9770 = vmatpush1.msra.mxu0 %v9623
      %9771 = vmatprep.subr.mxu0 %v9636
      %9772 = vmatpush1.msra.mxu0 %v9635
      %9773 = vmatprep.subr.mxu0 %v9628
      %9774 = vmatpush1.msra.mxu0 %v9627
      %9775 = vmatprep.subr.mxu0 %v9640
      %9776 = vmatpush1.msra.mxu0 %v9639
      %9777 = vmatprep.subr.mxu0 0.0
      %9778 = vmatpush1.msra.mxu0 0.0
      %9779 = vmatprep.subr.mxu0 0.0
      %9780 = vmatpush1.msra.mxu0 0.0
      %9781 = vmatprep.subr.mxu0 0.0
      %9782 = vmatpush1.msra.mxu0 0.0
      %9783 = vmatprep.subr.mxu0 0.0
      %9784 = vmatpush1.msra.mxu0 0.0
      %9785 = vmatprep.subr.mxu0 0.0
      %9786 = vmatpush1.msra.mxu0 0.0
      %9787 = vmatprep.subr.mxu0 0.0
      %9788 = vmatpush1.msra.mxu0 0.0
      %9789 = vmatprep.subr.mxu0 0.0
      %9790 = vmatpush1.msra.mxu0 0.0
      %9791 = vmatprep.subr.mxu0 0.0
      %9792 = vmatpush1.msra.mxu0 0.0
      %9793 = vmatprep.subr.mxu0 0.0
      %9794 = vmatpush1.msra.mxu0 0.0
      %9795 = vmatprep.subr.mxu0 0.0
      %9796 = vmatpush1.msra.mxu0 0.0
      %9797 = vmatprep.subr.mxu0 0.0
      %9798 = vmatpush1.msra.mxu0 0.0
      %9799 = vmatprep.subr.mxu0 0.0
      %9800 = vmatpush1.msra.mxu0 0.0
      %9801 = vmatprep.subr.mxu0 0.0
      %9802 = vmatpush1.msra.mxu0 0.0
      %9803 = vmatprep.subr.mxu0 0.0
      %9804 = vmatpush1.msra.mxu0 0.0
      %9805 = vmatprep.subr.mxu0 0.0
      %9806 = vmatpush1.msra.mxu0 0.0
      %9807 = vmatprep.subr.mxu0 0.0
      %9808 = vmatpush1.msra.mxu0 0.0
      %9809 = vmatprep.subr.mxu0 0.0
      %9810 = vmatpush1.msra.mxu0 0.0
      %9811 = vmatprep.subr.mxu0 0.0
      %9812 = vmatpush1.msra.mxu0 0.0
      %9813 = vmatprep.subr.mxu0 0.0
      %9814 = vmatpush1.msra.mxu0 0.0
      %9815 = vmatprep.subr.mxu0 0.0
      %9816 = vmatpush1.msra.mxu0 0.0
      %9817 = vmatprep.subr.mxu0 0.0
      %9818 = vmatpush1.msra.mxu0 0.0
      %9819 = vmatprep.subr.mxu0 0.0
      %9820 = vmatpush1.msra.mxu0 0.0
      %9821 = vmatprep.subr.mxu0 0.0
      %9822 = vmatpush1.msra.mxu0 0.0
      %9823 = vmatprep.subr.mxu0 0.0
      %9824 = vmatpush1.msra.mxu0 0.0
      %9825 = vmatprep.subr.mxu0 0.0
      %9826 = vmatpush1.msra.mxu0 0.0
      %9827 = vmatprep.subr.mxu0 0.0
      %9828 = vmatpush1.msra.mxu0 0.0
      %9829 = vmatprep.subr.mxu0 0.0
      %9830 = vmatpush1.msra.mxu0 0.0
      %9831 = vmatprep.subr.mxu0 0.0
      %9832 = vmatpush1.msra.mxu0 0.0
      %9833 = vmatprep.mubr.f32.mxu0 0.0
      %9834 = vmatmul.mubr.f32.gmra.mrb[0].mxu0 %v9672
      %v9835 = vpop.f32.mrb[0].mxu0
      %v9836 = vadd.f32 %v9655, %v9835
      %v9837 = vpop.f32.mrb[0].mxu0
      %v9838 = vadd.f32 %v9655, %v9837
      %9839 = vmatprep.mubr.f32.mxu0 0.0
      %9840 = vmatmul.mubr.f32.gmra.mrb[0].mxu0 %v9674
      %v9841 = vpop.f32.mrb[0].mxu0
      %v9842 = vadd.f32 %v9660, %v9841
      %v9843 = vpop.f32.mrb[0].mxu0
      %v9844 = vadd.f32 %v9660, %v9843
      %9845 = vmatprep.mubr.f32.mxu0 0.0
      %9846 = vmatmul.mubr.f32.gmra.mrb[0].mxu0 %v9676
      %v9847 = vpop.f32.mrb[0].mxu0
      %v9848 = vadd.f32 %v9665, %v9847
      %v9849 = vpop.f32.mrb[0].mxu0
      %v9850 = vadd.f32 %v9665, %v9849
      %9851 = vmatprep.mubr.f32.mxu0 0.0
      %9852 = vmatmul.mubr.f32.gmra.mrb[0].mxu0 %v9678
      %v9853 = vpop.f32.mrb[0].mxu0
      %v9854 = vadd.f32 %v9670, %v9853
      %v9855 = vpop.f32.mrb[0].mxu0
      %v9856 = vadd.f32 %v9670, %v9855
      %9857 = vdwg.mxu0
      %9858 = vmatprep.subr.mxu0 %v9626
      %9859 = vmatpush1.msra.mxu0 %v9625
      %9860 = vmatprep.subr.mxu0 %v9638
      %9861 = vmatpush1.msra.mxu0 %v9637
      %9862 = vmatprep.subr.mxu0 %v9630
      %9863 = vmatpush1.msra.mxu0 %v9629
      %9864 = vmatprep.subr.mxu0 %v9642
      %9865 = vmatpush1.msra.mxu0 %v9641
      %9866 = vmatprep.subr.mxu0 0.0
      %9867 = vmatpush1.msra.mxu0 0.0
      %9868 = vmatprep.subr.mxu0 0.0
      %9869 = vmatpush1.msra.mxu0 0.0
      %9870 = vmatprep.subr.mxu0 0.0
      %9871 = vmatpush1.msra.mxu0 0.0
      %9872 = vmatprep.subr.mxu0 0.0
      %9873 = vmatpush1.msra.mxu0 0.0
      %9874 = vmatprep.subr.mxu0 0.0
      %9875 = vmatpush1.msra.mxu0 0.0
      %9876 = vmatprep.subr.mxu0 0.0
      %9877 = vmatpush1.msra.mxu0 0.0
      %9878 = vmatprep.subr.mxu0 0.0
      %9879 = vmatpush1.msra.mxu0 0.0
      %9880 = vmatprep.subr.mxu0 0.0
      %9881 = vmatpush1.msra.mxu0 0.0
      %9882 = vmatprep.subr.mxu0 0.0
      %9883 = vmatpush1.msra.mxu0 0.0
      %9884 = vmatprep.subr.mxu0 0.0
      %9885 = vmatpush1.msra.mxu0 0.0
      %9886 = vmatprep.subr.mxu0 0.0
      %9887 = vmatpush1.msra.mxu0 0.0
      %9888 = vmatprep.subr.mxu0 0.0
      %9889 = vmatpush1.msra.mxu0 0.0
      %9890 = vmatprep.subr.mxu0 0.0
      %9891 = vmatpush1.msra.mxu0 0.0
      %9892 = vmatprep.subr.mxu0 0.0
      %9893 = vmatpush1.msra.mxu0 0.0
      %9894 = vmatprep.subr.mxu0 0.0
      %9895 = vmatpush1.msra.mxu0 0.0
      %9896 = vmatprep.subr.mxu0 0.0
      %9897 = vmatpush1.msra.mxu0 0.0
      %9898 = vmatprep.subr.mxu0 0.0
      %9899 = vmatpush1.msra.mxu0 0.0
      %9900 = vmatprep.subr.mxu0 0.0
      %9901 = vmatpush1.msra.mxu0 0.0
      %9902 = vmatprep.subr.mxu0 0.0
      %9903 = vmatpush1.msra.mxu0 0.0
      %9904 = vmatprep.subr.mxu0 0.0
      %9905 = vmatpush1.msra.mxu0 0.0
      %9906 = vmatprep.subr.mxu0 0.0
      %9907 = vmatpush1.msra.mxu0 0.0
      %9908 = vmatprep.subr.mxu0 0.0
      %9909 = vmatpush1.msra.mxu0 0.0
      %9910 = vmatprep.subr.mxu0 0.0
      %9911 = vmatpush1.msra.mxu0 0.0
      %9912 = vmatprep.subr.mxu0 0.0
      %9913 = vmatpush1.msra.mxu0 0.0
      %9914 = vmatprep.subr.mxu0 0.0
      %9915 = vmatpush1.msra.mxu0 0.0
      %9916 = vmatprep.subr.mxu0 0.0
      %9917 = vmatpush1.msra.mxu0 0.0
      %9918 = vmatprep.subr.mxu0 0.0
      %9919 = vmatpush1.msra.mxu0 0.0
      %9920 = vmatprep.subr.mxu0 0.0
      %9921 = vmatpush1.msra.mxu0 0.0
      %9922 = vmatprep.mubr.f32.mxu0 0.0
      %9923 = vmatmul.mubr.f32.gmra.mrb[0].mxu0 %v9672
      %v9924 = vpop.f32.mrb[0].mxu0
      %v9925 = vadd.f32 %v9655, %v9924
      %v9926 = vpop.f32.mrb[0].mxu0
      %v9927 = vadd.f32 %v9655, %v9926
      %9928 = vmatprep.mubr.f32.mxu0 0.0
      %9929 = vmatmul.mubr.f32.gmra.mrb[0].mxu0 %v9674
      %v9930 = vpop.f32.mrb[0].mxu0
      %v9931 = vadd.f32 %v9660, %v9930
      %v9932 = vpop.f32.mrb[0].mxu0
      %v9933 = vadd.f32 %v9660, %v9932
      %9934 = vmatprep.mubr.f32.mxu0 0.0
      %9935 = vmatmul.mubr.f32.gmra.mrb[0].mxu0 %v9676
      %v9936 = vpop.f32.mrb[0].mxu0
      %v9937 = vadd.f32 %v9665, %v9936
      %v9938 = vpop.f32.mrb[0].mxu0
      %v9939 = vadd.f32 %v9665, %v9938
      %9940 = vmatprep.mubr.f32.mxu0 0.0
      %9941 = vmatmul.mubr.f32.gmra.mrb[0].mxu0 %v9678
      %v9942 = vpop.f32.mrb[0].mxu0
      %v9943 = vadd.f32 %v9670, %v9942
      %v9944 = vpop.f32.mrb[0].mxu0
      %v9945 = vadd.f32 %v9670, %v9944
      %9946 = vdwg.mxu0
      %9947 = vmatprep.subr.mxu0 %v9628
      %9948 = vmatpush1.msra.mxu0 %v9627
      %9949 = vmatprep.subr.mxu0 %v9640
      %9950 = vmatpush1.msra.mxu0 %v9639
      %9951 = vmatprep.subr.mxu0 %v9632
      %9952 = vmatpush1.msra.mxu0 %v9631
      %9953 = vmatprep.subr.mxu0 %v9644
      %9954 = vmatpush1.msra.mxu0 %v9643
      %9955 = vmatprep.subr.mxu0 0.0
      %9956 = vmatpush1.msra.mxu0 0.0
      %9957 = vmatprep.subr.mxu0 0.0
      %9958 = vmatpush1.msra.mxu0 0.0
      %9959 = vmatprep.subr.mxu0 0.0
      %9960 = vmatpush1.msra.mxu0 0.0
      %9961 = vmatprep.subr.mxu0 0.0
      %9962 = vmatpush1.msra.mxu0 0.0
      %9963 = vmatprep.subr.mxu0 0.0
      %9964 = vmatpush1.msra.mxu0 0.0
      %9965 = vmatprep.subr.mxu0 0.0
      %9966 = vmatpush1.msra.mxu0 0.0
      %9967 = vmatprep.subr.mxu0 0.0
      %9968 = vmatpush1.msra.mxu0 0.0
      %9969 = vmatprep.subr.mxu0 0.0
      %9970 = vmatpush1.msra.mxu0 0.0
      %9971 = vmatprep.subr.mxu0 0.0
      %9972 = vmatpush1.msra.mxu0 0.0
      %9973 = vmatprep.subr.mxu0 0.0
      %9974 = vmatpush1.msra.mxu0 0.0
      %9975 = vmatprep.subr.mxu0 0.0
      %9976 = vmatpush1.msra.mxu0 0.0
      %9977 = vmatprep.subr.mxu0 0.0
      %9978 = vmatpush1.msra.mxu0 0.0
      %9979 = vmatprep.subr.mxu0 0.0
      %9980 = vmatpush1.msra.mxu0 0.0
      %9981 = vmatprep.subr.mxu0 0.0
      %9982 = vmatpush1.msra.mxu0 0.0
      %9983 = vmatprep.subr.mxu0 0.0
      %9984 = vmatpush1.msra.mxu0 0.0
      %9985 = vmatprep.subr.mxu0 0.0
      %9986 = vmatpush1.msra.mxu0 0.0
      %9987 = vmatprep.subr.mxu0 0.0
      %9988 = vmatpush1.msra.mxu0 0.0
      %9989 = vmatprep.subr.mxu0 0.0
      %9990 = vmatpush1.msra.mxu0 0.0
      %9991 = vmatprep.subr.mxu0 0.0
      %9992 = vmatpush1.msra.mxu0 0.0
      %9993 = vmatprep.subr.mxu0 0.0
      %9994 = vmatpush1.msra.mxu0 0.0
      %9995 = vmatprep.subr.mxu0 0.0
      %9996 = vmatpush1.msra.mxu0 0.0
      %9997 = vmatprep.subr.mxu0 0.0
      %9998 = vmatpush1.msra.mxu0 0.0
      %9999 = vmatprep.subr.mxu0 0.0
      %10000 = vmatpush1.msra.mxu0 0.0
      %10001 = vmatprep.subr.mxu0 0.0
      %10002 = vmatpush1.msra.mxu0 0.0
      %10003 = vmatprep.subr.mxu0 0.0
      %10004 = vmatpush1.msra.mxu0 0.0
      %10005 = vmatprep.subr.mxu0 0.0
      %10006 = vmatpush1.msra.mxu0 0.0
      %10007 = vmatprep.subr.mxu0 0.0
      %10008 = vmatpush1.msra.mxu0 0.0
      %10009 = vmatprep.subr.mxu0 0.0
      %10010 = vmatpush1.msra.mxu0 0.0
      %10011 = vmatprep.mubr.f32.mxu0 0.0
      %10012 = vmatmul.mubr.f32.gmra.mrb[0].mxu0 %v9672
      %v10013 = vpop.f32.mrb[0].mxu0
      %v10014 = vadd.f32 %v9655, %v10013
      %v10015 = vpop.f32.mrb[0].mxu0
      %v10016 = vadd.f32 %v9655, %v10015
      %10017 = vmatprep.mubr.f32.mxu0 0.0
      %10018 = vmatmul.mubr.f32.gmra.mrb[0].mxu0 %v9674
      %v10019 = vpop.f32.mrb[0].mxu0
      %v10020 = vadd.f32 %v9660, %v10019
      %v10021 = vpop.f32.mrb[0].mxu0
      %v10022 = vadd.f32 %v9660, %v10021
      %10023 = vmatprep.mubr.f32.mxu0 0.0
      %10024 = vmatmul.mubr.f32.gmra.mrb[0].mxu0 %v9676
      %v10025 = vpop.f32.mrb[0].mxu0
      %v10026 = vadd.f32 %v9665, %v10025
      %v10027 = vpop.f32.mrb[0].mxu0
      %v10028 = vadd.f32 %v9665, %v10027
      %10029 = vmatprep.mubr.f32.mxu0 0.0
      %10030 = vmatmul.mubr.f32.gmra.mrb[0].mxu0 %v9678
      %v10031 = vpop.f32.mrb[0].mxu0
      %v10032 = vadd.f32 %v9670, %v10031
      %v10033 = vpop.f32.mrb[0].mxu0
      %v10034 = vadd.f32 %v9670, %v10033
      %10035 = vdwg.mxu0
      %v10036 = vtanh.pop %v9747
      %v10037 = vtanh.pop %v9749
      %v10038 = vtanh.pop %v9836
      %v10039 = vtanh.pop %v9838
      %v10040 = vtanh.pop %v9925
      %v10041 = vtanh.pop %v9927
      %v10042 = vtanh.pop %v10014
      %v10043 = vtanh.pop %v10016
      %v10044 = vtanh.pop %v9753
      %v10045 = vtanh.pop %v9755
      %v10046 = vtanh.pop %v9842
      %v10047 = vtanh.pop %v9844
      %v10048 = vtanh.pop %v9931
      %v10049 = vtanh.pop %v9933
      %v10050 = vtanh.pop %v10020
      %v10051 = vtanh.pop %v10022
      %v10052 = vxor.u32 %v9759, 2147483648
      %v10053 = vxor.u32 %v9761, 2147483648
      %v10054 = vxor.u32 %v9848, 2147483648
      %v10055 = vxor.u32 %v9850, 2147483648
      %v10056 = vxor.u32 %v9937, 2147483648
      %v10057 = vxor.u32 %v9939, 2147483648
      %v10058 = vxor.u32 %v10026, 2147483648
      %v10059 = vxor.u32 %v10028, 2147483648
      %v10060 = vxor.u32 %v9765, 2147483648
      %v10061 = vxor.u32 %v9767, 2147483648
      %v10062 = vxor.u32 %v9854, 2147483648
      %v10063 = vxor.u32 %v9856, 2147483648
      %v10064 = vxor.u32 %v9943, 2147483648
      %v10065 = vxor.u32 %v9945, 2147483648
      %v10066 = vxor.u32 %v10032, 2147483648
      %v10067 = vxor.u32 %v10034, 2147483648
      %v10068 = vmul.f32 %v10052, 1.442695
      %v10069 = vpow.pop %v10068
      %v10070 = vmul.f32 %v10053, 1.442695
      %v10071 = vpow.pop %v10070
      %v10072 = vmul.f32 %v10054, 1.442695
      %v10073 = vpow.pop %v10072
      %v10074 = vmul.f32 %v10055, 1.442695
      %v10075 = vpow.pop %v10074
      %v10076 = vmul.f32 %v10056, 1.442695
      %v10077 = vpow.pop %v10076
      %v10078 = vmul.f32 %v10057, 1.442695
      %v10079 = vpow.pop %v10078
      %v10080 = vmul.f32 %v10058, 1.442695
      %v10081 = vpow.pop %v10080
      %v10082 = vmul.f32 %v10059, 1.442695
      %v10083 = vpow.pop %v10082
      %v10084 = vmul.f32 %v10060, 1.442695
      %v10085 = vpow.pop %v10084
      %v10086 = vmul.f32 %v10061, 1.442695
      %v10087 = vpow.pop %v10086
      %v10088 = vmul.f32 %v10062, 1.442695
      %v10089 = vpow.pop %v10088
      %v10090 = vmul.f32 %v10063, 1.442695
      %v10091 = vpow.pop %v10090
      %v10092 = vmul.f32 %v10064, 1.442695
      %v10093 = vpow.pop %v10092
      %v10094 = vmul.f32 %v10065, 1.442695
      %v10095 = vpow.pop %v10094
      %v10096 = vmul.f32 %v10066, 1.442695
      %v10097 = vpow.pop %v10096
      %v10098 = vmul.f32 %v10067, 1.442695
      %v10099 = vpow.pop %v10098
      %v10100 = vadd.f32 %v10069, 1.0
      %v10101 = vadd.f32 %v10071, 1.0
      %v10102 = vadd.f32 %v10073, 1.0
      %v10103 = vadd.f32 %v10075, 1.0
      %v10104 = vadd.f32 %v10077, 1.0
      %v10105 = vadd.f32 %v10079, 1.0
      %v10106 = vadd.f32 %v10081, 1.0
      %v10107 = vadd.f32 %v10083, 1.0
      %v10108 = vadd.f32 %v10085, 1.0
      %v10109 = vadd.f32 %v10087, 1.0
      %v10110 = vadd.f32 %v10089, 1.0
      %v10111 = vadd.f32 %v10091, 1.0
      %v10112 = vadd.f32 %v10093, 1.0
      %v10113 = vadd.f32 %v10095, 1.0
      %v10114 = vadd.f32 %v10097, 1.0
      %v10115 = vadd.f32 %v10099, 1.0
      %v10116 = vrcp.pop %v10100
      %v10117 = vmul.f32 1.0, %v10116
      %v10118 = vrcp.pop %v10101
      %v10119 = vmul.f32 1.0, %v10118
      %v10120 = vrcp.pop %v10102
      %v10121 = vmul.f32 1.0, %v10120
      %v10122 = vrcp.pop %v10103
      %v10123 = vmul.f32 1.0, %v10122
      %v10124 = vrcp.pop %v10104
      %v10125 = vmul.f32 1.0, %v10124
      %v10126 = vrcp.pop %v10105
      %v10127 = vmul.f32 1.0, %v10126
      %v10128 = vrcp.pop %v10106
      %v10129 = vmul.f32 1.0, %v10128
      %v10130 = vrcp.pop %v10107
      %v10131 = vmul.f32 1.0, %v10130
      %v10132 = vrcp.pop %v10108
      %v10133 = vmul.f32 1.0, %v10132
      %v10134 = vrcp.pop %v10109
      %v10135 = vmul.f32 1.0, %v10134
      %v10136 = vrcp.pop %v10110
      %v10137 = vmul.f32 1.0, %v10136
      %v10138 = vrcp.pop %v10111
      %v10139 = vmul.f32 1.0, %v10138
      %v10140 = vrcp.pop %v10112
      %v10141 = vmul.f32 1.0, %v10140
      %v10142 = vrcp.pop %v10113
      %v10143 = vmul.f32 1.0, %v10142
      %v10144 = vrcp.pop %v10114
      %v10145 = vmul.f32 1.0, %v10144
      %v10146 = vrcp.pop %v10115
      %v10147 = vmul.f32 1.0, %v10146
      %v10148 = vmul.f32 %v10036, %v10117
      %v10149 = vmul.f32 %v10037, %v10119
      %v10150 = vmul.f32 %v10038, %v10121
      %v10151 = vmul.f32 %v10039, %v10123
      %v10152 = vmul.f32 %v10040, %v10125
      %v10153 = vmul.f32 %v10041, %v10127
      %v10154 = vmul.f32 %v10042, %v10129
      %v10155 = vmul.f32 %v10043, %v10131
      %v10156 = vmul.f32 %v10044, %v10133
      %v10157 = vmul.f32 %v10045, %v10135
      %v10158 = vmul.f32 %v10046, %v10137
      %v10159 = vmul.f32 %v10047, %v10139
      %v10160 = vmul.f32 %v10048, %v10141
      %v10161 = vmul.f32 %v10049, %v10143
      %v10162 = vmul.f32 %v10050, %v10145
      %v10163 = vmul.f32 %v10051, %v10147
      %10165 = vset.pattern.permute.xlu0 32
      %10166 = vperm.xlu0 %10165, %v9650
      %v10167 = vpop.permute.xlu0 %10166
      %10170 = vset.pattern.permute.xlu0 32
      %10171 = vperm.xlu0 %10170, %v9651
      %v10172 = vpop.permute.xlu0 %10171
      %v10174 = vsel %vm2008, %v9650, 0
      %v10176 = vsel %vm2008, %v9651, 0
      %10178 = vmatprep.subr.mxu0 %v10149
      %10179 = vmatpush1.msra.mxu0 %v10148
      %10180 = vmatprep.subr.mxu0 %v10157
      %10181 = vmatpush1.msra.mxu0 %v10156
      %10182 = vmatprep.subr.mxu0 0.0
      %10183 = vmatpush1.msra.mxu0 0.0
      %10184 = vmatprep.subr.mxu0 0.0
      %10185 = vmatpush1.msra.mxu0 0.0
      %10186 = vmatprep.subr.mxu0 0.0
      %10187 = vmatpush1.msra.mxu0 0.0
      %10188 = vmatprep.subr.mxu0 0.0
      %10189 = vmatpush1.msra.mxu0 0.0
      %10190 = vmatprep.subr.mxu0 0.0
      %10191 = vmatpush1.msra.mxu0 0.0
      %10192 = vmatprep.subr.mxu0 0.0
      %10193 = vmatpush1.msra.mxu0 0.0
      %10194 = vmatprep.subr.mxu0 0.0
      %10195 = vmatpush1.msra.mxu0 0.0
      %10196 = vmatprep.subr.mxu0 0.0
      %10197 = vmatpush1.msra.mxu0 0.0
      %10198 = vmatprep.subr.mxu0 0.0
      %10199 = vmatpush1.msra.mxu0 0.0
      %10200 = vmatprep.subr.mxu0 0.0
      %10201 = vmatpush1.msra.mxu0 0.0
      %10202 = vmatprep.subr.mxu0 0.0
      %10203 = vmatpush1.msra.mxu0 0.0
      %10204 = vmatprep.subr.mxu0 0.0
      %10205 = vmatpush1.msra.mxu0 0.0
      %10206 = vmatprep.subr.mxu0 0.0
      %10207 = vmatpush1.msra.mxu0 0.0
      %10208 = vmatprep.subr.mxu0 0.0
      %10209 = vmatpush1.msra.mxu0 0.0
      %10210 = vmatprep.subr.mxu0 0.0
      %10211 = vmatpush1.msra.mxu0 0.0
      %10212 = vmatprep.subr.mxu0 0.0
      %10213 = vmatpush1.msra.mxu0 0.0
      %10214 = vmatprep.subr.mxu0 0.0
      %10215 = vmatpush1.msra.mxu0 0.0
      %10216 = vmatprep.subr.mxu0 0.0
      %10217 = vmatpush1.msra.mxu0 0.0
      %10218 = vmatprep.subr.mxu0 0.0
      %10219 = vmatpush1.msra.mxu0 0.0
      %10220 = vmatprep.subr.mxu0 0.0
      %10221 = vmatpush1.msra.mxu0 0.0
      %10222 = vmatprep.subr.mxu0 0.0
      %10223 = vmatpush1.msra.mxu0 0.0
      %10224 = vmatprep.subr.mxu0 0.0
      %10225 = vmatpush1.msra.mxu0 0.0
      %10226 = vmatprep.subr.mxu0 0.0
      %10227 = vmatpush1.msra.mxu0 0.0
      %10228 = vmatprep.subr.mxu0 0.0
      %10229 = vmatpush1.msra.mxu0 0.0
      %10230 = vmatprep.subr.mxu0 0.0
      %10231 = vmatpush1.msra.mxu0 0.0
      %10232 = vmatprep.subr.mxu0 0.0
      %10233 = vmatpush1.msra.mxu0 0.0
      %10234 = vmatprep.subr.mxu0 0.0
      %10235 = vmatpush1.msra.mxu0 0.0
      %10236 = vmatprep.subr.mxu0 0.0
      %10237 = vmatpush1.msra.mxu0 0.0
      %10238 = vmatprep.subr.mxu0 0.0
      %10239 = vmatpush1.msra.mxu0 0.0
      %10240 = vmatprep.subr.mxu0 0.0
      %10241 = vmatpush1.msra.mxu0 0.0
      %10242 = vmatprep.mubr.f32.mxu0 0.0
      %10243 = vmatmul.mubr.f32.gmra.mrb[0].mxu0 %v10174
      %v10244 = vpop.f32.mrb[0].mxu0
      %v10245 = vadd.f32 %v10167, %v10244
      %v10246 = vpop.f32.mrb[0].mxu0
      %v10247 = vadd.f32 %v10167, %v10246
      %10248 = vmatprep.mubr.f32.mxu0 0.0
      %10249 = vmatmul.mubr.f32.gmra.mrb[0].mxu0 %v10176
      %v10250 = vpop.f32.mrb[0].mxu0
      %v10251 = vadd.f32 %v10172, %v10250
      %v10252 = vpop.f32.mrb[0].mxu0
      %v10253 = vadd.f32 %v10172, %v10252
      %10254 = vdwg.mxu0
      %10255 = vmatprep.subr.mxu0 %v10151
      %10256 = vmatpush1.msra.mxu0 %v10150
      %10257 = vmatprep.subr.mxu0 %v10159
      %10258 = vmatpush1.msra.mxu0 %v10158
      %10259 = vmatprep.subr.mxu0 0.0
      %10260 = vmatpush1.msra.mxu0 0.0
      %10261 = vmatprep.subr.mxu0 0.0
      %10262 = vmatpush1.msra.mxu0 0.0
      %10263 = vmatprep.subr.mxu0 0.0
      %10264 = vmatpush1.msra.mxu0 0.0
      %10265 = vmatprep.subr.mxu0 0.0
      %10266 = vmatpush1.msra.mxu0 0.0
      %10267 = vmatprep.subr.mxu0 0.0
      %10268 = vmatpush1.msra.mxu0 0.0
      %10269 = vmatprep.subr.mxu0 0.0
      %10270 = vmatpush1.msra.mxu0 0.0
      %10271 = vmatprep.subr.mxu0 0.0
      %10272 = vmatpush1.msra.mxu0 0.0
      %10273 = vmatprep.subr.mxu0 0.0
      %10274 = vmatpush1.msra.mxu0 0.0
      %10275 = vmatprep.subr.mxu0 0.0
      %10276 = vmatpush1.msra.mxu0 0.0
      %10277 = vmatprep.subr.mxu0 0.0
      %10278 = vmatpush1.msra.mxu0 0.0
      %10279 = vmatprep.subr.mxu0 0.0
      %10280 = vmatpush1.msra.mxu0 0.0
      %10281 = vmatprep.subr.mxu0 0.0
      %10282 = vmatpush1.msra.mxu0 0.0
      %10283 = vmatprep.subr.mxu0 0.0
      %10284 = vmatpush1.msra.mxu0 0.0
      %10285 = vmatprep.subr.mxu0 0.0
      %10286 = vmatpush1.msra.mxu0 0.0
      %10287 = vmatprep.subr.mxu0 0.0
      %10288 = vmatpush1.msra.mxu0 0.0
      %10289 = vmatprep.subr.mxu0 0.0
      %10290 = vmatpush1.msra.mxu0 0.0
      %10291 = vmatprep.subr.mxu0 0.0
      %10292 = vmatpush1.msra.mxu0 0.0
      %10293 = vmatprep.subr.mxu0 0.0
      %10294 = vmatpush1.msra.mxu0 0.0
      %10295 = vmatprep.subr.mxu0 0.0
      %10296 = vmatpush1.msra.mxu0 0.0
      %10297 = vmatprep.subr.mxu0 0.0
      %10298 = vmatpush1.msra.mxu0 0.0
      %10299 = vmatprep.subr.mxu0 0.0
      %10300 = vmatpush1.msra.mxu0 0.0
      %10301 = vmatprep.subr.mxu0 0.0
      %10302 = vmatpush1.msra.mxu0 0.0
      %10303 = vmatprep.subr.mxu0 0.0
      %10304 = vmatpush1.msra.mxu0 0.0
      %10305 = vmatprep.subr.mxu0 0.0
      %10306 = vmatpush1.msra.mxu0 0.0
      %10307 = vmatprep.subr.mxu0 0.0
      %10308 = vmatpush1.msra.mxu0 0.0
      %10309 = vmatprep.subr.mxu0 0.0
      %10310 = vmatpush1.msra.mxu0 0.0
      %10311 = vmatprep.subr.mxu0 0.0
      %10312 = vmatpush1.msra.mxu0 0.0
      %10313 = vmatprep.subr.mxu0 0.0
      %10314 = vmatpush1.msra.mxu0 0.0
      %10315 = vmatprep.subr.mxu0 0.0
      %10316 = vmatpush1.msra.mxu0 0.0
      %10317 = vmatprep.subr.mxu0 0.0
      %10318 = vmatpush1.msra.mxu0 0.0
      %10319 = vmatprep.mubr.f32.mxu0 0.0
      %10320 = vmatmul.mubr.f32.gmra.mrb[0].mxu0 %v10174
      %v10321 = vpop.f32.mrb[0].mxu0
      %v10322 = vadd.f32 %v10167, %v10321
      %v10323 = vpop.f32.mrb[0].mxu0
      %v10324 = vadd.f32 %v10167, %v10323
      %10325 = vmatprep.mubr.f32.mxu0 0.0
      %10326 = vmatmul.mubr.f32.gmra.mrb[0].mxu0 %v10176
      %v10327 = vpop.f32.mrb[0].mxu0
      %v10328 = vadd.f32 %v10172, %v10327
      %v10329 = vpop.f32.mrb[0].mxu0
      %v10330 = vadd.f32 %v10172, %v10329
      %10331 = vdwg.mxu0
      %10332 = vmatprep.subr.mxu0 %v10153
      %10333 = vmatpush1.msra.mxu0 %v10152
      %10334 = vmatprep.subr.mxu0 %v10161
      %10335 = vmatpush1.msra.mxu0 %v10160
      %10336 = vmatprep.subr.mxu0 0.0
      %10337 = vmatpush1.msra.mxu0 0.0
      %10338 = vmatprep.subr.mxu0 0.0
      %10339 = vmatpush1.msra.mxu0 0.0
      %10340 = vmatprep.subr.mxu0 0.0
      %10341 = vmatpush1.msra.mxu0 0.0
      %10342 = vmatprep.subr.mxu0 0.0
      %10343 = vmatpush1.msra.mxu0 0.0
      %10344 = vmatprep.subr.mxu0 0.0
      %10345 = vmatpush1.msra.mxu0 0.0
      %10346 = vmatprep.subr.mxu0 0.0
      %10347 = vmatpush1.msra.mxu0 0.0
      %10348 = vmatprep.subr.mxu0 0.0
      %10349 = vmatpush1.msra.mxu0 0.0
      %10350 = vmatprep.subr.mxu0 0.0
      %10351 = vmatpush1.msra.mxu0 0.0
      %10352 = vmatprep.subr.mxu0 0.0
      %10353 = vmatpush1.msra.mxu0 0.0
      %10354 = vmatprep.subr.mxu0 0.0
      %10355 = vmatpush1.msra.mxu0 0.0
      %10356 = vmatprep.subr.mxu0 0.0
      %10357 = vmatpush1.msra.mxu0 0.0
      %10358 = vmatprep.subr.mxu0 0.0
      %10359 = vmatpush1.msra.mxu0 0.0
      %10360 = vmatprep.subr.mxu0 0.0
      %10361 = vmatpush1.msra.mxu0 0.0
      %10362 = vmatprep.subr.mxu0 0.0
      %10363 = vmatpush1.msra.mxu0 0.0
      %10364 = vmatprep.subr.mxu0 0.0
      %10365 = vmatpush1.msra.mxu0 0.0
      %10366 = vmatprep.subr.mxu0 0.0
      %10367 = vmatpush1.msra.mxu0 0.0
      %10368 = vmatprep.subr.mxu0 0.0
      %10369 = vmatpush1.msra.mxu0 0.0
      %10370 = vmatprep.subr.mxu0 0.0
      %10371 = vmatpush1.msra.mxu0 0.0
      %10372 = vmatprep.subr.mxu0 0.0
      %10373 = vmatpush1.msra.mxu0 0.0
      %10374 = vmatprep.subr.mxu0 0.0
      %10375 = vmatpush1.msra.mxu0 0.0
      %10376 = vmatprep.subr.mxu0 0.0
      %10377 = vmatpush1.msra.mxu0 0.0
      %10378 = vmatprep.subr.mxu0 0.0
      %10379 = vmatpush1.msra.mxu0 0.0
      %10380 = vmatprep.subr.mxu0 0.0
      %10381 = vmatpush1.msra.mxu0 0.0
      %10382 = vmatprep.subr.mxu0 0.0
      %10383 = vmatpush1.msra.mxu0 0.0
      %10384 = vmatprep.subr.mxu0 0.0
      %10385 = vmatpush1.msra.mxu0 0.0
      %10386 = vmatprep.subr.mxu0 0.0
      %10387 = vmatpush1.msra.mxu0 0.0
      %10388 = vmatprep.subr.mxu0 0.0
      %10389 = vmatpush1.msra.mxu0 0.0
      %10390 = vmatprep.subr.mxu0 0.0
      %10391 = vmatpush1.msra.mxu0 0.0
      %10392 = vmatprep.subr.mxu0 0.0
      %10393 = vmatpush1.msra.mxu0 0.0
      %10394 = vmatprep.subr.mxu0 0.0
      %10395 = vmatpush1.msra.mxu0 0.0
      %10396 = vmatprep.mubr.f32.mxu0 0.0
      %10397 = vmatmul.mubr.f32.gmra.mrb[0].mxu0 %v10174
      %v10398 = vpop.f32.mrb[0].mxu0
      %v10399 = vadd.f32 %v10167, %v10398
      %v10400 = vpop.f32.mrb[0].mxu0
      %v10401 = vadd.f32 %v10167, %v10400
      %10402 = vmatprep.mubr.f32.mxu0 0.0
      %10403 = vmatmul.mubr.f32.gmra.mrb[0].mxu0 %v10176
      %v10404 = vpop.f32.mrb[0].mxu0
      %v10405 = vadd.f32 %v10172, %v10404
      %v10406 = vpop.f32.mrb[0].mxu0
      %v10407 = vadd.f32 %v10172, %v10406
      %10408 = vdwg.mxu0
      %10409 = vmatprep.subr.mxu0 %v10155
      %10410 = vmatpush1.msra.mxu0 %v10154
      %10411 = vmatprep.subr.mxu0 %v10163
      %10412 = vmatpush1.msra.mxu0 %v10162
      %10413 = vmatprep.subr.mxu0 0.0
      %10414 = vmatpush1.msra.mxu0 0.0
      %10415 = vmatprep.subr.mxu0 0.0
      %10416 = vmatpush1.msra.mxu0 0.0
      %10417 = vmatprep.subr.mxu0 0.0
      %10418 = vmatpush1.msra.mxu0 0.0
      %10419 = vmatprep.subr.mxu0 0.0
      %10420 = vmatpush1.msra.mxu0 0.0
      %10421 = vmatprep.subr.mxu0 0.0
      %10422 = vmatpush1.msra.mxu0 0.0
      %10423 = vmatprep.subr.mxu0 0.0
      %10424 = vmatpush1.msra.mxu0 0.0
      %10425 = vmatprep.subr.mxu0 0.0
      %10426 = vmatpush1.msra.mxu0 0.0
      %10427 = vmatprep.subr.mxu0 0.0
      %10428 = vmatpush1.msra.mxu0 0.0
      %10429 = vmatprep.subr.mxu0 0.0
      %10430 = vmatpush1.msra.mxu0 0.0
      %10431 = vmatprep.subr.mxu0 0.0
      %10432 = vmatpush1.msra.mxu0 0.0
      %10433 = vmatprep.subr.mxu0 0.0
      %10434 = vmatpush1.msra.mxu0 0.0
      %10435 = vmatprep.subr.mxu0 0.0
      %10436 = vmatpush1.msra.mxu0 0.0
      %10437 = vmatprep.subr.mxu0 0.0
      %10438 = vmatpush1.msra.mxu0 0.0
      %10439 = vmatprep.subr.mxu0 0.0
      %10440 = vmatpush1.msra.mxu0 0.0
      %10441 = vmatprep.subr.mxu0 0.0
      %10442 = vmatpush1.msra.mxu0 0.0
      %10443 = vmatprep.subr.mxu0 0.0
      %10444 = vmatpush1.msra.mxu0 0.0
      %10445 = vmatprep.subr.mxu0 0.0
      %10446 = vmatpush1.msra.mxu0 0.0
      %10447 = vmatprep.subr.mxu0 0.0
      %10448 = vmatpush1.msra.mxu0 0.0
      %10449 = vmatprep.subr.mxu0 0.0
      %10450 = vmatpush1.msra.mxu0 0.0
      %10451 = vmatprep.subr.mxu0 0.0
      %10452 = vmatpush1.msra.mxu0 0.0
      %10453 = vmatprep.subr.mxu0 0.0
      %10454 = vmatpush1.msra.mxu0 0.0
      %10455 = vmatprep.subr.mxu0 0.0
      %10456 = vmatpush1.msra.mxu0 0.0
      %10457 = vmatprep.subr.mxu0 0.0
      %10458 = vmatpush1.msra.mxu0 0.0
      %10459 = vmatprep.subr.mxu0 0.0
      %10460 = vmatpush1.msra.mxu0 0.0
      %10461 = vmatprep.subr.mxu0 0.0
      %10462 = vmatpush1.msra.mxu0 0.0
      %10463 = vmatprep.subr.mxu0 0.0
      %10464 = vmatpush1.msra.mxu0 0.0
      %10465 = vmatprep.subr.mxu0 0.0
      %10466 = vmatpush1.msra.mxu0 0.0
      %10467 = vmatprep.subr.mxu0 0.0
      %10468 = vmatpush1.msra.mxu0 0.0
      %10469 = vmatprep.subr.mxu0 0.0
      %10470 = vmatpush1.msra.mxu0 0.0
      %10471 = vmatprep.subr.mxu0 0.0
      %10472 = vmatpush1.msra.mxu0 0.0
      %10473 = vmatprep.mubr.f32.mxu0 0.0
      %10474 = vmatmul.mubr.f32.gmra.mrb[0].mxu0 %v10174
      %v10475 = vpop.f32.mrb[0].mxu0
      %v10476 = vadd.f32 %v10167, %v10475
      %v10477 = vpop.f32.mrb[0].mxu0
      %v10478 = vadd.f32 %v10167, %v10477
      %10479 = vmatprep.mubr.f32.mxu0 0.0
      %10480 = vmatmul.mubr.f32.gmra.mrb[0].mxu0 %v10176
      %v10481 = vpop.f32.mrb[0].mxu0
      %v10482 = vadd.f32 %v10172, %v10481
      %v10483 = vpop.f32.mrb[0].mxu0
      %v10484 = vadd.f32 %v10172, %v10483
      %10485 = vdwg.mxu0
      %v10486 = vadd.f32 %v10245, %v9625
      %v10487 = vadd.f32 %v10247, %v9626
      %v10488 = vadd.f32 %v10322, %v9627
      %v10489 = vadd.f32 %v10324, %v9628
      %v10490 = vadd.f32 %v10399, %v9629
      %v10491 = vadd.f32 %v10401, %v9630
      %v10492 = vadd.f32 %v10476, %v9631
      %v10493 = vadd.f32 %v10478, %v9632
      %v10494 = vadd.f32 %v10251, %v9637
      %v10495 = vadd.f32 %v10253, %v9638
      %v10496 = vadd.f32 %v10328, %v9639
      %v10497 = vadd.f32 %v10330, %v9640
      %v10498 = vadd.f32 %v10405, %v9641
      %v10499 = vadd.f32 %v10407, %v9642
      %v10500 = vadd.f32 %v10482, %v9643
      %v10501 = vadd.f32 %v10484, %v9644
      %s10502 = scalar_lea.vmem %s1, 288
      %v10503 = vld [vmem:[%s10502] sm:$0xff]
      %v10504 = vld [vmem:[%s10502 + $0x8] sm:$0xff]
      %v10505 = vld [vmem:[%s10502 + $0x10] sm:$0xff]
      %v10506 = vld [vmem:[%s10502 + $0x18] sm:$0xff]
      %v10507 = vld [vmem:[%s10502 + $0x20] sm:$0xff]
      %v10508 = vld [vmem:[%s10502 + $0x28] sm:$0xff]
      %10510 = vset.pattern.permute.xlu0 32
      %10511 = vperm.xlu0 %10510, %v10503
      %v10512 = vpop.permute.xlu0 %10511
      %10515 = vset.pattern.permute.xlu0 32
      %10516 = vperm.xlu0 %10515, %v10504
      %v10517 = vpop.permute.xlu0 %10516
      %10520 = vset.pattern.permute.xlu0 32
      %10521 = vperm.xlu0 %10520, %v10505
      %v10522 = vpop.permute.xlu0 %10521
      %10525 = vset.pattern.permute.xlu0 32
      %10526 = vperm.xlu0 %10525, %v10506
      %v10527 = vpop.permute.xlu0 %10526
      %v10529 = vsel %vm537, %v10503, 0
      %v10531 = vsel %vm537, %v10504, 0
      %v10533 = vsel %vm537, %v10505, 0
      %v10535 = vsel %vm537, %v10506, 0
      %10537 = vmatprep.subr.mxu0 %v10487
      %10538 = vmatpush1.msra.mxu0 %v10486
      %10539 = vmatprep.subr.mxu0 %v10495
      %10540 = vmatpush1.msra.mxu0 %v10494
      %10541 = vmatprep.subr.mxu0 %v10489
      %10542 = vmatpush1.msra.mxu0 %v10488
      %10543 = vmatprep.subr.mxu0 %v10497
      %10544 = vmatpush1.msra.mxu0 %v10496
      %10545 = vmatprep.subr.mxu0 0.0
      %10546 = vmatpush1.msra.mxu0 0.0
      %10547 = vmatprep.subr.mxu0 0.0
      %10548 = vmatpush1.msra.mxu0 0.0
      %10549 = vmatprep.subr.mxu0 0.0
      %10550 = vmatpush1.msra.mxu0 0.0
      %10551 = vmatprep.subr.mxu0 0.0
      %10552 = vmatpush1.msra.mxu0 0.0
      %10553 = vmatprep.subr.mxu0 0.0
      %10554 = vmatpush1.msra.mxu0 0.0
      %10555 = vmatprep.subr.mxu0 0.0
      %10556 = vmatpush1.msra.mxu0 0.0
      %10557 = vmatprep.subr.mxu0 0.0
      %10558 = vmatpush1.msra.mxu0 0.0
      %10559 = vmatprep.subr.mxu0 0.0
      %10560 = vmatpush1.msra.mxu0 0.0
      %10561 = vmatprep.subr.mxu0 0.0
      %10562 = vmatpush1.msra.mxu0 0.0
      %10563 = vmatprep.subr.mxu0 0.0
      %10564 = vmatpush1.msra.mxu0 0.0
      %10565 = vmatprep.subr.mxu0 0.0
      %10566 = vmatpush1.msra.mxu0 0.0
      %10567 = vmatprep.subr.mxu0 0.0
      %10568 = vmatpush1.msra.mxu0 0.0
      %10569 = vmatprep.subr.mxu0 0.0
      %10570 = vmatpush1.msra.mxu0 0.0
      %10571 = vmatprep.subr.mxu0 0.0
      %10572 = vmatpush1.msra.mxu0 0.0
      %10573 = vmatprep.subr.mxu0 0.0
      %10574 = vmatpush1.msra.mxu0 0.0
      %10575 = vmatprep.subr.mxu0 0.0
      %10576 = vmatpush1.msra.mxu0 0.0
      %10577 = vmatprep.subr.mxu0 0.0
      %10578 = vmatpush1.msra.mxu0 0.0
      %10579 = vmatprep.subr.mxu0 0.0
      %10580 = vmatpush1.msra.mxu0 0.0
      %10581 = vmatprep.subr.mxu0 0.0
      %10582 = vmatpush1.msra.mxu0 0.0
      %10583 = vmatprep.subr.mxu0 0.0
      %10584 = vmatpush1.msra.mxu0 0.0
      %10585 = vmatprep.subr.mxu0 0.0
      %10586 = vmatpush1.msra.mxu0 0.0
      %10587 = vmatprep.subr.mxu0 0.0
      %10588 = vmatpush1.msra.mxu0 0.0
      %10589 = vmatprep.subr.mxu0 0.0
      %10590 = vmatpush1.msra.mxu0 0.0
      %10591 = vmatprep.subr.mxu0 0.0
      %10592 = vmatpush1.msra.mxu0 0.0
      %10593 = vmatprep.subr.mxu0 0.0
      %10594 = vmatpush1.msra.mxu0 0.0
      %10595 = vmatprep.subr.mxu0 0.0
      %10596 = vmatpush1.msra.mxu0 0.0
      %10597 = vmatprep.subr.mxu0 0.0
      %10598 = vmatpush1.msra.mxu0 0.0
      %10599 = vmatprep.subr.mxu0 0.0
      %10600 = vmatpush1.msra.mxu0 0.0
      %10601 = vmatprep.mubr.f32.mxu0 0.0
      %10602 = vmatmul.mubr.f32.gmra.mrb[0].mxu0 %v10529
      %v10603 = vpop.f32.mrb[0].mxu0
      %v10604 = vadd.f32 %v10512, %v10603
      %v10605 = vpop.f32.mrb[0].mxu0
      %v10606 = vadd.f32 %v10512, %v10605
      %10607 = vmatprep.mubr.f32.mxu0 0.0
      %10608 = vmatmul.mubr.f32.gmra.mrb[0].mxu0 %v10531
      %v10609 = vpop.f32.mrb[0].mxu0
      %v10610 = vadd.f32 %v10517, %v10609
      %v10611 = vpop.f32.mrb[0].mxu0
      %v10612 = vadd.f32 %v10517, %v10611
      %10613 = vmatprep.mubr.f32.mxu0 0.0
      %10614 = vmatmul.mubr.f32.gmra.mrb[0].mxu0 %v10533
      %v10615 = vpop.f32.mrb[0].mxu0
      %v10616 = vadd.f32 %v10522, %v10615
      %v10617 = vpop.f32.mrb[0].mxu0
      %v10618 = vadd.f32 %v10522, %v10617
      %10619 = vmatprep.mubr.f32.mxu0 0.0
      %10620 = vmatmul.mubr.f32.gmra.mrb[0].mxu0 %v10535
      %v10621 = vpop.f32.mrb[0].mxu0
      %v10622 = vadd.f32 %v10527, %v10621
      %v10623 = vpop.f32.mrb[0].mxu0
      %v10624 = vadd.f32 %v10527, %v10623
      %10625 = vdwg.mxu0
      %10626 = vmatprep.subr.mxu0 %v10491
      %10627 = vmatpush1.msra.mxu0 %v10490
      %10628 = vmatprep.subr.mxu0 %v10499
      %10629 = vmatpush1.msra.mxu0 %v10498
      %10630 = vmatprep.subr.mxu0 %v10493
      %10631 = vmatpush1.msra.mxu0 %v10492
      %10632 = vmatprep.subr.mxu0 %v10501
      %10633 = vmatpush1.msra.mxu0 %v10500
      %10634 = vmatprep.subr.mxu0 0.0
      %10635 = vmatpush1.msra.mxu0 0.0
      %10636 = vmatprep.subr.mxu0 0.0
      %10637 = vmatpush1.msra.mxu0 0.0
      %10638 = vmatprep.subr.mxu0 0.0
      %10639 = vmatpush1.msra.mxu0 0.0
      %10640 = vmatprep.subr.mxu0 0.0
      %10641 = vmatpush1.msra.mxu0 0.0
      %10642 = vmatprep.subr.mxu0 0.0
      %10643 = vmatpush1.msra.mxu0 0.0
      %10644 = vmatprep.subr.mxu0 0.0
      %10645 = vmatpush1.msra.mxu0 0.0
      %10646 = vmatprep.subr.mxu0 0.0
      %10647 = vmatpush1.msra.mxu0 0.0
      %10648 = vmatprep.subr.mxu0 0.0
      %10649 = vmatpush1.msra.mxu0 0.0
      %10650 = vmatprep.subr.mxu0 0.0
      %10651 = vmatpush1.msra.mxu0 0.0
      %10652 = vmatprep.subr.mxu0 0.0
      %10653 = vmatpush1.msra.mxu0 0.0
      %10654 = vmatprep.subr.mxu0 0.0
      %10655 = vmatpush1.msra.mxu0 0.0
      %10656 = vmatprep.subr.mxu0 0.0
      %10657 = vmatpush1.msra.mxu0 0.0
      %10658 = vmatprep.subr.mxu0 0.0
      %10659 = vmatpush1.msra.mxu0 0.0
      %10660 = vmatprep.subr.mxu0 0.0
      %10661 = vmatpush1.msra.mxu0 0.0
      %10662 = vmatprep.subr.mxu0 0.0
      %10663 = vmatpush1.msra.mxu0 0.0
      %10664 = vmatprep.subr.mxu0 0.0
      %10665 = vmatpush1.msra.mxu0 0.0
      %10666 = vmatprep.subr.mxu0 0.0
      %10667 = vmatpush1.msra.mxu0 0.0
      %10668 = vmatprep.subr.mxu0 0.0
      %10669 = vmatpush1.msra.mxu0 0.0
      %10670 = vmatprep.subr.mxu0 0.0
      %10671 = vmatpush1.msra.mxu0 0.0
      %10672 = vmatprep.subr.mxu0 0.0
      %10673 = vmatpush1.msra.mxu0 0.0
      %10674 = vmatprep.subr.mxu0 0.0
      %10675 = vmatpush1.msra.mxu0 0.0
      %10676 = vmatprep.subr.mxu0 0.0
      %10677 = vmatpush1.msra.mxu0 0.0
      %10678 = vmatprep.subr.mxu0 0.0
      %10679 = vmatpush1.msra.mxu0 0.0
      %10680 = vmatprep.subr.mxu0 0.0
      %10681 = vmatpush1.msra.mxu0 0.0
      %10682 = vmatprep.subr.mxu0 0.0
      %10683 = vmatpush1.msra.mxu0 0.0
      %10684 = vmatprep.subr.mxu0 0.0
      %10685 = vmatpush1.msra.mxu0 0.0
      %10686 = vmatprep.subr.mxu0 0.0
      %10687 = vmatpush1.msra.mxu0 0.0
      %10688 = vmatprep.subr.mxu0 0.0
      %10689 = vmatpush1.msra.mxu0 0.0
      %10690 = vmatprep.mubr.f32.mxu0 0.0
      %10691 = vmatmul.mubr.f32.gmra.mrb[0].mxu0 %v10529
      %v10692 = vpop.f32.mrb[0].mxu0
      %v10693 = vadd.f32 %v10512, %v10692
      %v10694 = vpop.f32.mrb[0].mxu0
      %v10695 = vadd.f32 %v10512, %v10694
      %10696 = vmatprep.mubr.f32.mxu0 0.0
      %10697 = vmatmul.mubr.f32.gmra.mrb[0].mxu0 %v10531
      %v10698 = vpop.f32.mrb[0].mxu0
      %v10699 = vadd.f32 %v10517, %v10698
      %v10700 = vpop.f32.mrb[0].mxu0
      %v10701 = vadd.f32 %v10517, %v10700
      %10702 = vmatprep.mubr.f32.mxu0 0.0
      %10703 = vmatmul.mubr.f32.gmra.mrb[0].mxu0 %v10533
      %v10704 = vpop.f32.mrb[0].mxu0
      %v10705 = vadd.f32 %v10522, %v10704
      %v10706 = vpop.f32.mrb[0].mxu0
      %v10707 = vadd.f32 %v10522, %v10706
      %10708 = vmatprep.mubr.f32.mxu0 0.0
      %10709 = vmatmul.mubr.f32.gmra.mrb[0].mxu0 %v10535
      %v10710 = vpop.f32.mrb[0].mxu0
      %v10711 = vadd.f32 %v10527, %v10710
      %v10712 = vpop.f32.mrb[0].mxu0
      %v10713 = vadd.f32 %v10527, %v10712
      %10714 = vdwg.mxu0
      %v10715 = vtanh.pop %v10604
      %v10716 = vtanh.pop %v10606
      %v10717 = vtanh.pop %v10693
      %v10718 = vtanh.pop %v10695
      %v10719 = vtanh.pop %v10610
      %v10720 = vtanh.pop %v10612
      %v10721 = vtanh.pop %v10699
      %v10722 = vtanh.pop %v10701
      %v10723 = vxor.u32 %v10616, 2147483648
      %v10724 = vxor.u32 %v10618, 2147483648
      %v10725 = vxor.u32 %v10705, 2147483648
      %v10726 = vxor.u32 %v10707, 2147483648
      %v10727 = vxor.u32 %v10622, 2147483648
      %v10728 = vxor.u32 %v10624, 2147483648
      %v10729 = vxor.u32 %v10711, 2147483648
      %v10730 = vxor.u32 %v10713, 2147483648
      %v10731 = vmul.f32 %v10723, 1.442695
      %v10732 = vpow.pop %v10731
      %v10733 = vmul.f32 %v10724, 1.442695
      %v10734 = vpow.pop %v10733
      %v10735 = vmul.f32 %v10725, 1.442695
      %v10736 = vpow.pop %v10735
      %v10737 = vmul.f32 %v10726, 1.442695
      %v10738 = vpow.pop %v10737
      %v10739 = vmul.f32 %v10727, 1.442695
      %v10740 = vpow.pop %v10739
      %v10741 = vmul.f32 %v10728, 1.442695
      %v10742 = vpow.pop %v10741
      %v10743 = vmul.f32 %v10729, 1.442695
      %v10744 = vpow.pop %v10743
      %v10745 = vmul.f32 %v10730, 1.442695
      %v10746 = vpow.pop %v10745
      %v10747 = vadd.f32 %v10732, 1.0
      %v10748 = vadd.f32 %v10734, 1.0
      %v10749 = vadd.f32 %v10736, 1.0
      %v10750 = vadd.f32 %v10738, 1.0
      %v10751 = vadd.f32 %v10740, 1.0
      %v10752 = vadd.f32 %v10742, 1.0
      %v10753 = vadd.f32 %v10744, 1.0
      %v10754 = vadd.f32 %v10746, 1.0
      %v10755 = vrcp.pop %v10747
      %v10756 = vmul.f32 1.0, %v10755
      %v10757 = vrcp.pop %v10748
      %v10758 = vmul.f32 1.0, %v10757
      %v10759 = vrcp.pop %v10749
      %v10760 = vmul.f32 1.0, %v10759
      %v10761 = vrcp.pop %v10750
      %v10762 = vmul.f32 1.0, %v10761
      %v10763 = vrcp.pop %v10751
      %v10764 = vmul.f32 1.0, %v10763
      %v10765 = vrcp.pop %v10752
      %v10766 = vmul.f32 1.0, %v10765
      %v10767 = vrcp.pop %v10753
      %v10768 = vmul.f32 1.0, %v10767
      %v10769 = vrcp.pop %v10754
      %v10770 = vmul.f32 1.0, %v10769
      %v10771 = vmul.f32 %v10715, %v10756
      %v10772 = vmul.f32 %v10716, %v10758
      %v10773 = vmul.f32 %v10717, %v10760
      %v10774 = vmul.f32 %v10718, %v10762
      %v10775 = vmul.f32 %v10719, %v10764
      %v10776 = vmul.f32 %v10720, %v10766
      %v10777 = vmul.f32 %v10721, %v10768
      %v10778 = vmul.f32 %v10722, %v10770
      %10780 = vset.pattern.permute.xlu0 32
      %10781 = vperm.xlu0 %10780, %v10507
      %v10782 = vpop.permute.xlu0 %10781
      %10785 = vset.pattern.permute.xlu0 32
      %10786 = vperm.xlu0 %10785, %v10508
      %v10787 = vpop.permute.xlu0 %10786
      %v10789 = vsel %vm2008, %v10507, 0
      %v10791 = vsel %vm2008, %v10508, 0
      %10793 = vmatprep.subr.mxu0 %v10772
      %10794 = vmatpush1.msra.mxu0 %v10771
      %10795 = vmatprep.subr.mxu0 %v10776
      %10796 = vmatpush1.msra.mxu0 %v10775
      %10797 = vmatprep.subr.mxu0 0.0
      %10798 = vmatpush1.msra.mxu0 0.0
      %10799 = vmatprep.subr.mxu0 0.0
      %10800 = vmatpush1.msra.mxu0 0.0
      %10801 = vmatprep.subr.mxu0 0.0
      %10802 = vmatpush1.msra.mxu0 0.0
      %10803 = vmatprep.subr.mxu0 0.0
      %10804 = vmatpush1.msra.mxu0 0.0
      %10805 = vmatprep.subr.mxu0 0.0
      %10806 = vmatpush1.msra.mxu0 0.0
      %10807 = vmatprep.subr.mxu0 0.0
      %10808 = vmatpush1.msra.mxu0 0.0
      %10809 = vmatprep.subr.mxu0 0.0
      %10810 = vmatpush1.msra.mxu0 0.0
      %10811 = vmatprep.subr.mxu0 0.0
      %10812 = vmatpush1.msra.mxu0 0.0
      %10813 = vmatprep.subr.mxu0 0.0
      %10814 = vmatpush1.msra.mxu0 0.0
      %10815 = vmatprep.subr.mxu0 0.0
      %10816 = vmatpush1.msra.mxu0 0.0
      %10817 = vmatprep.subr.mxu0 0.0
      %10818 = vmatpush1.msra.mxu0 0.0
      %10819 = vmatprep.subr.mxu0 0.0
      %10820 = vmatpush1.msra.mxu0 0.0
      %10821 = vmatprep.subr.mxu0 0.0
      %10822 = vmatpush1.msra.mxu0 0.0
      %10823 = vmatprep.subr.mxu0 0.0
      %10824 = vmatpush1.msra.mxu0 0.0
      %10825 = vmatprep.subr.mxu0 0.0
      %10826 = vmatpush1.msra.mxu0 0.0
      %10827 = vmatprep.subr.mxu0 0.0
      %10828 = vmatpush1.msra.mxu0 0.0
      %10829 = vmatprep.subr.mxu0 0.0
      %10830 = vmatpush1.msra.mxu0 0.0
      %10831 = vmatprep.subr.mxu0 0.0
      %10832 = vmatpush1.msra.mxu0 0.0
      %10833 = vmatprep.subr.mxu0 0.0
      %10834 = vmatpush1.msra.mxu0 0.0
      %10835 = vmatprep.subr.mxu0 0.0
      %10836 = vmatpush1.msra.mxu0 0.0
      %10837 = vmatprep.subr.mxu0 0.0
      %10838 = vmatpush1.msra.mxu0 0.0
      %10839 = vmatprep.subr.mxu0 0.0
      %10840 = vmatpush1.msra.mxu0 0.0
      %10841 = vmatprep.subr.mxu0 0.0
      %10842 = vmatpush1.msra.mxu0 0.0
      %10843 = vmatprep.subr.mxu0 0.0
      %10844 = vmatpush1.msra.mxu0 0.0
      %10845 = vmatprep.subr.mxu0 0.0
      %10846 = vmatpush1.msra.mxu0 0.0
      %10847 = vmatprep.subr.mxu0 0.0
      %10848 = vmatpush1.msra.mxu0 0.0
      %10849 = vmatprep.subr.mxu0 0.0
      %10850 = vmatpush1.msra.mxu0 0.0
      %10851 = vmatprep.subr.mxu0 0.0
      %10852 = vmatpush1.msra.mxu0 0.0
      %10853 = vmatprep.subr.mxu0 0.0
      %10854 = vmatpush1.msra.mxu0 0.0
      %10855 = vmatprep.subr.mxu0 0.0
      %10856 = vmatpush1.msra.mxu0 0.0
      %10857 = vmatprep.mubr.f32.mxu0 0.0
      %10858 = vmatmul.mubr.f32.gmra.mrb[0].mxu0 %v10789
      %v10859 = vpop.f32.mrb[0].mxu0
      %v10860 = vadd.f32 %v10782, %v10859
      %v10861 = vpop.f32.mrb[0].mxu0
      %v10862 = vadd.f32 %v10782, %v10861
      %10863 = vmatprep.mubr.f32.mxu0 0.0
      %10864 = vmatmul.mubr.f32.gmra.mrb[0].mxu0 %v10791
      %v10865 = vpop.f32.mrb[0].mxu0
      %v10866 = vadd.f32 %v10787, %v10865
      %v10867 = vpop.f32.mrb[0].mxu0
      %v10868 = vadd.f32 %v10787, %v10867
      %10869 = vdwg.mxu0
      %10870 = vmatprep.subr.mxu0 %v10774
      %10871 = vmatpush1.msra.mxu0 %v10773
      %10872 = vmatprep.subr.mxu0 %v10778
      %10873 = vmatpush1.msra.mxu0 %v10777
      %10874 = vmatprep.subr.mxu0 0.0
      %10875 = vmatpush1.msra.mxu0 0.0
      %10876 = vmatprep.subr.mxu0 0.0
      %10877 = vmatpush1.msra.mxu0 0.0
      %10878 = vmatprep.subr.mxu0 0.0
      %10879 = vmatpush1.msra.mxu0 0.0
      %10880 = vmatprep.subr.mxu0 0.0
      %10881 = vmatpush1.msra.mxu0 0.0
      %10882 = vmatprep.subr.mxu0 0.0
      %10883 = vmatpush1.msra.mxu0 0.0
      %10884 = vmatprep.subr.mxu0 0.0
      %10885 = vmatpush1.msra.mxu0 0.0
      %10886 = vmatprep.subr.mxu0 0.0
      %10887 = vmatpush1.msra.mxu0 0.0
      %10888 = vmatprep.subr.mxu0 0.0
      %10889 = vmatpush1.msra.mxu0 0.0
      %10890 = vmatprep.subr.mxu0 0.0
      %10891 = vmatpush1.msra.mxu0 0.0
      %10892 = vmatprep.subr.mxu0 0.0
      %10893 = vmatpush1.msra.mxu0 0.0
      %10894 = vmatprep.subr.mxu0 0.0
      %10895 = vmatpush1.msra.mxu0 0.0
      %10896 = vmatprep.subr.mxu0 0.0
      %10897 = vmatpush1.msra.mxu0 0.0
      %10898 = vmatprep.subr.mxu0 0.0
      %10899 = vmatpush1.msra.mxu0 0.0
      %10900 = vmatprep.subr.mxu0 0.0
      %10901 = vmatpush1.msra.mxu0 0.0
      %10902 = vmatprep.subr.mxu0 0.0
      %10903 = vmatpush1.msra.mxu0 0.0
      %10904 = vmatprep.subr.mxu0 0.0
      %10905 = vmatpush1.msra.mxu0 0.0
      %10906 = vmatprep.subr.mxu0 0.0
      %10907 = vmatpush1.msra.mxu0 0.0
      %10908 = vmatprep.subr.mxu0 0.0
      %10909 = vmatpush1.msra.mxu0 0.0
      %10910 = vmatprep.subr.mxu0 0.0
      %10911 = vmatpush1.msra.mxu0 0.0
      %10912 = vmatprep.subr.mxu0 0.0
      %10913 = vmatpush1.msra.mxu0 0.0
      %10914 = vmatprep.subr.mxu0 0.0
      %10915 = vmatpush1.msra.mxu0 0.0
      %10916 = vmatprep.subr.mxu0 0.0
      %10917 = vmatpush1.msra.mxu0 0.0
      %10918 = vmatprep.subr.mxu0 0.0
      %10919 = vmatpush1.msra.mxu0 0.0
      %10920 = vmatprep.subr.mxu0 0.0
      %10921 = vmatpush1.msra.mxu0 0.0
      %10922 = vmatprep.subr.mxu0 0.0
      %10923 = vmatpush1.msra.mxu0 0.0
      %10924 = vmatprep.subr.mxu0 0.0
      %10925 = vmatpush1.msra.mxu0 0.0
      %10926 = vmatprep.subr.mxu0 0.0
      %10927 = vmatpush1.msra.mxu0 0.0
      %10928 = vmatprep.subr.mxu0 0.0
      %10929 = vmatpush1.msra.mxu0 0.0
      %10930 = vmatprep.subr.mxu0 0.0
      %10931 = vmatpush1.msra.mxu0 0.0
      %10932 = vmatprep.subr.mxu0 0.0
      %10933 = vmatpush1.msra.mxu0 0.0
      %10934 = vmatprep.mubr.f32.mxu0 0.0
      %10935 = vmatmul.mubr.f32.gmra.mrb[0].mxu0 %v10789
      %v10936 = vpop.f32.mrb[0].mxu0
      %v10937 = vadd.f32 %v10782, %v10936
      %v10938 = vpop.f32.mrb[0].mxu0
      %v10939 = vadd.f32 %v10782, %v10938
      %10940 = vmatprep.mubr.f32.mxu0 0.0
      %10941 = vmatmul.mubr.f32.gmra.mrb[0].mxu0 %v10791
      %v10942 = vpop.f32.mrb[0].mxu0
      %v10943 = vadd.f32 %v10787, %v10942
      %v10944 = vpop.f32.mrb[0].mxu0
      %v10945 = vadd.f32 %v10787, %v10944
      %10946 = vdwg.mxu0
      %v10947 = vadd.f32 %v10860, %v10488
      %v10948 = vadd.f32 %v10862, %v10489
      %v10949 = vadd.f32 %v10937, %v10492
      %v10950 = vadd.f32 %v10939, %v10493
      %v10951 = vadd.f32 %v10866, %v10496
      %v10952 = vadd.f32 %v10868, %v10497
      %v10953 = vadd.f32 %v10943, %v10500
      %v10954 = vadd.f32 %v10945, %v10501
      %s10955 = scalar_lea.vmem %s1, 336
      %v10956 = vld [vmem:[%s10955] sm:$0xff]
      %v10957 = vld [vmem:[%s10955 + $0x8] sm:$0xff]
      %v10958 = vld [vmem:[%s10955 + $0x10] sm:$0xff]
      %v10959 = vld [vmem:[%s10955 + $0x18] sm:$0xff]
      %10961 = vset.pattern.permute.xlu0 32
      %10962 = vperm.xlu0 %10961, %v10956
      %v10963 = vpop.permute.xlu0 %10962
      %10966 = vset.pattern.permute.xlu0 32
      %10967 = vperm.xlu0 %10966, %v10957
      %v10968 = vpop.permute.xlu0 %10967
      %10971 = vset.pattern.permute.xlu0 32
      %10972 = vperm.xlu0 %10971, %v10958
      %v10973 = vpop.permute.xlu0 %10972
      %10976 = vset.pattern.permute.xlu0 32
      %10977 = vperm.xlu0 %10976, %v10959
      %v10978 = vpop.permute.xlu0 %10977
      %v10980 = vsel %vm537, %v10956, 0
      %v10982 = vsel %vm537, %v10957, 0
      %v10984 = vsel %vm537, %v10958, 0
      %v10986 = vsel %vm537, %v10959, 0
      %10988 = vmatprep.subr.mxu0 %v10948
      %10989 = vmatpush1.msra.mxu0 %v10947
      %10990 = vmatprep.subr.mxu0 %v10952
      %10991 = vmatpush1.msra.mxu0 %v10951
      %10992 = vmatprep.subr.mxu0 %v10950
      %10993 = vmatpush1.msra.mxu0 %v10949
      %10994 = vmatprep.subr.mxu0 %v10954
      %10995 = vmatpush1.msra.mxu0 %v10953
      %10996 = vmatprep.subr.mxu0 0.0
      %10997 = vmatpush1.msra.mxu0 0.0
      %10998 = vmatprep.subr.mxu0 0.0
      %10999 = vmatpush1.msra.mxu0 0.0
      %11000 = vmatprep.subr.mxu0 0.0
      %11001 = vmatpush1.msra.mxu0 0.0
      %11002 = vmatprep.subr.mxu0 0.0
      %11003 = vmatpush1.msra.mxu0 0.0
      %11004 = vmatprep.subr.mxu0 0.0
      %11005 = vmatpush1.msra.mxu0 0.0
      %11006 = vmatprep.subr.mxu0 0.0
      %11007 = vmatpush1.msra.mxu0 0.0
      %11008 = vmatprep.subr.mxu0 0.0
      %11009 = vmatpush1.msra.mxu0 0.0
      %11010 = vmatprep.subr.mxu0 0.0
      %11011 = vmatpush1.msra.mxu0 0.0
      %11012 = vmatprep.subr.mxu0 0.0
      %11013 = vmatpush1.msra.mxu0 0.0
      %11014 = vmatprep.subr.mxu0 0.0
      %11015 = vmatpush1.msra.mxu0 0.0
      %11016 = vmatprep.subr.mxu0 0.0
      %11017 = vmatpush1.msra.mxu0 0.0
      %11018 = vmatprep.subr.mxu0 0.0
      %11019 = vmatpush1.msra.mxu0 0.0
      %11020 = vmatprep.subr.mxu0 0.0
      %11021 = vmatpush1.msra.mxu0 0.0
      %11022 = vmatprep.subr.mxu0 0.0
      %11023 = vmatpush1.msra.mxu0 0.0
      %11024 = vmatprep.subr.mxu0 0.0
      %11025 = vmatpush1.msra.mxu0 0.0
      %11026 = vmatprep.subr.mxu0 0.0
      %11027 = vmatpush1.msra.mxu0 0.0
      %11028 = vmatprep.subr.mxu0 0.0
      %11029 = vmatpush1.msra.mxu0 0.0
      %11030 = vmatprep.subr.mxu0 0.0
      %11031 = vmatpush1.msra.mxu0 0.0
      %11032 = vmatprep.subr.mxu0 0.0
      %11033 = vmatpush1.msra.mxu0 0.0
      %11034 = vmatprep.subr.mxu0 0.0
      %11035 = vmatpush1.msra.mxu0 0.0
      %11036 = vmatprep.subr.mxu0 0.0
      %11037 = vmatpush1.msra.mxu0 0.0
      %11038 = vmatprep.subr.mxu0 0.0
      %11039 = vmatpush1.msra.mxu0 0.0
      %11040 = vmatprep.subr.mxu0 0.0
      %11041 = vmatpush1.msra.mxu0 0.0
      %11042 = vmatprep.subr.mxu0 0.0
      %11043 = vmatpush1.msra.mxu0 0.0
      %11044 = vmatprep.subr.mxu0 0.0
      %11045 = vmatpush1.msra.mxu0 0.0
      %11046 = vmatprep.subr.mxu0 0.0
      %11047 = vmatpush1.msra.mxu0 0.0
      %11048 = vmatprep.subr.mxu0 0.0
      %11049 = vmatpush1.msra.mxu0 0.0
      %11050 = vmatprep.subr.mxu0 0.0
      %11051 = vmatpush1.msra.mxu0 0.0
      %11052 = vmatprep.mubr.f32.mxu0 0.0
      %11053 = vmatmul.mubr.f32.gmra.mrb[0].mxu0 %v10980
      %v11054 = vpop.f32.mrb[0].mxu0
      %v11055 = vadd.f32 %v10963, %v11054
      %v11056 = vpop.f32.mrb[0].mxu0
      %v11057 = vadd.f32 %v10963, %v11056
      %11058 = vmatprep.mubr.f32.mxu0 0.0
      %11059 = vmatmul.mubr.f32.gmra.mrb[0].mxu0 %v10982
      %v11060 = vpop.f32.mrb[0].mxu0
      %v11061 = vadd.f32 %v10968, %v11060
      %v11062 = vpop.f32.mrb[0].mxu0
      %v11063 = vadd.f32 %v10968, %v11062
      %11064 = vmatprep.mubr.f32.mxu0 0.0
      %11065 = vmatmul.mubr.f32.gmra.mrb[0].mxu0 %v10984
      %v11066 = vpop.f32.mrb[0].mxu0
      %v11067 = vadd.f32 %v10973, %v11066
      %v11068 = vpop.f32.mrb[0].mxu0
      %v11069 = vadd.f32 %v10973, %v11068
      %11070 = vmatprep.mubr.f32.mxu0 0.0
      %11071 = vmatmul.mubr.f32.gmra.mrb[0].mxu0 %v10986
      %v11072 = vpop.f32.mrb[0].mxu0
      %v11073 = vadd.f32 %v10978, %v11072
      %v11074 = vpop.f32.mrb[0].mxu0
      %v11075 = vadd.f32 %v10978, %v11074
      %11076 = vdwg.mxu0
      %v11077 = vtanh.pop %v11055
      %v11078 = vtanh.pop %v11057
      %v11079 = vtanh.pop %v11061
      %v11080 = vtanh.pop %v11063
      %v11081 = vxor.u32 %v11067, 2147483648
      %v11082 = vxor.u32 %v11069, 2147483648
      %v11083 = vxor.u32 %v11073, 2147483648
      %v11084 = vxor.u32 %v11075, 2147483648
      %v11085 = vmul.f32 %v11081, 1.442695
      %v11086 = vpow.pop %v11085
      %v11087 = vmul.f32 %v11082, 1.442695
      %v11088 = vpow.pop %v11087
      %v11089 = vmul.f32 %v11083, 1.442695
      %v11090 = vpow.pop %v11089
      %v11091 = vmul.f32 %v11084, 1.442695
      %v11092 = vpow.pop %v11091
      %v11093 = vadd.f32 %v11086, 1.0
      %v11094 = vadd.f32 %v11088, 1.0
      %v11095 = vadd.f32 %v11090, 1.0
      %v11096 = vadd.f32 %v11092, 1.0
      %v11097 = vrcp.pop %v11093
      %v11098 = vmul.f32 1.0, %v11097
      %v11099 = vrcp.pop %v11094
      %v11100 = vmul.f32 1.0, %v11099
      %v11101 = vrcp.pop %v11095
      %v11102 = vmul.f32 1.0, %v11101
      %v11103 = vrcp.pop %v11096
      %v11104 = vmul.f32 1.0, %v11103
      %v11105 = vmul.f32 %v11077, %v11098
      %v11106 = vmul.f32 %v11078, %v11100
      %v11107 = vmul.f32 %v11079, %v11102
      %v11108 = vmul.f32 %v11080, %v11104
      %v11109 = vld [vmem:[%s2] sm:$0xff]
      %v11110 = vld [vmem:[%s2 + $0x10] sm:$0xff]
      %v11111 = vld [vmem:[%s2 + $0x8] sm:$0xff]
      %v11112 = vld [vmem:[%s2 + $0x18] sm:$0xff]
      %11114 = vset.pattern.permute.xlu0 0
      %11115 = vperm.xlu0 %11114, %v11111
      %v11116 = vpop.permute.xlu0 %11115
      %11119 = vset.pattern.permute.xlu0 0
      %11120 = vperm.xlu0 %11119, %v11112
      %v11121 = vpop.permute.xlu0 %11120
      %11123 = vmatprep.subr.mxu0 %v1973
      %11124 = vmatpush1.msra.mxu0 %v1972
      %11125 = vmatprep.subr.mxu0 %v1997
      %11126 = vmatpush1.msra.mxu0 %v1996
      %11127 = vmatprep.subr.mxu0 %v4209
      %11128 = vmatpush1.msra.mxu0 %v4208
      %11129 = vmatprep.subr.mxu0 %v4229
      %11130 = vmatpush1.msra.mxu0 %v4228
      %11131 = vmatprep.subr.mxu0 %v6159
      %11132 = vmatpush1.msra.mxu0 %v6158
      %11133 = vmatprep.subr.mxu0 %v6177
      %11134 = vmatpush1.msra.mxu0 %v6176
      %11135 = vmatprep.subr.mxu0 %v7788
      %11136 = vmatpush1.msra.mxu0 %v7787
      %11137 = vmatprep.subr.mxu0 %v7802
      %11138 = vmatpush1.msra.mxu0 %v7801
      %11139 = vmatprep.subr.mxu0 %v9132
      %11140 = vmatpush1.msra.mxu0 %v9131
      %11141 = vmatprep.subr.mxu0 %v9144
      %11142 = vmatpush1.msra.mxu0 %v9143
      %11143 = vmatprep.subr.mxu0 %v10155
      %11144 = vmatpush1.msra.mxu0 %v10154
      %11145 = vmatprep.subr.mxu0 %v10163
      %11146 = vmatpush1.msra.mxu0 %v10162
      %11147 = vmatprep.subr.mxu0 %v10774
      %11148 = vmatpush1.msra.mxu0 %v10773
      %11149 = vmatprep.subr.mxu0 %v10778
      %11150 = vmatpush1.msra.mxu0 %v10777
      %11151 = vmatprep.subr.mxu0 %v11106
      %11152 = vmatpush1.msra.mxu0 %v11105
      %11153 = vmatprep.subr.mxu0 %v11108
      %11154 = vmatpush1.msra.mxu0 %v11107
      %11155 = vmatprep.subr.mxu0 0.0
      %11156 = vmatpush1.msra.mxu0 0.0
      %11157 = vmatprep.subr.mxu0 0.0
      %11158 = vmatpush1.msra.mxu0 0.0
      %11159 = vmatprep.subr.mxu0 0.0
      %11160 = vmatpush1.msra.mxu0 0.0
      %11161 = vmatprep.subr.mxu0 0.0
      %11162 = vmatpush1.msra.mxu0 0.0
      %11163 = vmatprep.subr.mxu0 0.0
      %11164 = vmatpush1.msra.mxu0 0.0
      %11165 = vmatprep.subr.mxu0 0.0
      %11166 = vmatpush1.msra.mxu0 0.0
      %11167 = vmatprep.subr.mxu0 0.0
      %11168 = vmatpush1.msra.mxu0 0.0
      %11169 = vmatprep.subr.mxu0 0.0
      %11170 = vmatpush1.msra.mxu0 0.0
      %11171 = vmatprep.subr.mxu0 0.0
      %11172 = vmatpush1.msra.mxu0 0.0
      %11173 = vmatprep.subr.mxu0 0.0
      %11174 = vmatpush1.msra.mxu0 0.0
      %11175 = vmatprep.subr.mxu0 0.0
      %11176 = vmatpush1.msra.mxu0 0.0
      %11177 = vmatprep.subr.mxu0 0.0
      %11178 = vmatpush1.msra.mxu0 0.0
      %11179 = vmatprep.subr.mxu0 0.0
      %11180 = vmatpush1.msra.mxu0 0.0
      %11181 = vmatprep.subr.mxu0 0.0
      %11182 = vmatpush1.msra.mxu0 0.0
      %11183 = vmatprep.subr.mxu0 0.0
      %11184 = vmatpush1.msra.mxu0 0.0
      %11185 = vmatprep.subr.mxu0 0.0
      %11186 = vmatpush1.msra.mxu0 0.0
      %11187 = vmatprep.mubr.f32.mxu0 0.0
      %11188 = vmatmul.mubr.f32.gmra.mrb[0].mxu0 %v11109
      %v11189 = vpop.f32.mrb[0].mxu0
      %v11190 = vadd.f32 %v11116, %v11189
      %v11191 = vpop.f32.mrb[0].mxu0
      %v11192 = vadd.f32 %v11116, %v11191
      %11193 = vmatprep.mubr.f32.mxu0 0.0
      %11194 = vmatmul.mubr.f32.gmra.mrb[0].mxu0 %v11110
      %v11195 = vpop.f32.mrb[0].mxu0
      %v11196 = vadd.f32 %v11121, %v11195
      %v11197 = vpop.f32.mrb[0].mxu0
      %v11198 = vadd.f32 %v11121, %v11197
      %11199 = vdwg.mxu0
      %v11200 = vmax.f32 %v11190, 0.0
      %v11201 = vmax.f32 %v11192, 0.0
      %v11202 = vmax.f32 %v11196, 0.0
      %v11203 = vmax.f32 %v11198, 0.0
      %v11204 = vld [vmem:[%s4] sm:$0xff]
      %v11205 = vld [vmem:[%s4 + $0x8] sm:$0xff]
      %11207 = vset.pattern.permute.xlu0 16
      %11208 = vperm.xlu0 %11207, %v11204
      %v11209 = vpop.permute.xlu0 %11208
      %11212 = vset.pattern.permute.xlu0 16
      %11213 = vperm.xlu0 %11212, %v11205
      %v11214 = vpop.permute.xlu0 %11213
      %v11216 = vsel %vm2008, %v11204, 0
      %v11218 = vsel %vm2008, %v11205, 0
      %11220 = vmatprep.subr.mxu0 %v11201
      %11221 = vmatpush1.msra.mxu0 %v11200
      %11222 = vmatprep.subr.mxu0 %v11203
      %11223 = vmatpush1.msra.mxu0 %v11202
      %11224 = vmatprep.subr.mxu0 0.0
      %11225 = vmatpush1.msra.mxu0 0.0
      %11226 = vmatprep.subr.mxu0 0.0
      %11227 = vmatpush1.msra.mxu0 0.0
      %11228 = vmatprep.subr.mxu0 0.0
      %11229 = vmatpush1.msra.mxu0 0.0
      %11230 = vmatprep.subr.mxu0 0.0
      %11231 = vmatpush1.msra.mxu0 0.0
      %11232 = vmatprep.subr.mxu0 0.0
      %11233 = vmatpush1.msra.mxu0 0.0
      %11234 = vmatprep.subr.mxu0 0.0
      %11235 = vmatpush1.msra.mxu0 0.0
      %11236 = vmatprep.subr.mxu0 0.0
      %11237 = vmatpush1.msra.mxu0 0.0
      %11238 = vmatprep.subr.mxu0 0.0
      %11239 = vmatpush1.msra.mxu0 0.0
      %11240 = vmatprep.subr.mxu0 0.0
      %11241 = vmatpush1.msra.mxu0 0.0
      %11242 = vmatprep.subr.mxu0 0.0
      %11243 = vmatpush1.msra.mxu0 0.0
      %11244 = vmatprep.subr.mxu0 0.0
      %11245 = vmatpush1.msra.mxu0 0.0
      %11246 = vmatprep.subr.mxu0 0.0
      %11247 = vmatpush1.msra.mxu0 0.0
      %11248 = vmatprep.subr.mxu0 0.0
      %11249 = vmatpush1.msra.mxu0 0.0
      %11250 = vmatprep.subr.mxu0 0.0
      %11251 = vmatpush1.msra.mxu0 0.0
      %11252 = vmatprep.subr.mxu0 0.0
      %11253 = vmatpush1.msra.mxu0 0.0
      %11254 = vmatprep.subr.mxu0 0.0
      %11255 = vmatpush1.msra.mxu0 0.0
      %11256 = vmatprep.subr.mxu0 0.0
      %11257 = vmatpush1.msra.mxu0 0.0
      %11258 = vmatprep.subr.mxu0 0.0
      %11259 = vmatpush1.msra.mxu0 0.0
      %11260 = vmatprep.subr.mxu0 0.0
      %11261 = vmatpush1.msra.mxu0 0.0
      %11262 = vmatprep.subr.mxu0 0.0
      %11263 = vmatpush1.msra.mxu0 0.0
      %11264 = vmatprep.subr.mxu0 0.0
      %11265 = vmatpush1.msra.mxu0 0.0
      %11266 = vmatprep.subr.mxu0 0.0
      %11267 = vmatpush1.msra.mxu0 0.0
      %11268 = vmatprep.subr.mxu0 0.0
      %11269 = vmatpush1.msra.mxu0 0.0
      %11270 = vmatprep.subr.mxu0 0.0
      %11271 = vmatpush1.msra.mxu0 0.0
      %11272 = vmatprep.subr.mxu0 0.0
      %11273 = vmatpush1.msra.mxu0 0.0
      %11274 = vmatprep.subr.mxu0 0.0
      %11275 = vmatpush1.msra.mxu0 0.0
      %11276 = vmatprep.subr.mxu0 0.0
      %11277 = vmatpush1.msra.mxu0 0.0
      %11278 = vmatprep.subr.mxu0 0.0
      %11279 = vmatpush1.msra.mxu0 0.0
      %11280 = vmatprep.subr.mxu0 0.0
      %11281 = vmatpush1.msra.mxu0 0.0
      %11282 = vmatprep.subr.mxu0 0.0
      %11283 = vmatpush1.msra.mxu0 0.0
      %11284 = vmatprep.mubr.f32.mxu0 0.0
      %11285 = vmatmul.mubr.f32.gmra.mrb[0].mxu0 %v11216
      %v11286 = vpop.f32.mrb[0].mxu0
      %v11287 = vadd.f32 %v11209, %v11286
      %v11288 = vpop.f32.mrb[0].mxu0
      %v11289 = vadd.f32 %v11209, %v11288
      %11290 = vmatprep.mubr.f32.mxu0 0.0
      %11291 = vmatmul.mubr.f32.gmra.mrb[0].mxu0 %v11218
      %v11292 = vpop.f32.mrb[0].mxu0
      %v11293 = vadd.f32 %v11214, %v11292
      %v11294 = vpop.f32.mrb[0].mxu0
      %v11295 = vadd.f32 %v11214, %v11294
      %11296 = vdwg.mxu0
      %v11297 = vmax.f32 %v11287, 0.0
      %v11298 = vmax.f32 %v11289, 0.0
      %v11299 = vmax.f32 %v11293, 0.0
      %v11300 = vmax.f32 %v11295, 0.0
      %v11301 = vld [vmem:[%s5] sm:$0xff]
      %v11302 = vld [vmem:[%s5 + $0x8] sm:$0xf]
      %11304 = vset.pattern.permute.xlu0 16
      %11305 = vperm.xlu0 %11304, %v11301
      %v11306 = vpop.permute.xlu0 %11305
      %11309 = vset.pattern.permute.xlu0 16
      %11310 = vperm.xlu0 %11309, %v11302
      %v11311 = vpop.permute.xlu0 %11310
      %v11313 = vsel %vm2008, %v11301, 0
      %v11315 = vsel %vm2008, %v11302, 0
      %11317 = vmatprep.subr.mxu0 %v11298
      %11318 = vmatpush1.msra.mxu0 %v11297
      %11319 = vmatprep.subr.mxu0 %v11300
      %11320 = vmatpush1.msra.mxu0 %v11299
      %11321 = vmatprep.subr.mxu0 0.0
      %11322 = vmatpush1.msra.mxu0 0.0
      %11323 = vmatprep.subr.mxu0 0.0
      %11324 = vmatpush1.msra.mxu0 0.0
      %11325 = vmatprep.subr.mxu0 0.0
      %11326 = vmatpush1.msra.mxu0 0.0
      %11327 = vmatprep.subr.mxu0 0.0
      %11328 = vmatpush1.msra.mxu0 0.0
      %11329 = vmatprep.subr.mxu0 0.0
      %11330 = vmatpush1.msra.mxu0 0.0
      %11331 = vmatprep.subr.mxu0 0.0
      %11332 = vmatpush1.msra.mxu0 0.0
      %11333 = vmatprep.subr.mxu0 0.0
      %11334 = vmatpush1.msra.mxu0 0.0
      %11335 = vmatprep.subr.mxu0 0.0
      %11336 = vmatpush1.msra.mxu0 0.0
      %11337 = vmatprep.subr.mxu0 0.0
      %11338 = vmatpush1.msra.mxu0 0.0
      %11339 = vmatprep.subr.mxu0 0.0
      %11340 = vmatpush1.msra.mxu0 0.0
      %11341 = vmatprep.subr.mxu0 0.0
      %11342 = vmatpush1.msra.mxu0 0.0
      %11343 = vmatprep.subr.mxu0 0.0
      %11344 = vmatpush1.msra.mxu0 0.0
      %11345 = vmatprep.subr.mxu0 0.0
      %11346 = vmatpush1.msra.mxu0 0.0
      %11347 = vmatprep.subr.mxu0 0.0
      %11348 = vmatpush1.msra.mxu0 0.0
      %11349 = vmatprep.subr.mxu0 0.0
      %11350 = vmatpush1.msra.mxu0 0.0
      %11351 = vmatprep.subr.mxu0 0.0
      %11352 = vmatpush1.msra.mxu0 0.0
      %11353 = vmatprep.subr.mxu0 0.0
      %11354 = vmatpush1.msra.mxu0 0.0
      %11355 = vmatprep.subr.mxu0 0.0
      %11356 = vmatpush1.msra.mxu0 0.0
      %11357 = vmatprep.subr.mxu0 0.0
      %11358 = vmatpush1.msra.mxu0 0.0
      %11359 = vmatprep.subr.mxu0 0.0
      %11360 = vmatpush1.msra.mxu0 0.0
      %11361 = vmatprep.subr.mxu0 0.0
      %11362 = vmatpush1.msra.mxu0 0.0
      %11363 = vmatprep.subr.mxu0 0.0
      %11364 = vmatpush1.msra.mxu0 0.0
      %11365 = vmatprep.subr.mxu0 0.0
      %11366 = vmatpush1.msra.mxu0 0.0
      %11367 = vmatprep.subr.mxu0 0.0
      %11368 = vmatpush1.msra.mxu0 0.0
      %11369 = vmatprep.subr.mxu0 0.0
      %11370 = vmatpush1.msra.mxu0 0.0
      %11371 = vmatprep.subr.mxu0 0.0
      %11372 = vmatpush1.msra.mxu0 0.0
      %11373 = vmatprep.subr.mxu0 0.0
      %11374 = vmatpush1.msra.mxu0 0.0
      %11375 = vmatprep.subr.mxu0 0.0
      %11376 = vmatpush1.msra.mxu0 0.0
      %11377 = vmatprep.subr.mxu0 0.0
      %11378 = vmatpush1.msra.mxu0 0.0
      %11379 = vmatprep.subr.mxu0 0.0
      %11380 = vmatpush1.msra.mxu0 0.0
      %11381 = vmatprep.mubr.f32.mxu0 0.0
      %11382 = vmatmul.mubr.f32.gmra.mrb[0].mxu0 %v11313
      %v11383 = vpop.f32.mrb[0].mxu0
      %v11384 = vadd.f32 %v11306, %v11383
      %v11385 = vpop.f32.mrb[0].mxu0
      %v11386 = vadd.f32 %v11306, %v11385
      %11387 = vmatprep.mubr.f32.mxu0 0.0
      %11388 = vmatmul.mubr.f32.gmra.mrb[0].mxu0 %v11315
      %v11389 = vpop.f32.mrb[0].mxu0
      %v11390 = vadd.f32 %v11311, %v11389
      %v11391 = vpop.f32.mrb[0].mxu0
      %v11392 = vadd.f32 %v11311, %v11391
      %11393 = vdwg.mxu0
      %11394 = vst [vmem:[%s248] sm:$0xff] %v11384
      %11395 = vst [vmem:[%s248 + $0x8] sm:$0xff] %v11386
      %11396 = vst [vmem:[%s248 + $0x10] sm:$0xf] %v11390
      %11397 = vst [vmem:[%s248 + $0x18] sm:$0xf] %v11392
      %p11398 = scmp.lt.s32.totalorder %s17, 1
      %s11399 = scalar_select %p11398, %s17, 1
      %s11400 = smul.addr %s11399, 4
      %s11401 = smul.addr %s11400, 8
      %s11402 = scalar_lea.vmem %s6, %s11401
      // Predicated region
      $region45: #{tpu_custom_call.1} parent=43 // pred_check
        %p11403 = pneg %p166
      $region46: #{tpu_custom_call.1} parent=43 // pred_check_branch
        %11405 = sbr.rel (%p11403) target = $region48
      $region47: #{tpu_custom_call.1} parent=43 // pred_region
        _
      $region48: #{tpu_custom_call.1} parent=43 // pred_fallthru
        _
    $region44: #{tpu_custom_call.1} parent=5 // pred_fallthru
      _
    %p11406 = scmp.le.s32.totalorder 2, %s12
    // Predicated region
    $region49: #{tpu_custom_call.1} parent=5 // pred_check
      %p11407 = pneg %p11406
    $region50: #{tpu_custom_call.1} parent=5 // pred_check_branch
      %11409 = sbr.rel (%p11407) target = $region52
    $region51: #{tpu_custom_call.1} parent=5 // pred_region
      %s11410 = ssub.s32 %s12, 2
      // Predicated region
      $region53: #{tpu_custom_call.1} parent=51 // pred_check
        %p11411 = pneg %p172
      $region54: #{tpu_custom_call.1} parent=51 // pred_check_branch
        %11413 = sbr.rel (%p11411) target = $region56
      $region55: #{tpu_custom_call.1} parent=51 // pred_region
        %p11414 = scmp.lt.s32.totalorder %s18, 1
        %s11415 = scalar_select %p11414, %s18, 1
        %s11416 = smul.addr %s11415, 4
        %s11417 = smul.addr %s11416, 8
        %s11418 = scalar_lea.vmem %s6, %s11417
      $region56: #{tpu_custom_call.1} parent=51 // pred_fallthru
        _
    $region52: #{tpu_custom_call.1} parent=5 // pred_fallthru
      _
  $region6: #{tpu_custom_call.1} parent=0 // loop_footer
    %s16 = sadd.s32 1, %s12
  $region7: #{tpu_custom_call.1} parent=0 // loop_footer_branch
    %11 = sbr.rel target = $region3
  $region8: #{tpu_custom_call.1} parent=0 // loop_exit
    _

</llo_original>
